<compile_context>
chip_gen: v5e
topology: v5e:2x2
jax: 0.10.0
libtpu: 0.0.40
codegen_flags: <defaults>
</compile_context>

<pallas_src>
import jax
import jax.numpy as jnp
from jax.experimental import pallas as pl
from jax.experimental.pallas import tpu as pltpu

EPS = 1e-5                      # ContBatchNorm3d default eps
VMEM_LIMIT = 32 * 1024 * 1024   # fits v5e/v6e (128 MiB) and v7x (64 MiB) VMEM


def _pick_rows(n, cap):
    """Largest row tile <= cap that divides n (multiple of 8 when possible)."""
    for t in range(min(n, cap), 0, -1):
        if n % t == 0 and (t % 8 == 0 or t == n):
            return t
    return n


# ----------------------------- Pallas kernels ------------------------------ #

def _matmul_bias_kernel(x_ref, w_ref, b_ref, o_ref):
    # x: (TM, 2*Cin) bf16, w: (2*Cin, 16*Cout) bf16, b/o: (.., 16*Cout) f32
    o_ref[...] = (
        jnp.dot(x_ref[...], w_ref[...], preferred_element_type=jnp.float32)
        + b_ref[...])


def _conv3x3_stats_kernel(x0_ref, x1_ref, x2_ref, w_ref, b_ref,
                          y_ref, s_ref, ss_ref):
    """One (n, d) output slice of Conv3d(3x3x3, pad=1) + partial BN stats.

    x{0,1,2}_ref: (1, 1, H+2, W+2, Cin) bf16  -- D-taps d, d+1, d+2 of the
                                                 zero-padded input.
    w_ref:        (27*Cin, Cout) bf16         -- taps ordered (kd, kh, kw, ci).
    b_ref:        (1, Cout) f32
    y_ref:        (1, 1, H*W, Cout) f32       -- conv output for this slice.
    s_ref/ss_ref: (1, 1, 1, Cout) f32         -- per-tile sum / sum-of-squares.
    """
    hp2 = x0_ref.shape[2]
    wp2 = x0_ref.shape[3]
    cin = x0_ref.shape[4]
    h, w = hp2 - 2, wp2 - 2

    # Build the (H*W, 27*Cin) im2col entirely in VMEM: 27 shifted taps from the
    # three D-slabs, concatenated along the channel (lane) axis, then a single
    # big-K MXU matmul (instead of 27 tiny-K dots / a 27x HBM im2col).
    parts = []
    for slab_ref in (x0_ref, x1_ref, x2_ref):            # kd = 0, 1, 2
        for kh in range(3):
            for kw in range(3):
                parts.append(slab_ref[0, 0, kh:kh + h, kw:kw + w, :])
    im2col = jnp.concatenate(parts, axis=-1)             # (H, W, 27*Cin) bf16
    im2col = im2col.reshape(h * w, 27 * cin)

    acc = jnp.dot(im2col, w_ref[...], preferred_element_type=jnp.float32)
    acc = acc + b_ref[...]

    y_ref[0, 0] = acc
    s_ref[0, 0] = jnp.sum(acc, axis=0, keepdims=True)
    ss_ref[0, 0] = jnp.sum(acc * acc, axis=0, keepdims=True)


def _bn_relu_kernel(y_ref, scale_ref, shift_ref, o_ref):
    # Global batch statistics are already folded into scale/shift.
    o_ref[...] = jnp.maximum(y_ref[...] * scale_ref[...] + shift_ref[...], 0.0)


# ------------------------------ wrappers ----------------------------------- #

def conv_transpose3d_k2s2(x, w, b, *, row_cap=2048):
    """x: (N, D, H, W, Cin); w: (Cin, Cout, 2, 2, 2) [PyTorch]; b: (Cout,)."""
    N, D, H, W, Cin = x.shape
    Cout = w.shape[1]
    K8 = 8 * Cout
    M0 = N * D * H * W
    assert M0 % 2 == 0, "voxel count must be even for 2-row lane packing"
    rows = M0 // 2

    # (Cin, Cout, kd, kh, kw) -> (Cin, kd, kh, kw, Cout) -> (Cin, 8*Cout).
    w8 = jnp.transpose(w, (0, 2, 3, 4, 1)).reshape(Cin, K8)
    # Pack two voxels per matmul row (block-diagonal weight): output tile is
    # 2*8*Cout = 128 lanes wide -> unmasked vector stores.
    w2 = jnp.zeros((2 * Cin, 2 * K8), jnp.float32)
    w2 = w2.at[:Cin, :K8].set(w8).at[Cin:, K8:].set(w8).astype(jnp.bfloat16)
    b2 = jnp.tile(jnp.tile(b, 8), 2).reshape(1, 2 * K8).astype(jnp.float32)
    x2 = x.reshape(rows, 2 * Cin).astype(jnp.bfloat16)

    tm = _pick_rows(rows, row_cap)
    y = pl.pallas_call(
        _matmul_bias_kernel,
        grid=(rows // tm,),
        in_specs=(pl.BlockSpec((tm, 2 * Cin), lambda i: (i, 0)),
                  pl.BlockSpec((2 * Cin, 2 * K8), lambda i: (0, 0)),
                  pl.BlockSpec((1, 2 * K8), lambda i: (0, 0))),
        out_specs=pl.BlockSpec((tm, 2 * K8), lambda i: (i, 0)),
        out_shape=jax.ShapeDtypeStruct((rows, 2 * K8), jnp.float32),
        compiler_params=pltpu.CompilerParams(
            dimension_semantics=("parallel",),
            vmem_limit_bytes=VMEM_LIMIT),
    )(x2, w2, b2)

    # TODO(synk): fuse this scatter + the following channel concat into the
    # pallas_call (out_specs index_map + input_output_aliases) to remove two
    # extra full HBM passes over the upsampled tensor.
    y = y.reshape(N, D, H, W, 2, 2, 2, Cout)
    y = jnp.transpose(y, (0, 1, 4, 2, 5, 3, 6, 7))   # (N, D,kd, H,kh, W,kw, C)
    return y.reshape(N, 2 * D, 2 * H, 2 * W, Cout)


def luconv(x, w, b, gamma, beta, *, row_cap=1024):
    """Conv3d(3x3x3, pad=1) + ContBatchNorm3d(training stats) + ReLU.

    x: (N, D, H, W, Cin) f32; w: (3, 3, 3, Cin, Cout) f32.
    """
    N, D, H, W, Cin = x.shape
    Cout = w.shape[-1]
    M = N * D * H * W
    HW = H * W

    xp = jnp.pad(x, ((0, 0), (1, 1), (1, 1), (1, 1), (0, 0)))
    xp = xp.astype(jnp.bfloat16)
    wk = w.reshape(27 * Cin, Cout).astype(jnp.bfloat16)
    bk = b.reshape(1, Cout).astype(jnp.float32)

    slab = (1, 1, H + 2, W + 2, Cin)
    # TODO(synk): for production volumes (large H*W) the in-kernel
    # (H*W, 27*Cin) im2col should additionally be tiled over H to stay inside
    # the v7x 64 MiB VMEM budget.
    y, ps, pss = pl.pallas_call(
        _conv3x3_stats_kernel,
        grid=(N, D),
        in_specs=(
            pl.BlockSpec(slab, lambda n, d: (n, d, 0, 0, 0)),       # kd = 0
            pl.BlockSpec(slab, lambda n, d: (n, d + 1, 0, 0, 0)),   # kd = 1
            pl.BlockSpec(slab, lambda n, d: (n, d + 2, 0, 0, 0)),   # kd = 2
            pl.BlockSpec((27 * Cin, Cout), lambda n, d: (0, 0)),
            pl.BlockSpec((1, Cout), lambda n, d: (0, 0)),
        ),
        out_specs=(
            pl.BlockSpec((1, 1, HW, Cout), lambda n, d: (n, d, 0, 0)),
            pl.BlockSpec((1, 1, 1, Cout), lambda n, d: (n, d, 0, 0)),
            pl.BlockSpec((1, 1, 1, Cout), lambda n, d: (n, d, 0, 0)),
        ),
        out_shape=(
            jax.ShapeDtypeStruct((N, D, HW, Cout), jnp.float32),
            jax.ShapeDtypeStruct((N, D, 1, Cout), jnp.float32),
            jax.ShapeDtypeStruct((N, D, 1, Cout), jnp.float32),
        ),
        compiler_params=pltpu.CompilerParams(
            dimension_semantics=("parallel", "parallel"),
            vmem_limit_bytes=VMEM_LIMIT),
    )(xp, xp, xp, wk, bk)

    # ContBatchNorm3d always normalizes with *batch* statistics; reduce the
    # per-tile partials and fold mean/var/gamma/beta into scale & shift.
    # TODO(synk): running_mean/running_var momentum buffer updates (a
    # training-time side effect) are not reproduced; only activations are.
    cnt = jnp.float32(M)
    mean = jnp.sum(ps, axis=(0, 1, 2)) / cnt
    var = jnp.maximum(jnp.sum(pss, axis=(0, 1, 2)) / cnt - mean * mean, 0.0)
    scale = gamma * jax.lax.rsqrt(var + EPS)
    shift = beta - mean * scale

    rows = N * D * HW
    tm = _pick_rows(rows, row_cap)
    # TODO(synk): Cout=64 (< 128 lanes) makes these stores masked; pack two
    # rows per 128-lane output row (or pad Cout) for a fully lane-dense slab.
    out = pl.pallas_call(
        _bn_relu_kernel,
        grid=(rows // tm,),
        in_specs=(pl.BlockSpec((tm, Cout), lambda i: (i, 0)),
                  pl.BlockSpec((1, Cout), lambda i: (0, 0)),
                  pl.BlockSpec((1, Cout), lambda i: (0, 0))),
        out_specs=pl.BlockSpec((tm, Cout), lambda i: (i, 0)),
        out_shape=jax.ShapeDtypeStruct((rows, Cout), jnp.float32),
        compiler_params=pltpu.CompilerParams(
            dimension_semantics=("parallel",),
            vmem_limit_bytes=VMEM_LIMIT),
    )(y.reshape(rows, Cout),
      scale.reshape(1, Cout).astype(jnp.float32),
      shift.reshape(1, Cout).astype(jnp.float32))
    return out.reshape(N, D, H, W, Cout)


def up_transition(x_ncdhw, skip_ncdhw, params):
    """UpTransition.forward.  Inputs in PyTorch NCDHW, output in NCDHW."""
    x = jnp.transpose(x_ncdhw, (0, 2, 3, 4, 1))       # -> NDHWC
    skip = jnp.transpose(skip_ncdhw, (0, 2, 3, 4, 1))

    y_up = conv_transpose3d_k2s2(x, params["up_w"], params["up_b"])
    concat = jnp.concatenate([y_up, skip], axis=-1)   # torch.cat(dim=1)
    h = luconv(concat, params["w1"], params["b1"], params["g1"], params["bt1"])
    out = luconv(h, params["w2"], params["b2"], params["g2"], params["bt2"])
    return jnp.transpose(out, (0, 4, 1, 2, 3))        # back to NCDHW


# --------------------------- pure-JAX reference ----------------------------- #

def ref_up_transition(x_ncdhw, skip_ncdhw, params):
    hp = jax.lax.Precision.HIGHEST
    x = jnp.transpose(x_ncdhw, (0, 2, 3, 4, 1))
    skip = jnp.transpose(skip_ncdhw, (0, 2, 3, 4, 1))
    N, D, H, W, _ = x.shape
    Cout = params["up_w"].shape[1]

    y = jnp.zeros((N, 2 * D, 2 * H, 2 * W, Cout), jnp.float32)
    for kd in range(2):
        for kh in range(2):
            for kw in range(2):
                contrib = jnp.einsum("ndhwc,co->ndhwo", x,
                                     params["up_w"][:, :, kd, kh, kw],
                                     precision=hp)
                y = y.at[:, kd::2, kh::2, kw::2, :].set(contrib)
    y = y + params["up_b"]
    concat = jnp.concatenate([y, skip], axis=-1)

    def ref_luconv(z, w, b, g, bt):
        c = jax.lax.conv_general_dilated(
            z, w, window_strides=(1, 1, 1), padding="SAME",
            dimension_numbers=("NDHWC", "DHWIO", "NDHWC"), precision=hp) + b
        mean = jnp.mean(c, axis=(0, 1, 2, 3), keepdims=True)
        var = jnp.mean((c - mean) ** 2, axis=(0, 1, 2, 3), keepdims=True)
        return jnp.maximum((c - mean) * jax.lax.rsqrt(var + EPS) * g + bt, 0.0)

    h = ref_luconv(concat, params["w1"], params["b1"], params["g1"],
                   params["bt1"])
    out = ref_luconv(h, params["w2"], params["b2"], params["g2"],
                     params["bt2"])
    return jnp.transpose(out, (0, 4, 1, 2, 3))


# --------------------------------- main ------------------------------------ #

if __name__ == "__main__":
    # UpTransition(inChans=8, outChans=8, depth=0, act='relu')
    inChans, outChans, depth = 8, 8, 0
    ch = 32 * 2 ** (depth + 1)          # = 64 (double_chnnel=True branch)
    cat_ch = inChans + outChans // 2    # = 12
    N, D, H, W = 2, 4, 4, 4

    key = jax.random.PRNGKey(0)
    ks = jax.random.split(key, 12)

    params = {
        # ConvTranspose3d(inChans, outChans, kernel_size=2, stride=2)
        "up_w": 0.1 * jax.random.normal(ks[0], (inChans, outChans, 2, 2, 2),
                                        jnp.float32),
        "up_b": 0.1 * jax.random.normal(ks[1], (outChans,), jnp.float32),
        # LUConv(cat_ch, 64): Conv3d(3x3x3) + ContBatchNorm3d + ReLU
        "w1": 0.1 * jax.random.normal(ks[2], (3, 3, 3, cat_ch, ch),
                                      jnp.float32),
        "b1": 0.1 * jax.random.normal(ks[3], (ch,), jnp.float32),
        "g1": 1.0 + 0.1 * jax.random.normal(ks[4], (ch,), jnp.float32),
        "bt1": 0.1 * jax.random.normal(ks[5], (ch,), jnp.float32),
        # LUConv(64, 64)
        "w2": 0.1 * jax.random.normal(ks[6], (3, 3, 3, ch, ch), jnp.float32),
        "b2": 0.1 * jax.random.normal(ks[7], (ch,), jnp.float32),
        "g2": 1.0 + 0.1 * jax.random.normal(ks[8], (ch,), jnp.float32),
        "bt2": 0.1 * jax.random.normal(ks[9], (ch,), jnp.float32),
    }

    # PyTorch-style NCDHW inputs: x is the decoder feature, skip_x the encoder
    # skip (cat_ch - outChans = 4 channels at 2x spatial resolution).
    x = jax.random.normal(ks[10], (N, inChans, D, H, W), jnp.float32)
    skip_x = jax.random.normal(ks[11], (N, cat_ch - outChans, 2 * D, 2 * H,
                                        2 * W), jnp.float32)

    up = jax.jit(up_transition)
    out = jax.block_until_ready(up(x, skip_x, params))
    ref = jax.block_until_ready(ref_up_transition(x, skip_x, params))

    assert out.shape == (N, ch, 2 * D, 2 * H, 2 * W), out.shape
    err = float(jnp.max(jnp.abs(out - ref)))
    # bf16 MXU operands (f32 accumulation) vs. the f32-highest reference.
    assert jnp.allclose(out, ref, atol=4e-2, rtol=4e-2), err
    print("KERNEL_OK")
</pallas_src>

<mosaic_0001>
module attributes {stable_mosaic.version = 11 : i64} {
  func.func @_matmul_bias_kernel(%arg0: i32, %arg1: memref<64x16xbf16, #tpu.memory_space<vmem>>, %arg2: memref<16x128xbf16, #tpu.memory_space<vmem>>, %arg3: memref<1x128xf32, #tpu.memory_space<vmem>>, %arg4: memref<64x128xf32, #tpu.memory_space<vmem>>) attributes {dimension_semantics = [#tpu.dimension_semantics<parallel>], iteration_bounds = array<i64: 1>, scalar_prefetch = 0 : i64, scratch_operands = 0 : i64, tpu.core_type = #tpu.core_type<tc>, window_params = [{transform_indices = @transform_0, window_bounds = array<i64: 64, 16>}, {pipeline_mode = #tpu.pipeline_mode<synchronous>, transform_indices = @transform_1, window_bounds = array<i64: 16, 128>}, {pipeline_mode = #tpu.pipeline_mode<synchronous>, transform_indices = @transform_2, window_bounds = array<i64: 1, 128>}, {transform_indices = @transform_3, window_bounds = array<i64: 64, 128>}]} {
    %c0 = arith.constant 0 : index
    %c0_0 = arith.constant 0 : index
    %0 = vector.load %arg1[%c0, %c0_0] : memref<64x16xbf16, #tpu.memory_space<vmem>>, vector<64x16xbf16>
    %c0_1 = arith.constant 0 : index
    %c0_2 = arith.constant 0 : index
    %1 = vector.load %arg2[%c0_1, %c0_2] : memref<16x128xbf16, #tpu.memory_space<vmem>>, vector<16x128xbf16>
    %cst = arith.constant dense<0.000000e+00> : vector<64x128xf32>
    %2 = tpu.matmul %0, %1, %cst {dimension_numbers = #tpu.dot_dimension_numbers<[1], [0], [0], [1], [0, 0, 1, 1], [], []>} : vector<64x16xbf16>, vector<16x128xbf16>, vector<64x128xf32> -> vector<64x128xf32>
    %c0_3 = arith.constant 0 : index
    %c0_4 = arith.constant 0 : index
    %3 = vector.load %arg3[%c0_3, %c0_4] : memref<1x128xf32, #tpu.memory_space<vmem>>, vector<1x128xf32>
    %4 = vector.broadcast %3 : vector<1x128xf32> to vector<64x128xf32>
    %5 = arith.addf %2, %4 : vector<64x128xf32>
    %c0_5 = arith.constant 0 : index
    %c0_6 = arith.constant 0 : index
    %6 = vector.load %arg4[%c0_5, %c0_6] : memref<64x128xf32, #tpu.memory_space<vmem>>, vector<64x128xf32>
    tpu.vector_store %arg4[%c0_5, %c0_6], %5 {strides = array<i32>} : memref<64x128xf32, #tpu.memory_space<vmem>>, vector<64x128xf32>,
    return
  }
  func.func @transform_0(%arg0: i32) -> (i32, i32) {
    %c0_i32 = arith.constant 0 : i32
    %c0_i32_0 = arith.constant 0 : i32
    return %arg0, %c0_i32 : i32, i32
  }
  func.func @transform_1(%arg0: i32) -> (i32, i32) {
    %c0_i32 = arith.constant 0 : i32
    %c0_i32_0 = arith.constant 0 : i32
    %c0_i32_1 = arith.constant 0 : i32
    return %c0_i32, %c0_i32_0 : i32, i32
  }
  func.func @transform_2(%arg0: i32) -> (i32, i32) {
    %c0_i32 = arith.constant 0 : i32
    %c0_i32_0 = arith.constant 0 : i32
    %c0_i32_1 = arith.constant 0 : i32
    return %c0_i32, %c0_i32_0 : i32, i32
  }
  func.func @transform_3(%arg0: i32) -> (i32, i32) {
    %c0_i32 = arith.constant 0 : i32
    %c0_i32_0 = arith.constant 0 : i32
    return %arg0, %c0_i32 : i32, i32
  }
}

module attributes {stable_mosaic.version = 11 : i64} {
  func.func @_conv3x3_stats_kernel(%arg0: i32, %arg1: i32, %arg2: memref<1x1x10x10x12xbf16, #tpu.memory_space<vmem>>, %arg3: memref<1x1x10x10x12xbf16, #tpu.memory_space<vmem>>, %arg4: memref<1x1x10x10x12xbf16, #tpu.memory_space<vmem>>, %arg5: memref<324x64xbf16, #tpu.memory_space<vmem>>, %arg6: memref<1x64xf32, #tpu.memory_space<vmem>>, %arg7: memref<1x1x64x64xf32, #tpu.memory_space<vmem>>, %arg8: memref<1x1x1x64xf32, #tpu.memory_space<vmem>>, %arg9: memref<1x1x1x64xf32, #tpu.memory_space<vmem>>) attributes {dimension_semantics = [#tpu.dimension_semantics<parallel>, #tpu.dimension_semantics<parallel>], iteration_bounds = array<i64: 2, 8>, scalar_prefetch = 0 : i64, scratch_operands = 0 : i64, tpu.core_type = #tpu.core_type<tc>, window_params = [{transform_indices = @transform_0, window_bounds = array<i64: 1, 1, 10, 10, 12>}, {transform_indices = @transform_1, window_bounds = array<i64: 1, 1, 10, 10, 12>}, {transform_indices = @transform_2, window_bounds = array<i64: 1, 1, 10, 10, 12>}, {pipeline_mode = #tpu.pipeline_mode<synchronous>, transform_indices = @transform_3, window_bounds = array<i64: 324, 64>}, {pipeline_mode = #tpu.pipeline_mode<synchronous>, transform_indices = @transform_4, window_bounds = array<i64: 1, 64>}, {transform_indices = @transform_5, window_bounds = array<i64: 1, 1, 64, 64>}, {transform_indices = @transform_6, window_bounds = array<i64: 1, 1, 1, 64>}, {transform_indices = @transform_7, window_bounds = array<i64: 1, 1, 1, 64>}]} {
    %c0 = arith.constant 0 : index
    %c0_0 = arith.constant 0 : index
    %c0_1 = arith.constant 0 : index
    %c0_2 = arith.constant 0 : index
    %c0_3 = arith.constant 0 : index
    %0 = vector.load %arg2[%c0, %c0_0, %c0_1, %c0_2, %c0_3] : memref<1x1x10x10x12xbf16, #tpu.memory_space<vmem>>, vector<1x1x8x8x12xbf16>
    %1 = vector.shape_cast %0 : vector<1x1x8x8x12xbf16> to vector<8x8x12xbf16>
    %c0_4 = arith.constant 0 : index
    %c0_5 = arith.constant 0 : index
    %c0_6 = arith.constant 0 : index
    %c1 = arith.constant 1 : index
    %c0_7 = arith.constant 0 : index
    %2 = vector.load %arg2[%c0_4, %c0_5, %c0_6, %c1, %c0_7] : memref<1x1x10x10x12xbf16, #tpu.memory_space<vmem>>, vector<1x1x8x8x12xbf16>
    %3 = vector.shape_cast %2 : vector<1x1x8x8x12xbf16> to vector<8x8x12xbf16>
    %c0_8 = arith.constant 0 : index
    %c0_9 = arith.constant 0 : index
    %c0_10 = arith.constant 0 : index
    %c2 = arith.constant 2 : index
    %c0_11 = arith.constant 0 : index
    %4 = vector.load %arg2[%c0_8, %c0_9, %c0_10, %c2, %c0_11] : memref<1x1x10x10x12xbf16, #tpu.memory_space<vmem>>, vector<1x1x8x8x12xbf16>
    %5 = vector.shape_cast %4 : vector<1x1x8x8x12xbf16> to vector<8x8x12xbf16>
    %c0_12 = arith.constant 0 : index
    %c0_13 = arith.constant 0 : index
    %c1_14 = arith.constant 1 : index
    %c0_15 = arith.constant 0 : index
    %c0_16 = arith.constant 0 : index
    %6 = vector.load %arg2[%c0_12, %c0_13, %c1_14, %c0_15, %c0_16] : memref<1x1x10x10x12xbf16, #tpu.memory_space<vmem>>, vector<1x1x8x8x12xbf16>
    %7 = vector.shape_cast %6 : vector<1x1x8x8x12xbf16> to vector<8x8x12xbf16>
    %c0_17 = arith.constant 0 : index
    %c0_18 = arith.constant 0 : index
    %c1_19 = arith.constant 1 : index
    %c1_20 = arith.constant 1 : index
    %c0_21 = arith.constant 0 : index
    %8 = vector.load %arg2[%c0_17, %c0_18, %c1_19, %c1_20, %c0_21] : memref<1x1x10x10x12xbf16, #tpu.memory_space<vmem>>, vector<1x1x8x8x12xbf16>
    %9 = vector.shape_cast %8 : vector<1x1x8x8x12xbf16> to vector<8x8x12xbf16>
    %c0_22 = arith.constant 0 : index
    %c0_23 = arith.constant 0 : index
    %c1_24 = arith.constant 1 : index
    %c2_25 = arith.constant 2 : index
    %c0_26 = arith.constant 0 : index
    %10 = vector.load %arg2[%c0_22, %c0_23, %c1_24, %c2_25, %c0_26] : memref<1x1x10x10x12xbf16, #tpu.memory_space<vmem>>, vector<1x1x8x8x12xbf16>
    %11 = vector.shape_cast %10 : vector<1x1x8x8x12xbf16> to vector<8x8x12xbf16>
    %c0_27 = arith.constant 0 : index
    %c0_28 = arith.constant 0 : index
    %c2_29 = arith.constant 2 : index
    %c0_30 = arith.constant 0 : index
    %c0_31 = arith.constant 0 : index
    %12 = vector.load %arg2[%c0_27, %c0_28, %c2_29, %c0_30, %c0_31] : memref<1x1x10x10x12xbf16, #tpu.memory_space<vmem>>, vector<1x1x8x8x12xbf16>
    %13 = vector.shape_cast %12 : vector<1x1x8x8x12xbf16> to vector<8x8x12xbf16>
    %c0_32 = arith.constant 0 : index
    %c0_33 = arith.constant 0 : index
    %c2_34 = arith.constant 2 : index
    %c1_35 = arith.constant 1 : index
    %c0_36 = arith.constant 0 : index
    %14 = vector.load %arg2[%c0_32, %c0_33, %c2_34, %c1_35, %c0_36] : memref<1x1x10x10x12xbf16, #tpu.memory_space<vmem>>, vector<1x1x8x8x12xbf16>
    %15 = vector.shape_cast %14 : vector<1x1x8x8x12xbf16> to vector<8x8x12xbf16>
    %c0_37 = arith.constant 0 : index
    %c0_38 = arith.constant 0 : index
    %c2_39 = arith.constant 2 : index
    %c2_40 = arith.constant 2 : index
    %c0_41 = arith.constant 0 : index
    %16 = vector.load %arg2[%c0_37, %c0_38, %c2_39, %c2_40, %c0_41] : memref<1x1x10x10x12xbf16, #tpu.memory_space<vmem>>, vector<1x1x8x8x12xbf16>
    %17 = vector.shape_cast %16 : vector<1x1x8x8x12xbf16> to vector<8x8x12xbf16>
    %c0_42 = arith.constant 0 : index
    %c0_43 = arith.constant 0 : index
    %c0_44 = arith.constant 0 : index
    %c0_45 = arith.constant 0 : index
    %c0_46 = arith.constant 0 : index
    %18 = vector.load %arg3[%c0_42, %c0_43, %c0_44, %c0_45, %c0_46] : memref<1x1x10x10x12xbf16, #tpu.memory_space<vmem>>, vector<1x1x8x8x12xbf16>
    %19 = vector.shape_cast %18 : vector<1x1x8x8x12xbf16> to vector<8x8x12xbf16>
    %c0_47 = arith.constant 0 : index
    %c0_48 = arith.constant 0 : index
    %c0_49 = arith.constant 0 : index
    %c1_50 = arith.constant 1 : index
    %c0_51 = arith.constant 0 : index
    %20 = vector.load %arg3[%c0_47, %c0_48, %c0_49, %c1_50, %c0_51] : memref<1x1x10x10x12xbf16, #tpu.memory_space<vmem>>, vector<1x1x8x8x12xbf16>
    %21 = vector.shape_cast %20 : vector<1x1x8x8x12xbf16> to vector<8x8x12xbf16>
    %c0_52 = arith.constant 0 : index
    %c0_53 = arith.constant 0 : index
    %c0_54 = arith.constant 0 : index
    %c2_55 = arith.constant 2 : index
    %c0_56 = arith.constant 0 : index
    %22 = vector.load %arg3[%c0_52, %c0_53, %c0_54, %c2_55, %c0_56] : memref<1x1x10x10x12xbf16, #tpu.memory_space<vmem>>, vector<1x1x8x8x12xbf16>
    %23 = vector.shape_cast %22 : vector<1x1x8x8x12xbf16> to vector<8x8x12xbf16>
    %c0_57 = arith.constant 0 : index
    %c0_58 = arith.constant 0 : index
    %c1_59 = arith.constant 1 : index
    %c0_60 = arith.constant 0 : index
    %c0_61 = arith.constant 0 : index
    %24 = vector.load %arg3[%c0_57, %c0_58, %c1_59, %c0_60, %c0_61] : memref<1x1x10x10x12xbf16, #tpu.memory_space<vmem>>, vector<1x1x8x8x12xbf16>
    %25 = vector.shape_cast %24 : vector<1x1x8x8x12xbf16> to vector<8x8x12xbf16>
    %c0_62 = arith.constant 0 : index
    %c0_63 = arith.constant 0 : index
    %c1_64 = arith.constant 1 : index
    %c1_65 = arith.constant 1 : index
    %c0_66 = arith.constant 0 : index
    %26 = vector.load %arg3[%c0_62, %c0_63, %c1_64, %c1_65, %c0_66] : memref<1x1x10x10x12xbf16, #tpu.memory_space<vmem>>, vector<1x1x8x8x12xbf16>
    %27 = vector.shape_cast %26 : vector<1x1x8x8x12xbf16> to vector<8x8x12xbf16>
    %c0_67 = arith.constant 0 : index
    %c0_68 = arith.constant 0 : index
    %c1_69 = arith.constant 1 : index
    %c2_70 = arith.constant 2 : index
    %c0_71 = arith.constant 0 : index
    %28 = vector.load %arg3[%c0_67, %c0_68, %c1_69, %c2_70, %c0_71] : memref<1x1x10x10x12xbf16, #tpu.memory_space<vmem>>, vector<1x1x8x8x12xbf16>
    %29 = vector.shape_cast %28 : vector<1x1x8x8x12xbf16> to vector<8x8x12xbf16>
    %c0_72 = arith.constant 0 : index
    %c0_73 = arith.constant 0 : index
    %c2_74 = arith.constant 2 : index
    %c0_75 = arith.constant 0 : index
    %c0_76 = arith.constant 0 : index
    %30 = vector.load %arg3[%c0_72, %c0_73, %c2_74, %c0_75, %c0_76] : memref<1x1x10x10x12xbf16, #tpu.memory_space<vmem>>, vector<1x1x8x8x12xbf16>
    %31 = vector.shape_cast %30 : vector<1x1x8x8x12xbf16> to vector<8x8x12xbf16>
    %c0_77 = arith.constant 0 : index
    %c0_78 = arith.constant 0 : index
    %c2_79 = arith.constant 2 : index
    %c1_80 = arith.constant 1 : index
    %c0_81 = arith.constant 0 : index
    %32 = vector.load %arg3[%c0_77, %c0_78, %c2_79, %c1_80, %c0_81] : memref<1x1x10x10x12xbf16, #tpu.memory_space<vmem>>, vector<1x1x8x8x12xbf16>
    %33 = vector.shape_cast %32 : vector<1x1x8x8x12xbf16> to vector<8x8x12xbf16>
    %c0_82 = arith.constant 0 : index
    %c0_83 = arith.constant 0 : index
    %c2_84 = arith.constant 2 : index
    %c2_85 = arith.constant 2 : index
    %c0_86 = arith.constant 0 : index
    %34 = vector.load %arg3[%c0_82, %c0_83, %c2_84, %c2_85, %c0_86] : memref<1x1x10x10x12xbf16, #tpu.memory_space<vmem>>, vector<1x1x8x8x12xbf16>
    %35 = vector.shape_cast %34 : vector<1x1x8x8x12xbf16> to vector<8x8x12xbf16>
    %c0_87 = arith.constant 0 : index
    %c0_88 = arith.constant 0 : index
    %c0_89 = arith.constant 0 : index
    %c0_90 = arith.constant 0 : index
    %c0_91 = arith.constant 0 : index
    %36 = vector.load %arg4[%c0_87, %c0_88, %c0_89, %c0_90, %c0_91] : memref<1x1x10x10x12xbf16, #tpu.memory_space<vmem>>, vector<1x1x8x8x12xbf16>
    %37 = vector.shape_cast %36 : vector<1x1x8x8x12xbf16> to vector<8x8x12xbf16>
    %c0_92 = arith.constant 0 : index
    %c0_93 = arith.constant 0 : index
    %c0_94 = arith.constant 0 : index
    %c1_95 = arith.constant 1 : index
    %c0_96 = arith.constant 0 : index
    %38 = vector.load %arg4[%c0_92, %c0_93, %c0_94, %c1_95, %c0_96] : memref<1x1x10x10x12xbf16, #tpu.memory_space<vmem>>, vector<1x1x8x8x12xbf16>
    %39 = vector.shape_cast %38 : vector<1x1x8x8x12xbf16> to vector<8x8x12xbf16>
    %c0_97 = arith.constant 0 : index
    %c0_98 = arith.constant 0 : index
    %c0_99 = arith.constant 0 : index
    %c2_100 = arith.constant 2 : index
    %c0_101 = arith.constant 0 : index
    %40 = vector.load %arg4[%c0_97, %c0_98, %c0_99, %c2_100, %c0_101] : memref<1x1x10x10x12xbf16, #tpu.memory_space<vmem>>, vector<1x1x8x8x12xbf16>
    %41 = vector.shape_cast %40 : vector<1x1x8x8x12xbf16> to vector<8x8x12xbf16>
    %c0_102 = arith.constant 0 : index
    %c0_103 = arith.constant 0 : index
    %c1_104 = arith.constant 1 : index
    %c0_105 = arith.constant 0 : index
    %c0_106 = arith.constant 0 : index
    %42 = vector.load %arg4[%c0_102, %c0_103, %c1_104, %c0_105, %c0_106] : memref<1x1x10x10x12xbf16, #tpu.memory_space<vmem>>, vector<1x1x8x8x12xbf16>
    %43 = vector.shape_cast %42 : vector<1x1x8x8x12xbf16> to vector<8x8x12xbf16>
    %c0_107 = arith.constant 0 : index
    %c0_108 = arith.constant 0 : index
    %c1_109 = arith.constant 1 : index
    %c1_110 = arith.constant 1 : index
    %c0_111 = arith.constant 0 : index
    %44 = vector.load %arg4[%c0_107, %c0_108, %c1_109, %c1_110, %c0_111] : memref<1x1x10x10x12xbf16, #tpu.memory_space<vmem>>, vector<1x1x8x8x12xbf16>
    %45 = vector.shape_cast %44 : vector<1x1x8x8x12xbf16> to vector<8x8x12xbf16>
    %c0_112 = arith.constant 0 : index
    %c0_113 = arith.constant 0 : index
    %c1_114 = arith.constant 1 : index
    %c2_115 = arith.constant 2 : index
    %c0_116 = arith.constant 0 : index
    %46 = vector.load %arg4[%c0_112, %c0_113, %c1_114, %c2_115, %c0_116] : memref<1x1x10x10x12xbf16, #tpu.memory_space<vmem>>, vector<1x1x8x8x12xbf16>
    %47 = vector.shape_cast %46 : vector<1x1x8x8x12xbf16> to vector<8x8x12xbf16>
    %c0_117 = arith.constant 0 : index
    %c0_118 = arith.constant 0 : index
    %c2_119 = arith.constant 2 : index
    %c0_120 = arith.constant 0 : index
    %c0_121 = arith.constant 0 : index
    %48 = vector.load %arg4[%c0_117, %c0_118, %c2_119, %c0_120, %c0_121] : memref<1x1x10x10x12xbf16, #tpu.memory_space<vmem>>, vector<1x1x8x8x12xbf16>
    %49 = vector.shape_cast %48 : vector<1x1x8x8x12xbf16> to vector<8x8x12xbf16>
    %c0_122 = arith.constant 0 : index
    %c0_123 = arith.constant 0 : index
    %c2_124 = arith.constant 2 : index
    %c1_125 = arith.constant 1 : index
    %c0_126 = arith.constant 0 : index
    %50 = vector.load %arg4[%c0_122, %c0_123, %c2_124, %c1_125, %c0_126] : memref<1x1x10x10x12xbf16, #tpu.memory_space<vmem>>, vector<1x1x8x8x12xbf16>
    %51 = vector.shape_cast %50 : vector<1x1x8x8x12xbf16> to vector<8x8x12xbf16>
    %c0_127 = arith.constant 0 : index
    %c0_128 = arith.constant 0 : index
    %c2_129 = arith.constant 2 : index
    %c2_130 = arith.constant 2 : index
    %c0_131 = arith.constant 0 : index
    %52 = vector.load %arg4[%c0_127, %c0_128, %c2_129, %c2_130, %c0_131] : memref<1x1x10x10x12xbf16, #tpu.memory_space<vmem>>, vector<1x1x8x8x12xbf16>
    %53 = vector.shape_cast %52 : vector<1x1x8x8x12xbf16> to vector<8x8x12xbf16>
    %54 = tpu.concatenate %1, %3, %5, %7, %9, %11, %13, %15, %17, %19, %21, %23, %25, %27, %29, %31 in 2 : vector<8x8x12xbf16>, vector<8x8x12xbf16>, vector<8x8x12xbf16>, vector<8x8x12xbf16>, vector<8x8x12xbf16>, vector<8x8x12xbf16>, vector<8x8x12xbf16>, vector<8x8x12xbf16>, vector<8x8x12xbf16>, vector<8x8x12xbf16>, vector<8x8x12xbf16>, vector<8x8x12xbf16>, vector<8x8x12xbf16>, vector<8x8x12xbf16>, vector<8x8x12xbf16>, vector<8x8x12xbf16> -> vector<8x8x192xbf16>
    %55 = tpu.concatenate %33, %35, %37, %39, %41, %43, %45, %47, %49, %51, %53 in 2 : vector<8x8x12xbf16>, vector<8x8x12xbf16>, vector<8x8x12xbf16>, vector<8x8x12xbf16>, vector<8x8x12xbf16>, vector<8x8x12xbf16>, vector<8x8x12xbf16>, vector<8x8x12xbf16>, vector<8x8x12xbf16>, vector<8x8x12xbf16>, vector<8x8x12xbf16> -> vector<8x8x132xbf16>
    %56 = tpu.concatenate %54, %55 in 2 : vector<8x8x192xbf16>, vector<8x8x132xbf16> -> vector<8x8x324xbf16>
    %57 = vector.shape_cast %56 : vector<8x8x324xbf16> to vector<64x324xbf16>
    %c0_132 = arith.constant 0 : index
    %c0_133 = arith.constant 0 : index
    %58 = vector.load %arg5[%c0_132, %c0_133] : memref<324x64xbf16, #tpu.memory_space<vmem>>, vector<324x64xbf16>
    %cst = arith.constant dense<0.000000e+00> : vector<64x64xf32>
    %59 = tpu.matmul %57, %58, %cst {dimension_numbers = #tpu.dot_dimension_numbers<[1], [0], [0], [1], [0, 0, 1, 1], [], []>} : vector<64x324xbf16>, vector<324x64xbf16>, vector<64x64xf32> -> vector<64x64xf32>
    %c0_134 = arith.constant 0 : index
    %c0_135 = arith.constant 0 : index
    %60 = vector.load %arg6[%c0_134, %c0_135] : memref<1x64xf32, #tpu.memory_space<vmem>>, vector<1x64xf32>
    %61 = vector.broadcast %60 : vector<1x64xf32> to vector<64x64xf32>
    %62 = arith.addf %59, %61 : vector<64x64xf32>
    %c0_136 = arith.constant 0 : index
    %c0_137 = arith.constant 0 : index
    %c0_138 = arith.constant 0 : index
    %c0_139 = arith.constant 0 : index
    %63 = vector.load %arg7[%c0_136, %c0_137, %c0_138, %c0_139] : memref<1x1x64x64xf32, #tpu.memory_space<vmem>>, vector<1x1x64x64xf32>
    %64 = vector.shape_cast %63 : vector<1x1x64x64xf32> to vector<64x64xf32>
    %65 = vector.shape_cast %62 : vector<64x64xf32> to vector<1x1x64x64xf32>
    tpu.vector_store %arg7[%c0_136, %c0_137, %c0_138, %c0_139], %65 {strides = array<i32>} : memref<1x1x64x64xf32, #tpu.memory_space<vmem>>, vector<1x1x64x64xf32>,
    %cst_140 = arith.constant dense<0.000000e+00> : vector<64xf32>
    %66 = vector.multi_reduction <add>, %62, %cst_140 [0] : vector<64x64xf32> to vector<64xf32>
    %67 = vector.shape_cast %66 : vector<64xf32> to vector<1x64xf32>
    %c0_141 = arith.constant 0 : index
    %c0_142 = arith.constant 0 : index
    %c0_143 = arith.constant 0 : index
    %c0_144 = arith.constant 0 : index
    %68 = vector.load %arg8[%c0_141, %c0_142, %c0_143, %c0_144] : memref<1x1x1x64xf32, #tpu.memory_space<vmem>>, vector<1x1x1x64xf32>
    %69 = vector.shape_cast %68 : vector<1x1x1x64xf32> to vector<1x64xf32>
    %70 = vector.shape_cast %67 : vector<1x64xf32> to vector<1x1x1x64xf32>
    tpu.vector_store %arg8[%c0_141, %c0_142, %c0_143, %c0_144], %70 {strides = array<i32>} : memref<1x1x1x64xf32, #tpu.memory_space<vmem>>, vector<1x1x1x64xf32>,
    %71 = arith.mulf %62, %62 : vector<64x64xf32>
    %cst_145 = arith.constant dense<0.000000e+00> : vector<64xf32>
    %72 = vector.multi_reduction <add>, %71, %cst_145 [0] : vector<64x64xf32> to vector<64xf32>
    %73 = vector.shape_cast %72 : vector<64xf32> to vector<1x64xf32>
    %c0_146 = arith.constant 0 : index
    %c0_147 = arith.constant 0 : index
    %c0_148 = arith.constant 0 : index
    %c0_149 = arith.constant 0 : index
    %74 = vector.load %arg9[%c0_146, %c0_147, %c0_148, %c0_149] : memref<1x1x1x64xf32, #tpu.memory_space<vmem>>, vector<1x1x1x64xf32>
    %75 = vector.shape_cast %74 : vector<1x1x1x64xf32> to vector<1x64xf32>
    %76 = vector.shape_cast %73 : vector<1x64xf32> to vector<1x1x1x64xf32>
    tpu.vector_store %arg9[%c0_146, %c0_147, %c0_148, %c0_149], %76 {strides = array<i32>} : memref<1x1x1x64xf32, #tpu.memory_space<vmem>>, vector<1x1x1x64xf32>,
    return
  }
  func.func @transform_0(%arg0: i32, %arg1: i32) -> (i32, i32, i32, i32, i32) {
    %c0_i32 = arith.constant 0 : i32
    %c0_i32_0 = arith.constant 0 : i32
    %c0_i32_1 = arith.constant 0 : i32
    %c0_i32_2 = arith.constant 0 : i32
    return %arg0, %arg1, %c0_i32, %c0_i32_0, %c0_i32_1 : i32, i32, i32, i32, i32
  }
  func.func @transform_1(%arg0: i32, %arg1: i32) -> (i32, i32, i32, i32, i32) {
    %c1_i32 = arith.constant 1 : i32
    %0 = arith.addi %arg1, %c1_i32 : i32
    %c0_i32 = arith.constant 0 : i32
    %c0_i32_0 = arith.constant 0 : i32
    %c0_i32_1 = arith.constant 0 : i32
    %c0_i32_2 = arith.constant 0 : i32
    return %arg0, %0, %c0_i32, %c0_i32_0, %c0_i32_1 : i32, i32, i32, i32, i32
  }
  func.func @transform_2(%arg0: i32, %arg1: i32) -> (i32, i32, i32, i32, i32) {
    %c2_i32 = arith.constant 2 : i32
    %0 = arith.addi %arg1, %c2_i32 : i32
    %c0_i32 = arith.constant 0 : i32
    %c0_i32_0 = arith.constant 0 : i32
    %c0_i32_1 = arith.constant 0 : i32
    %c0_i32_2 = arith.constant 0 : i32
    return %arg0, %0, %c0_i32, %c0_i32_0, %c0_i32_1 : i32, i32, i32, i32, i32
  }
  func.func @transform_3(%arg0: i32, %arg1: i32) -> (i32, i32) {
    %c0_i32 = arith.constant 0 : i32
    %c0_i32_0 = arith.constant 0 : i32
    %c0_i32_1 = arith.constant 0 : i32
    return %c0_i32, %c0_i32_0 : i32, i32
  }
  func.func @transform_4(%arg0: i32, %arg1: i32) -> (i32, i32) {
    %c0_i32 = arith.constant 0 : i32
    %c0_i32_0 = arith.constant 0 : i32
    %c0_i32_1 = arith.constant 0 : i32
    return %c0_i32, %c0_i32_0 : i32, i32
  }
  func.func @transform_5(%arg0: i32, %arg1: i32) -> (i32, i32, i32, i32) {
    %c0_i32 = arith.constant 0 : i32
    %c0_i32_0 = arith.constant 0 : i32
    %c0_i32_1 = arith.constant 0 : i32
    return %arg0, %arg1, %c0_i32, %c0_i32_0 : i32, i32, i32, i32
  }
  func.func @transform_6(%arg0: i32, %arg1: i32) -> (i32, i32, i32, i32) {
    %c0_i32 = arith.constant 0 : i32
    %c0_i32_0 = arith.constant 0 : i32
    %c0_i32_1 = arith.constant 0 : i32
    return %arg0, %arg1, %c0_i32, %c0_i32_0 : i32, i32, i32, i32
  }
  func.func @transform_7(%arg0: i32, %arg1: i32) -> (i32, i32, i32, i32) {
    %c0_i32 = arith.constant 0 : i32
    %c0_i32_0 = arith.constant 0 : i32
    %c0_i32_1 = arith.constant 0 : i32
    return %arg0, %arg1, %c0_i32, %c0_i32_0 : i32, i32, i32, i32
  }
}

module attributes {stable_mosaic.version = 11 : i64} {
  func.func @_bn_relu_kernel(%arg0: i32, %arg1: memref<1024x64xf32, #tpu.memory_space<vmem>>, %arg2: memref<1x64xf32, #tpu.memory_space<vmem>>, %arg3: memref<1x64xf32, #tpu.memory_space<vmem>>, %arg4: memref<1024x64xf32, #tpu.memory_space<vmem>>) attributes {dimension_semantics = [#tpu.dimension_semantics<parallel>], iteration_bounds = array<i64: 1>, scalar_prefetch = 0 : i64, scratch_operands = 0 : i64, tpu.core_type = #tpu.core_type<tc>, window_params = [{transform_indices = @transform_0, window_bounds = array<i64: 1024, 64>}, {pipeline_mode = #tpu.pipeline_mode<synchronous>, transform_indices = @transform_1, window_bounds = array<i64: 1, 64>}, {pipeline_mode = #tpu.pipeline_mode<synchronous>, transform_indices = @transform_2, window_bounds = array<i64: 1, 64>}, {transform_indices = @transform_3, window_bounds = array<i64: 1024, 64>}]} {
    %c0 = arith.constant 0 : index
    %c0_0 = arith.constant 0 : index
    %0 = vector.load %arg1[%c0, %c0_0] : memref<1024x64xf32, #tpu.memory_space<vmem>>, vector<1024x64xf32>
    %c0_1 = arith.constant 0 : index
    %c0_2 = arith.constant 0 : index
    %1 = vector.load %arg2[%c0_1, %c0_2] : memref<1x64xf32, #tpu.memory_space<vmem>>, vector<1x64xf32>
    %2 = vector.broadcast %1 : vector<1x64xf32> to vector<1024x64xf32>
    %3 = arith.mulf %0, %2 : vector<1024x64xf32>
    %c0_3 = arith.constant 0 : index
    %c0_4 = arith.constant 0 : index
    %4 = vector.load %arg3[%c0_3, %c0_4] : memref<1x64xf32, #tpu.memory_space<vmem>>, vector<1x64xf32>
    %5 = vector.broadcast %4 : vector<1x64xf32> to vector<1024x64xf32>
    %6 = arith.addf %3, %5 : vector<1024x64xf32>
    %cst = arith.constant 0.000000e+00 : f32
    %7 = vector.broadcast %cst : f32 to vector<1024x64xf32>
    %8 = arith.maximumf %6, %7 : vector<1024x64xf32>
    %c0_5 = arith.constant 0 : index
    %c0_6 = arith.constant 0 : index
    %9 = vector.load %arg4[%c0_5, %c0_6] : memref<1024x64xf32, #tpu.memory_space<vmem>>, vector<1024x64xf32>
    tpu.vector_store %arg4[%c0_5, %c0_6], %8 {strides = array<i32>} : memref<1024x64xf32, #tpu.memory_space<vmem>>, vector<1024x64xf32>,
    return
  }
  func.func @transform_0(%arg0: i32) -> (i32, i32) {
    %c0_i32 = arith.constant 0 : i32
    %c0_i32_0 = arith.constant 0 : i32
    return %arg0, %c0_i32 : i32, i32
  }
  func.func @transform_1(%arg0: i32) -> (i32, i32) {
    %c0_i32 = arith.constant 0 : i32
    %c0_i32_0 = arith.constant 0 : i32
    %c0_i32_1 = arith.constant 0 : i32
    return %c0_i32, %c0_i32_0 : i32, i32
  }
  func.func @transform_2(%arg0: i32) -> (i32, i32) {
    %c0_i32 = arith.constant 0 : i32
    %c0_i32_0 = arith.constant 0 : i32
    %c0_i32_1 = arith.constant 0 : i32
    return %c0_i32, %c0_i32_0 : i32, i32
  }
  func.func @transform_3(%arg0: i32) -> (i32, i32) {
    %c0_i32 = arith.constant 0 : i32
    %c0_i32_0 = arith.constant 0 : i32
    return %arg0, %c0_i32 : i32, i32
  }
}

module attributes {stable_mosaic.version = 11 : i64} {
  func.func @_conv3x3_stats_kernel(%arg0: i32, %arg1: i32, %arg2: memref<1x1x10x10x64xbf16, #tpu.memory_space<vmem>>, %arg3: memref<1x1x10x10x64xbf16, #tpu.memory_space<vmem>>, %arg4: memref<1x1x10x10x64xbf16, #tpu.memory_space<vmem>>, %arg5: memref<1728x64xbf16, #tpu.memory_space<vmem>>, %arg6: memref<1x64xf32, #tpu.memory_space<vmem>>, %arg7: memref<1x1x64x64xf32, #tpu.memory_space<vmem>>, %arg8: memref<1x1x1x64xf32, #tpu.memory_space<vmem>>, %arg9: memref<1x1x1x64xf32, #tpu.memory_space<vmem>>) attributes {dimension_semantics = [#tpu.dimension_semantics<parallel>, #tpu.dimension_semantics<parallel>], iteration_bounds = array<i64: 2, 8>, scalar_prefetch = 0 : i64, scratch_operands = 0 : i64, tpu.core_type = #tpu.core_type<tc>, window_params = [{transform_indices = @transform_0, window_bounds = array<i64: 1, 1, 10, 10, 64>}, {transform_indices = @transform_1, window_bounds = array<i64: 1, 1, 10, 10, 64>}, {transform_indices = @transform_2, window_bounds = array<i64: 1, 1, 10, 10, 64>}, {pipeline_mode = #tpu.pipeline_mode<synchronous>, transform_indices = @transform_3, window_bounds = array<i64: 1728, 64>}, {pipeline_mode = #tpu.pipeline_mode<synchronous>, transform_indices = @transform_4, window_bounds = array<i64: 1, 64>}, {transform_indices = @transform_5, window_bounds = array<i64: 1, 1, 64, 64>}, {transform_indices = @transform_6, window_bounds = array<i64: 1, 1, 1, 64>}, {transform_indices = @transform_7, window_bounds = array<i64: 1, 1, 1, 64>}]} {
    %c0 = arith.constant 0 : index
    %c0_0 = arith.constant 0 : index
    %c0_1 = arith.constant 0 : index
    %c0_2 = arith.constant 0 : index
    %c0_3 = arith.constant 0 : index
    %0 = vector.load %arg2[%c0, %c0_0, %c0_1, %c0_2, %c0_3] : memref<1x1x10x10x64xbf16, #tpu.memory_space<vmem>>, vector<1x1x8x8x64xbf16>
    %1 = vector.shape_cast %0 : vector<1x1x8x8x64xbf16> to vector<8x8x64xbf16>
    %c0_4 = arith.constant 0 : index
    %c0_5 = arith.constant 0 : index
    %c0_6 = arith.constant 0 : index
    %c1 = arith.constant 1 : index
    %c0_7 = arith.constant 0 : index
    %2 = vector.load %arg2[%c0_4, %c0_5, %c0_6, %c1, %c0_7] : memref<1x1x10x10x64xbf16, #tpu.memory_space<vmem>>, vector<1x1x8x8x64xbf16>
    %3 = vector.shape_cast %2 : vector<1x1x8x8x64xbf16> to vector<8x8x64xbf16>
    %c0_8 = arith.constant 0 : index
    %c0_9 = arith.constant 0 : index
    %c0_10 = arith.constant 0 : index
    %c2 = arith.constant 2 : index
    %c0_11 = arith.constant 0 : index
    %4 = vector.load %arg2[%c0_8, %c0_9, %c0_10, %c2, %c0_11] : memref<1x1x10x10x64xbf16, #tpu.memory_space<vmem>>, vector<1x1x8x8x64xbf16>
    %5 = vector.shape_cast %4 : vector<1x1x8x8x64xbf16> to vector<8x8x64xbf16>
    %c0_12 = arith.constant 0 : index
    %c0_13 = arith.constant 0 : index
    %c1_14 = arith.constant 1 : index
    %c0_15 = arith.constant 0 : index
    %c0_16 = arith.constant 0 : index
    %6 = vector.load %arg2[%c0_12, %c0_13, %c1_14, %c0_15, %c0_16] : memref<1x1x10x10x64xbf16, #tpu.memory_space<vmem>>, vector<1x1x8x8x64xbf16>
    %7 = vector.shape_cast %6 : vector<1x1x8x8x64xbf16> to vector<8x8x64xbf16>
    %c0_17 = arith.constant 0 : index
    %c0_18 = arith.constant 0 : index
    %c1_19 = arith.constant 1 : index
    %c1_20 = arith.constant 1 : index
    %c0_21 = arith.constant 0 : index
    %8 = vector.load %arg2[%c0_17, %c0_18, %c1_19, %c1_20, %c0_21] : memref<1x1x10x10x64xbf16, #tpu.memory_space<vmem>>, vector<1x1x8x8x64xbf16>
    %9 = vector.shape_cast %8 : vector<1x1x8x8x64xbf16> to vector<8x8x64xbf16>
    %c0_22 = arith.constant 0 : index
    %c0_23 = arith.constant 0 : index
    %c1_24 = arith.constant 1 : index
    %c2_25 = arith.constant 2 : index
    %c0_26 = arith.constant 0 : index
    %10 = vector.load %arg2[%c0_22, %c0_23, %c1_24, %c2_25, %c0_26] : memref<1x1x10x10x64xbf16, #tpu.memory_space<vmem>>, vector<1x1x8x8x64xbf16>
    %11 = vector.shape_cast %10 : vector<1x1x8x8x64xbf16> to vector<8x8x64xbf16>
    %c0_27 = arith.constant 0 : index
    %c0_28 = arith.constant 0 : index
    %c2_29 = arith.constant 2 : index
    %c0_30 = arith.constant 0 : index
    %c0_31 = arith.constant 0 : index
    %12 = vector.load %arg2[%c0_27, %c0_28, %c2_29, %c0_30, %c0_31] : memref<1x1x10x10x64xbf16, #tpu.memory_space<vmem>>, vector<1x1x8x8x64xbf16>
    %13 = vector.shape_cast %12 : vector<1x1x8x8x64xbf16> to vector<8x8x64xbf16>
    %c0_32 = arith.constant 0 : index
    %c0_33 = arith.constant 0 : index
    %c2_34 = arith.constant 2 : index
    %c1_35 = arith.constant 1 : index
    %c0_36 = arith.constant 0 : index
    %14 = vector.load %arg2[%c0_32, %c0_33, %c2_34, %c1_35, %c0_36] : memref<1x1x10x10x64xbf16, #tpu.memory_space<vmem>>, vector<1x1x8x8x64xbf16>
    %15 = vector.shape_cast %14 : vector<1x1x8x8x64xbf16> to vector<8x8x64xbf16>
    %c0_37 = arith.constant 0 : index
    %c0_38 = arith.constant 0 : index
    %c2_39 = arith.constant 2 : index
    %c2_40 = arith.constant 2 : index
    %c0_41 = arith.constant 0 : index
    %16 = vector.load %arg2[%c0_37, %c0_38, %c2_39, %c2_40, %c0_41] : memref<1x1x10x10x64xbf16, #tpu.memory_space<vmem>>, vector<1x1x8x8x64xbf16>
    %17 = vector.shape_cast %16 : vector<1x1x8x8x64xbf16> to vector<8x8x64xbf16>
    %c0_42 = arith.constant 0 : index
    %c0_43 = arith.constant 0 : index
    %c0_44 = arith.constant 0 : index
    %c0_45 = arith.constant 0 : index
    %c0_46 = arith.constant 0 : index
    %18 = vector.load %arg3[%c0_42, %c0_43, %c0_44, %c0_45, %c0_46] : memref<1x1x10x10x64xbf16, #tpu.memory_space<vmem>>, vector<1x1x8x8x64xbf16>
    %19 = vector.shape_cast %18 : vector<1x1x8x8x64xbf16> to vector<8x8x64xbf16>
    %c0_47 = arith.constant 0 : index
    %c0_48 = arith.constant 0 : index
    %c0_49 = arith.constant 0 : index
    %c1_50 = arith.constant 1 : index
    %c0_51 = arith.constant 0 : index
    %20 = vector.load %arg3[%c0_47, %c0_48, %c0_49, %c1_50, %c0_51] : memref<1x1x10x10x64xbf16, #tpu.memory_space<vmem>>, vector<1x1x8x8x64xbf16>
    %21 = vector.shape_cast %20 : vector<1x1x8x8x64xbf16> to vector<8x8x64xbf16>
    %c0_52 = arith.constant 0 : index
    %c0_53 = arith.constant 0 : index
    %c0_54 = arith.constant 0 : index
    %c2_55 = arith.constant 2 : index
    %c0_56 = arith.constant 0 : index
    %22 = vector.load %arg3[%c0_52, %c0_53, %c0_54, %c2_55, %c0_56] : memref<1x1x10x10x64xbf16, #tpu.memory_space<vmem>>, vector<1x1x8x8x64xbf16>
    %23 = vector.shape_cast %22 : vector<1x1x8x8x64xbf16> to vector<8x8x64xbf16>
    %c0_57 = arith.constant 0 : index
    %c0_58 = arith.constant 0 : index
    %c1_59 = arith.constant 1 : index
    %c0_60 = arith.constant 0 : index
    %c0_61 = arith.constant 0 : index
    %24 = vector.load %arg3[%c0_57, %c0_58, %c1_59, %c0_60, %c0_61] : memref<1x1x10x10x64xbf16, #tpu.memory_space<vmem>>, vector<1x1x8x8x64xbf16>
    %25 = vector.shape_cast %24 : vector<1x1x8x8x64xbf16> to vector<8x8x64xbf16>
    %c0_62 = arith.constant 0 : index
    %c0_63 = arith.constant 0 : index
    %c1_64 = arith.constant 1 : index
    %c1_65 = arith.constant 1 : index
    %c0_66 = arith.constant 0 : index
    %26 = vector.load %arg3[%c0_62, %c0_63, %c1_64, %c1_65, %c0_66] : memref<1x1x10x10x64xbf16, #tpu.memory_space<vmem>>, vector<1x1x8x8x64xbf16>
    %27 = vector.shape_cast %26 : vector<1x1x8x8x64xbf16> to vector<8x8x64xbf16>
    %c0_67 = arith.constant 0 : index
    %c0_68 = arith.constant 0 : index
    %c1_69 = arith.constant 1 : index
    %c2_70 = arith.constant 2 : index
    %c0_71 = arith.constant 0 : index
    %28 = vector.load %arg3[%c0_67, %c0_68, %c1_69, %c2_70, %c0_71] : memref<1x1x10x10x64xbf16, #tpu.memory_space<vmem>>, vector<1x1x8x8x64xbf16>
    %29 = vector.shape_cast %28 : vector<1x1x8x8x64xbf16> to vector<8x8x64xbf16>
    %c0_72 = arith.constant 0 : index
    %c0_73 = arith.constant 0 : index
    %c2_74 = arith.constant 2 : index
    %c0_75 = arith.constant 0 : index
    %c0_76 = arith.constant 0 : index
    %30 = vector.load %arg3[%c0_72, %c0_73, %c2_74, %c0_75, %c0_76] : memref<1x1x10x10x64xbf16, #tpu.memory_space<vmem>>, vector<1x1x8x8x64xbf16>
    %31 = vector.shape_cast %30 : vector<1x1x8x8x64xbf16> to vector<8x8x64xbf16>
    %c0_77 = arith.constant 0 : index
    %c0_78 = arith.constant 0 : index
    %c2_79 = arith.constant 2 : index
    %c1_80 = arith.constant 1 : index
    %c0_81 = arith.constant 0 : index
    %32 = vector.load %arg3[%c0_77, %c0_78, %c2_79, %c1_80, %c0_81] : memref<1x1x10x10x64xbf16, #tpu.memory_space<vmem>>, vector<1x1x8x8x64xbf16>
    %33 = vector.shape_cast %32 : vector<1x1x8x8x64xbf16> to vector<8x8x64xbf16>
    %c0_82 = arith.constant 0 : index
    %c0_83 = arith.constant 0 : index
    %c2_84 = arith.constant 2 : index
    %c2_85 = arith.constant 2 : index
    %c0_86 = arith.constant 0 : index
    %34 = vector.load %arg3[%c0_82, %c0_83, %c2_84, %c2_85, %c0_86] : memref<1x1x10x10x64xbf16, #tpu.memory_space<vmem>>, vector<1x1x8x8x64xbf16>
    %35 = vector.shape_cast %34 : vector<1x1x8x8x64xbf16> to vector<8x8x64xbf16>
    %c0_87 = arith.constant 0 : index
    %c0_88 = arith.constant 0 : index
    %c0_89 = arith.constant 0 : index
    %c0_90 = arith.constant 0 : index
    %c0_91 = arith.constant 0 : index
    %36 = vector.load %arg4[%c0_87, %c0_88, %c0_89, %c0_90, %c0_91] : memref<1x1x10x10x64xbf16, #tpu.memory_space<vmem>>, vector<1x1x8x8x64xbf16>
    %37 = vector.shape_cast %36 : vector<1x1x8x8x64xbf16> to vector<8x8x64xbf16>
    %c0_92 = arith.constant 0 : index
    %c0_93 = arith.constant 0 : index
    %c0_94 = arith.constant 0 : index
    %c1_95 = arith.constant 1 : index
    %c0_96 = arith.constant 0 : index
    %38 = vector.load %arg4[%c0_92, %c0_93, %c0_94, %c1_95, %c0_96] : memref<1x1x10x10x64xbf16, #tpu.memory_space<vmem>>, vector<1x1x8x8x64xbf16>
    %39 = vector.shape_cast %38 : vector<1x1x8x8x64xbf16> to vector<8x8x64xbf16>
    %c0_97 = arith.constant 0 : index
    %c0_98 = arith.constant 0 : index
    %c0_99 = arith.constant 0 : index
    %c2_100 = arith.constant 2 : index
    %c0_101 = arith.constant 0 : index
    %40 = vector.load %arg4[%c0_97, %c0_98, %c0_99, %c2_100, %c0_101] : memref<1x1x10x10x64xbf16, #tpu.memory_space<vmem>>, vector<1x1x8x8x64xbf16>
    %41 = vector.shape_cast %40 : vector<1x1x8x8x64xbf16> to vector<8x8x64xbf16>
    %c0_102 = arith.constant 0 : index
    %c0_103 = arith.constant 0 : index
    %c1_104 = arith.constant 1 : index
    %c0_105 = arith.constant 0 : index
    %c0_106 = arith.constant 0 : index
    %42 = vector.load %arg4[%c0_102, %c0_103, %c1_104, %c0_105, %c0_106] : memref<1x1x10x10x64xbf16, #tpu.memory_space<vmem>>, vector<1x1x8x8x64xbf16>
    %43 = vector.shape_cast %42 : vector<1x1x8x8x64xbf16> to vector<8x8x64xbf16>
    %c0_107 = arith.constant 0 : index
    %c0_108 = arith.constant 0 : index
    %c1_109 = arith.constant 1 : index
    %c1_110 = arith.constant 1 : index
    %c0_111 = arith.constant 0 : index
    %44 = vector.load %arg4[%c0_107, %c0_108, %c1_109, %c1_110, %c0_111] : memref<1x1x10x10x64xbf16, #tpu.memory_space<vmem>>, vector<1x1x8x8x64xbf16>
    %45 = vector.shape_cast %44 : vector<1x1x8x8x64xbf16> to vector<8x8x64xbf16>
    %c0_112 = arith.constant 0 : index
    %c0_113 = arith.constant 0 : index
    %c1_114 = arith.constant 1 : index
    %c2_115 = arith.constant 2 : index
    %c0_116 = arith.constant 0 : index
    %46 = vector.load %arg4[%c0_112, %c0_113, %c1_114, %c2_115, %c0_116] : memref<1x1x10x10x64xbf16, #tpu.memory_space<vmem>>, vector<1x1x8x8x64xbf16>
    %47 = vector.shape_cast %46 : vector<1x1x8x8x64xbf16> to vector<8x8x64xbf16>
    %c0_117 = arith.constant 0 : index
    %c0_118 = arith.constant 0 : index
    %c2_119 = arith.constant 2 : index
    %c0_120 = arith.constant 0 : index
    %c0_121 = arith.constant 0 : index
    %48 = vector.load %arg4[%c0_117, %c0_118, %c2_119, %c0_120, %c0_121] : memref<1x1x10x10x64xbf16, #tpu.memory_space<vmem>>, vector<1x1x8x8x64xbf16>
    %49 = vector.shape_cast %48 : vector<1x1x8x8x64xbf16> to vector<8x8x64xbf16>
    %c0_122 = arith.constant 0 : index
    %c0_123 = arith.constant 0 : index
    %c2_124 = arith.constant 2 : index
    %c1_125 = arith.constant 1 : index
    %c0_126 = arith.constant 0 : index
    %50 = vector.load %arg4[%c0_122, %c0_123, %c2_124, %c1_125, %c0_126] : memref<1x1x10x10x64xbf16, #tpu.memory_space<vmem>>, vector<1x1x8x8x64xbf16>
    %51 = vector.shape_cast %50 : vector<1x1x8x8x64xbf16> to vector<8x8x64xbf16>
    %c0_127 = arith.constant 0 : index
    %c0_128 = arith.constant 0 : index
    %c2_129 = arith.constant 2 : index
    %c2_130 = arith.constant 2 : index
    %c0_131 = arith.constant 0 : index
    %52 = vector.load %arg4[%c0_127, %c0_128, %c2_129, %c2_130, %c0_131] : memref<1x1x10x10x64xbf16, #tpu.memory_space<vmem>>, vector<1x1x8x8x64xbf16>
    %53 = vector.shape_cast %52 : vector<1x1x8x8x64xbf16> to vector<8x8x64xbf16>
    %54 = tpu.concatenate %1, %3, %5, %7, %9, %11, %13, %15, %17, %19, %21, %23, %25, %27, %29, %31 in 2 : vector<8x8x64xbf16>, vector<8x8x64xbf16>, vector<8x8x64xbf16>, vector<8x8x64xbf16>, vector<8x8x64xbf16>, vector<8x8x64xbf16>, vector<8x8x64xbf16>, vector<8x8x64xbf16>, vector<8x8x64xbf16>, vector<8x8x64xbf16>, vector<8x8x64xbf16>, vector<8x8x64xbf16>, vector<8x8x64xbf16>, vector<8x8x64xbf16>, vector<8x8x64xbf16>, vector<8x8x64xbf16> -> vector<8x8x1024xbf16>
    %55 = tpu.concatenate %33, %35, %37, %39, %41, %43, %45, %47, %49, %51, %53 in 2 : vector<8x8x64xbf16>, vector<8x8x64xbf16>, vector<8x8x64xbf16>, vector<8x8x64xbf16>, vector<8x8x64xbf16>, vector<8x8x64xbf16>, vector<8x8x64xbf16>, vector<8x8x64xbf16>, vector<8x8x64xbf16>, vector<8x8x64xbf16>, vector<8x8x64xbf16> -> vector<8x8x704xbf16>
    %56 = tpu.concatenate %54, %55 in 2 : vector<8x8x1024xbf16>, vector<8x8x704xbf16> -> vector<8x8x1728xbf16>
    %57 = vector.shape_cast %56 : vector<8x8x1728xbf16> to vector<64x1728xbf16>
    %c0_132 = arith.constant 0 : index
    %c0_133 = arith.constant 0 : index
    %58 = vector.load %arg5[%c0_132, %c0_133] : memref<1728x64xbf16, #tpu.memory_space<vmem>>, vector<1728x64xbf16>
    %cst = arith.constant dense<0.000000e+00> : vector<64x64xf32>
    %59 = tpu.matmul %57, %58, %cst {dimension_numbers = #tpu.dot_dimension_numbers<[1], [0], [0], [1], [0, 0, 1, 1], [], []>} : vector<64x1728xbf16>, vector<1728x64xbf16>, vector<64x64xf32> -> vector<64x64xf32>
    %c0_134 = arith.constant 0 : index
    %c0_135 = arith.constant 0 : index
    %60 = vector.load %arg6[%c0_134, %c0_135] : memref<1x64xf32, #tpu.memory_space<vmem>>, vector<1x64xf32>
    %61 = vector.broadcast %60 : vector<1x64xf32> to vector<64x64xf32>
    %62 = arith.addf %59, %61 : vector<64x64xf32>
    %c0_136 = arith.constant 0 : index
    %c0_137 = arith.constant 0 : index
    %c0_138 = arith.constant 0 : index
    %c0_139 = arith.constant 0 : index
    %63 = vector.load %arg7[%c0_136, %c0_137, %c0_138, %c0_139] : memref<1x1x64x64xf32, #tpu.memory_space<vmem>>, vector<1x1x64x64xf32>
    %64 = vector.shape_cast %63 : vector<1x1x64x64xf32> to vector<64x64xf32>
    %65 = vector.shape_cast %62 : vector<64x64xf32> to vector<1x1x64x64xf32>
    tpu.vector_store %arg7[%c0_136, %c0_137, %c0_138, %c0_139], %65 {strides = array<i32>} : memref<1x1x64x64xf32, #tpu.memory_space<vmem>>, vector<1x1x64x64xf32>,
    %cst_140 = arith.constant dense<0.000000e+00> : vector<64xf32>
    %66 = vector.multi_reduction <add>, %62, %cst_140 [0] : vector<64x64xf32> to vector<64xf32>
    %67 = vector.shape_cast %66 : vector<64xf32> to vector<1x64xf32>
    %c0_141 = arith.constant 0 : index
    %c0_142 = arith.constant 0 : index
    %c0_143 = arith.constant 0 : index
    %c0_144 = arith.constant 0 : index
    %68 = vector.load %arg8[%c0_141, %c0_142, %c0_143, %c0_144] : memref<1x1x1x64xf32, #tpu.memory_space<vmem>>, vector<1x1x1x64xf32>
    %69 = vector.shape_cast %68 : vector<1x1x1x64xf32> to vector<1x64xf32>
    %70 = vector.shape_cast %67 : vector<1x64xf32> to vector<1x1x1x64xf32>
    tpu.vector_store %arg8[%c0_141, %c0_142, %c0_143, %c0_144], %70 {strides = array<i32>} : memref<1x1x1x64xf32, #tpu.memory_space<vmem>>, vector<1x1x1x64xf32>,
    %71 = arith.mulf %62, %62 : vector<64x64xf32>
    %cst_145 = arith.constant dense<0.000000e+00> : vector<64xf32>
    %72 = vector.multi_reduction <add>, %71, %cst_145 [0] : vector<64x64xf32> to vector<64xf32>
    %73 = vector.shape_cast %72 : vector<64xf32> to vector<1x64xf32>
    %c0_146 = arith.constant 0 : index
    %c0_147 = arith.constant 0 : index
    %c0_148 = arith.constant 0 : index
    %c0_149 = arith.constant 0 : index
    %74 = vector.load %arg9[%c0_146, %c0_147, %c0_148, %c0_149] : memref<1x1x1x64xf32, #tpu.memory_space<vmem>>, vector<1x1x1x64xf32>
    %75 = vector.shape_cast %74 : vector<1x1x1x64xf32> to vector<1x64xf32>
    %76 = vector.shape_cast %73 : vector<1x64xf32> to vector<1x1x1x64xf32>
    tpu.vector_store %arg9[%c0_146, %c0_147, %c0_148, %c0_149], %76 {strides = array<i32>} : memref<1x1x1x64xf32, #tpu.memory_space<vmem>>, vector<1x1x1x64xf32>,
    return
  }
  func.func @transform_0(%arg0: i32, %arg1: i32) -> (i32, i32, i32, i32, i32) {
    %c0_i32 = arith.constant 0 : i32
    %c0_i32_0 = arith.constant 0 : i32
    %c0_i32_1 = arith.constant 0 : i32
    %c0_i32_2 = arith.constant 0 : i32
    return %arg0, %arg1, %c0_i32, %c0_i32_0, %c0_i32_1 : i32, i32, i32, i32, i32
  }
  func.func @transform_1(%arg0: i32, %arg1: i32) -> (i32, i32, i32, i32, i32) {
    %c1_i32 = arith.constant 1 : i32
    %0 = arith.addi %arg1, %c1_i32 : i32
    %c0_i32 = arith.constant 0 : i32
    %c0_i32_0 = arith.constant 0 : i32
    %c0_i32_1 = arith.constant 0 : i32
    %c0_i32_2 = arith.constant 0 : i32
    return %arg0, %0, %c0_i32, %c0_i32_0, %c0_i32_1 : i32, i32, i32, i32, i32
  }
  func.func @transform_2(%arg0: i32, %arg1: i32) -> (i32, i32, i32, i32, i32) {
    %c2_i32 = arith.constant 2 : i32
    %0 = arith.addi %arg1, %c2_i32 : i32
    %c0_i32 = arith.constant 0 : i32
    %c0_i32_0 = arith.constant 0 : i32
    %c0_i32_1 = arith.constant 0 : i32
    %c0_i32_2 = arith.constant 0 : i32
    return %arg0, %0, %c0_i32, %c0_i32_0, %c0_i32_1 : i32, i32, i32, i32, i32
  }
  func.func @transform_3(%arg0: i32, %arg1: i32) -> (i32, i32) {
    %c0_i32 = arith.constant 0 : i32
    %c0_i32_0 = arith.constant 0 : i32
    %c0_i32_1 = arith.constant 0 : i32
    return %c0_i32, %c0_i32_0 : i32, i32
  }
  func.func @transform_4(%arg0: i32, %arg1: i32) -> (i32, i32) {
    %c0_i32 = arith.constant 0 : i32
    %c0_i32_0 = arith.constant 0 : i32
    %c0_i32_1 = arith.constant 0 : i32
    return %c0_i32, %c0_i32_0 : i32, i32
  }
  func.func @transform_5(%arg0: i32, %arg1: i32) -> (i32, i32, i32, i32) {
    %c0_i32 = arith.constant 0 : i32
    %c0_i32_0 = arith.constant 0 : i32
    %c0_i32_1 = arith.constant 0 : i32
    return %arg0, %arg1, %c0_i32, %c0_i32_0 : i32, i32, i32, i32
  }
  func.func @transform_6(%arg0: i32, %arg1: i32) -> (i32, i32, i32, i32) {
    %c0_i32 = arith.constant 0 : i32
    %c0_i32_0 = arith.constant 0 : i32
    %c0_i32_1 = arith.constant 0 : i32
    return %arg0, %arg1, %c0_i32, %c0_i32_0 : i32, i32, i32, i32
  }
  func.func @transform_7(%arg0: i32, %arg1: i32) -> (i32, i32, i32, i32) {
    %c0_i32 = arith.constant 0 : i32
    %c0_i32_0 = arith.constant 0 : i32
    %c0_i32_1 = arith.constant 0 : i32
    return %arg0, %arg1, %c0_i32, %c0_i32_0 : i32, i32, i32, i32
  }
}

module attributes {stable_mosaic.version = 11 : i64} {
  func.func @_bn_relu_kernel(%arg0: i32, %arg1: memref<1024x64xf32, #tpu.memory_space<vmem>>, %arg2: memref<1x64xf32, #tpu.memory_space<vmem>>, %arg3: memref<1x64xf32, #tpu.memory_space<vmem>>, %arg4: memref<1024x64xf32, #tpu.memory_space<vmem>>) attributes {dimension_semantics = [#tpu.dimension_semantics<parallel>], iteration_bounds = array<i64: 1>, scalar_prefetch = 0 : i64, scratch_operands = 0 : i64, tpu.core_type = #tpu.core_type<tc>, window_params = [{transform_indices = @transform_0, window_bounds = array<i64: 1024, 64>}, {pipeline_mode = #tpu.pipeline_mode<synchronous>, transform_indices = @transform_1, window_bounds = array<i64: 1, 64>}, {pipeline_mode = #tpu.pipeline_mode<synchronous>, transform_indices = @transform_2, window_bounds = array<i64: 1, 64>}, {transform_indices = @transform_3, window_bounds = array<i64: 1024, 64>}]} {
    %c0 = arith.constant 0 : index
    %c0_0 = arith.constant 0 : index
    %0 = vector.load %arg1[%c0, %c0_0] : memref<1024x64xf32, #tpu.memory_space<vmem>>, vector<1024x64xf32>
    %c0_1 = arith.constant 0 : index
    %c0_2 = arith.constant 0 : index
    %1 = vector.load %arg2[%c0_1, %c0_2] : memref<1x64xf32, #tpu.memory_space<vmem>>, vector<1x64xf32>
    %2 = vector.broadcast %1 : vector<1x64xf32> to vector<1024x64xf32>
    %3 = arith.mulf %0, %2 : vector<1024x64xf32>
    %c0_3 = arith.constant 0 : index
    %c0_4 = arith.constant 0 : index
    %4 = vector.load %arg3[%c0_3, %c0_4] : memref<1x64xf32, #tpu.memory_space<vmem>>, vector<1x64xf32>
    %5 = vector.broadcast %4 : vector<1x64xf32> to vector<1024x64xf32>
    %6 = arith.addf %3, %5 : vector<1024x64xf32>
    %cst = arith.constant 0.000000e+00 : f32
    %7 = vector.broadcast %cst : f32 to vector<1024x64xf32>
    %8 = arith.maximumf %6, %7 : vector<1024x64xf32>
    %c0_5 = arith.constant 0 : index
    %c0_6 = arith.constant 0 : index
    %9 = vector.load %arg4[%c0_5, %c0_6] : memref<1024x64xf32, #tpu.memory_space<vmem>>, vector<1024x64xf32>
    tpu.vector_store %arg4[%c0_5, %c0_6], %8 {strides = array<i32>} : memref<1024x64xf32, #tpu.memory_space<vmem>>, vector<1024x64xf32>,
    return
  }
  func.func @transform_0(%arg0: i32) -> (i32, i32) {
    %c0_i32 = arith.constant 0 : i32
    %c0_i32_0 = arith.constant 0 : i32
    return %arg0, %c0_i32 : i32, i32
  }
  func.func @transform_1(%arg0: i32) -> (i32, i32) {
    %c0_i32 = arith.constant 0 : i32
    %c0_i32_0 = arith.constant 0 : i32
    %c0_i32_1 = arith.constant 0 : i32
    return %c0_i32, %c0_i32_0 : i32, i32
  }
  func.func @transform_2(%arg0: i32) -> (i32, i32) {
    %c0_i32 = arith.constant 0 : i32
    %c0_i32_0 = arith.constant 0 : i32
    %c0_i32_1 = arith.constant 0 : i32
    return %c0_i32, %c0_i32_0 : i32, i32
  }
  func.func @transform_3(%arg0: i32) -> (i32, i32) {
    %c0_i32 = arith.constant 0 : i32
    %c0_i32_0 = arith.constant 0 : i32
    return %arg0, %c0_i32 : i32, i32
  }
}

</mosaic_0001>

<llo_original>
// kernel: tile.12
$region0: #{tile.12}
  #allocation2 [shape = 's32[1]{0}', space=sflag, size = 0x4, scoped, tag = 'scoped memory for tile.12']
  %s0 = inlined_call_operand.hbm [shape: f32[8], index: 0, kind: input, shape index: {}]
  %s1 = inlined_call_operand.vmem [shape: f32[8,8], index: 1, kind: output, shape index: {}]
  $region1: #{tile.12} parent=0
    #allocation0 [shape = 'u8[512]{0}', space=vmem, size = 0x400, scoped, tag = 'operand span for operand 0']
    #allocation1 [shape = 's32[1]{0}', space=sflag, size = 0x4, scoped, tag = 'scoped memory for tile.12']
    %2 = vsyncpa [#allocation1], 0
    // Predicated region
    $region2: #{tile.12} parent=1 // pred_check
      _
    $region3: #{tile.12} parent=1 // pred_check_branch
      %4 = sbr.rel (0) target = $region5
    $region4: #{tile.12} parent=1 // pred_region
      %6 = vsyncadd [#allocation1], 0
      %s8 = sshll.u32 %s0, 4
      %s9 = int_to_ptr.hbm [resolvable:$true] %s8
      %s10 = sshll.u32 [#allocation0], 4
      %s11 = int_to_ptr.vmem [resolvable:$true] %s10
      %13 = dma.hbm_to_vmem [thread:$0]  %s9, 16, %s11, [#allocation1]
    $region5: #{tile.12} parent=1 // pred_fallthru
      _
    // Predicated region
    $region6: #{tile.12} parent=1 // pred_check
      _
    $region7: #{tile.12} parent=1 // pred_check_branch
      %15 = sbr.rel (0) target = $region9
    $region8: #{tile.12} parent=1 // pred_region
      %17 = dma.done [#allocation1], 16
    $region9: #{tile.12} parent=1 // pred_fallthru
      _
    %v18 = vld [vmem:[#allocation0] ss:$0 sm:$0xff]
    %19 = vst [vmem:[%s1] sm:$0xff] %v18
    %20 = vsyncpa [#allocation1], 1

// kernel: tile.15
$region0: #{tile.15}
  %s0 = inlined_call_operand.vmem [shape: f32[8,8], index: 0, kind: input, shape index: {}]
  %s1 = inlined_call_operand.vmem [shape: f32[64], index: 1, kind: output, shape index: {}]
  $region1: #{tile.15} parent=0
    #allocation0 [shape = 'u8[4096]{0}', space=vmem, size = 0x1000, scoped, tag = 'scoped mem for output reshape']
    %v2 = vld [vmem:[%s0] sm:$0x1]
    %vm3 = vcmask 64512
    %4 = vst.msk [vmem:[#allocation0] sm:$0x1] %vm3, %v2
    %s5 = scalar_lea.vmem %s0, 7
    %v6 = vld [vmem:[%s5] sm:$0x1]
    %7 = vrot.lane.b32.xlu0 %v6, 56
    %v8 = vpop.permute.xlu0 %7
    %vm9 = vcmask 523712
    %10 = vst.msk [vmem:[#allocation0] sm:$0x1] %vm9, %v8
    %s11 = scalar_lea.vmem %s0, 6
    %v12 = vld [vmem:[%s11] sm:$0x1]
    %13 = vrot.lane.b32.xlu0 %v12, 48
    %v14 = vpop.permute.xlu0 %13
    %vm15 = vcmask 458112
    %16 = vst.msk [vmem:[#allocation0] sm:$0x1] %vm15, %v14
    %s17 = scalar_lea.vmem %s0, 5
    %v18 = vld [vmem:[%s17] sm:$0x1]
    %19 = vrot.lane.b32.xlu0 %v18, 40
    %v20 = vpop.permute.xlu0 %19
    %vm21 = vcmask 392512
    %22 = vst.msk [vmem:[#allocation0] sm:$0x1] %vm21, %v20
    %s23 = scalar_lea.vmem %s0, 4
    %v24 = vld [vmem:[%s23] sm:$0x1]
    %25 = vrot.lane.b32.xlu0 %v24, 32
    %v26 = vpop.permute.xlu0 %25
    %vm27 = vcmask 326912
    %28 = vst.msk [vmem:[#allocation0] sm:$0x1] %vm27, %v26
    %s29 = scalar_lea.vmem %s0, 3
    %v30 = vld [vmem:[%s29] sm:$0x1]
    %31 = vrot.lane.b32.xlu0 %v30, 24
    %v32 = vpop.permute.xlu0 %31
    %vm33 = vcmask 261312
    %34 = vst.msk [vmem:[#allocation0] sm:$0x1] %vm33, %v32
    %s35 = scalar_lea.vmem %s0, 2
    %v36 = vld [vmem:[%s35] sm:$0x1]
    %37 = vrot.lane.b32.xlu0 %v36, 16
    %v38 = vpop.permute.xlu0 %37
    %vm39 = vcmask 195712
    %40 = vst.msk [vmem:[#allocation0] sm:$0x1] %vm39, %v38
    %s41 = scalar_lea.vmem %s0, 1
    %v42 = vld [vmem:[%s41] sm:$0x1]
    %43 = vrot.lane.b32.xlu0 %v42, 8
    %v44 = vpop.permute.xlu0 %43
    %vm45 = vcmask 130112
    %46 = vst.msk [vmem:[#allocation0] sm:$0x1] %vm45, %v44
    %s48 = ssub.s32 2, 1
    %v49 = vld [vmem:[#allocation0] sm:%s48]
    %s51 = ssub.s32 2, 1
    %52 = vst [vmem:[%s1] sm:%s51] %v49

// kernel: tile.16
$region0: #{tile.16}
  #allocation0 [shape = 's32[1]{0}', space=sflag, size = 0x4, scoped, tag = 'scoped memory for tile.16']
  %s0 = inlined_call_operand.vmem [shape: f32[64], index: 0, kind: input, shape index: {}]
  %s1 = inlined_call_operand.vmem [shape: f32[2,64], index: 1, kind: output, shape index: {}]
  // Predicated region
  $region2: #{tile.16} parent=0 // pred_check
    _
  $region3: #{tile.16} parent=0 // pred_check_branch
    %3 = sbr.rel (0) target = $region5
  $region4: #{tile.16} parent=0 // pred_region
    _
  $region5: #{tile.16} parent=0 // pred_fallthru
    _
  %v4 = vld [vmem:[%s0] ss:$0 sm:$0xff]
  %5 = vst [vmem:[%s1] sm:$0x3] %v4

// kernel: tile.17
$region0: #{tile.17}
  %s0 = inlined_call_operand.vmem [shape: f32[2,64], index: 0, kind: input, shape index: {}]
  %s1 = inlined_call_operand.vmem [shape: f32[1,128], index: 1, kind: output, shape index: {}]
  $region1: #{tile.17} parent=0
    #allocation0 [shape = 'u8[4096]{0}', space=vmem, size = 0x1000, scoped, tag = 'scoped mem for output reshape']
    #allocation1 [shape = 'u8[4096]{0}', space=vmem, size = 0x1000, scoped, tag = 'scoped mem for input reshape']
    %s3 = ssub.s32 4, 1
    %v4 = vld [vmem:[%s0] sm:%s3]
    %5 = vst [vmem:[#allocation1] sm:%s3] %v4
    %v6 = vld [vmem:[#allocation1] sm:$0x1]
    %vm7 = vcmask 523264
    %8 = vst.msk [vmem:[#allocation0] sm:$0x1] %vm7, %v6
    %s9 = scalar_lea.vmem [#allocation1], 1
    %v10 = vld [vmem:[%s9] sm:$0x1]
    %11 = vrot.lane.b32.xlu0 %v10, 64
    %v12 = vpop.permute.xlu0 %11
    %vm13 = vcmask 1048064
    %14 = vst.msk [vmem:[#allocation0] sm:$0x1] %vm13, %v12
    %s16 = ssub.s32 2, 1
    %v17 = vld [vmem:[#allocation0] sm:%s16]
    %s19 = ssub.s32 2, 1
    %20 = vst [vmem:[%s1] sm:%s19] %v17

// kernel: up_transition.5
$region0: #{up_transition.5}
  #allocation0 [shape = 'u32[]', space=smem, size = 0x4, offset = 0x4, fixed_abs, tag = 'smem constant byte address 0x4 - core index']
  #allocation1 [shape = 'u32[72,128]{1,0:T(1,128)}', space=vmem, size = 0x9000, scoped, tag = 'internal scratch']
  %s0 = inlined_call_operand.vmem [shape: bf16[64,16], index: 0, kind: input, shape index: {}]
  %s1 = inlined_call_operand.vmem [shape: bf16[16,128], index: 1, kind: input, shape index: {}]
  %s2 = inlined_call_operand.vmem [shape: f32[1,128], index: 2, kind: input, shape index: {}]
  %s3 = inlined_call_operand.vmem [shape: f32[64,128], index: 3, kind: output, shape index: {}]
  %s4 = sld [smem:[#allocation0]]
  $region22: #{up_transition.5} parent=0
    _
  %s6 = ssub.s32 1, %s4
  %s7 = scalar_select 0, %s6, %s4
  // Predicated region
  $region2: #{up_transition.5} parent=0 // pred_check
    _
  $region3: #{up_transition.5} parent=0 // pred_check_branch
    %9 = sbr.rel (0) target = $region5
  $region4: #{up_transition.5} parent=0 // pred_region
    _
  $region5: #{up_transition.5} parent=0 // pred_fallthru
    _
  // Predicated region
  $region6: #{up_transition.5} parent=0 // pred_check
    _
  $region7: #{up_transition.5} parent=0 // pred_check_branch
    %11 = sbr.rel (0) target = $region9
  $region8: #{up_transition.5} parent=0 // pred_region
    _
  $region9: #{up_transition.5} parent=0 // pred_fallthru
    _
  // Predicated region
  $region10: #{up_transition.5} parent=0 // pred_check
    _
  $region11: #{up_transition.5} parent=0 // pred_check_branch
    %13 = sbr.rel (0) target = $region13
  $region12: #{up_transition.5} parent=0 // pred_region
    _
  $region13: #{up_transition.5} parent=0 // pred_fallthru
    _
  %v15 = vld [vmem:[%s0] sm:$0xf]
  %v16 = vld [vmem:[%s0 + $0x4] sm:$0xf]
  %v17 = vld [vmem:[%s0 + $0x8] sm:$0xf]
  %v18 = vld [vmem:[%s0 + $0xc] sm:$0xf]
  %v19 = vld [vmem:[%s0 + $0x10] sm:$0xf]
  %v20 = vld [vmem:[%s0 + $0x14] sm:$0xf]
  %v21 = vld [vmem:[%s0 + $0x18] sm:$0xf]
  %v22 = vld [vmem:[%s0 + $0x1c] sm:$0xf]
  %v23 = vld [vmem:[%s1] sm:$0xf]
  %v24 = vld [vmem:[%s1 + $0x4] sm:$0xf]
  %v25 = vld [vmem:[%s2] sm:$0x1]
  %v27 = vperm.slane %v25, 0
  %v37 = vunpack.c.l.b16 %v15
  %v38 = vunpack.c.l.b16 %v16
  %v39 = vunpack.c.l.b16 %v17
  %v40 = vunpack.c.l.b16 %v18
  %v41 = vunpack.c.l.b16 %v19
  %v42 = vunpack.c.l.b16 %v20
  %v43 = vunpack.c.l.b16 %v21
  %v44 = vunpack.c.l.b16 %v22
  %v45 = vpack.c.b16 %v38, %v37
  %v46 = vpack.c.b16 %v40, %v39
  %v47 = vpack.c.b16 %v42, %v41
  %v48 = vpack.c.b16 %v44, %v43
  %v51 = vunpack.c.l.b16 %v23
  %v52 = vunpack.c.l.b16 %v24
  %v53 = vpack.c.b16 %v52, %v51
  %vm55 = vcmask 130048
  %v57 = vsel %vm55, %v45, 0
  %v60 = vsel %vm55, %v46, 0
  %v63 = vsel %vm55, %v47, 0
  %v66 = vsel %vm55, %v48, 0
  %68 = vmatpush.bf16.msra.mxu0 0
  %69 = vmatpush.bf16.msra.mxu0 0
  %70 = vmatpush.bf16.msra.mxu0 0
  %71 = vmatpush.bf16.msra.mxu0 0
  %72 = vmatpush.bf16.msra.mxu0 0
  %73 = vmatpush.bf16.msra.mxu0 0
  %74 = vmatpush.bf16.msra.mxu0 0
  %75 = vmatpush.bf16.msra.mxu0 %v53
  %76 = vmatmul.bf16.gmra.mxu0 %v57
  %v77 = vpop.f32.mrf.mxu0
  %v78 = vadd.f32 %v27, %v77
  %v79 = vpop.f32.mrf.mxu0
  %v80 = vadd.f32 %v27, %v79
  %81 = vmatmul.bf16.gmra.mxu0 %v60
  %v82 = vpop.f32.mrf.mxu0
  %v83 = vadd.f32 %v27, %v82
  %v84 = vpop.f32.mrf.mxu0
  %v85 = vadd.f32 %v27, %v84
  %86 = vmatmul.bf16.gmra.mxu0 %v63
  %v87 = vpop.f32.mrf.mxu0
  %v88 = vadd.f32 %v27, %v87
  %v89 = vpop.f32.mrf.mxu0
  %v90 = vadd.f32 %v27, %v89
  %91 = vmatmul.bf16.gmra.mxu0 %v66
  %v92 = vpop.f32.mrf.mxu0
  %v93 = vadd.f32 %v27, %v92
  %v94 = vpop.f32.mrf.mxu0
  %v95 = vadd.f32 %v27, %v94
  %96 = vdwg.mxu0
  %97 = vst [vmem:[%s3] sm:$0xff] %v78
  %98 = vst [vmem:[%s3 + $0x8] sm:$0xff] %v80
  %99 = vst [vmem:[%s3 + $0x10] sm:$0xff] %v83
  %100 = vst [vmem:[%s3 + $0x18] sm:$0xff] %v85
  %101 = vst [vmem:[%s3 + $0x20] sm:$0xff] %v88
  %102 = vst [vmem:[%s3 + $0x28] sm:$0xff] %v90
  %103 = vst [vmem:[%s3 + $0x30] sm:$0xff] %v93
  %104 = vst [vmem:[%s3 + $0x38] sm:$0xff] %v95
  // Predicated region
  $region14: #{up_transition.5} parent=0 // pred_check
    _
  $region15: #{up_transition.5} parent=0 // pred_check_branch
    %106 = sbr.rel (0) target = $region17
  $region16: #{up_transition.5} parent=0 // pred_region
    _
  $region17: #{up_transition.5} parent=0 // pred_fallthru
    _
  // Predicated region
  $region18: #{up_transition.5} parent=0 // pred_check
    _
  $region19: #{up_transition.5} parent=0 // pred_check_branch
    %108 = sbr.rel (0) target = $region21
  $region20: #{up_transition.5} parent=0 // pred_region
    _
  $region21: #{up_transition.5} parent=0 // pred_fallthru
    _

// kernel: up_transition.7
$region0: #{up_transition.7}
  #allocation0 [shape = 'u32[]', space=smem, size = 0x4, offset = 0x4, fixed_abs, tag = 'smem constant byte address 0x4 - core index']
  #allocation1 [shape = 'u32[72,128]{1,0:T(1,128)}', space=vmem, size = 0x9000, scoped, tag = 'internal scratch']
  %s0 = inlined_call_operand.vmem [shape: f32[1024,64], index: 0, kind: input, shape index: {}]
  %s1 = inlined_call_operand.vmem [shape: f32[1,64], index: 1, kind: input, shape index: {}]
  %s2 = inlined_call_operand.vmem [shape: f32[1,64], index: 2, kind: input, shape index: {}]
  %s3 = inlined_call_operand.vmem [shape: f32[1024,64], index: 3, kind: output, shape index: {}]
  %s4 = sld [smem:[#allocation0]]
  $region22: #{up_transition.7} parent=0
    _
  %s6 = ssub.s32 1, %s4
  %s7 = scalar_select 0, %s6, %s4
  // Predicated region
  $region2: #{up_transition.7} parent=0 // pred_check
    _
  $region3: #{up_transition.7} parent=0 // pred_check_branch
    %9 = sbr.rel (0) target = $region5
  $region4: #{up_transition.7} parent=0 // pred_region
    _
  $region5: #{up_transition.7} parent=0 // pred_fallthru
    _
  // Predicated region
  $region6: #{up_transition.7} parent=0 // pred_check
    _
  $region7: #{up_transition.7} parent=0 // pred_check_branch
    %11 = sbr.rel (0) target = $region9
  $region8: #{up_transition.7} parent=0 // pred_region
    _
  $region9: #{up_transition.7} parent=0 // pred_fallthru
    _
  // Predicated region
  $region10: #{up_transition.7} parent=0 // pred_check
    _
  $region11: #{up_transition.7} parent=0 // pred_check_branch
    %13 = sbr.rel (0) target = $region13
  $region12: #{up_transition.7} parent=0 // pred_region
    _
  $region13: #{up_transition.7} parent=0 // pred_fallthru
    _
  %v14 = vld [vmem:[%s0] sm:$0xff]
  %v15 = vld [vmem:[%s0 + $0x8] sm:$0xff]
  %v16 = vld [vmem:[%s0 + $0x10] sm:$0xff]
  %v17 = vld [vmem:[%s0 + $0x18] sm:$0xff]
  %v18 = vld [vmem:[%s0 + $0x20] sm:$0xff]
  %v19 = vld [vmem:[%s0 + $0x28] sm:$0xff]
  %v20 = vld [vmem:[%s0 + $0x30] sm:$0xff]
  %v21 = vld [vmem:[%s0 + $0x38] sm:$0xff]
  %v22 = vld [vmem:[%s0 + $0x40] sm:$0xff]
  %v23 = vld [vmem:[%s0 + $0x48] sm:$0xff]
  %v24 = vld [vmem:[%s0 + $0x50] sm:$0xff]
  %v25 = vld [vmem:[%s0 + $0x58] sm:$0xff]
  %v26 = vld [vmem:[%s0 + $0x60] sm:$0xff]
  %v27 = vld [vmem:[%s0 + $0x68] sm:$0xff]
  %v28 = vld [vmem:[%s0 + $0x70] sm:$0xff]
  %v29 = vld [vmem:[%s0 + $0x78] sm:$0xff]
  %v30 = vld [vmem:[%s0 + $0x80] sm:$0xff]
  %v31 = vld [vmem:[%s0 + $0x88] sm:$0xff]
  %v32 = vld [vmem:[%s0 + $0x90] sm:$0xff]
  %v33 = vld [vmem:[%s0 + $0x98] sm:$0xff]
  %v34 = vld [vmem:[%s0 + $0xa0] sm:$0xff]
  %v35 = vld [vmem:[%s0 + $0xa8] sm:$0xff]
  %v36 = vld [vmem:[%s0 + $0xb0] sm:$0xff]
  %v37 = vld [vmem:[%s0 + $0xb8] sm:$0xff]
  %v38 = vld [vmem:[%s0 + $0xc0] sm:$0xff]
  %v39 = vld [vmem:[%s0 + $0xc8] sm:$0xff]
  %v40 = vld [vmem:[%s0 + $0xd0] sm:$0xff]
  %v41 = vld [vmem:[%s0 + $0xd8] sm:$0xff]
  %v42 = vld [vmem:[%s0 + $0xe0] sm:$0xff]
  %v43 = vld [vmem:[%s0 + $0xe8] sm:$0xff]
  %v44 = vld [vmem:[%s0 + $0xf0] sm:$0xff]
  %v45 = vld [vmem:[%s0 + $0xf8] sm:$0xff]
  %v46 = vld [vmem:[%s0 + $0x100] sm:$0xff]
  %v47 = vld [vmem:[%s0 + $0x108] sm:$0xff]
  %v48 = vld [vmem:[%s0 + $0x110] sm:$0xff]
  %v49 = vld [vmem:[%s0 + $0x118] sm:$0xff]
  %v50 = vld [vmem:[%s0 + $0x120] sm:$0xff]
  %v51 = vld [vmem:[%s0 + $0x128] sm:$0xff]
  %v52 = vld [vmem:[%s0 + $0x130] sm:$0xff]
  %v53 = vld [vmem:[%s0 + $0x138] sm:$0xff]
  %v54 = vld [vmem:[%s0 + $0x140] sm:$0xff]
  %v55 = vld [vmem:[%s0 + $0x148] sm:$0xff]
  %v56 = vld [vmem:[%s0 + $0x150] sm:$0xff]
  %v57 = vld [vmem:[%s0 + $0x158] sm:$0xff]
  %v58 = vld [vmem:[%s0 + $0x160] sm:$0xff]
  %v59 = vld [vmem:[%s0 + $0x168] sm:$0xff]
  %v60 = vld [vmem:[%s0 + $0x170] sm:$0xff]
  %v61 = vld [vmem:[%s0 + $0x178] sm:$0xff]
  %v62 = vld [vmem:[%s0 + $0x180] sm:$0xff]
  %v63 = vld [vmem:[%s0 + $0x188] sm:$0xff]
  %v64 = vld [vmem:[%s0 + $0x190] sm:$0xff]
  %v65 = vld [vmem:[%s0 + $0x198] sm:$0xff]
  %v66 = vld [vmem:[%s0 + $0x1a0] sm:$0xff]
  %v67 = vld [vmem:[%s0 + $0x1a8] sm:$0xff]
  %v68 = vld [vmem:[%s0 + $0x1b0] sm:$0xff]
  %v69 = vld [vmem:[%s0 + $0x1b8] sm:$0xff]
  %v70 = vld [vmem:[%s0 + $0x1c0] sm:$0xff]
  %v71 = vld [vmem:[%s0 + $0x1c8] sm:$0xff]
  %v72 = vld [vmem:[%s0 + $0x1d0] sm:$0xff]
  %v73 = vld [vmem:[%s0 + $0x1d8] sm:$0xff]
  %v74 = vld [vmem:[%s0 + $0x1e0] sm:$0xff]
  %v75 = vld [vmem:[%s0 + $0x1e8] sm:$0xff]
  %v76 = vld [vmem:[%s0 + $0x1f0] sm:$0xff]
  %v77 = vld [vmem:[%s0 + $0x1f8] sm:$0xff]
  %v78 = vld [vmem:[%s0 + $0x200] sm:$0xff]
  %v79 = vld [vmem:[%s0 + $0x208] sm:$0xff]
  %v80 = vld [vmem:[%s0 + $0x210] sm:$0xff]
  %v81 = vld [vmem:[%s0 + $0x218] sm:$0xff]
  %v82 = vld [vmem:[%s0 + $0x220] sm:$0xff]
  %v83 = vld [vmem:[%s0 + $0x228] sm:$0xff]
  %v84 = vld [vmem:[%s0 + $0x230] sm:$0xff]
  %v85 = vld [vmem:[%s0 + $0x238] sm:$0xff]
  %v86 = vld [vmem:[%s0 + $0x240] sm:$0xff]
  %v87 = vld [vmem:[%s0 + $0x248] sm:$0xff]
  %v88 = vld [vmem:[%s0 + $0x250] sm:$0xff]
  %v89 = vld [vmem:[%s0 + $0x258] sm:$0xff]
  %v90 = vld [vmem:[%s0 + $0x260] sm:$0xff]
  %v91 = vld [vmem:[%s0 + $0x268] sm:$0xff]
  %v92 = vld [vmem:[%s0 + $0x270] sm:$0xff]
  %v93 = vld [vmem:[%s0 + $0x278] sm:$0xff]
  %v94 = vld [vmem:[%s0 + $0x280] sm:$0xff]
  %v95 = vld [vmem:[%s0 + $0x288] sm:$0xff]
  %v96 = vld [vmem:[%s0 + $0x290] sm:$0xff]
  %v97 = vld [vmem:[%s0 + $0x298] sm:$0xff]
  %v98 = vld [vmem:[%s0 + $0x2a0] sm:$0xff]
  %v99 = vld [vmem:[%s0 + $0x2a8] sm:$0xff]
  %v100 = vld [vmem:[%s0 + $0x2b0] sm:$0xff]
  %v101 = vld [vmem:[%s0 + $0x2b8] sm:$0xff]
  %v102 = vld [vmem:[%s0 + $0x2c0] sm:$0xff]
  %v103 = vld [vmem:[%s0 + $0x2c8] sm:$0xff]
  %v104 = vld [vmem:[%s0 + $0x2d0] sm:$0xff]
  %v105 = vld [vmem:[%s0 + $0x2d8] sm:$0xff]
  %v106 = vld [vmem:[%s0 + $0x2e0] sm:$0xff]
  %v107 = vld [vmem:[%s0 + $0x2e8] sm:$0xff]
  %v108 = vld [vmem:[%s0 + $0x2f0] sm:$0xff]
  %v109 = vld [vmem:[%s0 + $0x2f8] sm:$0xff]
  %v110 = vld [vmem:[%s0 + $0x300] sm:$0xff]
  %v111 = vld [vmem:[%s0 + $0x308] sm:$0xff]
  %v112 = vld [vmem:[%s0 + $0x310] sm:$0xff]
  %v113 = vld [vmem:[%s0 + $0x318] sm:$0xff]
  %v114 = vld [vmem:[%s0 + $0x320] sm:$0xff]
  %v115 = vld [vmem:[%s0 + $0x328] sm:$0xff]
  %v116 = vld [vmem:[%s0 + $0x330] sm:$0xff]
  %v117 = vld [vmem:[%s0 + $0x338] sm:$0xff]
  %v118 = vld [vmem:[%s0 + $0x340] sm:$0xff]
  %v119 = vld [vmem:[%s0 + $0x348] sm:$0xff]
  %v120 = vld [vmem:[%s0 + $0x350] sm:$0xff]
  %v121 = vld [vmem:[%s0 + $0x358] sm:$0xff]
  %v122 = vld [vmem:[%s0 + $0x360] sm:$0xff]
  %v123 = vld [vmem:[%s0 + $0x368] sm:$0xff]
  %v124 = vld [vmem:[%s0 + $0x370] sm:$0xff]
  %v125 = vld [vmem:[%s0 + $0x378] sm:$0xff]
  %v126 = vld [vmem:[%s0 + $0x380] sm:$0xff]
  %v127 = vld [vmem:[%s0 + $0x388] sm:$0xff]
  %v128 = vld [vmem:[%s0 + $0x390] sm:$0xff]
  %v129 = vld [vmem:[%s0 + $0x398] sm:$0xff]
  %v130 = vld [vmem:[%s0 + $0x3a0] sm:$0xff]
  %v131 = vld [vmem:[%s0 + $0x3a8] sm:$0xff]
  %v132 = vld [vmem:[%s0 + $0x3b0] sm:$0xff]
  %v133 = vld [vmem:[%s0 + $0x3b8] sm:$0xff]
  %v134 = vld [vmem:[%s0 + $0x3c0] sm:$0xff]
  %v135 = vld [vmem:[%s0 + $0x3c8] sm:$0xff]
  %v136 = vld [vmem:[%s0 + $0x3d0] sm:$0xff]
  %v137 = vld [vmem:[%s0 + $0x3d8] sm:$0xff]
  %v138 = vld [vmem:[%s0 + $0x3e0] sm:$0xff]
  %v139 = vld [vmem:[%s0 + $0x3e8] sm:$0xff]
  %v140 = vld [vmem:[%s0 + $0x3f0] sm:$0xff]
  %v141 = vld [vmem:[%s0 + $0x3f8] sm:$0xff]
  %v142 = vld [vmem:[%s1] sm:$0x1]
  %v144 = vperm.slane %v142, 0
  %v146 = vmul.f32 %v14, %v144
  %v147 = vmul.f32 %v15, %v144
  %v148 = vmul.f32 %v16, %v144
  %v149 = vmul.f32 %v17, %v144
  %v150 = vmul.f32 %v18, %v144
  %v151 = vmul.f32 %v19, %v144
  %v152 = vmul.f32 %v20, %v144
  %v153 = vmul.f32 %v21, %v144
  %v154 = vmul.f32 %v22, %v144
  %v155 = vmul.f32 %v23, %v144
  %v156 = vmul.f32 %v24, %v144
  %v157 = vmul.f32 %v25, %v144
  %v158 = vmul.f32 %v26, %v144
  %v159 = vmul.f32 %v27, %v144
  %v160 = vmul.f32 %v28, %v144
  %v161 = vmul.f32 %v29, %v144
  %v162 = vmul.f32 %v30, %v144
  %v163 = vmul.f32 %v31, %v144
  %v164 = vmul.f32 %v32, %v144
  %v165 = vmul.f32 %v33, %v144
  %v166 = vmul.f32 %v34, %v144
  %v167 = vmul.f32 %v35, %v144
  %v168 = vmul.f32 %v36, %v144
  %v169 = vmul.f32 %v37, %v144
  %v170 = vmul.f32 %v38, %v144
  %v171 = vmul.f32 %v39, %v144
  %v172 = vmul.f32 %v40, %v144
  %v173 = vmul.f32 %v41, %v144
  %v174 = vmul.f32 %v42, %v144
  %v175 = vmul.f32 %v43, %v144
  %v176 = vmul.f32 %v44, %v144
  %v177 = vmul.f32 %v45, %v144
  %v178 = vmul.f32 %v46, %v144
  %v179 = vmul.f32 %v47, %v144
  %v180 = vmul.f32 %v48, %v144
  %v181 = vmul.f32 %v49, %v144
  %v182 = vmul.f32 %v50, %v144
  %v183 = vmul.f32 %v51, %v144
  %v184 = vmul.f32 %v52, %v144
  %v185 = vmul.f32 %v53, %v144
  %v186 = vmul.f32 %v54, %v144
  %v187 = vmul.f32 %v55, %v144
  %v188 = vmul.f32 %v56, %v144
  %v189 = vmul.f32 %v57, %v144
  %v190 = vmul.f32 %v58, %v144
  %v191 = vmul.f32 %v59, %v144
  %v192 = vmul.f32 %v60, %v144
  %v193 = vmul.f32 %v61, %v144
  %v194 = vmul.f32 %v62, %v144
  %v195 = vmul.f32 %v63, %v144
  %v196 = vmul.f32 %v64, %v144
  %v197 = vmul.f32 %v65, %v144
  %v198 = vmul.f32 %v66, %v144
  %v199 = vmul.f32 %v67, %v144
  %v200 = vmul.f32 %v68, %v144
  %v201 = vmul.f32 %v69, %v144
  %v202 = vmul.f32 %v70, %v144
  %v203 = vmul.f32 %v71, %v144
  %v204 = vmul.f32 %v72, %v144
  %v205 = vmul.f32 %v73, %v144
  %v206 = vmul.f32 %v74, %v144
  %v207 = vmul.f32 %v75, %v144
  %v208 = vmul.f32 %v76, %v144
  %v209 = vmul.f32 %v77, %v144
  %v210 = vmul.f32 %v78, %v144
  %v211 = vmul.f32 %v79, %v144
  %v212 = vmul.f32 %v80, %v144
  %v213 = vmul.f32 %v81, %v144
  %v214 = vmul.f32 %v82, %v144
  %v215 = vmul.f32 %v83, %v144
  %v216 = vmul.f32 %v84, %v144
  %v217 = vmul.f32 %v85, %v144
  %v218 = vmul.f32 %v86, %v144
  %v219 = vmul.f32 %v87, %v144
  %v220 = vmul.f32 %v88, %v144
  %v221 = vmul.f32 %v89, %v144
  %v222 = vmul.f32 %v90, %v144
  %v223 = vmul.f32 %v91, %v144
  %v224 = vmul.f32 %v92, %v144
  %v225 = vmul.f32 %v93, %v144
  %v226 = vmul.f32 %v94, %v144
  %v227 = vmul.f32 %v95, %v144
  %v228 = vmul.f32 %v96, %v144
  %v229 = vmul.f32 %v97, %v144
  %v230 = vmul.f32 %v98, %v144
  %v231 = vmul.f32 %v99, %v144
  %v232 = vmul.f32 %v100, %v144
  %v233 = vmul.f32 %v101, %v144
  %v234 = vmul.f32 %v102, %v144
  %v235 = vmul.f32 %v103, %v144
  %v236 = vmul.f32 %v104, %v144
  %v237 = vmul.f32 %v105, %v144
  %v238 = vmul.f32 %v106, %v144
  %v239 = vmul.f32 %v107, %v144
  %v240 = vmul.f32 %v108, %v144
  %v241 = vmul.f32 %v109, %v144
  %v242 = vmul.f32 %v110, %v144
  %v243 = vmul.f32 %v111, %v144
  %v244 = vmul.f32 %v112, %v144
  %v245 = vmul.f32 %v113, %v144
  %v246 = vmul.f32 %v114, %v144
  %v247 = vmul.f32 %v115, %v144
  %v248 = vmul.f32 %v116, %v144
  %v249 = vmul.f32 %v117, %v144
  %v250 = vmul.f32 %v118, %v144
  %v251 = vmul.f32 %v119, %v144
  %v252 = vmul.f32 %v120, %v144
  %v253 = vmul.f32 %v121, %v144
  %v254 = vmul.f32 %v122, %v144
  %v255 = vmul.f32 %v123, %v144
  %v256 = vmul.f32 %v124, %v144
  %v257 = vmul.f32 %v125, %v144
  %v258 = vmul.f32 %v126, %v144
  %v259 = vmul.f32 %v127, %v144
  %v260 = vmul.f32 %v128, %v144
  %v261 = vmul.f32 %v129, %v144
  %v262 = vmul.f32 %v130, %v144
  %v263 = vmul.f32 %v131, %v144
  %v264 = vmul.f32 %v132, %v144
  %v265 = vmul.f32 %v133, %v144
  %v266 = vmul.f32 %v134, %v144
  %v267 = vmul.f32 %v135, %v144
  %v268 = vmul.f32 %v136, %v144
  %v269 = vmul.f32 %v137, %v144
  %v270 = vmul.f32 %v138, %v144
  %v271 = vmul.f32 %v139, %v144
  %v272 = vmul.f32 %v140, %v144
  %v273 = vmul.f32 %v141, %v144
  %v274 = vld [vmem:[%s2] sm:$0x1]
  %v276 = vperm.slane %v274, 0
  %v278 = vadd.f32 %v146, %v276
  %v279 = vadd.f32 %v147, %v276
  %v280 = vadd.f32 %v148, %v276
  %v281 = vadd.f32 %v149, %v276
  %v282 = vadd.f32 %v150, %v276
  %v283 = vadd.f32 %v151, %v276
  %v284 = vadd.f32 %v152, %v276
  %v285 = vadd.f32 %v153, %v276
  %v286 = vadd.f32 %v154, %v276
  %v287 = vadd.f32 %v155, %v276
  %v288 = vadd.f32 %v156, %v276
  %v289 = vadd.f32 %v157, %v276
  %v290 = vadd.f32 %v158, %v276
  %v291 = vadd.f32 %v159, %v276
  %v292 = vadd.f32 %v160, %v276
  %v293 = vadd.f32 %v161, %v276
  %v294 = vadd.f32 %v162, %v276
  %v295 = vadd.f32 %v163, %v276
  %v296 = vadd.f32 %v164, %v276
  %v297 = vadd.f32 %v165, %v276
  %v298 = vadd.f32 %v166, %v276
  %v299 = vadd.f32 %v167, %v276
  %v300 = vadd.f32 %v168, %v276
  %v301 = vadd.f32 %v169, %v276
  %v302 = vadd.f32 %v170, %v276
  %v303 = vadd.f32 %v171, %v276
  %v304 = vadd.f32 %v172, %v276
  %v305 = vadd.f32 %v173, %v276
  %v306 = vadd.f32 %v174, %v276
  %v307 = vadd.f32 %v175, %v276
  %v308 = vadd.f32 %v176, %v276
  %v309 = vadd.f32 %v177, %v276
  %v310 = vadd.f32 %v178, %v276
  %v311 = vadd.f32 %v179, %v276
  %v312 = vadd.f32 %v180, %v276
  %v313 = vadd.f32 %v181, %v276
  %v314 = vadd.f32 %v182, %v276
  %v315 = vadd.f32 %v183, %v276
  %v316 = vadd.f32 %v184, %v276
  %v317 = vadd.f32 %v185, %v276
  %v318 = vadd.f32 %v186, %v276
  %v319 = vadd.f32 %v187, %v276
  %v320 = vadd.f32 %v188, %v276
  %v321 = vadd.f32 %v189, %v276
  %v322 = vadd.f32 %v190, %v276
  %v323 = vadd.f32 %v191, %v276
  %v324 = vadd.f32 %v192, %v276
  %v325 = vadd.f32 %v193, %v276
  %v326 = vadd.f32 %v194, %v276
  %v327 = vadd.f32 %v195, %v276
  %v328 = vadd.f32 %v196, %v276
  %v329 = vadd.f32 %v197, %v276
  %v330 = vadd.f32 %v198, %v276
  %v331 = vadd.f32 %v199, %v276
  %v332 = vadd.f32 %v200, %v276
  %v333 = vadd.f32 %v201, %v276
  %v334 = vadd.f32 %v202, %v276
  %v335 = vadd.f32 %v203, %v276
  %v336 = vadd.f32 %v204, %v276
  %v337 = vadd.f32 %v205, %v276
  %v338 = vadd.f32 %v206, %v276
  %v339 = vadd.f32 %v207, %v276
  %v340 = vadd.f32 %v208, %v276
  %v341 = vadd.f32 %v209, %v276
  %v342 = vadd.f32 %v210, %v276
  %v343 = vadd.f32 %v211, %v276
  %v344 = vadd.f32 %v212, %v276
  %v345 = vadd.f32 %v213, %v276
  %v346 = vadd.f32 %v214, %v276
  %v347 = vadd.f32 %v215, %v276
  %v348 = vadd.f32 %v216, %v276
  %v349 = vadd.f32 %v217, %v276
  %v350 = vadd.f32 %v218, %v276
  %v351 = vadd.f32 %v219, %v276
  %v352 = vadd.f32 %v220, %v276
  %v353 = vadd.f32 %v221, %v276
  %v354 = vadd.f32 %v222, %v276
  %v355 = vadd.f32 %v223, %v276
  %v356 = vadd.f32 %v224, %v276
  %v357 = vadd.f32 %v225, %v276
  %v358 = vadd.f32 %v226, %v276
  %v359 = vadd.f32 %v227, %v276
  %v360 = vadd.f32 %v228, %v276
  %v361 = vadd.f32 %v229, %v276
  %v362 = vadd.f32 %v230, %v276
  %v363 = vadd.f32 %v231, %v276
  %v364 = vadd.f32 %v232, %v276
  %v365 = vadd.f32 %v233, %v276
  %v366 = vadd.f32 %v234, %v276
  %v367 = vadd.f32 %v235, %v276
  %v368 = vadd.f32 %v236, %v276
  %v369 = vadd.f32 %v237, %v276
  %v370 = vadd.f32 %v238, %v276
  %v371 = vadd.f32 %v239, %v276
  %v372 = vadd.f32 %v240, %v276
  %v373 = vadd.f32 %v241, %v276
  %v374 = vadd.f32 %v242, %v276
  %v375 = vadd.f32 %v243, %v276
  %v376 = vadd.f32 %v244, %v276
  %v377 = vadd.f32 %v245, %v276
  %v378 = vadd.f32 %v246, %v276
  %v379 = vadd.f32 %v247, %v276
  %v380 = vadd.f32 %v248, %v276
  %v381 = vadd.f32 %v249, %v276
  %v382 = vadd.f32 %v250, %v276
  %v383 = vadd.f32 %v251, %v276
  %v384 = vadd.f32 %v252, %v276
  %v385 = vadd.f32 %v253, %v276
  %v386 = vadd.f32 %v254, %v276
  %v387 = vadd.f32 %v255, %v276
  %v388 = vadd.f32 %v256, %v276
  %v389 = vadd.f32 %v257, %v276
  %v390 = vadd.f32 %v258, %v276
  %v391 = vadd.f32 %v259, %v276
  %v392 = vadd.f32 %v260, %v276
  %v393 = vadd.f32 %v261, %v276
  %v394 = vadd.f32 %v262, %v276
  %v395 = vadd.f32 %v263, %v276
  %v396 = vadd.f32 %v264, %v276
  %v397 = vadd.f32 %v265, %v276
  %v398 = vadd.f32 %v266, %v276
  %v399 = vadd.f32 %v267, %v276
  %v400 = vadd.f32 %v268, %v276
  %v401 = vadd.f32 %v269, %v276
  %v402 = vadd.f32 %v270, %v276
  %v403 = vadd.f32 %v271, %v276
  %v404 = vadd.f32 %v272, %v276
  %v405 = vadd.f32 %v273, %v276
  %v406 = vmax.f32 %v278, 0.0
  %v407 = vmax.f32 %v279, 0.0
  %v408 = vmax.f32 %v280, 0.0
  %v409 = vmax.f32 %v281, 0.0
  %v410 = vmax.f32 %v282, 0.0
  %v411 = vmax.f32 %v283, 0.0
  %v412 = vmax.f32 %v284, 0.0
  %v413 = vmax.f32 %v285, 0.0
  %v414 = vmax.f32 %v286, 0.0
  %v415 = vmax.f32 %v287, 0.0
  %v416 = vmax.f32 %v288, 0.0
  %v417 = vmax.f32 %v289, 0.0
  %v418 = vmax.f32 %v290, 0.0
  %v419 = vmax.f32 %v291, 0.0
  %v420 = vmax.f32 %v292, 0.0
  %v421 = vmax.f32 %v293, 0.0
  %v422 = vmax.f32 %v294, 0.0
  %v423 = vmax.f32 %v295, 0.0
  %v424 = vmax.f32 %v296, 0.0
  %v425 = vmax.f32 %v297, 0.0
  %v426 = vmax.f32 %v298, 0.0
  %v427 = vmax.f32 %v299, 0.0
  %v428 = vmax.f32 %v300, 0.0
  %v429 = vmax.f32 %v301, 0.0
  %v430 = vmax.f32 %v302, 0.0
  %v431 = vmax.f32 %v303, 0.0
  %v432 = vmax.f32 %v304, 0.0
  %v433 = vmax.f32 %v305, 0.0
  %v434 = vmax.f32 %v306, 0.0
  %v435 = vmax.f32 %v307, 0.0
  %v436 = vmax.f32 %v308, 0.0
  %v437 = vmax.f32 %v309, 0.0
  %v438 = vmax.f32 %v310, 0.0
  %v439 = vmax.f32 %v311, 0.0
  %v440 = vmax.f32 %v312, 0.0
  %v441 = vmax.f32 %v313, 0.0
  %v442 = vmax.f32 %v314, 0.0
  %v443 = vmax.f32 %v315, 0.0
  %v444 = vmax.f32 %v316, 0.0
  %v445 = vmax.f32 %v317, 0.0
  %v446 = vmax.f32 %v318, 0.0
  %v447 = vmax.f32 %v319, 0.0
  %v448 = vmax.f32 %v320, 0.0
  %v449 = vmax.f32 %v321, 0.0
  %v450 = vmax.f32 %v322, 0.0
  %v451 = vmax.f32 %v323, 0.0
  %v452 = vmax.f32 %v324, 0.0
  %v453 = vmax.f32 %v325, 0.0
  %v454 = vmax.f32 %v326, 0.0
  %v455 = vmax.f32 %v327, 0.0
  %v456 = vmax.f32 %v328, 0.0
  %v457 = vmax.f32 %v329, 0.0
  %v458 = vmax.f32 %v330, 0.0
  %v459 = vmax.f32 %v331, 0.0
  %v460 = vmax.f32 %v332, 0.0
  %v461 = vmax.f32 %v333, 0.0
  %v462 = vmax.f32 %v334, 0.0
  %v463 = vmax.f32 %v335, 0.0
  %v464 = vmax.f32 %v336, 0.0
  %v465 = vmax.f32 %v337, 0.0
  %v466 = vmax.f32 %v338, 0.0
  %v467 = vmax.f32 %v339, 0.0
  %v468 = vmax.f32 %v340, 0.0
  %v469 = vmax.f32 %v341, 0.0
  %v470 = vmax.f32 %v342, 0.0
  %v471 = vmax.f32 %v343, 0.0
  %v472 = vmax.f32 %v344, 0.0
  %v473 = vmax.f32 %v345, 0.0
  %v474 = vmax.f32 %v346, 0.0
  %v475 = vmax.f32 %v347, 0.0
  %v476 = vmax.f32 %v348, 0.0
  %v477 = vmax.f32 %v349, 0.0
  %v478 = vmax.f32 %v350, 0.0
  %v479 = vmax.f32 %v351, 0.0
  %v480 = vmax.f32 %v352, 0.0
  %v481 = vmax.f32 %v353, 0.0
  %v482 = vmax.f32 %v354, 0.0
  %v483 = vmax.f32 %v355, 0.0
  %v484 = vmax.f32 %v356, 0.0
  %v485 = vmax.f32 %v357, 0.0
  %v486 = vmax.f32 %v358, 0.0
  %v487 = vmax.f32 %v359, 0.0
  %v488 = vmax.f32 %v360, 0.0
  %v489 = vmax.f32 %v361, 0.0
  %v490 = vmax.f32 %v362, 0.0
  %v491 = vmax.f32 %v363, 0.0
  %v492 = vmax.f32 %v364, 0.0
  %v493 = vmax.f32 %v365, 0.0
  %v494 = vmax.f32 %v366, 0.0
  %v495 = vmax.f32 %v367, 0.0
  %v496 = vmax.f32 %v368, 0.0
  %v497 = vmax.f32 %v369, 0.0
  %v498 = vmax.f32 %v370, 0.0
  %v499 = vmax.f32 %v371, 0.0
  %v500 = vmax.f32 %v372, 0.0
  %v501 = vmax.f32 %v373, 0.0
  %v502 = vmax.f32 %v374, 0.0
  %v503 = vmax.f32 %v375, 0.0
  %v504 = vmax.f32 %v376, 0.0
  %v505 = vmax.f32 %v377, 0.0
  %v506 = vmax.f32 %v378, 0.0
  %v507 = vmax.f32 %v379, 0.0
  %v508 = vmax.f32 %v380, 0.0
  %v509 = vmax.f32 %v381, 0.0
  %v510 = vmax.f32 %v382, 0.0
  %v511 = vmax.f32 %v383, 0.0
  %v512 = vmax.f32 %v384, 0.0
  %v513 = vmax.f32 %v385, 0.0
  %v514 = vmax.f32 %v386, 0.0
  %v515 = vmax.f32 %v387, 0.0
  %v516 = vmax.f32 %v388, 0.0
  %v517 = vmax.f32 %v389, 0.0
  %v518 = vmax.f32 %v390, 0.0
  %v519 = vmax.f32 %v391, 0.0
  %v520 = vmax.f32 %v392, 0.0
  %v521 = vmax.f32 %v393, 0.0
  %v522 = vmax.f32 %v394, 0.0
  %v523 = vmax.f32 %v395, 0.0
  %v524 = vmax.f32 %v396, 0.0
  %v525 = vmax.f32 %v397, 0.0
  %v526 = vmax.f32 %v398, 0.0
  %v527 = vmax.f32 %v399, 0.0
  %v528 = vmax.f32 %v400, 0.0
  %v529 = vmax.f32 %v401, 0.0
  %v530 = vmax.f32 %v402, 0.0
  %v531 = vmax.f32 %v403, 0.0
  %v532 = vmax.f32 %v404, 0.0
  %v533 = vmax.f32 %v405, 0.0
  %vm534 = vcmask 523264
  %535 = vst.msk [vmem:[%s3] sm:$0xff] %vm534, %v406
  %536 = vst.msk [vmem:[%s3 + $0x8] sm:$0xff] %vm534, %v407
  %537 = vst.msk [vmem:[%s3 + $0x10] sm:$0xff] %vm534, %v408
  %538 = vst.msk [vmem:[%s3 + $0x18] sm:$0xff] %vm534, %v409
  %539 = vst.msk [vmem:[%s3 + $0x20] sm:$0xff] %vm534, %v410
  %540 = vst.msk [vmem:[%s3 + $0x28] sm:$0xff] %vm534, %v411
  %541 = vst.msk [vmem:[%s3 + $0x30] sm:$0xff] %vm534, %v412
  %542 = vst.msk [vmem:[%s3 + $0x38] sm:$0xff] %vm534, %v413
  %543 = vst.msk [vmem:[%s3 + $0x40] sm:$0xff] %vm534, %v414
  %544 = vst.msk [vmem:[%s3 + $0x48] sm:$0xff] %vm534, %v415
  %545 = vst.msk [vmem:[%s3 + $0x50] sm:$0xff] %vm534, %v416
  %546 = vst.msk [vmem:[%s3 + $0x58] sm:$0xff] %vm534, %v417
  %547 = vst.msk [vmem:[%s3 + $0x60] sm:$0xff] %vm534, %v418
  %548 = vst.msk [vmem:[%s3 + $0x68] sm:$0xff] %vm534, %v419
  %549 = vst.msk [vmem:[%s3 + $0x70] sm:$0xff] %vm534, %v420
  %550 = vst.msk [vmem:[%s3 + $0x78] sm:$0xff] %vm534, %v421
  %551 = vst.msk [vmem:[%s3 + $0x80] sm:$0xff] %vm534, %v422
  %552 = vst.msk [vmem:[%s3 + $0x88] sm:$0xff] %vm534, %v423
  %553 = vst.msk [vmem:[%s3 + $0x90] sm:$0xff] %vm534, %v424
  %554 = vst.msk [vmem:[%s3 + $0x98] sm:$0xff] %vm534, %v425
  %555 = vst.msk [vmem:[%s3 + $0xa0] sm:$0xff] %vm534, %v426
  %556 = vst.msk [vmem:[%s3 + $0xa8] sm:$0xff] %vm534, %v427
  %557 = vst.msk [vmem:[%s3 + $0xb0] sm:$0xff] %vm534, %v428
  %558 = vst.msk [vmem:[%s3 + $0xb8] sm:$0xff] %vm534, %v429
  %559 = vst.msk [vmem:[%s3 + $0xc0] sm:$0xff] %vm534, %v430
  %560 = vst.msk [vmem:[%s3 + $0xc8] sm:$0xff] %vm534, %v431
  %561 = vst.msk [vmem:[%s3 + $0xd0] sm:$0xff] %vm534, %v432
  %562 = vst.msk [vmem:[%s3 + $0xd8] sm:$0xff] %vm534, %v433
  %563 = vst.msk [vmem:[%s3 + $0xe0] sm:$0xff] %vm534, %v434
  %564 = vst.msk [vmem:[%s3 + $0xe8] sm:$0xff] %vm534, %v435
  %565 = vst.msk [vmem:[%s3 + $0xf0] sm:$0xff] %vm534, %v436
  %566 = vst.msk [vmem:[%s3 + $0xf8] sm:$0xff] %vm534, %v437
  %567 = vst.msk [vmem:[%s3 + $0x100] sm:$0xff] %vm534, %v438
  %568 = vst.msk [vmem:[%s3 + $0x108] sm:$0xff] %vm534, %v439
  %569 = vst.msk [vmem:[%s3 + $0x110] sm:$0xff] %vm534, %v440
  %570 = vst.msk [vmem:[%s3 + $0x118] sm:$0xff] %vm534, %v441
  %571 = vst.msk [vmem:[%s3 + $0x120] sm:$0xff] %vm534, %v442
  %572 = vst.msk [vmem:[%s3 + $0x128] sm:$0xff] %vm534, %v443
  %573 = vst.msk [vmem:[%s3 + $0x130] sm:$0xff] %vm534, %v444
  %574 = vst.msk [vmem:[%s3 + $0x138] sm:$0xff] %vm534, %v445
  %575 = vst.msk [vmem:[%s3 + $0x140] sm:$0xff] %vm534, %v446
  %576 = vst.msk [vmem:[%s3 + $0x148] sm:$0xff] %vm534, %v447
  %577 = vst.msk [vmem:[%s3 + $0x150] sm:$0xff] %vm534, %v448
  %578 = vst.msk [vmem:[%s3 + $0x158] sm:$0xff] %vm534, %v449
  %579 = vst.msk [vmem:[%s3 + $0x160] sm:$0xff] %vm534, %v450
  %580 = vst.msk [vmem:[%s3 + $0x168] sm:$0xff] %vm534, %v451
  %581 = vst.msk [vmem:[%s3 + $0x170] sm:$0xff] %vm534, %v452
  %582 = vst.msk [vmem:[%s3 + $0x178] sm:$0xff] %vm534, %v453
  %583 = vst.msk [vmem:[%s3 + $0x180] sm:$0xff] %vm534, %v454
  %584 = vst.msk [vmem:[%s3 + $0x188] sm:$0xff] %vm534, %v455
  %585 = vst.msk [vmem:[%s3 + $0x190] sm:$0xff] %vm534, %v456
  %586 = vst.msk [vmem:[%s3 + $0x198] sm:$0xff] %vm534, %v457
  %587 = vst.msk [vmem:[%s3 + $0x1a0] sm:$0xff] %vm534, %v458
  %588 = vst.msk [vmem:[%s3 + $0x1a8] sm:$0xff] %vm534, %v459
  %589 = vst.msk [vmem:[%s3 + $0x1b0] sm:$0xff] %vm534, %v460
  %590 = vst.msk [vmem:[%s3 + $0x1b8] sm:$0xff] %vm534, %v461
  %591 = vst.msk [vmem:[%s3 + $0x1c0] sm:$0xff] %vm534, %v462
  %592 = vst.msk [vmem:[%s3 + $0x1c8] sm:$0xff] %vm534, %v463
  %593 = vst.msk [vmem:[%s3 + $0x1d0] sm:$0xff] %vm534, %v464
  %594 = vst.msk [vmem:[%s3 + $0x1d8] sm:$0xff] %vm534, %v465
  %595 = vst.msk [vmem:[%s3 + $0x1e0] sm:$0xff] %vm534, %v466
  %596 = vst.msk [vmem:[%s3 + $0x1e8] sm:$0xff] %vm534, %v467
  %597 = vst.msk [vmem:[%s3 + $0x1f0] sm:$0xff] %vm534, %v468
  %598 = vst.msk [vmem:[%s3 + $0x1f8] sm:$0xff] %vm534, %v469
  %599 = vst.msk [vmem:[%s3 + $0x200] sm:$0xff] %vm534, %v470
  %600 = vst.msk [vmem:[%s3 + $0x208] sm:$0xff] %vm534, %v471
  %601 = vst.msk [vmem:[%s3 + $0x210] sm:$0xff] %vm534, %v472
  %602 = vst.msk [vmem:[%s3 + $0x218] sm:$0xff] %vm534, %v473
  %603 = vst.msk [vmem:[%s3 + $0x220] sm:$0xff] %vm534, %v474
  %604 = vst.msk [vmem:[%s3 + $0x228] sm:$0xff] %vm534, %v475
  %605 = vst.msk [vmem:[%s3 + $0x230] sm:$0xff] %vm534, %v476
  %606 = vst.msk [vmem:[%s3 + $0x238] sm:$0xff] %vm534, %v477
  %607 = vst.msk [vmem:[%s3 + $0x240] sm:$0xff] %vm534, %v478
  %608 = vst.msk [vmem:[%s3 + $0x248] sm:$0xff] %vm534, %v479
  %609 = vst.msk [vmem:[%s3 + $0x250] sm:$0xff] %vm534, %v480
  %610 = vst.msk [vmem:[%s3 + $0x258] sm:$0xff] %vm534, %v481
  %611 = vst.msk [vmem:[%s3 + $0x260] sm:$0xff] %vm534, %v482
  %612 = vst.msk [vmem:[%s3 + $0x268] sm:$0xff] %vm534, %v483
  %613 = vst.msk [vmem:[%s3 + $0x270] sm:$0xff] %vm534, %v484
  %614 = vst.msk [vmem:[%s3 + $0x278] sm:$0xff] %vm534, %v485
  %615 = vst.msk [vmem:[%s3 + $0x280] sm:$0xff] %vm534, %v486
  %616 = vst.msk [vmem:[%s3 + $0x288] sm:$0xff] %vm534, %v487
  %617 = vst.msk [vmem:[%s3 + $0x290] sm:$0xff] %vm534, %v488
  %618 = vst.msk [vmem:[%s3 + $0x298] sm:$0xff] %vm534, %v489
  %619 = vst.msk [vmem:[%s3 + $0x2a0] sm:$0xff] %vm534, %v490
  %620 = vst.msk [vmem:[%s3 + $0x2a8] sm:$0xff] %vm534, %v491
  %621 = vst.msk [vmem:[%s3 + $0x2b0] sm:$0xff] %vm534, %v492
  %622 = vst.msk [vmem:[%s3 + $0x2b8] sm:$0xff] %vm534, %v493
  %623 = vst.msk [vmem:[%s3 + $0x2c0] sm:$0xff] %vm534, %v494
  %624 = vst.msk [vmem:[%s3 + $0x2c8] sm:$0xff] %vm534, %v495
  %625 = vst.msk [vmem:[%s3 + $0x2d0] sm:$0xff] %vm534, %v496
  %626 = vst.msk [vmem:[%s3 + $0x2d8] sm:$0xff] %vm534, %v497
  %627 = vst.msk [vmem:[%s3 + $0x2e0] sm:$0xff] %vm534, %v498
  %628 = vst.msk [vmem:[%s3 + $0x2e8] sm:$0xff] %vm534, %v499
  %629 = vst.msk [vmem:[%s3 + $0x2f0] sm:$0xff] %vm534, %v500
  %630 = vst.msk [vmem:[%s3 + $0x2f8] sm:$0xff] %vm534, %v501
  %631 = vst.msk [vmem:[%s3 + $0x300] sm:$0xff] %vm534, %v502
  %632 = vst.msk [vmem:[%s3 + $0x308] sm:$0xff] %vm534, %v503
  %633 = vst.msk [vmem:[%s3 + $0x310] sm:$0xff] %vm534, %v504
  %634 = vst.msk [vmem:[%s3 + $0x318] sm:$0xff] %vm534, %v505
  %635 = vst.msk [vmem:[%s3 + $0x320] sm:$0xff] %vm534, %v506
  %636 = vst.msk [vmem:[%s3 + $0x328] sm:$0xff] %vm534, %v507
  %637 = vst.msk [vmem:[%s3 + $0x330] sm:$0xff] %vm534, %v508
  %638 = vst.msk [vmem:[%s3 + $0x338] sm:$0xff] %vm534, %v509
  %639 = vst.msk [vmem:[%s3 + $0x340] sm:$0xff] %vm534, %v510
  %640 = vst.msk [vmem:[%s3 + $0x348] sm:$0xff] %vm534, %v511
  %641 = vst.msk [vmem:[%s3 + $0x350] sm:$0xff] %vm534, %v512
  %642 = vst.msk [vmem:[%s3 + $0x358] sm:$0xff] %vm534, %v513
  %643 = vst.msk [vmem:[%s3 + $0x360] sm:$0xff] %vm534, %v514
  %644 = vst.msk [vmem:[%s3 + $0x368] sm:$0xff] %vm534, %v515
  %645 = vst.msk [vmem:[%s3 + $0x370] sm:$0xff] %vm534, %v516
  %646 = vst.msk [vmem:[%s3 + $0x378] sm:$0xff] %vm534, %v517
  %647 = vst.msk [vmem:[%s3 + $0x380] sm:$0xff] %vm534, %v518
  %648 = vst.msk [vmem:[%s3 + $0x388] sm:$0xff] %vm534, %v519
  %649 = vst.msk [vmem:[%s3 + $0x390] sm:$0xff] %vm534, %v520
  %650 = vst.msk [vmem:[%s3 + $0x398] sm:$0xff] %vm534, %v521
  %651 = vst.msk [vmem:[%s3 + $0x3a0] sm:$0xff] %vm534, %v522
  %652 = vst.msk [vmem:[%s3 + $0x3a8] sm:$0xff] %vm534, %v523
  %653 = vst.msk [vmem:[%s3 + $0x3b0] sm:$0xff] %vm534, %v524
  %654 = vst.msk [vmem:[%s3 + $0x3b8] sm:$0xff] %vm534, %v525
  %655 = vst.msk [vmem:[%s3 + $0x3c0] sm:$0xff] %vm534, %v526
  %656 = vst.msk [vmem:[%s3 + $0x3c8] sm:$0xff] %vm534, %v527
  %657 = vst.msk [vmem:[%s3 + $0x3d0] sm:$0xff] %vm534, %v528
  %658 = vst.msk [vmem:[%s3 + $0x3d8] sm:$0xff] %vm534, %v529
  %659 = vst.msk [vmem:[%s3 + $0x3e0] sm:$0xff] %vm534, %v530
  %660 = vst.msk [vmem:[%s3 + $0x3e8] sm:$0xff] %vm534, %v531
  %661 = vst.msk [vmem:[%s3 + $0x3f0] sm:$0xff] %vm534, %v532
  %662 = vst.msk [vmem:[%s3 + $0x3f8] sm:$0xff] %vm534, %v533
  // Predicated region
  $region14: #{up_transition.7} parent=0 // pred_check
    _
  $region15: #{up_transition.7} parent=0 // pred_check_branch
    %664 = sbr.rel (0) target = $region17
  $region16: #{up_transition.7} parent=0 // pred_region
    _
  $region17: #{up_transition.7} parent=0 // pred_fallthru
    _
  // Predicated region
  $region18: #{up_transition.7} parent=0 // pred_check
    _
  $region19: #{up_transition.7} parent=0 // pred_check_branch
    %666 = sbr.rel (0) target = $region21
  $region20: #{up_transition.7} parent=0 // pred_region
    _
  $region21: #{up_transition.7} parent=0 // pred_fallthru
    _

// kernel: up_transition.6
$region0: #{up_transition.6}
  #allocation0 [shape = 'u32[]', space=smem, size = 0x4, offset = 0x4, fixed_abs, tag = 'smem constant byte address 0x4 - core index']
  #allocation1 [shape = 'u32[72,128]{1,0:T(1,128)}', space=vmem, size = 0x9000, scoped, tag = 'internal scratch']
  %s0 = inlined_call_operand.vmem [shape: bf16[2,10,10,10,12], index: 0, kind: input, shape index: {}, may-alias: {0,1,2}]
  %s1 = inlined_call_operand.vmem [shape: bf16[2,10,10,10,12], index: 1, kind: input, shape index: {}, may-alias: {0,1,2}]
  %s2 = inlined_call_operand.vmem [shape: bf16[2,10,10,10,12], index: 2, kind: input, shape index: {}, may-alias: {0,1,2}]
  %s3 = inlined_call_operand.vmem [shape: bf16[324,64], index: 3, kind: input, shape index: {}]
  %s4 = inlined_call_operand.vmem [shape: f32[1,64], index: 4, kind: input, shape index: {}]
  %s5 = inlined_call_operand.vmem [shape: f32[2,8,64,64], index: 5, kind: output, shape index: {0}]
  %s6 = inlined_call_operand.vmem [shape: f32[2,8,1,64], index: 6, kind: output, shape index: {1}]
  %s7 = inlined_call_operand.vmem [shape: f32[2,8,1,64], index: 7, kind: output, shape index: {2}]
  %8 = xla_tuple %s5, %s6, %s7
  %s9 = sld [smem:[#allocation0]]
  $region69: #{up_transition.6} parent=0
    _
  %s11 = ssub.s32 1, %s9
  %s12 = scalar_select 0, %s11, %s9
  loop: start=0, step=1, limit=18
  $region2: #{up_transition.6} parent=0 // loop_pre_header
    _
  $region3: #{up_transition.6} parent=0 // loop_header
    %s14 = sphi 0, %s18
    %p15 = scmp.ge.s32.totalorder %s14, 18
    %s21 = sphi 0, %s33
    %s22 = sphi 0, %s29
    %s23 = sphi 0, %s21
    %s24 = sphi 0, %s22
    %s25 = sphi 0, %s23
    %s26 = sphi 0, %s24
    %s38 = sphi 0, %s40
    %s41 = sphi 0, %s38
    %s42 = sphi 0, %s41
    %s58 = sphi 0, %s42
    %s68 = sphi 0, %s70
    %s71 = sphi 0, %s68
    %s72 = sphi 0, %s71
    %s88 = sphi 0, %s72
    %s98 = sphi 0, %s100
    %s101 = sphi 0, %s98
    %s102 = sphi 0, %s101
    %s118 = sphi 0, %s102
    %s122 = sphi 0, %s122
    %s124 = sphi 0, %s122
    %s125 = sphi 0, %s124
    %s139 = sphi 0, %s125
    %s143 = sphi 0, %s143
    %s145 = sphi 0, %s143
    %s146 = sphi 0, %s145
    %s160 = sphi 0, %s146
    %s168 = sphi 0, %s170
    %s171 = sphi 0, %s168
    %s172 = sphi 0, %s171
    %s188 = sphi 0, %s172
    %s196 = sphi 0, %s198
    %s199 = sphi 0, %s196
    %s200 = sphi 0, %s199
    %s216 = sphi 0, %s200
    %s224 = sphi 0, %s226
    %s227 = sphi 0, %s224
    %s228 = sphi 0, %s227
    %s244 = sphi 0, %s228
  $region4: #{up_transition.6} parent=0 // loop_header_branch
    %17 = sbr.rel (%p15) target = $region8
  $region5: #{up_transition.6} parent=0 // loop_body
    %s19 = ssub.s32 %s14, 1
    %s20 = ssub.s32 %s14, 2
    %s27 = sadd.s32 1, %s22
    %p28 = scmp.ge.s32.totalorder %s27, 8
    %s29 = scalar_select %p28, 0, %s27
    %s30 = sadd.s32 1, %s21
    %s31 = scalar_select %p28, %s30, %s21
    %p32 = scmp.ge.s32.totalorder %s31, 2
    %s33 = scalar_select %p32, 0, %s31
    %s34 = ssub.s32 %s21, %s33
    %s35 = ssub.s32 %s22, %s29
    %s36 = sor.u32 %s34, %s35
    %p37 = scmp.eq.s32.totalorder %s36, 0
    %s39 = sadd.s32 %s38, 1
    %s40 = scalar_select %p37, %s38, %s39
    %p43 = pneg %p37
    %p44 = scmp.eq.s32.totalorder %s14, 15
    %p45 = por %p43, %p44
    %p46 = scmp.ne.s32.totalorder %s38, %s41
    %p47 = scmp.eq.s32.totalorder %s14, 0
    %p48 = por %p46, %p47
    %p49 = scmp.ne.s32.totalorder %s38, %s41
    %p50 = scmp.eq.s32.totalorder %s19, 15
    %p51 = por %p49, %p50
    %p52 = scmp.ne.s32.totalorder %s41, %s42
    %p53 = scmp.eq.s32.totalorder %s19, 0
    %p54 = por %p52, %p53
    %p55 = scmp.ne.s32.totalorder %s41, %s42
    %p56 = scmp.eq.s32.totalorder %s20, 15
    %p57 = por %p55, %p56
    %p59 = scmp.ne.s32.totalorder %s42, %s58
    %p60 = scmp.eq.s32.totalorder %s20, 0
    %p61 = por %p59, %p60
    %s62 = sadd.s32 %s22, 1
    %s63 = sadd.s32 %s29, 1
    %s64 = ssub.s32 %s21, %s33
    %s65 = ssub.s32 %s62, %s63
    %s66 = sor.u32 %s64, %s65
    %p67 = scmp.eq.s32.totalorder %s66, 0
    %s69 = sadd.s32 %s68, 1
    %s70 = scalar_select %p67, %s68, %s69
    %p73 = pneg %p67
    %p74 = scmp.eq.s32.totalorder %s14, 15
    %p75 = por %p73, %p74
    %p76 = scmp.ne.s32.totalorder %s68, %s71
    %p77 = scmp.eq.s32.totalorder %s14, 0
    %p78 = por %p76, %p77
    %p79 = scmp.ne.s32.totalorder %s68, %s71
    %p80 = scmp.eq.s32.totalorder %s19, 15
    %p81 = por %p79, %p80
    %p82 = scmp.ne.s32.totalorder %s71, %s72
    %p83 = scmp.eq.s32.totalorder %s19, 0
    %p84 = por %p82, %p83
    %p85 = scmp.ne.s32.totalorder %s71, %s72
    %p86 = scmp.eq.s32.totalorder %s20, 15
    %p87 = por %p85, %p86
    %p89 = scmp.ne.s32.totalorder %s72, %s88
    %p90 = scmp.eq.s32.totalorder %s20, 0
    %p91 = por %p89, %p90
    %s92 = sadd.s32 %s22, 2
    %s93 = sadd.s32 %s29, 2
    %s94 = ssub.s32 %s21, %s33
    %s95 = ssub.s32 %s92, %s93
    %s96 = sor.u32 %s94, %s95
    %p97 = scmp.eq.s32.totalorder %s96, 0
    %s99 = sadd.s32 %s98, 1
    %s100 = scalar_select %p97, %s98, %s99
    %p103 = pneg %p97
    %p104 = scmp.eq.s32.totalorder %s14, 15
    %p105 = por %p103, %p104
    %p106 = scmp.ne.s32.totalorder %s98, %s101
    %p107 = scmp.eq.s32.totalorder %s14, 0
    %p108 = por %p106, %p107
    %p109 = scmp.ne.s32.totalorder %s98, %s101
    %p110 = scmp.eq.s32.totalorder %s19, 15
    %p111 = por %p109, %p110
    %p112 = scmp.ne.s32.totalorder %s101, %s102
    %p113 = scmp.eq.s32.totalorder %s19, 0
    %p114 = por %p112, %p113
    %p115 = scmp.ne.s32.totalorder %s101, %s102
    %p116 = scmp.eq.s32.totalorder %s20, 15
    %p117 = por %p115, %p116
    %p119 = scmp.ne.s32.totalorder %s102, %s118
    %p120 = scmp.eq.s32.totalorder %s20, 0
    %p121 = por %p119, %p120
    %s123 = sadd.s32 %s122, 1
    %p126 = scmp.eq.s32.totalorder %s14, 15
    %p127 = scmp.ne.s32.totalorder %s122, %s124
    %p128 = scmp.eq.s32.totalorder %s14, 0
    %p129 = por %p127, %p128
    %p130 = scmp.ne.s32.totalorder %s122, %s124
    %p131 = scmp.eq.s32.totalorder %s19, 15
    %p132 = por %p130, %p131
    %p133 = scmp.ne.s32.totalorder %s124, %s125
    %p134 = scmp.eq.s32.totalorder %s19, 0
    %p135 = por %p133, %p134
    %p136 = scmp.ne.s32.totalorder %s124, %s125
    %p137 = scmp.eq.s32.totalorder %s20, 15
    %p138 = por %p136, %p137
    %p140 = scmp.ne.s32.totalorder %s125, %s139
    %p141 = scmp.eq.s32.totalorder %s20, 0
    %p142 = por %p140, %p141
    %s144 = sadd.s32 %s143, 1
    %p147 = scmp.eq.s32.totalorder %s14, 15
    %p148 = scmp.ne.s32.totalorder %s143, %s145
    %p149 = scmp.eq.s32.totalorder %s14, 0
    %p150 = por %p148, %p149
    %p151 = scmp.ne.s32.totalorder %s143, %s145
    %p152 = scmp.eq.s32.totalorder %s19, 15
    %p153 = por %p151, %p152
    %p154 = scmp.ne.s32.totalorder %s145, %s146
    %p155 = scmp.eq.s32.totalorder %s19, 0
    %p156 = por %p154, %p155
    %p157 = scmp.ne.s32.totalorder %s145, %s146
    %p158 = scmp.eq.s32.totalorder %s20, 15
    %p159 = por %p157, %p158
    %p161 = scmp.ne.s32.totalorder %s146, %s160
    %p162 = scmp.eq.s32.totalorder %s20, 0
    %p163 = por %p161, %p162
    %s164 = ssub.s32 %s21, %s33
    %s165 = ssub.s32 %s22, %s29
    %s166 = sor.u32 %s164, %s165
    %p167 = scmp.eq.s32.totalorder %s166, 0
    %s169 = sadd.s32 %s168, 1
    %s170 = scalar_select %p167, %s168, %s169
    %p173 = pneg %p167
    %p174 = scmp.eq.s32.totalorder %s14, 15
    %p175 = por %p173, %p174
    %p176 = scmp.ne.s32.totalorder %s168, %s171
    %p177 = scmp.eq.s32.totalorder %s14, 0
    %p178 = por %p176, %p177
    %p179 = scmp.ne.s32.totalorder %s168, %s171
    %p180 = scmp.eq.s32.totalorder %s19, 15
    %p181 = por %p179, %p180
    %p182 = scmp.ne.s32.totalorder %s171, %s172
    %p183 = scmp.eq.s32.totalorder %s19, 0
    %p184 = por %p182, %p183
    %p185 = scmp.ne.s32.totalorder %s171, %s172
    %p186 = scmp.eq.s32.totalorder %s20, 15
    %p187 = por %p185, %p186
    %p189 = scmp.ne.s32.totalorder %s172, %s188
    %p190 = scmp.eq.s32.totalorder %s20, 0
    %p191 = por %p189, %p190
    %s192 = ssub.s32 %s21, %s33
    %s193 = ssub.s32 %s22, %s29
    %s194 = sor.u32 %s192, %s193
    %p195 = scmp.eq.s32.totalorder %s194, 0
    %s197 = sadd.s32 %s196, 1
    %s198 = scalar_select %p195, %s196, %s197
    %p201 = pneg %p195
    %p202 = scmp.eq.s32.totalorder %s14, 15
    %p203 = por %p201, %p202
    %p204 = scmp.ne.s32.totalorder %s196, %s199
    %p205 = scmp.eq.s32.totalorder %s14, 0
    %p206 = por %p204, %p205
    %p207 = scmp.ne.s32.totalorder %s196, %s199
    %p208 = scmp.eq.s32.totalorder %s19, 15
    %p209 = por %p207, %p208
    %p210 = scmp.ne.s32.totalorder %s199, %s200
    %p211 = scmp.eq.s32.totalorder %s19, 0
    %p212 = por %p210, %p211
    %p213 = scmp.ne.s32.totalorder %s199, %s200
    %p214 = scmp.eq.s32.totalorder %s20, 15
    %p215 = por %p213, %p214
    %p217 = scmp.ne.s32.totalorder %s200, %s216
    %p218 = scmp.eq.s32.totalorder %s20, 0
    %p219 = por %p217, %p218
    %s220 = ssub.s32 %s21, %s33
    %s221 = ssub.s32 %s22, %s29
    %s222 = sor.u32 %s220, %s221
    %p223 = scmp.eq.s32.totalorder %s222, 0
    %s225 = sadd.s32 %s224, 1
    %s226 = scalar_select %p223, %s224, %s225
    %p229 = pneg %p223
    %p230 = scmp.eq.s32.totalorder %s14, 15
    %p231 = por %p229, %p230
    %p232 = scmp.ne.s32.totalorder %s224, %s227
    %p233 = scmp.eq.s32.totalorder %s14, 0
    %p234 = por %p232, %p233
    %p235 = scmp.ne.s32.totalorder %s224, %s227
    %p236 = scmp.eq.s32.totalorder %s19, 15
    %p237 = por %p235, %p236
    %p238 = scmp.ne.s32.totalorder %s227, %s228
    %p239 = scmp.eq.s32.totalorder %s19, 0
    %p240 = por %p238, %p239
    %p241 = scmp.ne.s32.totalorder %s227, %s228
    %p242 = scmp.eq.s32.totalorder %s20, 15
    %p243 = por %p241, %p242
    %p245 = scmp.ne.s32.totalorder %s228, %s244
    %p246 = scmp.eq.s32.totalorder %s20, 0
    %p247 = por %p245, %p246
    %p248 = scmp.le.s32.totalorder 1, %s14
    %p249 = scmp.lt.s32.totalorder %s14, 17
    %p250 = pnand %p248, %p249
    %p251 = pneg %p250
    // Predicated region
    $region9: #{up_transition.6} parent=5 // pred_check
      _
    $region10: #{up_transition.6} parent=5 // pred_check_branch
      %253 = sbr.rel (%p250) target = $region12
    $region11: #{up_transition.6} parent=5 // pred_region
      %s254 = ssub.s32 %s14, 1
      // Predicated region
      $region13: #{up_transition.6} parent=11 // pred_check
        %p255 = pneg %p135
      $region14: #{up_transition.6} parent=11 // pred_check_branch
        %257 = sbr.rel (%p255) target = $region16
      $region15: #{up_transition.6} parent=11 // pred_region
        _
      $region16: #{up_transition.6} parent=11 // pred_fallthru
        _
      // Predicated region
      $region17: #{up_transition.6} parent=11 // pred_check
        %p258 = pneg %p156
      $region18: #{up_transition.6} parent=11 // pred_check_branch
        %260 = sbr.rel (%p258) target = $region20
      $region19: #{up_transition.6} parent=11 // pred_region
        _
      $region20: #{up_transition.6} parent=11 // pred_fallthru
        _
    $region12: #{up_transition.6} parent=5 // pred_fallthru
      _
    %p261 = scmp.lt.s32.totalorder %s14, 16
    // Predicated region
    $region21: #{up_transition.6} parent=5 // pred_check
      %p262 = pneg %p261
    $region22: #{up_transition.6} parent=5 // pred_check_branch
      %264 = sbr.rel (%p262) target = $region24
    $region23: #{up_transition.6} parent=5 // pred_region
      // Predicated region
      $region25: #{up_transition.6} parent=23 // pred_check
        %p265 = pneg %p48
      $region26: #{up_transition.6} parent=23 // pred_check_branch
        %267 = sbr.rel (%p265) target = $region28
      $region27: #{up_transition.6} parent=23 // pred_region
        %p268 = scmp.lt.s32.totalorder %s21, 1
        %s269 = scalar_select %p268, %s21, 1
        %p270 = scmp.lt.s32.totalorder %s22, 9
        %s271 = scalar_select %p270, %s22, 9
        %s272 = smul.addr %s271, 20
        %s273 = smul.addr %s269, 200
        %s274 = sadd.s32 %s272, %s273
        %s275 = smul.addr %s274, 4
        %s276 = scalar_lea.vmem %s0, %s275
      $region28: #{up_transition.6} parent=23 // pred_fallthru
        _
      // Predicated region
      $region29: #{up_transition.6} parent=23 // pred_check
        %p277 = pneg %p78
      $region30: #{up_transition.6} parent=23 // pred_check_branch
        %279 = sbr.rel (%p277) target = $region32
      $region31: #{up_transition.6} parent=23 // pred_region
        %s280 = sadd.s32 %s22, 1
        %p281 = scmp.lt.s32.totalorder %s21, 1
        %s282 = scalar_select %p281, %s21, 1
        %p283 = scmp.lt.s32.totalorder %s280, 9
        %s284 = scalar_select %p283, %s280, 9
        %s285 = smul.addr %s284, 20
        %s286 = smul.addr %s282, 200
        %s287 = sadd.s32 %s285, %s286
        %s288 = smul.addr %s287, 4
        %s289 = scalar_lea.vmem %s1, %s288
        %s290 = sadd.s32 %s22, 1
      $region32: #{up_transition.6} parent=23 // pred_fallthru
        _
      // Predicated region
      $region33: #{up_transition.6} parent=23 // pred_check
        %p291 = pneg %p108
      $region34: #{up_transition.6} parent=23 // pred_check_branch
        %293 = sbr.rel (%p291) target = $region36
      $region35: #{up_transition.6} parent=23 // pred_region
        %s294 = sadd.s32 %s22, 2
        %p295 = scmp.lt.s32.totalorder %s21, 1
        %s296 = scalar_select %p295, %s21, 1
        %p297 = scmp.lt.s32.totalorder %s294, 9
        %s298 = scalar_select %p297, %s294, 9
        %s299 = smul.addr %s298, 20
        %s300 = smul.addr %s296, 200
        %s301 = sadd.s32 %s299, %s300
        %s302 = smul.addr %s301, 4
        %s303 = scalar_lea.vmem %s2, %s302
        %s304 = sadd.s32 %s22, 2
      $region36: #{up_transition.6} parent=23 // pred_fallthru
        _
    $region24: #{up_transition.6} parent=5 // pred_fallthru
      _
    %p305 = scmp.le.s32.totalorder 1, %s14
    %p306 = scmp.lt.s32.totalorder %s14, 17
    %p307 = pnand %p305, %p306
    %p308 = pneg %p307
    // Predicated region
    $region37: #{up_transition.6} parent=5 // pred_check
      _
    $region38: #{up_transition.6} parent=5 // pred_check_branch
      %310 = sbr.rel (%p307) target = $region40
    $region39: #{up_transition.6} parent=5 // pred_region
      %s311 = ssub.s32 %s14, 1
      %p312 = scmp.lt.s32.totalorder %s23, 1
      %s313 = scalar_select %p312, %s23, 1
      %p314 = scmp.lt.s32.totalorder %s24, 9
      %s315 = scalar_select %p314, %s24, 9
      %s316 = smul.addr %s315, 20
      %s317 = smul.addr %s313, 200
      %s318 = sadd.s32 %s316, %s317
      %s319 = smul.addr %s318, 4
      %s320 = scalar_lea.vmem %s0, %s319
      %p321 = pneg %p54
      %p322 = pneg %p51
      %s323 = sadd.s32 %s24, 1
      %p324 = scmp.lt.s32.totalorder %s23, 1
      %s325 = scalar_select %p324, %s23, 1
      %p326 = scmp.lt.s32.totalorder %s323, 9
      %s327 = scalar_select %p326, %s323, 9
      %s328 = smul.addr %s327, 20
      %s329 = smul.addr %s325, 200
      %s330 = sadd.s32 %s328, %s329
      %s331 = smul.addr %s330, 4
      %s332 = scalar_lea.vmem %s1, %s331
      %p333 = pneg %p84
      %p334 = pneg %p81
      %s335 = sadd.s32 %s24, 2
      %p336 = scmp.lt.s32.totalorder %s23, 1
      %s337 = scalar_select %p336, %s23, 1
      %p338 = scmp.lt.s32.totalorder %s335, 9
      %s339 = scalar_select %p338, %s335, 9
      %s340 = smul.addr %s339, 20
      %s341 = smul.addr %s337, 200
      %s342 = sadd.s32 %s340, %s341
      %s343 = smul.addr %s342, 4
      %s344 = scalar_lea.vmem %s2, %s343
      %p345 = pneg %p114
      %p346 = pneg %p111
      %p347 = pneg %p135
      %p348 = pneg %p132
      %p349 = pneg %p156
      %p350 = pneg %p153
      %p351 = pneg %p184
      %p352 = pneg %p181
      %p353 = scmp.lt.s32.totalorder %s23, 1
      %s354 = scalar_select %p353, %s23, 1
      %p355 = scmp.lt.s32.totalorder %s24, 7
      %s356 = scalar_select %p355, %s24, 7
      %s357 = smul.addr %s356, 8
      %s358 = smul.addr %s354, 64
      %s359 = sadd.s32 %s357, %s358
      %s360 = smul.addr %s359, 8
      %s361 = scalar_lea.vmem %s5, %s360
      %p362 = pneg %p212
      %p363 = pneg %p209
      %p364 = scmp.lt.s32.totalorder %s23, 1
      %s365 = scalar_select %p364, %s23, 1
      %p366 = scmp.lt.s32.totalorder %s24, 7
      %s367 = scalar_select %p366, %s24, 7
      %s368 = smul.addr %s365, 8
      %s369 = sadd.s32 %s367, %s368
      %s370 = scalar_lea.vmem %s6, %s369
      %p371 = pneg %p240
      %p372 = pneg %p237
      %p373 = scmp.lt.s32.totalorder %s23, 1
      %s374 = scalar_select %p373, %s23, 1
      %p375 = scmp.lt.s32.totalorder %s24, 7
      %s376 = scalar_select %p375, %s24, 7
      %s377 = smul.addr %s374, 8
      %s378 = sadd.s32 %s376, %s377
      %s379 = scalar_lea.vmem %s7, %s378
      %p380 = scmp.lt.s32.totalorder %s23, 1
      %s381 = scalar_select %p380, %s23, 1
      %p382 = scmp.lt.s32.totalorder %s24, 9
      %s383 = scalar_select %p382, %s24, 9
      %s384 = smul.addr %s383, 20
      %s385 = smul.addr %s381, 200
      %s386 = sadd.s32 %s384, %s385
      %s387 = smul.addr %s386, 4
      %s388 = scalar_lea.vmem %s0, %s387
      %s389 = sadd.s32 %s24, 1
      %p390 = scmp.lt.s32.totalorder %s23, 1
      %s391 = scalar_select %p390, %s23, 1
      %p392 = scmp.lt.s32.totalorder %s389, 9
      %s393 = scalar_select %p392, %s389, 9
      %s394 = smul.addr %s393, 20
      %s395 = smul.addr %s391, 200
      %s396 = sadd.s32 %s394, %s395
      %s397 = smul.addr %s396, 4
      %s398 = scalar_lea.vmem %s1, %s397
      %s399 = sadd.s32 %s24, 1
      %s400 = sadd.s32 %s24, 2
      %p401 = scmp.lt.s32.totalorder %s23, 1
      %s402 = scalar_select %p401, %s23, 1
      %p403 = scmp.lt.s32.totalorder %s400, 9
      %s404 = scalar_select %p403, %s400, 9
      %s405 = smul.addr %s404, 20
      %s406 = smul.addr %s402, 200
      %s407 = sadd.s32 %s405, %s406
      %s408 = smul.addr %s407, 4
      %s409 = scalar_lea.vmem %s2, %s408
      %s410 = sadd.s32 %s24, 2
      %p411 = scmp.lt.s32.totalorder %s23, 1
      %s412 = scalar_select %p411, %s23, 1
      %p413 = scmp.lt.s32.totalorder %s24, 7
      %s414 = scalar_select %p413, %s24, 7
      %s415 = smul.addr %s414, 8
      %s416 = smul.addr %s412, 64
      %s417 = sadd.s32 %s415, %s416
      %s418 = smul.addr %s417, 8
      %s419 = scalar_lea.vmem %s5, %s418
      %p420 = scmp.lt.s32.totalorder %s23, 1
      %s421 = scalar_select %p420, %s23, 1
      %p422 = scmp.lt.s32.totalorder %s24, 7
      %s423 = scalar_select %p422, %s24, 7
      %s424 = smul.addr %s421, 8
      %s425 = sadd.s32 %s423, %s424
      %s426 = scalar_lea.vmem %s6, %s425
      %p427 = scmp.lt.s32.totalorder %s23, 1
      %s428 = scalar_select %p427, %s23, 1
      %p429 = scmp.lt.s32.totalorder %s24, 7
      %s430 = scalar_select %p429, %s24, 7
      %s431 = smul.addr %s428, 8
      %s432 = sadd.s32 %s430, %s431
      %s433 = scalar_lea.vmem %s7, %s432
      %v435 = vld [vmem:[%s388] sm:$0xf]
      %v436 = vld [vmem:[%s388 + $0x8] sm:$0xf]
      %v437 = vld [vmem:[%s388 + $0x10] sm:$0xf]
      %v438 = vld [vmem:[%s388 + $0x18] sm:$0xf]
      %v439 = vld [vmem:[%s388 + $0x20] sm:$0xf]
      %v440 = vld [vmem:[%s388 + $0x28] sm:$0xf]
      %v441 = vld [vmem:[%s388 + $0x30] sm:$0xf]
      %v442 = vld [vmem:[%s388 + $0x38] sm:$0xf]
      %v443 = vld [vmem:[%s388 + $0x4] sm:$0x1]
      %v444 = vld [vmem:[%s388 + $0xc] sm:$0x1]
      %v445 = vld [vmem:[%s388 + $0x14] sm:$0x1]
      %v446 = vld [vmem:[%s388 + $0x1c] sm:$0x1]
      %v447 = vld [vmem:[%s388 + $0x24] sm:$0x1]
      %v448 = vld [vmem:[%s388 + $0x2c] sm:$0x1]
      %v449 = vld [vmem:[%s388 + $0x34] sm:$0x1]
      %v450 = vld [vmem:[%s388 + $0x3c] sm:$0x1]
      %v451 = vld [vmem:[%s388] sm:$0xe]
      %v452 = vld [vmem:[%s388 + $0x8] sm:$0xe]
      %v453 = vld [vmem:[%s388 + $0x10] sm:$0xe]
      %v454 = vld [vmem:[%s388 + $0x18] sm:$0xe]
      %v455 = vld [vmem:[%s388 + $0x20] sm:$0xe]
      %v456 = vld [vmem:[%s388 + $0x28] sm:$0xe]
      %v457 = vld [vmem:[%s388 + $0x30] sm:$0xe]
      %v458 = vld [vmem:[%s388 + $0x38] sm:$0xe]
      %s459 = scalar_lea.vmem %s388, 8
      %v460 = vld [vmem:[%s459] sm:$0xf]
      %v461 = vld [vmem:[%s459 + $0x8] sm:$0xf]
      %v462 = vld [vmem:[%s459 + $0x10] sm:$0xf]
      %v463 = vld [vmem:[%s459 + $0x18] sm:$0xf]
      %v464 = vld [vmem:[%s459 + $0x20] sm:$0xf]
      %v465 = vld [vmem:[%s459 + $0x28] sm:$0xf]
      %v466 = vld [vmem:[%s459 + $0x30] sm:$0xf]
      %v467 = vld [vmem:[%s459 + $0x38] sm:$0xf]
      %v468 = vld [vmem:[%s459 + $0x4] sm:$0x1]
      %v469 = vld [vmem:[%s459 + $0xc] sm:$0x1]
      %v470 = vld [vmem:[%s459 + $0x14] sm:$0x1]
      %v471 = vld [vmem:[%s459 + $0x1c] sm:$0x1]
      %v472 = vld [vmem:[%s459 + $0x24] sm:$0x1]
      %v473 = vld [vmem:[%s459 + $0x2c] sm:$0x1]
      %v474 = vld [vmem:[%s459 + $0x34] sm:$0x1]
      %v475 = vld [vmem:[%s459 + $0x3c] sm:$0x1]
      %v476 = vld [vmem:[%s459] sm:$0xe]
      %v477 = vld [vmem:[%s459 + $0x8] sm:$0xe]
      %v478 = vld [vmem:[%s459 + $0x10] sm:$0xe]
      %v479 = vld [vmem:[%s459 + $0x18] sm:$0xe]
      %v480 = vld [vmem:[%s459 + $0x20] sm:$0xe]
      %v481 = vld [vmem:[%s459 + $0x28] sm:$0xe]
      %v482 = vld [vmem:[%s459 + $0x30] sm:$0xe]
      %v483 = vld [vmem:[%s459 + $0x38] sm:$0xe]
      %s484 = scalar_lea.vmem %s388, 16
      %v485 = vld [vmem:[%s484] sm:$0xf]
      %v486 = vld [vmem:[%s484 + $0x8] sm:$0xf]
      %v487 = vld [vmem:[%s484 + $0x10] sm:$0xf]
      %v488 = vld [vmem:[%s484 + $0x18] sm:$0xf]
      %v489 = vld [vmem:[%s484 + $0x20] sm:$0xf]
      %v490 = vld [vmem:[%s484 + $0x28] sm:$0xf]
      %v491 = vld [vmem:[%s484 + $0x30] sm:$0xf]
      %v492 = vld [vmem:[%s484 + $0x38] sm:$0xf]
      %v493 = vld [vmem:[%s484 + $0x4] sm:$0x1]
      %v494 = vld [vmem:[%s484 + $0xc] sm:$0x1]
      %v495 = vld [vmem:[%s484 + $0x14] sm:$0x1]
      %v496 = vld [vmem:[%s484 + $0x1c] sm:$0x1]
      %v497 = vld [vmem:[%s484 + $0x24] sm:$0x1]
      %v498 = vld [vmem:[%s484 + $0x2c] sm:$0x1]
      %v499 = vld [vmem:[%s484 + $0x34] sm:$0x1]
      %v500 = vld [vmem:[%s484 + $0x3c] sm:$0x1]
      %v501 = vld [vmem:[%s484] sm:$0xe]
      %v502 = vld [vmem:[%s484 + $0x8] sm:$0xe]
      %v503 = vld [vmem:[%s484 + $0x10] sm:$0xe]
      %v504 = vld [vmem:[%s484 + $0x18] sm:$0xe]
      %v505 = vld [vmem:[%s484 + $0x20] sm:$0xe]
      %v506 = vld [vmem:[%s484 + $0x28] sm:$0xe]
      %v507 = vld [vmem:[%s484 + $0x30] sm:$0xe]
      %v508 = vld [vmem:[%s484 + $0x38] sm:$0xe]
      %v509 = vld [vmem:[%s398] sm:$0xf]
      %v510 = vld [vmem:[%s398 + $0x8] sm:$0xf]
      %v511 = vld [vmem:[%s398 + $0x10] sm:$0xf]
      %v512 = vld [vmem:[%s398 + $0x18] sm:$0xf]
      %v513 = vld [vmem:[%s398 + $0x20] sm:$0xf]
      %v514 = vld [vmem:[%s398 + $0x28] sm:$0xf]
      %v515 = vld [vmem:[%s398 + $0x30] sm:$0xf]
      %v516 = vld [vmem:[%s398 + $0x38] sm:$0xf]
      %v517 = vld [vmem:[%s398 + $0x4] sm:$0x1]
      %v518 = vld [vmem:[%s398 + $0xc] sm:$0x1]
      %v519 = vld [vmem:[%s398 + $0x14] sm:$0x1]
      %v520 = vld [vmem:[%s398 + $0x1c] sm:$0x1]
      %v521 = vld [vmem:[%s398 + $0x24] sm:$0x1]
      %v522 = vld [vmem:[%s398 + $0x2c] sm:$0x1]
      %v523 = vld [vmem:[%s398 + $0x34] sm:$0x1]
      %v524 = vld [vmem:[%s398 + $0x3c] sm:$0x1]
      %v525 = vld [vmem:[%s398] sm:$0xe]
      %v526 = vld [vmem:[%s398 + $0x8] sm:$0xe]
      %v527 = vld [vmem:[%s398 + $0x10] sm:$0xe]
      %v528 = vld [vmem:[%s398 + $0x18] sm:$0xe]
      %v529 = vld [vmem:[%s398 + $0x20] sm:$0xe]
      %v530 = vld [vmem:[%s398 + $0x28] sm:$0xe]
      %v531 = vld [vmem:[%s398 + $0x30] sm:$0xe]
      %v532 = vld [vmem:[%s398 + $0x38] sm:$0xe]
      %s533 = scalar_lea.vmem %s398, 8
      %v534 = vld [vmem:[%s533] sm:$0xf]
      %v535 = vld [vmem:[%s533 + $0x8] sm:$0xf]
      %v536 = vld [vmem:[%s533 + $0x10] sm:$0xf]
      %v537 = vld [vmem:[%s533 + $0x18] sm:$0xf]
      %v538 = vld [vmem:[%s533 + $0x20] sm:$0xf]
      %v539 = vld [vmem:[%s533 + $0x28] sm:$0xf]
      %v540 = vld [vmem:[%s533 + $0x30] sm:$0xf]
      %v541 = vld [vmem:[%s533 + $0x38] sm:$0xf]
      %v542 = vld [vmem:[%s533 + $0x4] sm:$0x1]
      %v543 = vld [vmem:[%s533 + $0xc] sm:$0x1]
      %v544 = vld [vmem:[%s533 + $0x14] sm:$0x1]
      %v545 = vld [vmem:[%s533 + $0x1c] sm:$0x1]
      %v546 = vld [vmem:[%s533 + $0x24] sm:$0x1]
      %v547 = vld [vmem:[%s533 + $0x2c] sm:$0x1]
      %v548 = vld [vmem:[%s533 + $0x34] sm:$0x1]
      %v549 = vld [vmem:[%s533 + $0x3c] sm:$0x1]
      %v550 = vld [vmem:[%s533] sm:$0xe]
      %v551 = vld [vmem:[%s533 + $0x8] sm:$0xe]
      %v552 = vld [vmem:[%s533 + $0x10] sm:$0xe]
      %v553 = vld [vmem:[%s533 + $0x18] sm:$0xe]
      %v554 = vld [vmem:[%s533 + $0x20] sm:$0xe]
      %v555 = vld [vmem:[%s533 + $0x28] sm:$0xe]
      %v556 = vld [vmem:[%s533 + $0x30] sm:$0xe]
      %v557 = vld [vmem:[%s533 + $0x38] sm:$0xe]
      %s558 = scalar_lea.vmem %s398, 16
      %v559 = vld [vmem:[%s558] sm:$0xf]
      %v560 = vld [vmem:[%s558 + $0x8] sm:$0xf]
      %v561 = vld [vmem:[%s558 + $0x10] sm:$0xf]
      %v562 = vld [vmem:[%s558 + $0x18] sm:$0xf]
      %v563 = vld [vmem:[%s558 + $0x20] sm:$0xf]
      %v564 = vld [vmem:[%s558 + $0x28] sm:$0xf]
      %v565 = vld [vmem:[%s558 + $0x30] sm:$0xf]
      %v566 = vld [vmem:[%s558 + $0x38] sm:$0xf]
      %v567 = vld [vmem:[%s558 + $0x4] sm:$0x1]
      %v568 = vld [vmem:[%s558 + $0xc] sm:$0x1]
      %v569 = vld [vmem:[%s558 + $0x14] sm:$0x1]
      %v570 = vld [vmem:[%s558 + $0x1c] sm:$0x1]
      %v571 = vld [vmem:[%s558 + $0x24] sm:$0x1]
      %v572 = vld [vmem:[%s558 + $0x2c] sm:$0x1]
      %v573 = vld [vmem:[%s558 + $0x34] sm:$0x1]
      %v574 = vld [vmem:[%s558 + $0x3c] sm:$0x1]
      %v575 = vld [vmem:[%s558] sm:$0xe]
      %v576 = vld [vmem:[%s558 + $0x8] sm:$0xe]
      %v577 = vld [vmem:[%s558 + $0x10] sm:$0xe]
      %v578 = vld [vmem:[%s558 + $0x18] sm:$0xe]
      %v579 = vld [vmem:[%s558 + $0x20] sm:$0xe]
      %v580 = vld [vmem:[%s558 + $0x28] sm:$0xe]
      %v581 = vld [vmem:[%s558 + $0x30] sm:$0xe]
      %v582 = vld [vmem:[%s558 + $0x38] sm:$0xe]
      %v583 = vld [vmem:[%s409] sm:$0xf]
      %v584 = vld [vmem:[%s409 + $0x8] sm:$0xf]
      %v585 = vld [vmem:[%s409 + $0x10] sm:$0xf]
      %v586 = vld [vmem:[%s409 + $0x18] sm:$0xf]
      %v587 = vld [vmem:[%s409 + $0x20] sm:$0xf]
      %v588 = vld [vmem:[%s409 + $0x28] sm:$0xf]
      %v589 = vld [vmem:[%s409 + $0x30] sm:$0xf]
      %v590 = vld [vmem:[%s409 + $0x38] sm:$0xf]
      %v591 = vld [vmem:[%s409 + $0x4] sm:$0x1]
      %v592 = vld [vmem:[%s409 + $0xc] sm:$0x1]
      %v593 = vld [vmem:[%s409 + $0x14] sm:$0x1]
      %v594 = vld [vmem:[%s409 + $0x1c] sm:$0x1]
      %v595 = vld [vmem:[%s409 + $0x24] sm:$0x1]
      %v596 = vld [vmem:[%s409 + $0x2c] sm:$0x1]
      %v597 = vld [vmem:[%s409 + $0x34] sm:$0x1]
      %v598 = vld [vmem:[%s409 + $0x3c] sm:$0x1]
      %v599 = vld [vmem:[%s409] sm:$0xe]
      %v600 = vld [vmem:[%s409 + $0x8] sm:$0xe]
      %v601 = vld [vmem:[%s409 + $0x10] sm:$0xe]
      %v602 = vld [vmem:[%s409 + $0x18] sm:$0xe]
      %v603 = vld [vmem:[%s409 + $0x20] sm:$0xe]
      %v604 = vld [vmem:[%s409 + $0x28] sm:$0xe]
      %v605 = vld [vmem:[%s409 + $0x30] sm:$0xe]
      %v606 = vld [vmem:[%s409 + $0x38] sm:$0xe]
      %s607 = scalar_lea.vmem %s409, 8
      %v608 = vld [vmem:[%s607] sm:$0xf]
      %v609 = vld [vmem:[%s607 + $0x8] sm:$0xf]
      %v610 = vld [vmem:[%s607 + $0x10] sm:$0xf]
      %v611 = vld [vmem:[%s607 + $0x18] sm:$0xf]
      %v612 = vld [vmem:[%s607 + $0x20] sm:$0xf]
      %v613 = vld [vmem:[%s607 + $0x28] sm:$0xf]
      %v614 = vld [vmem:[%s607 + $0x30] sm:$0xf]
      %v615 = vld [vmem:[%s607 + $0x38] sm:$0xf]
      %v616 = vld [vmem:[%s607 + $0x4] sm:$0x1]
      %v617 = vld [vmem:[%s607 + $0xc] sm:$0x1]
      %v618 = vld [vmem:[%s607 + $0x14] sm:$0x1]
      %v619 = vld [vmem:[%s607 + $0x1c] sm:$0x1]
      %v620 = vld [vmem:[%s607 + $0x24] sm:$0x1]
      %v621 = vld [vmem:[%s607 + $0x2c] sm:$0x1]
      %v622 = vld [vmem:[%s607 + $0x34] sm:$0x1]
      %v623 = vld [vmem:[%s607 + $0x3c] sm:$0x1]
      %v624 = vld [vmem:[%s607] sm:$0xe]
      %v625 = vld [vmem:[%s607 + $0x8] sm:$0xe]
      %v626 = vld [vmem:[%s607 + $0x10] sm:$0xe]
      %v627 = vld [vmem:[%s607 + $0x18] sm:$0xe]
      %v628 = vld [vmem:[%s607 + $0x20] sm:$0xe]
      %v629 = vld [vmem:[%s607 + $0x28] sm:$0xe]
      %v630 = vld [vmem:[%s607 + $0x30] sm:$0xe]
      %v631 = vld [vmem:[%s607 + $0x38] sm:$0xe]
      %s632 = scalar_lea.vmem %s409, 16
      %v633 = vld [vmem:[%s632] sm:$0xf]
      %v634 = vld [vmem:[%s632 + $0x8] sm:$0xf]
      %v635 = vld [vmem:[%s632 + $0x10] sm:$0xf]
      %v636 = vld [vmem:[%s632 + $0x18] sm:$0xf]
      %v637 = vld [vmem:[%s632 + $0x20] sm:$0xf]
      %v638 = vld [vmem:[%s632 + $0x28] sm:$0xf]
      %v639 = vld [vmem:[%s632 + $0x30] sm:$0xf]
      %v640 = vld [vmem:[%s632 + $0x38] sm:$0xf]
      %v641 = vld [vmem:[%s632 + $0x4] sm:$0x1]
      %v642 = vld [vmem:[%s632 + $0xc] sm:$0x1]
      %v643 = vld [vmem:[%s632 + $0x14] sm:$0x1]
      %v644 = vld [vmem:[%s632 + $0x1c] sm:$0x1]
      %v645 = vld [vmem:[%s632 + $0x24] sm:$0x1]
      %v646 = vld [vmem:[%s632 + $0x2c] sm:$0x1]
      %v647 = vld [vmem:[%s632 + $0x34] sm:$0x1]
      %v648 = vld [vmem:[%s632 + $0x3c] sm:$0x1]
      %v649 = vld [vmem:[%s632] sm:$0xe]
      %v650 = vld [vmem:[%s632 + $0x8] sm:$0xe]
      %v651 = vld [vmem:[%s632 + $0x10] sm:$0xe]
      %v652 = vld [vmem:[%s632 + $0x18] sm:$0xe]
      %v653 = vld [vmem:[%s632 + $0x20] sm:$0xe]
      %v654 = vld [vmem:[%s632 + $0x28] sm:$0xe]
      %v655 = vld [vmem:[%s632 + $0x30] sm:$0xe]
      %v656 = vld [vmem:[%s632 + $0x38] sm:$0xe]
      %v673 = vunpack.c.l.b16 %v435
      %v674 = vunpack.c.l.b16 %v443
      %v675 = vunpack.c.l.b16 %v436
      %v676 = vunpack.c.l.b16 %v444
      %v677 = vunpack.c.l.b16 %v437
      %v678 = vunpack.c.l.b16 %v445
      %v679 = vunpack.c.l.b16 %v438
      %v680 = vunpack.c.l.b16 %v446
      %v681 = vunpack.c.l.b16 %v439
      %v682 = vunpack.c.l.b16 %v447
      %v683 = vunpack.c.l.b16 %v440
      %v684 = vunpack.c.l.b16 %v448
      %v685 = vunpack.c.l.b16 %v441
      %v686 = vunpack.c.l.b16 %v449
      %v687 = vunpack.c.l.b16 %v442
      %v688 = vunpack.c.l.b16 %v450
      %v689 = vpack.c.b16 %v674, %v673
      %v690 = vpack.c.b16 %v676, %v675
      %v691 = vpack.c.b16 %v678, %v677
      %v692 = vpack.c.b16 %v680, %v679
      %v693 = vpack.c.b16 %v682, %v681
      %v694 = vpack.c.b16 %v684, %v683
      %v695 = vpack.c.b16 %v686, %v685
      %v696 = vpack.c.b16 %v688, %v687
      %v698 = vshrl.u32 %v689, 16
      %v700 = vshll.u32 %v689, 16
      %v702 = vrot.slane %v700, 1
      %v703 = vor.u32 %v698, %v702
      %v705 = vshrl.u32 %v690, 16
      %v707 = vshll.u32 %v690, 16
      %v709 = vrot.slane %v707, 1
      %v710 = vor.u32 %v705, %v709
      %v712 = vshrl.u32 %v691, 16
      %v714 = vshll.u32 %v691, 16
      %v716 = vrot.slane %v714, 1
      %v717 = vor.u32 %v712, %v716
      %v719 = vshrl.u32 %v692, 16
      %v721 = vshll.u32 %v692, 16
      %v723 = vrot.slane %v721, 1
      %v724 = vor.u32 %v719, %v723
      %v726 = vshrl.u32 %v693, 16
      %v728 = vshll.u32 %v693, 16
      %v730 = vrot.slane %v728, 1
      %v731 = vor.u32 %v726, %v730
      %v733 = vshrl.u32 %v694, 16
      %v735 = vshll.u32 %v694, 16
      %v737 = vrot.slane %v735, 1
      %v738 = vor.u32 %v733, %v737
      %v740 = vshrl.u32 %v695, 16
      %v742 = vshll.u32 %v695, 16
      %v744 = vrot.slane %v742, 1
      %v745 = vor.u32 %v740, %v744
      %v747 = vshrl.u32 %v696, 16
      %v749 = vshll.u32 %v696, 16
      %v751 = vrot.slane %v749, 1
      %v752 = vor.u32 %v747, %v751
      %753 = vrot.lane.b32.xlu0 %v703, 12
      %v754 = vpop.permute.xlu0 %753
      %755 = vrot.lane.b32.xlu0 %v710, 12
      %v756 = vpop.permute.xlu0 %755
      %757 = vrot.lane.b32.xlu0 %v717, 12
      %v758 = vpop.permute.xlu0 %757
      %759 = vrot.lane.b32.xlu0 %v724, 12
      %v760 = vpop.permute.xlu0 %759
      %761 = vrot.lane.b32.xlu0 %v731, 12
      %v762 = vpop.permute.xlu0 %761
      %763 = vrot.lane.b32.xlu0 %v738, 12
      %v764 = vpop.permute.xlu0 %763
      %765 = vrot.lane.b32.xlu0 %v745, 12
      %v766 = vpop.permute.xlu0 %765
      %767 = vrot.lane.b32.xlu0 %v752, 12
      %v768 = vpop.permute.xlu0 %767
      %v777 = vunpack.c.l.b16 %v451
      %v778 = vunpack.c.l.b16 %v452
      %v779 = vunpack.c.l.b16 %v453
      %v780 = vunpack.c.l.b16 %v454
      %v781 = vunpack.c.l.b16 %v455
      %v782 = vunpack.c.l.b16 %v456
      %v783 = vunpack.c.l.b16 %v457
      %v784 = vunpack.c.l.b16 %v458
      %v785 = vpack.c.b16 %v674, %v777
      %v786 = vpack.c.b16 %v676, %v778
      %v787 = vpack.c.b16 %v678, %v779
      %v788 = vpack.c.b16 %v680, %v780
      %v789 = vpack.c.b16 %v682, %v781
      %v790 = vpack.c.b16 %v684, %v782
      %v791 = vpack.c.b16 %v686, %v783
      %v792 = vpack.c.b16 %v688, %v784
      %v793 = vrot.slane %v785, 1
      %v794 = vrot.slane %v786, 1
      %v795 = vrot.slane %v787, 1
      %v796 = vrot.slane %v788, 1
      %v797 = vrot.slane %v789, 1
      %v798 = vrot.slane %v790, 1
      %v799 = vrot.slane %v791, 1
      %v800 = vrot.slane %v792, 1
      %801 = vrot.lane.b32.xlu0 %v793, 24
      %v802 = vpop.permute.xlu0 %801
      %803 = vrot.lane.b32.xlu0 %v794, 24
      %v804 = vpop.permute.xlu0 %803
      %805 = vrot.lane.b32.xlu0 %v795, 24
      %v806 = vpop.permute.xlu0 %805
      %807 = vrot.lane.b32.xlu0 %v796, 24
      %v808 = vpop.permute.xlu0 %807
      %809 = vrot.lane.b32.xlu0 %v797, 24
      %v810 = vpop.permute.xlu0 %809
      %811 = vrot.lane.b32.xlu0 %v798, 24
      %v812 = vpop.permute.xlu0 %811
      %813 = vrot.lane.b32.xlu0 %v799, 24
      %v814 = vpop.permute.xlu0 %813
      %815 = vrot.lane.b32.xlu0 %v800, 24
      %v816 = vpop.permute.xlu0 %815
      %v825 = vunpack.c.l.b16 %v460
      %v826 = vunpack.c.l.b16 %v461
      %v827 = vunpack.c.l.b16 %v462
      %v828 = vunpack.c.l.b16 %v463
      %v829 = vunpack.c.l.b16 %v464
      %v830 = vunpack.c.l.b16 %v465
      %v831 = vunpack.c.l.b16 %v466
      %v832 = vunpack.c.l.b16 %v467
      %v833 = vpack.c.b16 %v825, %v825
      %v834 = vpack.c.b16 %v826, %v826
      %v835 = vpack.c.b16 %v827, %v827
      %v836 = vpack.c.b16 %v828, %v828
      %v837 = vpack.c.b16 %v829, %v829
      %v838 = vpack.c.b16 %v830, %v830
      %v839 = vpack.c.b16 %v831, %v831
      %v840 = vpack.c.b16 %v832, %v832
      %841 = vrot.lane.b32.xlu0 %v833, 36
      %v842 = vpop.permute.xlu0 %841
      %843 = vrot.lane.b32.xlu0 %v834, 36
      %v844 = vpop.permute.xlu0 %843
      %845 = vrot.lane.b32.xlu0 %v835, 36
      %v846 = vpop.permute.xlu0 %845
      %847 = vrot.lane.b32.xlu0 %v836, 36
      %v848 = vpop.permute.xlu0 %847
      %849 = vrot.lane.b32.xlu0 %v837, 36
      %v850 = vpop.permute.xlu0 %849
      %851 = vrot.lane.b32.xlu0 %v838, 36
      %v852 = vpop.permute.xlu0 %851
      %853 = vrot.lane.b32.xlu0 %v839, 36
      %v854 = vpop.permute.xlu0 %853
      %855 = vrot.lane.b32.xlu0 %v840, 36
      %v856 = vpop.permute.xlu0 %855
      %v865 = vunpack.c.l.b16 %v468
      %v866 = vunpack.c.l.b16 %v469
      %v867 = vunpack.c.l.b16 %v470
      %v868 = vunpack.c.l.b16 %v471
      %v869 = vunpack.c.l.b16 %v472
      %v870 = vunpack.c.l.b16 %v473
      %v871 = vunpack.c.l.b16 %v474
      %v872 = vunpack.c.l.b16 %v475
      %v873 = vpack.c.b16 %v865, %v825
      %v874 = vpack.c.b16 %v866, %v826
      %v875 = vpack.c.b16 %v867, %v827
      %v876 = vpack.c.b16 %v868, %v828
      %v877 = vpack.c.b16 %v869, %v829
      %v878 = vpack.c.b16 %v870, %v830
      %v879 = vpack.c.b16 %v871, %v831
      %v880 = vpack.c.b16 %v872, %v832
      %v882 = vshrl.u32 %v873, 16
      %v884 = vshll.u32 %v873, 16
      %v886 = vrot.slane %v884, 1
      %v887 = vor.u32 %v882, %v886
      %v889 = vshrl.u32 %v874, 16
      %v891 = vshll.u32 %v874, 16
      %v893 = vrot.slane %v891, 1
      %v894 = vor.u32 %v889, %v893
      %v896 = vshrl.u32 %v875, 16
      %v898 = vshll.u32 %v875, 16
      %v900 = vrot.slane %v898, 1
      %v901 = vor.u32 %v896, %v900
      %v903 = vshrl.u32 %v876, 16
      %v905 = vshll.u32 %v876, 16
      %v907 = vrot.slane %v905, 1
      %v908 = vor.u32 %v903, %v907
      %v910 = vshrl.u32 %v877, 16
      %v912 = vshll.u32 %v877, 16
      %v914 = vrot.slane %v912, 1
      %v915 = vor.u32 %v910, %v914
      %v917 = vshrl.u32 %v878, 16
      %v919 = vshll.u32 %v878, 16
      %v921 = vrot.slane %v919, 1
      %v922 = vor.u32 %v917, %v921
      %v924 = vshrl.u32 %v879, 16
      %v926 = vshll.u32 %v879, 16
      %v928 = vrot.slane %v926, 1
      %v929 = vor.u32 %v924, %v928
      %v931 = vshrl.u32 %v880, 16
      %v933 = vshll.u32 %v880, 16
      %v935 = vrot.slane %v933, 1
      %v936 = vor.u32 %v931, %v935
      %937 = vrot.lane.b32.xlu0 %v887, 48
      %v938 = vpop.permute.xlu0 %937
      %939 = vrot.lane.b32.xlu0 %v894, 48
      %v940 = vpop.permute.xlu0 %939
      %941 = vrot.lane.b32.xlu0 %v901, 48
      %v942 = vpop.permute.xlu0 %941
      %943 = vrot.lane.b32.xlu0 %v908, 48
      %v944 = vpop.permute.xlu0 %943
      %945 = vrot.lane.b32.xlu0 %v915, 48
      %v946 = vpop.permute.xlu0 %945
      %947 = vrot.lane.b32.xlu0 %v922, 48
      %v948 = vpop.permute.xlu0 %947
      %949 = vrot.lane.b32.xlu0 %v929, 48
      %v950 = vpop.permute.xlu0 %949
      %951 = vrot.lane.b32.xlu0 %v936, 48
      %v952 = vpop.permute.xlu0 %951
      %v961 = vunpack.c.l.b16 %v476
      %v962 = vunpack.c.l.b16 %v477
      %v963 = vunpack.c.l.b16 %v478
      %v964 = vunpack.c.l.b16 %v479
      %v965 = vunpack.c.l.b16 %v480
      %v966 = vunpack.c.l.b16 %v481
      %v967 = vunpack.c.l.b16 %v482
      %v968 = vunpack.c.l.b16 %v483
      %v969 = vpack.c.b16 %v865, %v961
      %v970 = vpack.c.b16 %v866, %v962
      %v971 = vpack.c.b16 %v867, %v963
      %v972 = vpack.c.b16 %v868, %v964
      %v973 = vpack.c.b16 %v869, %v965
      %v974 = vpack.c.b16 %v870, %v966
      %v975 = vpack.c.b16 %v871, %v967
      %v976 = vpack.c.b16 %v872, %v968
      %v977 = vrot.slane %v969, 1
      %v978 = vrot.slane %v970, 1
      %v979 = vrot.slane %v971, 1
      %v980 = vrot.slane %v972, 1
      %v981 = vrot.slane %v973, 1
      %v982 = vrot.slane %v974, 1
      %v983 = vrot.slane %v975, 1
      %v984 = vrot.slane %v976, 1
      %985 = vrot.lane.b32.xlu0 %v977, 60
      %v986 = vpop.permute.xlu0 %985
      %987 = vrot.lane.b32.xlu0 %v978, 60
      %v988 = vpop.permute.xlu0 %987
      %989 = vrot.lane.b32.xlu0 %v979, 60
      %v990 = vpop.permute.xlu0 %989
      %991 = vrot.lane.b32.xlu0 %v980, 60
      %v992 = vpop.permute.xlu0 %991
      %993 = vrot.lane.b32.xlu0 %v981, 60
      %v994 = vpop.permute.xlu0 %993
      %995 = vrot.lane.b32.xlu0 %v982, 60
      %v996 = vpop.permute.xlu0 %995
      %997 = vrot.lane.b32.xlu0 %v983, 60
      %v998 = vpop.permute.xlu0 %997
      %999 = vrot.lane.b32.xlu0 %v984, 60
      %v1000 = vpop.permute.xlu0 %999
      %v1009 = vunpack.c.l.b16 %v485
      %v1010 = vunpack.c.l.b16 %v486
      %v1011 = vunpack.c.l.b16 %v487
      %v1012 = vunpack.c.l.b16 %v488
      %v1013 = vunpack.c.l.b16 %v489
      %v1014 = vunpack.c.l.b16 %v490
      %v1015 = vunpack.c.l.b16 %v491
      %v1016 = vunpack.c.l.b16 %v492
      %v1017 = vpack.c.b16 %v1009, %v1009
      %v1018 = vpack.c.b16 %v1010, %v1010
      %v1019 = vpack.c.b16 %v1011, %v1011
      %v1020 = vpack.c.b16 %v1012, %v1012
      %v1021 = vpack.c.b16 %v1013, %v1013
      %v1022 = vpack.c.b16 %v1014, %v1014
      %v1023 = vpack.c.b16 %v1015, %v1015
      %v1024 = vpack.c.b16 %v1016, %v1016
      %1025 = vrot.lane.b32.xlu0 %v1017, 72
      %v1026 = vpop.permute.xlu0 %1025
      %1027 = vrot.lane.b32.xlu0 %v1018, 72
      %v1028 = vpop.permute.xlu0 %1027
      %1029 = vrot.lane.b32.xlu0 %v1019, 72
      %v1030 = vpop.permute.xlu0 %1029
      %1031 = vrot.lane.b32.xlu0 %v1020, 72
      %v1032 = vpop.permute.xlu0 %1031
      %1033 = vrot.lane.b32.xlu0 %v1021, 72
      %v1034 = vpop.permute.xlu0 %1033
      %1035 = vrot.lane.b32.xlu0 %v1022, 72
      %v1036 = vpop.permute.xlu0 %1035
      %1037 = vrot.lane.b32.xlu0 %v1023, 72
      %v1038 = vpop.permute.xlu0 %1037
      %1039 = vrot.lane.b32.xlu0 %v1024, 72
      %v1040 = vpop.permute.xlu0 %1039
      %v1049 = vunpack.c.l.b16 %v493
      %v1050 = vunpack.c.l.b16 %v494
      %v1051 = vunpack.c.l.b16 %v495
      %v1052 = vunpack.c.l.b16 %v496
      %v1053 = vunpack.c.l.b16 %v497
      %v1054 = vunpack.c.l.b16 %v498
      %v1055 = vunpack.c.l.b16 %v499
      %v1056 = vunpack.c.l.b16 %v500
      %v1057 = vpack.c.b16 %v1049, %v1009
      %v1058 = vpack.c.b16 %v1050, %v1010
      %v1059 = vpack.c.b16 %v1051, %v1011
      %v1060 = vpack.c.b16 %v1052, %v1012
      %v1061 = vpack.c.b16 %v1053, %v1013
      %v1062 = vpack.c.b16 %v1054, %v1014
      %v1063 = vpack.c.b16 %v1055, %v1015
      %v1064 = vpack.c.b16 %v1056, %v1016
      %v1066 = vshrl.u32 %v1057, 16
      %v1068 = vshll.u32 %v1057, 16
      %v1070 = vrot.slane %v1068, 1
      %v1071 = vor.u32 %v1066, %v1070
      %v1073 = vshrl.u32 %v1058, 16
      %v1075 = vshll.u32 %v1058, 16
      %v1077 = vrot.slane %v1075, 1
      %v1078 = vor.u32 %v1073, %v1077
      %v1080 = vshrl.u32 %v1059, 16
      %v1082 = vshll.u32 %v1059, 16
      %v1084 = vrot.slane %v1082, 1
      %v1085 = vor.u32 %v1080, %v1084
      %v1087 = vshrl.u32 %v1060, 16
      %v1089 = vshll.u32 %v1060, 16
      %v1091 = vrot.slane %v1089, 1
      %v1092 = vor.u32 %v1087, %v1091
      %v1094 = vshrl.u32 %v1061, 16
      %v1096 = vshll.u32 %v1061, 16
      %v1098 = vrot.slane %v1096, 1
      %v1099 = vor.u32 %v1094, %v1098
      %v1101 = vshrl.u32 %v1062, 16
      %v1103 = vshll.u32 %v1062, 16
      %v1105 = vrot.slane %v1103, 1
      %v1106 = vor.u32 %v1101, %v1105
      %v1108 = vshrl.u32 %v1063, 16
      %v1110 = vshll.u32 %v1063, 16
      %v1112 = vrot.slane %v1110, 1
      %v1113 = vor.u32 %v1108, %v1112
      %v1115 = vshrl.u32 %v1064, 16
      %v1117 = vshll.u32 %v1064, 16
      %v1119 = vrot.slane %v1117, 1
      %v1120 = vor.u32 %v1115, %v1119
      %1121 = vrot.lane.b32.xlu0 %v1071, 84
      %v1122 = vpop.permute.xlu0 %1121
      %1123 = vrot.lane.b32.xlu0 %v1078, 84
      %v1124 = vpop.permute.xlu0 %1123
      %1125 = vrot.lane.b32.xlu0 %v1085, 84
      %v1126 = vpop.permute.xlu0 %1125
      %1127 = vrot.lane.b32.xlu0 %v1092, 84
      %v1128 = vpop.permute.xlu0 %1127
      %1129 = vrot.lane.b32.xlu0 %v1099, 84
      %v1130 = vpop.permute.xlu0 %1129
      %1131 = vrot.lane.b32.xlu0 %v1106, 84
      %v1132 = vpop.permute.xlu0 %1131
      %1133 = vrot.lane.b32.xlu0 %v1113, 84
      %v1134 = vpop.permute.xlu0 %1133
      %1135 = vrot.lane.b32.xlu0 %v1120, 84
      %v1136 = vpop.permute.xlu0 %1135
      %v1145 = vunpack.c.l.b16 %v501
      %v1146 = vunpack.c.l.b16 %v502
      %v1147 = vunpack.c.l.b16 %v503
      %v1148 = vunpack.c.l.b16 %v504
      %v1149 = vunpack.c.l.b16 %v505
      %v1150 = vunpack.c.l.b16 %v506
      %v1151 = vunpack.c.l.b16 %v507
      %v1152 = vunpack.c.l.b16 %v508
      %v1153 = vpack.c.b16 %v1049, %v1145
      %v1154 = vpack.c.b16 %v1050, %v1146
      %v1155 = vpack.c.b16 %v1051, %v1147
      %v1156 = vpack.c.b16 %v1052, %v1148
      %v1157 = vpack.c.b16 %v1053, %v1149
      %v1158 = vpack.c.b16 %v1054, %v1150
      %v1159 = vpack.c.b16 %v1055, %v1151
      %v1160 = vpack.c.b16 %v1056, %v1152
      %v1161 = vrot.slane %v1153, 1
      %v1162 = vrot.slane %v1154, 1
      %v1163 = vrot.slane %v1155, 1
      %v1164 = vrot.slane %v1156, 1
      %v1165 = vrot.slane %v1157, 1
      %v1166 = vrot.slane %v1158, 1
      %v1167 = vrot.slane %v1159, 1
      %v1168 = vrot.slane %v1160, 1
      %1169 = vrot.lane.b32.xlu0 %v1161, 96
      %v1170 = vpop.permute.xlu0 %1169
      %1171 = vrot.lane.b32.xlu0 %v1162, 96
      %v1172 = vpop.permute.xlu0 %1171
      %1173 = vrot.lane.b32.xlu0 %v1163, 96
      %v1174 = vpop.permute.xlu0 %1173
      %1175 = vrot.lane.b32.xlu0 %v1164, 96
      %v1176 = vpop.permute.xlu0 %1175
      %1177 = vrot.lane.b32.xlu0 %v1165, 96
      %v1178 = vpop.permute.xlu0 %1177
      %1179 = vrot.lane.b32.xlu0 %v1166, 96
      %v1180 = vpop.permute.xlu0 %1179
      %1181 = vrot.lane.b32.xlu0 %v1167, 96
      %v1182 = vpop.permute.xlu0 %1181
      %1183 = vrot.lane.b32.xlu0 %v1168, 96
      %v1184 = vpop.permute.xlu0 %1183
      %v1193 = vunpack.c.l.b16 %v509
      %v1194 = vunpack.c.l.b16 %v510
      %v1195 = vunpack.c.l.b16 %v511
      %v1196 = vunpack.c.l.b16 %v512
      %v1197 = vunpack.c.l.b16 %v513
      %v1198 = vunpack.c.l.b16 %v514
      %v1199 = vunpack.c.l.b16 %v515
      %v1200 = vunpack.c.l.b16 %v516
      %v1201 = vpack.c.b16 %v1193, %v1193
      %v1202 = vpack.c.b16 %v1194, %v1194
      %v1203 = vpack.c.b16 %v1195, %v1195
      %v1204 = vpack.c.b16 %v1196, %v1196
      %v1205 = vpack.c.b16 %v1197, %v1197
      %v1206 = vpack.c.b16 %v1198, %v1198
      %v1207 = vpack.c.b16 %v1199, %v1199
      %v1208 = vpack.c.b16 %v1200, %v1200
      %1209 = vrot.lane.b32.xlu0 %v1201, 108
      %v1210 = vpop.permute.xlu0 %1209
      %1211 = vrot.lane.b32.xlu0 %v1202, 108
      %v1212 = vpop.permute.xlu0 %1211
      %1213 = vrot.lane.b32.xlu0 %v1203, 108
      %v1214 = vpop.permute.xlu0 %1213
      %1215 = vrot.lane.b32.xlu0 %v1204, 108
      %v1216 = vpop.permute.xlu0 %1215
      %1217 = vrot.lane.b32.xlu0 %v1205, 108
      %v1218 = vpop.permute.xlu0 %1217
      %1219 = vrot.lane.b32.xlu0 %v1206, 108
      %v1220 = vpop.permute.xlu0 %1219
      %1221 = vrot.lane.b32.xlu0 %v1207, 108
      %v1222 = vpop.permute.xlu0 %1221
      %1223 = vrot.lane.b32.xlu0 %v1208, 108
      %v1224 = vpop.permute.xlu0 %1223
      %v1233 = vunpack.c.l.b16 %v517
      %v1234 = vunpack.c.l.b16 %v518
      %v1235 = vunpack.c.l.b16 %v519
      %v1236 = vunpack.c.l.b16 %v520
      %v1237 = vunpack.c.l.b16 %v521
      %v1238 = vunpack.c.l.b16 %v522
      %v1239 = vunpack.c.l.b16 %v523
      %v1240 = vunpack.c.l.b16 %v524
      %v1241 = vpack.c.b16 %v1233, %v1193
      %v1242 = vpack.c.b16 %v1234, %v1194
      %v1243 = vpack.c.b16 %v1235, %v1195
      %v1244 = vpack.c.b16 %v1236, %v1196
      %v1245 = vpack.c.b16 %v1237, %v1197
      %v1246 = vpack.c.b16 %v1238, %v1198
      %v1247 = vpack.c.b16 %v1239, %v1199
      %v1248 = vpack.c.b16 %v1240, %v1200
      %v1250 = vshrl.u32 %v1241, 16
      %v1252 = vshll.u32 %v1241, 16
      %v1254 = vrot.slane %v1252, 1
      %v1255 = vor.u32 %v1250, %v1254
      %v1257 = vshrl.u32 %v1242, 16
      %v1259 = vshll.u32 %v1242, 16
      %v1261 = vrot.slane %v1259, 1
      %v1262 = vor.u32 %v1257, %v1261
      %v1264 = vshrl.u32 %v1243, 16
      %v1266 = vshll.u32 %v1243, 16
      %v1268 = vrot.slane %v1266, 1
      %v1269 = vor.u32 %v1264, %v1268
      %v1271 = vshrl.u32 %v1244, 16
      %v1273 = vshll.u32 %v1244, 16
      %v1275 = vrot.slane %v1273, 1
      %v1276 = vor.u32 %v1271, %v1275
      %v1278 = vshrl.u32 %v1245, 16
      %v1280 = vshll.u32 %v1245, 16
      %v1282 = vrot.slane %v1280, 1
      %v1283 = vor.u32 %v1278, %v1282
      %v1285 = vshrl.u32 %v1246, 16
      %v1287 = vshll.u32 %v1246, 16
      %v1289 = vrot.slane %v1287, 1
      %v1290 = vor.u32 %v1285, %v1289
      %v1292 = vshrl.u32 %v1247, 16
      %v1294 = vshll.u32 %v1247, 16
      %v1296 = vrot.slane %v1294, 1
      %v1297 = vor.u32 %v1292, %v1296
      %v1299 = vshrl.u32 %v1248, 16
      %v1301 = vshll.u32 %v1248, 16
      %v1303 = vrot.slane %v1301, 1
      %v1304 = vor.u32 %v1299, %v1303
      %1305 = vrot.lane.b32.xlu0 %v1255, 120
      %v1306 = vpop.permute.xlu0 %1305
      %1307 = vrot.lane.b32.xlu0 %v1262, 120
      %v1308 = vpop.permute.xlu0 %1307
      %1309 = vrot.lane.b32.xlu0 %v1269, 120
      %v1310 = vpop.permute.xlu0 %1309
      %1311 = vrot.lane.b32.xlu0 %v1276, 120
      %v1312 = vpop.permute.xlu0 %1311
      %1313 = vrot.lane.b32.xlu0 %v1283, 120
      %v1314 = vpop.permute.xlu0 %1313
      %1315 = vrot.lane.b32.xlu0 %v1290, 120
      %v1316 = vpop.permute.xlu0 %1315
      %1317 = vrot.lane.b32.xlu0 %v1297, 120
      %v1318 = vpop.permute.xlu0 %1317
      %1319 = vrot.lane.b32.xlu0 %v1304, 120
      %v1320 = vpop.permute.xlu0 %1319
      %v1329 = vunpack.c.l.b16 %v525
      %v1330 = vunpack.c.l.b16 %v526
      %v1331 = vunpack.c.l.b16 %v527
      %v1332 = vunpack.c.l.b16 %v528
      %v1333 = vunpack.c.l.b16 %v529
      %v1334 = vunpack.c.l.b16 %v530
      %v1335 = vunpack.c.l.b16 %v531
      %v1336 = vunpack.c.l.b16 %v532
      %v1337 = vpack.c.b16 %v1233, %v1329
      %v1338 = vpack.c.b16 %v1234, %v1330
      %v1339 = vpack.c.b16 %v1235, %v1331
      %v1340 = vpack.c.b16 %v1236, %v1332
      %v1341 = vpack.c.b16 %v1237, %v1333
      %v1342 = vpack.c.b16 %v1238, %v1334
      %v1343 = vpack.c.b16 %v1239, %v1335
      %v1344 = vpack.c.b16 %v1240, %v1336
      %v1345 = vrot.slane %v1337, 1
      %v1346 = vrot.slane %v1338, 1
      %v1347 = vrot.slane %v1339, 1
      %v1348 = vrot.slane %v1340, 1
      %v1349 = vrot.slane %v1341, 1
      %v1350 = vrot.slane %v1342, 1
      %v1351 = vrot.slane %v1343, 1
      %v1352 = vrot.slane %v1344, 1
      %1353 = vrot.lane.b32.xlu0 %v1345, 4
      %v1354 = vpop.permute.xlu0 %1353
      %1355 = vrot.lane.b32.xlu0 %v1346, 4
      %v1356 = vpop.permute.xlu0 %1355
      %1357 = vrot.lane.b32.xlu0 %v1347, 4
      %v1358 = vpop.permute.xlu0 %1357
      %1359 = vrot.lane.b32.xlu0 %v1348, 4
      %v1360 = vpop.permute.xlu0 %1359
      %1361 = vrot.lane.b32.xlu0 %v1349, 4
      %v1362 = vpop.permute.xlu0 %1361
      %1363 = vrot.lane.b32.xlu0 %v1350, 4
      %v1364 = vpop.permute.xlu0 %1363
      %1365 = vrot.lane.b32.xlu0 %v1351, 4
      %v1366 = vpop.permute.xlu0 %1365
      %1367 = vrot.lane.b32.xlu0 %v1352, 4
      %v1368 = vpop.permute.xlu0 %1367
      %v1377 = vunpack.c.l.b16 %v534
      %v1378 = vunpack.c.l.b16 %v535
      %v1379 = vunpack.c.l.b16 %v536
      %v1380 = vunpack.c.l.b16 %v537
      %v1381 = vunpack.c.l.b16 %v538
      %v1382 = vunpack.c.l.b16 %v539
      %v1383 = vunpack.c.l.b16 %v540
      %v1384 = vunpack.c.l.b16 %v541
      %v1385 = vpack.c.b16 %v1377, %v1377
      %v1386 = vpack.c.b16 %v1378, %v1378
      %v1387 = vpack.c.b16 %v1379, %v1379
      %v1388 = vpack.c.b16 %v1380, %v1380
      %v1389 = vpack.c.b16 %v1381, %v1381
      %v1390 = vpack.c.b16 %v1382, %v1382
      %v1391 = vpack.c.b16 %v1383, %v1383
      %v1392 = vpack.c.b16 %v1384, %v1384
      %1393 = vrot.lane.b32.xlu0 %v1385, 16
      %v1394 = vpop.permute.xlu0 %1393
      %1395 = vrot.lane.b32.xlu0 %v1386, 16
      %v1396 = vpop.permute.xlu0 %1395
      %1397 = vrot.lane.b32.xlu0 %v1387, 16
      %v1398 = vpop.permute.xlu0 %1397
      %1399 = vrot.lane.b32.xlu0 %v1388, 16
      %v1400 = vpop.permute.xlu0 %1399
      %1401 = vrot.lane.b32.xlu0 %v1389, 16
      %v1402 = vpop.permute.xlu0 %1401
      %1403 = vrot.lane.b32.xlu0 %v1390, 16
      %v1404 = vpop.permute.xlu0 %1403
      %1405 = vrot.lane.b32.xlu0 %v1391, 16
      %v1406 = vpop.permute.xlu0 %1405
      %1407 = vrot.lane.b32.xlu0 %v1392, 16
      %v1408 = vpop.permute.xlu0 %1407
      %v1417 = vunpack.c.l.b16 %v542
      %v1418 = vunpack.c.l.b16 %v543
      %v1419 = vunpack.c.l.b16 %v544
      %v1420 = vunpack.c.l.b16 %v545
      %v1421 = vunpack.c.l.b16 %v546
      %v1422 = vunpack.c.l.b16 %v547
      %v1423 = vunpack.c.l.b16 %v548
      %v1424 = vunpack.c.l.b16 %v549
      %v1425 = vpack.c.b16 %v1417, %v1377
      %v1426 = vpack.c.b16 %v1418, %v1378
      %v1427 = vpack.c.b16 %v1419, %v1379
      %v1428 = vpack.c.b16 %v1420, %v1380
      %v1429 = vpack.c.b16 %v1421, %v1381
      %v1430 = vpack.c.b16 %v1422, %v1382
      %v1431 = vpack.c.b16 %v1423, %v1383
      %v1432 = vpack.c.b16 %v1424, %v1384
      %v1434 = vshrl.u32 %v1425, 16
      %v1436 = vshll.u32 %v1425, 16
      %v1438 = vrot.slane %v1436, 1
      %v1439 = vor.u32 %v1434, %v1438
      %v1441 = vshrl.u32 %v1426, 16
      %v1443 = vshll.u32 %v1426, 16
      %v1445 = vrot.slane %v1443, 1
      %v1446 = vor.u32 %v1441, %v1445
      %v1448 = vshrl.u32 %v1427, 16
      %v1450 = vshll.u32 %v1427, 16
      %v1452 = vrot.slane %v1450, 1
      %v1453 = vor.u32 %v1448, %v1452
      %v1455 = vshrl.u32 %v1428, 16
      %v1457 = vshll.u32 %v1428, 16
      %v1459 = vrot.slane %v1457, 1
      %v1460 = vor.u32 %v1455, %v1459
      %v1462 = vshrl.u32 %v1429, 16
      %v1464 = vshll.u32 %v1429, 16
      %v1466 = vrot.slane %v1464, 1
      %v1467 = vor.u32 %v1462, %v1466
      %v1469 = vshrl.u32 %v1430, 16
      %v1471 = vshll.u32 %v1430, 16
      %v1473 = vrot.slane %v1471, 1
      %v1474 = vor.u32 %v1469, %v1473
      %v1476 = vshrl.u32 %v1431, 16
      %v1478 = vshll.u32 %v1431, 16
      %v1480 = vrot.slane %v1478, 1
      %v1481 = vor.u32 %v1476, %v1480
      %v1483 = vshrl.u32 %v1432, 16
      %v1485 = vshll.u32 %v1432, 16
      %v1487 = vrot.slane %v1485, 1
      %v1488 = vor.u32 %v1483, %v1487
      %1489 = vrot.lane.b32.xlu0 %v1439, 28
      %v1490 = vpop.permute.xlu0 %1489
      %1491 = vrot.lane.b32.xlu0 %v1446, 28
      %v1492 = vpop.permute.xlu0 %1491
      %1493 = vrot.lane.b32.xlu0 %v1453, 28
      %v1494 = vpop.permute.xlu0 %1493
      %1495 = vrot.lane.b32.xlu0 %v1460, 28
      %v1496 = vpop.permute.xlu0 %1495
      %1497 = vrot.lane.b32.xlu0 %v1467, 28
      %v1498 = vpop.permute.xlu0 %1497
      %1499 = vrot.lane.b32.xlu0 %v1474, 28
      %v1500 = vpop.permute.xlu0 %1499
      %1501 = vrot.lane.b32.xlu0 %v1481, 28
      %v1502 = vpop.permute.xlu0 %1501
      %1503 = vrot.lane.b32.xlu0 %v1488, 28
      %v1504 = vpop.permute.xlu0 %1503
      %v1513 = vunpack.c.l.b16 %v550
      %v1514 = vunpack.c.l.b16 %v551
      %v1515 = vunpack.c.l.b16 %v552
      %v1516 = vunpack.c.l.b16 %v553
      %v1517 = vunpack.c.l.b16 %v554
      %v1518 = vunpack.c.l.b16 %v555
      %v1519 = vunpack.c.l.b16 %v556
      %v1520 = vunpack.c.l.b16 %v557
      %v1521 = vpack.c.b16 %v1417, %v1513
      %v1522 = vpack.c.b16 %v1418, %v1514
      %v1523 = vpack.c.b16 %v1419, %v1515
      %v1524 = vpack.c.b16 %v1420, %v1516
      %v1525 = vpack.c.b16 %v1421, %v1517
      %v1526 = vpack.c.b16 %v1422, %v1518
      %v1527 = vpack.c.b16 %v1423, %v1519
      %v1528 = vpack.c.b16 %v1424, %v1520
      %v1529 = vrot.slane %v1521, 1
      %v1530 = vrot.slane %v1522, 1
      %v1531 = vrot.slane %v1523, 1
      %v1532 = vrot.slane %v1524, 1
      %v1533 = vrot.slane %v1525, 1
      %v1534 = vrot.slane %v1526, 1
      %v1535 = vrot.slane %v1527, 1
      %v1536 = vrot.slane %v1528, 1
      %1537 = vrot.lane.b32.xlu0 %v1529, 40
      %v1538 = vpop.permute.xlu0 %1537
      %1539 = vrot.lane.b32.xlu0 %v1530, 40
      %v1540 = vpop.permute.xlu0 %1539
      %1541 = vrot.lane.b32.xlu0 %v1531, 40
      %v1542 = vpop.permute.xlu0 %1541
      %1543 = vrot.lane.b32.xlu0 %v1532, 40
      %v1544 = vpop.permute.xlu0 %1543
      %1545 = vrot.lane.b32.xlu0 %v1533, 40
      %v1546 = vpop.permute.xlu0 %1545
      %1547 = vrot.lane.b32.xlu0 %v1534, 40
      %v1548 = vpop.permute.xlu0 %1547
      %1549 = vrot.lane.b32.xlu0 %v1535, 40
      %v1550 = vpop.permute.xlu0 %1549
      %1551 = vrot.lane.b32.xlu0 %v1536, 40
      %v1552 = vpop.permute.xlu0 %1551
      %v1561 = vunpack.c.l.b16 %v559
      %v1562 = vunpack.c.l.b16 %v560
      %v1563 = vunpack.c.l.b16 %v561
      %v1564 = vunpack.c.l.b16 %v562
      %v1565 = vunpack.c.l.b16 %v563
      %v1566 = vunpack.c.l.b16 %v564
      %v1567 = vunpack.c.l.b16 %v565
      %v1568 = vunpack.c.l.b16 %v566
      %v1569 = vpack.c.b16 %v1561, %v1561
      %v1570 = vpack.c.b16 %v1562, %v1562
      %v1571 = vpack.c.b16 %v1563, %v1563
      %v1572 = vpack.c.b16 %v1564, %v1564
      %v1573 = vpack.c.b16 %v1565, %v1565
      %v1574 = vpack.c.b16 %v1566, %v1566
      %v1575 = vpack.c.b16 %v1567, %v1567
      %v1576 = vpack.c.b16 %v1568, %v1568
      %1577 = vrot.lane.b32.xlu0 %v1569, 52
      %v1578 = vpop.permute.xlu0 %1577
      %1579 = vrot.lane.b32.xlu0 %v1570, 52
      %v1580 = vpop.permute.xlu0 %1579
      %1581 = vrot.lane.b32.xlu0 %v1571, 52
      %v1582 = vpop.permute.xlu0 %1581
      %1583 = vrot.lane.b32.xlu0 %v1572, 52
      %v1584 = vpop.permute.xlu0 %1583
      %1585 = vrot.lane.b32.xlu0 %v1573, 52
      %v1586 = vpop.permute.xlu0 %1585
      %1587 = vrot.lane.b32.xlu0 %v1574, 52
      %v1588 = vpop.permute.xlu0 %1587
      %1589 = vrot.lane.b32.xlu0 %v1575, 52
      %v1590 = vpop.permute.xlu0 %1589
      %1591 = vrot.lane.b32.xlu0 %v1576, 52
      %v1592 = vpop.permute.xlu0 %1591
      %vm1593 = vcmask 97280
      %v1596 = vsel %vm1593, %v435, %v754
      %v1599 = vsel %vm1593, %v436, %v756
      %v1602 = vsel %vm1593, %v437, %v758
      %v1605 = vsel %vm1593, %v438, %v760
      %v1608 = vsel %vm1593, %v439, %v762
      %v1611 = vsel %vm1593, %v440, %v764
      %v1614 = vsel %vm1593, %v441, %v766
      %v1617 = vsel %vm1593, %v442, %v768
      %vm1618 = vcmask 195584
      %v1620 = vsel %vm1618, %v1596, %v802
      %v1622 = vsel %vm1618, %v1599, %v804
      %v1624 = vsel %vm1618, %v1602, %v806
      %v1626 = vsel %vm1618, %v1605, %v808
      %v1628 = vsel %vm1618, %v1608, %v810
      %v1630 = vsel %vm1618, %v1611, %v812
      %v1632 = vsel %vm1618, %v1614, %v814
      %v1634 = vsel %vm1618, %v1617, %v816
      %vm1635 = vcmask 293888
      %v1637 = vsel %vm1635, %v1620, %v842
      %v1639 = vsel %vm1635, %v1622, %v844
      %v1641 = vsel %vm1635, %v1624, %v846
      %v1643 = vsel %vm1635, %v1626, %v848
      %v1645 = vsel %vm1635, %v1628, %v850
      %v1647 = vsel %vm1635, %v1630, %v852
      %v1649 = vsel %vm1635, %v1632, %v854
      %v1651 = vsel %vm1635, %v1634, %v856
      %vm1652 = vcmask 392192
      %v1654 = vsel %vm1652, %v1637, %v938
      %v1656 = vsel %vm1652, %v1639, %v940
      %v1658 = vsel %vm1652, %v1641, %v942
      %v1660 = vsel %vm1652, %v1643, %v944
      %v1662 = vsel %vm1652, %v1645, %v946
      %v1664 = vsel %vm1652, %v1647, %v948
      %v1666 = vsel %vm1652, %v1649, %v950
      %v1668 = vsel %vm1652, %v1651, %v952
      %vm1669 = vcmask 490496
      %v1671 = vsel %vm1669, %v1654, %v986
      %v1673 = vsel %vm1669, %v1656, %v988
      %v1675 = vsel %vm1669, %v1658, %v990
      %v1677 = vsel %vm1669, %v1660, %v992
      %v1679 = vsel %vm1669, %v1662, %v994
      %v1681 = vsel %vm1669, %v1664, %v996
      %v1683 = vsel %vm1669, %v1666, %v998
      %v1685 = vsel %vm1669, %v1668, %v1000
      %vm1686 = vcmask 588800
      %v1688 = vsel %vm1686, %v1671, %v1026
      %v1690 = vsel %vm1686, %v1673, %v1028
      %v1692 = vsel %vm1686, %v1675, %v1030
      %v1694 = vsel %vm1686, %v1677, %v1032
      %v1696 = vsel %vm1686, %v1679, %v1034
      %v1698 = vsel %vm1686, %v1681, %v1036
      %v1700 = vsel %vm1686, %v1683, %v1038
      %v1702 = vsel %vm1686, %v1685, %v1040
      %vm1703 = vcmask 687104
      %v1705 = vsel %vm1703, %v1688, %v1122
      %v1707 = vsel %vm1703, %v1690, %v1124
      %v1709 = vsel %vm1703, %v1692, %v1126
      %v1711 = vsel %vm1703, %v1694, %v1128
      %v1713 = vsel %vm1703, %v1696, %v1130
      %v1715 = vsel %vm1703, %v1698, %v1132
      %v1717 = vsel %vm1703, %v1700, %v1134
      %v1719 = vsel %vm1703, %v1702, %v1136
      %vm1720 = vcmask 785408
      %v1722 = vsel %vm1720, %v1705, %v1170
      %v1724 = vsel %vm1720, %v1707, %v1172
      %v1726 = vsel %vm1720, %v1709, %v1174
      %v1728 = vsel %vm1720, %v1711, %v1176
      %v1730 = vsel %vm1720, %v1713, %v1178
      %v1732 = vsel %vm1720, %v1715, %v1180
      %v1734 = vsel %vm1720, %v1717, %v1182
      %v1736 = vsel %vm1720, %v1719, %v1184
      %vm1737 = vcmask 883712
      %v1739 = vsel %vm1737, %v1722, %v1210
      %v1741 = vsel %vm1737, %v1724, %v1212
      %v1743 = vsel %vm1737, %v1726, %v1214
      %v1745 = vsel %vm1737, %v1728, %v1216
      %v1747 = vsel %vm1737, %v1730, %v1218
      %v1749 = vsel %vm1737, %v1732, %v1220
      %v1751 = vsel %vm1737, %v1734, %v1222
      %v1753 = vsel %vm1737, %v1736, %v1224
      %vm1754 = vcmask 982016
      %v1756 = vsel %vm1754, %v1739, %v1306
      %v1758 = vsel %vm1754, %v1741, %v1308
      %v1760 = vsel %vm1754, %v1743, %v1310
      %v1762 = vsel %vm1754, %v1745, %v1312
      %v1764 = vsel %vm1754, %v1747, %v1314
      %v1766 = vsel %vm1754, %v1749, %v1316
      %v1768 = vsel %vm1754, %v1751, %v1318
      %v1770 = vsel %vm1754, %v1753, %v1320
      %vm1771 = vcmask 31744
      %v1773 = vsel %vm1771, %v1306, %v1354
      %v1775 = vsel %vm1771, %v1308, %v1356
      %v1777 = vsel %vm1771, %v1310, %v1358
      %v1779 = vsel %vm1771, %v1312, %v1360
      %v1781 = vsel %vm1771, %v1314, %v1362
      %v1783 = vsel %vm1771, %v1316, %v1364
      %v1785 = vsel %vm1771, %v1318, %v1366
      %v1787 = vsel %vm1771, %v1320, %v1368
      %vm1788 = vcmask 130048
      %v1790 = vsel %vm1788, %v1773, %v1394
      %v1792 = vsel %vm1788, %v1775, %v1396
      %v1794 = vsel %vm1788, %v1777, %v1398
      %v1796 = vsel %vm1788, %v1779, %v1400
      %v1798 = vsel %vm1788, %v1781, %v1402
      %v1800 = vsel %vm1788, %v1783, %v1404
      %v1802 = vsel %vm1788, %v1785, %v1406
      %v1804 = vsel %vm1788, %v1787, %v1408
      %vm1805 = vcmask 228352
      %v1807 = vsel %vm1805, %v1790, %v1490
      %v1809 = vsel %vm1805, %v1792, %v1492
      %v1811 = vsel %vm1805, %v1794, %v1494
      %v1813 = vsel %vm1805, %v1796, %v1496
      %v1815 = vsel %vm1805, %v1798, %v1498
      %v1817 = vsel %vm1805, %v1800, %v1500
      %v1819 = vsel %vm1805, %v1802, %v1502
      %v1821 = vsel %vm1805, %v1804, %v1504
      %vm1822 = vcmask 326656
      %v1824 = vsel %vm1822, %v1807, %v1538
      %v1826 = vsel %vm1822, %v1809, %v1540
      %v1828 = vsel %vm1822, %v1811, %v1542
      %v1830 = vsel %vm1822, %v1813, %v1544
      %v1832 = vsel %vm1822, %v1815, %v1546
      %v1834 = vsel %vm1822, %v1817, %v1548
      %v1836 = vsel %vm1822, %v1819, %v1550
      %v1838 = vsel %vm1822, %v1821, %v1552
      %vm1839 = vcmask 424960
      %v1841 = vsel %vm1839, %v1824, %v1578
      %v1843 = vsel %vm1839, %v1826, %v1580
      %v1845 = vsel %vm1839, %v1828, %v1582
      %v1847 = vsel %vm1839, %v1830, %v1584
      %v1849 = vsel %vm1839, %v1832, %v1586
      %v1851 = vsel %vm1839, %v1834, %v1588
      %v1853 = vsel %vm1839, %v1836, %v1590
      %v1855 = vsel %vm1839, %v1838, %v1592
      %v1864 = vunpack.c.l.b16 %v567
      %v1865 = vunpack.c.l.b16 %v568
      %v1866 = vunpack.c.l.b16 %v569
      %v1867 = vunpack.c.l.b16 %v570
      %v1868 = vunpack.c.l.b16 %v571
      %v1869 = vunpack.c.l.b16 %v572
      %v1870 = vunpack.c.l.b16 %v573
      %v1871 = vunpack.c.l.b16 %v574
      %v1872 = vpack.c.b16 %v1864, %v1561
      %v1873 = vpack.c.b16 %v1865, %v1562
      %v1874 = vpack.c.b16 %v1866, %v1563
      %v1875 = vpack.c.b16 %v1867, %v1564
      %v1876 = vpack.c.b16 %v1868, %v1565
      %v1877 = vpack.c.b16 %v1869, %v1566
      %v1878 = vpack.c.b16 %v1870, %v1567
      %v1879 = vpack.c.b16 %v1871, %v1568
      %v1888 = vunpack.c.l.b16 %v575
      %v1889 = vunpack.c.l.b16 %v576
      %v1890 = vunpack.c.l.b16 %v577
      %v1891 = vunpack.c.l.b16 %v578
      %v1892 = vunpack.c.l.b16 %v579
      %v1893 = vunpack.c.l.b16 %v580
      %v1894 = vunpack.c.l.b16 %v581
      %v1895 = vunpack.c.l.b16 %v582
      %v1896 = vpack.c.b16 %v1864, %v1888
      %v1897 = vpack.c.b16 %v1865, %v1889
      %v1898 = vpack.c.b16 %v1866, %v1890
      %v1899 = vpack.c.b16 %v1867, %v1891
      %v1900 = vpack.c.b16 %v1868, %v1892
      %v1901 = vpack.c.b16 %v1869, %v1893
      %v1902 = vpack.c.b16 %v1870, %v1894
      %v1903 = vpack.c.b16 %v1871, %v1895
      %v1905 = vshrl.u32 %v1896, 16
      %v1907 = vshll.u32 %v1896, 16
      %v1909 = vrot.slane %v1907, 1
      %v1910 = vor.u32 %v1905, %v1909
      %v1912 = vshrl.u32 %v1897, 16
      %v1914 = vshll.u32 %v1897, 16
      %v1916 = vrot.slane %v1914, 1
      %v1917 = vor.u32 %v1912, %v1916
      %v1919 = vshrl.u32 %v1898, 16
      %v1921 = vshll.u32 %v1898, 16
      %v1923 = vrot.slane %v1921, 1
      %v1924 = vor.u32 %v1919, %v1923
      %v1926 = vshrl.u32 %v1899, 16
      %v1928 = vshll.u32 %v1899, 16
      %v1930 = vrot.slane %v1928, 1
      %v1931 = vor.u32 %v1926, %v1930
      %v1933 = vshrl.u32 %v1900, 16
      %v1935 = vshll.u32 %v1900, 16
      %v1937 = vrot.slane %v1935, 1
      %v1938 = vor.u32 %v1933, %v1937
      %v1940 = vshrl.u32 %v1901, 16
      %v1942 = vshll.u32 %v1901, 16
      %v1944 = vrot.slane %v1942, 1
      %v1945 = vor.u32 %v1940, %v1944
      %v1947 = vshrl.u32 %v1902, 16
      %v1949 = vshll.u32 %v1902, 16
      %v1951 = vrot.slane %v1949, 1
      %v1952 = vor.u32 %v1947, %v1951
      %v1954 = vshrl.u32 %v1903, 16
      %v1956 = vshll.u32 %v1903, 16
      %v1958 = vrot.slane %v1956, 1
      %v1959 = vor.u32 %v1954, %v1958
      %1960 = vrot.lane.b32.xlu0 %v1910, 12
      %v1961 = vpop.permute.xlu0 %1960
      %1962 = vrot.lane.b32.xlu0 %v1917, 12
      %v1963 = vpop.permute.xlu0 %1962
      %1964 = vrot.lane.b32.xlu0 %v1924, 12
      %v1965 = vpop.permute.xlu0 %1964
      %1966 = vrot.lane.b32.xlu0 %v1931, 12
      %v1967 = vpop.permute.xlu0 %1966
      %1968 = vrot.lane.b32.xlu0 %v1938, 12
      %v1969 = vpop.permute.xlu0 %1968
      %1970 = vrot.lane.b32.xlu0 %v1945, 12
      %v1971 = vpop.permute.xlu0 %1970
      %1972 = vrot.lane.b32.xlu0 %v1952, 12
      %v1973 = vpop.permute.xlu0 %1972
      %1974 = vrot.lane.b32.xlu0 %v1959, 12
      %v1975 = vpop.permute.xlu0 %1974
      %v1984 = vunpack.c.l.b16 %v583
      %v1985 = vunpack.c.l.b16 %v584
      %v1986 = vunpack.c.l.b16 %v585
      %v1987 = vunpack.c.l.b16 %v586
      %v1988 = vunpack.c.l.b16 %v587
      %v1989 = vunpack.c.l.b16 %v588
      %v1990 = vunpack.c.l.b16 %v589
      %v1991 = vunpack.c.l.b16 %v590
      %v1992 = vpack.c.b16 %v1984, %v1984
      %v1993 = vpack.c.b16 %v1985, %v1985
      %v1994 = vpack.c.b16 %v1986, %v1986
      %v1995 = vpack.c.b16 %v1987, %v1987
      %v1996 = vpack.c.b16 %v1988, %v1988
      %v1997 = vpack.c.b16 %v1989, %v1989
      %v1998 = vpack.c.b16 %v1990, %v1990
      %v1999 = vpack.c.b16 %v1991, %v1991
      %v2001 = vshrl.u32 %v1992, 16
      %v2003 = vrot.slane %v2001, 7
      %v2004 = vshll.u32 %v1992, 16
      %v2006 = vor.u32 %v2003, %v2004
      %v2008 = vshrl.u32 %v1993, 16
      %v2010 = vrot.slane %v2008, 7
      %v2011 = vshll.u32 %v1993, 16
      %v2013 = vor.u32 %v2010, %v2011
      %v2015 = vshrl.u32 %v1994, 16
      %v2017 = vrot.slane %v2015, 7
      %v2018 = vshll.u32 %v1994, 16
      %v2020 = vor.u32 %v2017, %v2018
      %v2022 = vshrl.u32 %v1995, 16
      %v2024 = vrot.slane %v2022, 7
      %v2025 = vshll.u32 %v1995, 16
      %v2027 = vor.u32 %v2024, %v2025
      %v2029 = vshrl.u32 %v1996, 16
      %v2031 = vrot.slane %v2029, 7
      %v2032 = vshll.u32 %v1996, 16
      %v2034 = vor.u32 %v2031, %v2032
      %v2036 = vshrl.u32 %v1997, 16
      %v2038 = vrot.slane %v2036, 7
      %v2039 = vshll.u32 %v1997, 16
      %v2041 = vor.u32 %v2038, %v2039
      %v2043 = vshrl.u32 %v1998, 16
      %v2045 = vrot.slane %v2043, 7
      %v2046 = vshll.u32 %v1998, 16
      %v2048 = vor.u32 %v2045, %v2046
      %v2050 = vshrl.u32 %v1999, 16
      %v2052 = vrot.slane %v2050, 7
      %v2053 = vshll.u32 %v1999, 16
      %v2055 = vor.u32 %v2052, %v2053
      %2056 = vrot.lane.b32.xlu0 %v2006, 24
      %v2057 = vpop.permute.xlu0 %2056
      %2058 = vrot.lane.b32.xlu0 %v2013, 24
      %v2059 = vpop.permute.xlu0 %2058
      %2060 = vrot.lane.b32.xlu0 %v2020, 24
      %v2061 = vpop.permute.xlu0 %2060
      %2062 = vrot.lane.b32.xlu0 %v2027, 24
      %v2063 = vpop.permute.xlu0 %2062
      %2064 = vrot.lane.b32.xlu0 %v2034, 24
      %v2065 = vpop.permute.xlu0 %2064
      %2066 = vrot.lane.b32.xlu0 %v2041, 24
      %v2067 = vpop.permute.xlu0 %2066
      %2068 = vrot.lane.b32.xlu0 %v2048, 24
      %v2069 = vpop.permute.xlu0 %2068
      %2070 = vrot.lane.b32.xlu0 %v2055, 24
      %v2071 = vpop.permute.xlu0 %2070
      %v2080 = vunpack.c.l.b16 %v591
      %v2081 = vunpack.c.l.b16 %v592
      %v2082 = vunpack.c.l.b16 %v593
      %v2083 = vunpack.c.l.b16 %v594
      %v2084 = vunpack.c.l.b16 %v595
      %v2085 = vunpack.c.l.b16 %v596
      %v2086 = vunpack.c.l.b16 %v597
      %v2087 = vunpack.c.l.b16 %v598
      %v2088 = vpack.c.b16 %v2080, %v1984
      %v2089 = vpack.c.b16 %v2081, %v1985
      %v2090 = vpack.c.b16 %v2082, %v1986
      %v2091 = vpack.c.b16 %v2083, %v1987
      %v2092 = vpack.c.b16 %v2084, %v1988
      %v2093 = vpack.c.b16 %v2085, %v1989
      %v2094 = vpack.c.b16 %v2086, %v1990
      %v2095 = vpack.c.b16 %v2087, %v1991
      %2096 = vrot.lane.b32.xlu0 %v2088, 36
      %v2097 = vpop.permute.xlu0 %2096
      %2098 = vrot.lane.b32.xlu0 %v2089, 36
      %v2099 = vpop.permute.xlu0 %2098
      %2100 = vrot.lane.b32.xlu0 %v2090, 36
      %v2101 = vpop.permute.xlu0 %2100
      %2102 = vrot.lane.b32.xlu0 %v2091, 36
      %v2103 = vpop.permute.xlu0 %2102
      %2104 = vrot.lane.b32.xlu0 %v2092, 36
      %v2105 = vpop.permute.xlu0 %2104
      %2106 = vrot.lane.b32.xlu0 %v2093, 36
      %v2107 = vpop.permute.xlu0 %2106
      %2108 = vrot.lane.b32.xlu0 %v2094, 36
      %v2109 = vpop.permute.xlu0 %2108
      %2110 = vrot.lane.b32.xlu0 %v2095, 36
      %v2111 = vpop.permute.xlu0 %2110
      %v2120 = vunpack.c.l.b16 %v599
      %v2121 = vunpack.c.l.b16 %v600
      %v2122 = vunpack.c.l.b16 %v601
      %v2123 = vunpack.c.l.b16 %v602
      %v2124 = vunpack.c.l.b16 %v603
      %v2125 = vunpack.c.l.b16 %v604
      %v2126 = vunpack.c.l.b16 %v605
      %v2127 = vunpack.c.l.b16 %v606
      %v2128 = vpack.c.b16 %v2080, %v2120
      %v2129 = vpack.c.b16 %v2081, %v2121
      %v2130 = vpack.c.b16 %v2082, %v2122
      %v2131 = vpack.c.b16 %v2083, %v2123
      %v2132 = vpack.c.b16 %v2084, %v2124
      %v2133 = vpack.c.b16 %v2085, %v2125
      %v2134 = vpack.c.b16 %v2086, %v2126
      %v2135 = vpack.c.b16 %v2087, %v2127
      %v2137 = vshrl.u32 %v2128, 16
      %v2139 = vshll.u32 %v2128, 16
      %v2141 = vrot.slane %v2139, 1
      %v2142 = vor.u32 %v2137, %v2141
      %v2144 = vshrl.u32 %v2129, 16
      %v2146 = vshll.u32 %v2129, 16
      %v2148 = vrot.slane %v2146, 1
      %v2149 = vor.u32 %v2144, %v2148
      %v2151 = vshrl.u32 %v2130, 16
      %v2153 = vshll.u32 %v2130, 16
      %v2155 = vrot.slane %v2153, 1
      %v2156 = vor.u32 %v2151, %v2155
      %v2158 = vshrl.u32 %v2131, 16
      %v2160 = vshll.u32 %v2131, 16
      %v2162 = vrot.slane %v2160, 1
      %v2163 = vor.u32 %v2158, %v2162
      %v2165 = vshrl.u32 %v2132, 16
      %v2167 = vshll.u32 %v2132, 16
      %v2169 = vrot.slane %v2167, 1
      %v2170 = vor.u32 %v2165, %v2169
      %v2172 = vshrl.u32 %v2133, 16
      %v2174 = vshll.u32 %v2133, 16
      %v2176 = vrot.slane %v2174, 1
      %v2177 = vor.u32 %v2172, %v2176
      %v2179 = vshrl.u32 %v2134, 16
      %v2181 = vshll.u32 %v2134, 16
      %v2183 = vrot.slane %v2181, 1
      %v2184 = vor.u32 %v2179, %v2183
      %v2186 = vshrl.u32 %v2135, 16
      %v2188 = vshll.u32 %v2135, 16
      %v2190 = vrot.slane %v2188, 1
      %v2191 = vor.u32 %v2186, %v2190
      %2192 = vrot.lane.b32.xlu0 %v2142, 48
      %v2193 = vpop.permute.xlu0 %2192
      %2194 = vrot.lane.b32.xlu0 %v2149, 48
      %v2195 = vpop.permute.xlu0 %2194
      %2196 = vrot.lane.b32.xlu0 %v2156, 48
      %v2197 = vpop.permute.xlu0 %2196
      %2198 = vrot.lane.b32.xlu0 %v2163, 48
      %v2199 = vpop.permute.xlu0 %2198
      %2200 = vrot.lane.b32.xlu0 %v2170, 48
      %v2201 = vpop.permute.xlu0 %2200
      %2202 = vrot.lane.b32.xlu0 %v2177, 48
      %v2203 = vpop.permute.xlu0 %2202
      %2204 = vrot.lane.b32.xlu0 %v2184, 48
      %v2205 = vpop.permute.xlu0 %2204
      %2206 = vrot.lane.b32.xlu0 %v2191, 48
      %v2207 = vpop.permute.xlu0 %2206
      %v2216 = vunpack.c.l.b16 %v608
      %v2217 = vunpack.c.l.b16 %v609
      %v2218 = vunpack.c.l.b16 %v610
      %v2219 = vunpack.c.l.b16 %v611
      %v2220 = vunpack.c.l.b16 %v612
      %v2221 = vunpack.c.l.b16 %v613
      %v2222 = vunpack.c.l.b16 %v614
      %v2223 = vunpack.c.l.b16 %v615
      %v2224 = vpack.c.b16 %v2216, %v2216
      %v2225 = vpack.c.b16 %v2217, %v2217
      %v2226 = vpack.c.b16 %v2218, %v2218
      %v2227 = vpack.c.b16 %v2219, %v2219
      %v2228 = vpack.c.b16 %v2220, %v2220
      %v2229 = vpack.c.b16 %v2221, %v2221
      %v2230 = vpack.c.b16 %v2222, %v2222
      %v2231 = vpack.c.b16 %v2223, %v2223
      %v2233 = vshrl.u32 %v2224, 16
      %v2235 = vrot.slane %v2233, 7
      %v2236 = vshll.u32 %v2224, 16
      %v2238 = vor.u32 %v2235, %v2236
      %v2240 = vshrl.u32 %v2225, 16
      %v2242 = vrot.slane %v2240, 7
      %v2243 = vshll.u32 %v2225, 16
      %v2245 = vor.u32 %v2242, %v2243
      %v2247 = vshrl.u32 %v2226, 16
      %v2249 = vrot.slane %v2247, 7
      %v2250 = vshll.u32 %v2226, 16
      %v2252 = vor.u32 %v2249, %v2250
      %v2254 = vshrl.u32 %v2227, 16
      %v2256 = vrot.slane %v2254, 7
      %v2257 = vshll.u32 %v2227, 16
      %v2259 = vor.u32 %v2256, %v2257
      %v2261 = vshrl.u32 %v2228, 16
      %v2263 = vrot.slane %v2261, 7
      %v2264 = vshll.u32 %v2228, 16
      %v2266 = vor.u32 %v2263, %v2264
      %v2268 = vshrl.u32 %v2229, 16
      %v2270 = vrot.slane %v2268, 7
      %v2271 = vshll.u32 %v2229, 16
      %v2273 = vor.u32 %v2270, %v2271
      %v2275 = vshrl.u32 %v2230, 16
      %v2277 = vrot.slane %v2275, 7
      %v2278 = vshll.u32 %v2230, 16
      %v2280 = vor.u32 %v2277, %v2278
      %v2282 = vshrl.u32 %v2231, 16
      %v2284 = vrot.slane %v2282, 7
      %v2285 = vshll.u32 %v2231, 16
      %v2287 = vor.u32 %v2284, %v2285
      %2288 = vrot.lane.b32.xlu0 %v2238, 60
      %v2289 = vpop.permute.xlu0 %2288
      %2290 = vrot.lane.b32.xlu0 %v2245, 60
      %v2291 = vpop.permute.xlu0 %2290
      %2292 = vrot.lane.b32.xlu0 %v2252, 60
      %v2293 = vpop.permute.xlu0 %2292
      %2294 = vrot.lane.b32.xlu0 %v2259, 60
      %v2295 = vpop.permute.xlu0 %2294
      %2296 = vrot.lane.b32.xlu0 %v2266, 60
      %v2297 = vpop.permute.xlu0 %2296
      %2298 = vrot.lane.b32.xlu0 %v2273, 60
      %v2299 = vpop.permute.xlu0 %2298
      %2300 = vrot.lane.b32.xlu0 %v2280, 60
      %v2301 = vpop.permute.xlu0 %2300
      %2302 = vrot.lane.b32.xlu0 %v2287, 60
      %v2303 = vpop.permute.xlu0 %2302
      %v2312 = vunpack.c.l.b16 %v616
      %v2313 = vunpack.c.l.b16 %v617
      %v2314 = vunpack.c.l.b16 %v618
      %v2315 = vunpack.c.l.b16 %v619
      %v2316 = vunpack.c.l.b16 %v620
      %v2317 = vunpack.c.l.b16 %v621
      %v2318 = vunpack.c.l.b16 %v622
      %v2319 = vunpack.c.l.b16 %v623
      %v2320 = vpack.c.b16 %v2312, %v2216
      %v2321 = vpack.c.b16 %v2313, %v2217
      %v2322 = vpack.c.b16 %v2314, %v2218
      %v2323 = vpack.c.b16 %v2315, %v2219
      %v2324 = vpack.c.b16 %v2316, %v2220
      %v2325 = vpack.c.b16 %v2317, %v2221
      %v2326 = vpack.c.b16 %v2318, %v2222
      %v2327 = vpack.c.b16 %v2319, %v2223
      %2328 = vrot.lane.b32.xlu0 %v2320, 72
      %v2329 = vpop.permute.xlu0 %2328
      %2330 = vrot.lane.b32.xlu0 %v2321, 72
      %v2331 = vpop.permute.xlu0 %2330
      %2332 = vrot.lane.b32.xlu0 %v2322, 72
      %v2333 = vpop.permute.xlu0 %2332
      %2334 = vrot.lane.b32.xlu0 %v2323, 72
      %v2335 = vpop.permute.xlu0 %2334
      %2336 = vrot.lane.b32.xlu0 %v2324, 72
      %v2337 = vpop.permute.xlu0 %2336
      %2338 = vrot.lane.b32.xlu0 %v2325, 72
      %v2339 = vpop.permute.xlu0 %2338
      %2340 = vrot.lane.b32.xlu0 %v2326, 72
      %v2341 = vpop.permute.xlu0 %2340
      %2342 = vrot.lane.b32.xlu0 %v2327, 72
      %v2343 = vpop.permute.xlu0 %2342
      %v2352 = vunpack.c.l.b16 %v624
      %v2353 = vunpack.c.l.b16 %v625
      %v2354 = vunpack.c.l.b16 %v626
      %v2355 = vunpack.c.l.b16 %v627
      %v2356 = vunpack.c.l.b16 %v628
      %v2357 = vunpack.c.l.b16 %v629
      %v2358 = vunpack.c.l.b16 %v630
      %v2359 = vunpack.c.l.b16 %v631
      %v2360 = vpack.c.b16 %v2312, %v2352
      %v2361 = vpack.c.b16 %v2313, %v2353
      %v2362 = vpack.c.b16 %v2314, %v2354
      %v2363 = vpack.c.b16 %v2315, %v2355
      %v2364 = vpack.c.b16 %v2316, %v2356
      %v2365 = vpack.c.b16 %v2317, %v2357
      %v2366 = vpack.c.b16 %v2318, %v2358
      %v2367 = vpack.c.b16 %v2319, %v2359
      %v2369 = vshrl.u32 %v2360, 16
      %v2371 = vshll.u32 %v2360, 16
      %v2373 = vrot.slane %v2371, 1
      %v2374 = vor.u32 %v2369, %v2373
      %v2376 = vshrl.u32 %v2361, 16
      %v2378 = vshll.u32 %v2361, 16
      %v2380 = vrot.slane %v2378, 1
      %v2381 = vor.u32 %v2376, %v2380
      %v2383 = vshrl.u32 %v2362, 16
      %v2385 = vshll.u32 %v2362, 16
      %v2387 = vrot.slane %v2385, 1
      %v2388 = vor.u32 %v2383, %v2387
      %v2390 = vshrl.u32 %v2363, 16
      %v2392 = vshll.u32 %v2363, 16
      %v2394 = vrot.slane %v2392, 1
      %v2395 = vor.u32 %v2390, %v2394
      %v2397 = vshrl.u32 %v2364, 16
      %v2399 = vshll.u32 %v2364, 16
      %v2401 = vrot.slane %v2399, 1
      %v2402 = vor.u32 %v2397, %v2401
      %v2404 = vshrl.u32 %v2365, 16
      %v2406 = vshll.u32 %v2365, 16
      %v2408 = vrot.slane %v2406, 1
      %v2409 = vor.u32 %v2404, %v2408
      %v2411 = vshrl.u32 %v2366, 16
      %v2413 = vshll.u32 %v2366, 16
      %v2415 = vrot.slane %v2413, 1
      %v2416 = vor.u32 %v2411, %v2415
      %v2418 = vshrl.u32 %v2367, 16
      %v2420 = vshll.u32 %v2367, 16
      %v2422 = vrot.slane %v2420, 1
      %v2423 = vor.u32 %v2418, %v2422
      %2424 = vrot.lane.b32.xlu0 %v2374, 84
      %v2425 = vpop.permute.xlu0 %2424
      %2426 = vrot.lane.b32.xlu0 %v2381, 84
      %v2427 = vpop.permute.xlu0 %2426
      %2428 = vrot.lane.b32.xlu0 %v2388, 84
      %v2429 = vpop.permute.xlu0 %2428
      %2430 = vrot.lane.b32.xlu0 %v2395, 84
      %v2431 = vpop.permute.xlu0 %2430
      %2432 = vrot.lane.b32.xlu0 %v2402, 84
      %v2433 = vpop.permute.xlu0 %2432
      %2434 = vrot.lane.b32.xlu0 %v2409, 84
      %v2435 = vpop.permute.xlu0 %2434
      %2436 = vrot.lane.b32.xlu0 %v2416, 84
      %v2437 = vpop.permute.xlu0 %2436
      %2438 = vrot.lane.b32.xlu0 %v2423, 84
      %v2439 = vpop.permute.xlu0 %2438
      %v2448 = vunpack.c.l.b16 %v633
      %v2449 = vunpack.c.l.b16 %v634
      %v2450 = vunpack.c.l.b16 %v635
      %v2451 = vunpack.c.l.b16 %v636
      %v2452 = vunpack.c.l.b16 %v637
      %v2453 = vunpack.c.l.b16 %v638
      %v2454 = vunpack.c.l.b16 %v639
      %v2455 = vunpack.c.l.b16 %v640
      %v2456 = vpack.c.b16 %v2448, %v2448
      %v2457 = vpack.c.b16 %v2449, %v2449
      %v2458 = vpack.c.b16 %v2450, %v2450
      %v2459 = vpack.c.b16 %v2451, %v2451
      %v2460 = vpack.c.b16 %v2452, %v2452
      %v2461 = vpack.c.b16 %v2453, %v2453
      %v2462 = vpack.c.b16 %v2454, %v2454
      %v2463 = vpack.c.b16 %v2455, %v2455
      %v2465 = vshrl.u32 %v2456, 16
      %v2467 = vrot.slane %v2465, 7
      %v2468 = vshll.u32 %v2456, 16
      %v2470 = vor.u32 %v2467, %v2468
      %v2472 = vshrl.u32 %v2457, 16
      %v2474 = vrot.slane %v2472, 7
      %v2475 = vshll.u32 %v2457, 16
      %v2477 = vor.u32 %v2474, %v2475
      %v2479 = vshrl.u32 %v2458, 16
      %v2481 = vrot.slane %v2479, 7
      %v2482 = vshll.u32 %v2458, 16
      %v2484 = vor.u32 %v2481, %v2482
      %v2486 = vshrl.u32 %v2459, 16
      %v2488 = vrot.slane %v2486, 7
      %v2489 = vshll.u32 %v2459, 16
      %v2491 = vor.u32 %v2488, %v2489
      %v2493 = vshrl.u32 %v2460, 16
      %v2495 = vrot.slane %v2493, 7
      %v2496 = vshll.u32 %v2460, 16
      %v2498 = vor.u32 %v2495, %v2496
      %v2500 = vshrl.u32 %v2461, 16
      %v2502 = vrot.slane %v2500, 7
      %v2503 = vshll.u32 %v2461, 16
      %v2505 = vor.u32 %v2502, %v2503
      %v2507 = vshrl.u32 %v2462, 16
      %v2509 = vrot.slane %v2507, 7
      %v2510 = vshll.u32 %v2462, 16
      %v2512 = vor.u32 %v2509, %v2510
      %v2514 = vshrl.u32 %v2463, 16
      %v2516 = vrot.slane %v2514, 7
      %v2517 = vshll.u32 %v2463, 16
      %v2519 = vor.u32 %v2516, %v2517
      %2520 = vrot.lane.b32.xlu0 %v2470, 96
      %v2521 = vpop.permute.xlu0 %2520
      %2522 = vrot.lane.b32.xlu0 %v2477, 96
      %v2523 = vpop.permute.xlu0 %2522
      %2524 = vrot.lane.b32.xlu0 %v2484, 96
      %v2525 = vpop.permute.xlu0 %2524
      %2526 = vrot.lane.b32.xlu0 %v2491, 96
      %v2527 = vpop.permute.xlu0 %2526
      %2528 = vrot.lane.b32.xlu0 %v2498, 96
      %v2529 = vpop.permute.xlu0 %2528
      %2530 = vrot.lane.b32.xlu0 %v2505, 96
      %v2531 = vpop.permute.xlu0 %2530
      %2532 = vrot.lane.b32.xlu0 %v2512, 96
      %v2533 = vpop.permute.xlu0 %2532
      %2534 = vrot.lane.b32.xlu0 %v2519, 96
      %v2535 = vpop.permute.xlu0 %2534
      %v2544 = vunpack.c.l.b16 %v641
      %v2545 = vunpack.c.l.b16 %v642
      %v2546 = vunpack.c.l.b16 %v643
      %v2547 = vunpack.c.l.b16 %v644
      %v2548 = vunpack.c.l.b16 %v645
      %v2549 = vunpack.c.l.b16 %v646
      %v2550 = vunpack.c.l.b16 %v647
      %v2551 = vunpack.c.l.b16 %v648
      %v2552 = vpack.c.b16 %v2544, %v2448
      %v2553 = vpack.c.b16 %v2545, %v2449
      %v2554 = vpack.c.b16 %v2546, %v2450
      %v2555 = vpack.c.b16 %v2547, %v2451
      %v2556 = vpack.c.b16 %v2548, %v2452
      %v2557 = vpack.c.b16 %v2549, %v2453
      %v2558 = vpack.c.b16 %v2550, %v2454
      %v2559 = vpack.c.b16 %v2551, %v2455
      %2560 = vrot.lane.b32.xlu0 %v2552, 108
      %v2561 = vpop.permute.xlu0 %2560
      %2562 = vrot.lane.b32.xlu0 %v2553, 108
      %v2563 = vpop.permute.xlu0 %2562
      %2564 = vrot.lane.b32.xlu0 %v2554, 108
      %v2565 = vpop.permute.xlu0 %2564
      %2566 = vrot.lane.b32.xlu0 %v2555, 108
      %v2567 = vpop.permute.xlu0 %2566
      %2568 = vrot.lane.b32.xlu0 %v2556, 108
      %v2569 = vpop.permute.xlu0 %2568
      %2570 = vrot.lane.b32.xlu0 %v2557, 108
      %v2571 = vpop.permute.xlu0 %2570
      %2572 = vrot.lane.b32.xlu0 %v2558, 108
      %v2573 = vpop.permute.xlu0 %2572
      %2574 = vrot.lane.b32.xlu0 %v2559, 108
      %v2575 = vpop.permute.xlu0 %2574
      %v2584 = vunpack.c.l.b16 %v649
      %v2585 = vunpack.c.l.b16 %v650
      %v2586 = vunpack.c.l.b16 %v651
      %v2587 = vunpack.c.l.b16 %v652
      %v2588 = vunpack.c.l.b16 %v653
      %v2589 = vunpack.c.l.b16 %v654
      %v2590 = vunpack.c.l.b16 %v655
      %v2591 = vunpack.c.l.b16 %v656
      %v2592 = vpack.c.b16 %v2544, %v2584
      %v2593 = vpack.c.b16 %v2545, %v2585
      %v2594 = vpack.c.b16 %v2546, %v2586
      %v2595 = vpack.c.b16 %v2547, %v2587
      %v2596 = vpack.c.b16 %v2548, %v2588
      %v2597 = vpack.c.b16 %v2549, %v2589
      %v2598 = vpack.c.b16 %v2550, %v2590
      %v2599 = vpack.c.b16 %v2551, %v2591
      %v2601 = vshrl.u32 %v2592, 16
      %v2603 = vshll.u32 %v2592, 16
      %v2605 = vrot.slane %v2603, 1
      %v2606 = vor.u32 %v2601, %v2605
      %v2608 = vshrl.u32 %v2593, 16
      %v2610 = vshll.u32 %v2593, 16
      %v2612 = vrot.slane %v2610, 1
      %v2613 = vor.u32 %v2608, %v2612
      %v2615 = vshrl.u32 %v2594, 16
      %v2617 = vshll.u32 %v2594, 16
      %v2619 = vrot.slane %v2617, 1
      %v2620 = vor.u32 %v2615, %v2619
      %v2622 = vshrl.u32 %v2595, 16
      %v2624 = vshll.u32 %v2595, 16
      %v2626 = vrot.slane %v2624, 1
      %v2627 = vor.u32 %v2622, %v2626
      %v2629 = vshrl.u32 %v2596, 16
      %v2631 = vshll.u32 %v2596, 16
      %v2633 = vrot.slane %v2631, 1
      %v2634 = vor.u32 %v2629, %v2633
      %v2636 = vshrl.u32 %v2597, 16
      %v2638 = vshll.u32 %v2597, 16
      %v2640 = vrot.slane %v2638, 1
      %v2641 = vor.u32 %v2636, %v2640
      %v2643 = vshrl.u32 %v2598, 16
      %v2645 = vshll.u32 %v2598, 16
      %v2647 = vrot.slane %v2645, 1
      %v2648 = vor.u32 %v2643, %v2647
      %v2650 = vshrl.u32 %v2599, 16
      %v2652 = vshll.u32 %v2599, 16
      %v2654 = vrot.slane %v2652, 1
      %v2655 = vor.u32 %v2650, %v2654
      %2656 = vrot.lane.b32.xlu0 %v2606, 120
      %v2657 = vpop.permute.xlu0 %2656
      %2658 = vrot.lane.b32.xlu0 %v2613, 120
      %v2659 = vpop.permute.xlu0 %2658
      %2660 = vrot.lane.b32.xlu0 %v2620, 120
      %v2661 = vpop.permute.xlu0 %2660
      %2662 = vrot.lane.b32.xlu0 %v2627, 120
      %v2663 = vpop.permute.xlu0 %2662
      %2664 = vrot.lane.b32.xlu0 %v2634, 120
      %v2665 = vpop.permute.xlu0 %2664
      %2666 = vrot.lane.b32.xlu0 %v2641, 120
      %v2667 = vpop.permute.xlu0 %2666
      %2668 = vrot.lane.b32.xlu0 %v2648, 120
      %v2669 = vpop.permute.xlu0 %2668
      %2670 = vrot.lane.b32.xlu0 %v2655, 120
      %v2671 = vpop.permute.xlu0 %2670
      %v2674 = vsel %vm1593, %v1872, %v1961
      %v2677 = vsel %vm1593, %v1873, %v1963
      %v2680 = vsel %vm1593, %v1874, %v1965
      %v2683 = vsel %vm1593, %v1875, %v1967
      %v2686 = vsel %vm1593, %v1876, %v1969
      %v2689 = vsel %vm1593, %v1877, %v1971
      %v2692 = vsel %vm1593, %v1878, %v1973
      %v2695 = vsel %vm1593, %v1879, %v1975
      %v2697 = vsel %vm1618, %v2674, %v2057
      %v2699 = vsel %vm1618, %v2677, %v2059
      %v2701 = vsel %vm1618, %v2680, %v2061
      %v2703 = vsel %vm1618, %v2683, %v2063
      %v2705 = vsel %vm1618, %v2686, %v2065
      %v2707 = vsel %vm1618, %v2689, %v2067
      %v2709 = vsel %vm1618, %v2692, %v2069
      %v2711 = vsel %vm1618, %v2695, %v2071
      %v2713 = vsel %vm1635, %v2697, %v2097
      %v2715 = vsel %vm1635, %v2699, %v2099
      %v2717 = vsel %vm1635, %v2701, %v2101
      %v2719 = vsel %vm1635, %v2703, %v2103
      %v2721 = vsel %vm1635, %v2705, %v2105
      %v2723 = vsel %vm1635, %v2707, %v2107
      %v2725 = vsel %vm1635, %v2709, %v2109
      %v2727 = vsel %vm1635, %v2711, %v2111
      %v2729 = vsel %vm1652, %v2713, %v2193
      %v2731 = vsel %vm1652, %v2715, %v2195
      %v2733 = vsel %vm1652, %v2717, %v2197
      %v2735 = vsel %vm1652, %v2719, %v2199
      %v2737 = vsel %vm1652, %v2721, %v2201
      %v2739 = vsel %vm1652, %v2723, %v2203
      %v2741 = vsel %vm1652, %v2725, %v2205
      %v2743 = vsel %vm1652, %v2727, %v2207
      %v2745 = vsel %vm1669, %v2729, %v2289
      %v2747 = vsel %vm1669, %v2731, %v2291
      %v2749 = vsel %vm1669, %v2733, %v2293
      %v2751 = vsel %vm1669, %v2735, %v2295
      %v2753 = vsel %vm1669, %v2737, %v2297
      %v2755 = vsel %vm1669, %v2739, %v2299
      %v2757 = vsel %vm1669, %v2741, %v2301
      %v2759 = vsel %vm1669, %v2743, %v2303
      %v2761 = vsel %vm1686, %v2745, %v2329
      %v2763 = vsel %vm1686, %v2747, %v2331
      %v2765 = vsel %vm1686, %v2749, %v2333
      %v2767 = vsel %vm1686, %v2751, %v2335
      %v2769 = vsel %vm1686, %v2753, %v2337
      %v2771 = vsel %vm1686, %v2755, %v2339
      %v2773 = vsel %vm1686, %v2757, %v2341
      %v2775 = vsel %vm1686, %v2759, %v2343
      %v2777 = vsel %vm1703, %v2761, %v2425
      %v2779 = vsel %vm1703, %v2763, %v2427
      %v2781 = vsel %vm1703, %v2765, %v2429
      %v2783 = vsel %vm1703, %v2767, %v2431
      %v2785 = vsel %vm1703, %v2769, %v2433
      %v2787 = vsel %vm1703, %v2771, %v2435
      %v2789 = vsel %vm1703, %v2773, %v2437
      %v2791 = vsel %vm1703, %v2775, %v2439
      %v2793 = vsel %vm1720, %v2777, %v2521
      %v2795 = vsel %vm1720, %v2779, %v2523
      %v2797 = vsel %vm1720, %v2781, %v2525
      %v2799 = vsel %vm1720, %v2783, %v2527
      %v2801 = vsel %vm1720, %v2785, %v2529
      %v2803 = vsel %vm1720, %v2787, %v2531
      %v2805 = vsel %vm1720, %v2789, %v2533
      %v2807 = vsel %vm1720, %v2791, %v2535
      %v2809 = vsel %vm1737, %v2793, %v2561
      %v2811 = vsel %vm1737, %v2795, %v2563
      %v2813 = vsel %vm1737, %v2797, %v2565
      %v2815 = vsel %vm1737, %v2799, %v2567
      %v2817 = vsel %vm1737, %v2801, %v2569
      %v2819 = vsel %vm1737, %v2803, %v2571
      %v2821 = vsel %vm1737, %v2805, %v2573
      %v2823 = vsel %vm1737, %v2807, %v2575
      %v2825 = vsel %vm1754, %v2809, %v2657
      %v2827 = vsel %vm1754, %v2811, %v2659
      %v2829 = vsel %vm1754, %v2813, %v2661
      %v2831 = vsel %vm1754, %v2815, %v2663
      %v2833 = vsel %vm1754, %v2817, %v2665
      %v2835 = vsel %vm1754, %v2819, %v2667
      %v2837 = vsel %vm1754, %v2821, %v2669
      %v2839 = vsel %vm1754, %v2823, %v2671
      %v2840 = vshrl.u32 %v2825, 16
      %v2842 = vshll.u32 %v2825, 16
      %v2844 = vrot.slane %v2842, 1
      %v2845 = vor.u32 %v2840, %v2844
      %v2846 = vshrl.u32 %v2657, 16
      %v2848 = vshll.u32 %v2657, 16
      %v2850 = vrot.slane %v2848, 1
      %v2851 = vor.u32 %v2846, %v2850
      %v2852 = vshrl.u32 %v2827, 16
      %v2854 = vshll.u32 %v2827, 16
      %v2856 = vrot.slane %v2854, 1
      %v2857 = vor.u32 %v2852, %v2856
      %v2858 = vshrl.u32 %v2659, 16
      %v2860 = vshll.u32 %v2659, 16
      %v2862 = vrot.slane %v2860, 1
      %v2863 = vor.u32 %v2858, %v2862
      %v2864 = vshrl.u32 %v2829, 16
      %v2866 = vshll.u32 %v2829, 16
      %v2868 = vrot.slane %v2866, 1
      %v2869 = vor.u32 %v2864, %v2868
      %v2870 = vshrl.u32 %v2661, 16
      %v2872 = vshll.u32 %v2661, 16
      %v2874 = vrot.slane %v2872, 1
      %v2875 = vor.u32 %v2870, %v2874
      %v2876 = vshrl.u32 %v2831, 16
      %v2878 = vshll.u32 %v2831, 16
      %v2880 = vrot.slane %v2878, 1
      %v2881 = vor.u32 %v2876, %v2880
      %v2882 = vshrl.u32 %v2663, 16
      %v2884 = vshll.u32 %v2663, 16
      %v2886 = vrot.slane %v2884, 1
      %v2887 = vor.u32 %v2882, %v2886
      %v2888 = vshrl.u32 %v2833, 16
      %v2890 = vshll.u32 %v2833, 16
      %v2892 = vrot.slane %v2890, 1
      %v2893 = vor.u32 %v2888, %v2892
      %v2894 = vshrl.u32 %v2665, 16
      %v2896 = vshll.u32 %v2665, 16
      %v2898 = vrot.slane %v2896, 1
      %v2899 = vor.u32 %v2894, %v2898
      %v2900 = vshrl.u32 %v2835, 16
      %v2902 = vshll.u32 %v2835, 16
      %v2904 = vrot.slane %v2902, 1
      %v2905 = vor.u32 %v2900, %v2904
      %v2906 = vshrl.u32 %v2667, 16
      %v2908 = vshll.u32 %v2667, 16
      %v2910 = vrot.slane %v2908, 1
      %v2911 = vor.u32 %v2906, %v2910
      %v2912 = vshrl.u32 %v2837, 16
      %v2914 = vshll.u32 %v2837, 16
      %v2916 = vrot.slane %v2914, 1
      %v2917 = vor.u32 %v2912, %v2916
      %v2918 = vshrl.u32 %v2669, 16
      %v2920 = vshll.u32 %v2669, 16
      %v2922 = vrot.slane %v2920, 1
      %v2923 = vor.u32 %v2918, %v2922
      %v2924 = vshrl.u32 %v2839, 16
      %v2926 = vshll.u32 %v2839, 16
      %v2928 = vrot.slane %v2926, 1
      %v2929 = vor.u32 %v2924, %v2928
      %v2930 = vshrl.u32 %v2671, 16
      %v2932 = vshll.u32 %v2671, 16
      %v2934 = vrot.slane %v2932, 1
      %v2935 = vor.u32 %v2930, %v2934
      %2936 = vrot.lane.b32.xlu0 %v2845, 64
      %v2937 = vpop.permute.xlu0 %2936
      %2938 = vrot.lane.b32.xlu0 %v2851, 64
      %v2939 = vpop.permute.xlu0 %2938
      %2940 = vrot.lane.b32.xlu0 %v2857, 64
      %v2941 = vpop.permute.xlu0 %2940
      %2942 = vrot.lane.b32.xlu0 %v2863, 64
      %v2943 = vpop.permute.xlu0 %2942
      %2944 = vrot.lane.b32.xlu0 %v2869, 64
      %v2945 = vpop.permute.xlu0 %2944
      %2946 = vrot.lane.b32.xlu0 %v2875, 64
      %v2947 = vpop.permute.xlu0 %2946
      %2948 = vrot.lane.b32.xlu0 %v2881, 64
      %v2949 = vpop.permute.xlu0 %2948
      %2950 = vrot.lane.b32.xlu0 %v2887, 64
      %v2951 = vpop.permute.xlu0 %2950
      %2952 = vrot.lane.b32.xlu0 %v2893, 64
      %v2953 = vpop.permute.xlu0 %2952
      %2954 = vrot.lane.b32.xlu0 %v2899, 64
      %v2955 = vpop.permute.xlu0 %2954
      %2956 = vrot.lane.b32.xlu0 %v2905, 64
      %v2957 = vpop.permute.xlu0 %2956
      %2958 = vrot.lane.b32.xlu0 %v2911, 64
      %v2959 = vpop.permute.xlu0 %2958
      %2960 = vrot.lane.b32.xlu0 %v2917, 64
      %v2961 = vpop.permute.xlu0 %2960
      %2962 = vrot.lane.b32.xlu0 %v2923, 64
      %v2963 = vpop.permute.xlu0 %2962
      %2964 = vrot.lane.b32.xlu0 %v2929, 64
      %v2965 = vpop.permute.xlu0 %2964
      %2966 = vrot.lane.b32.xlu0 %v2935, 64
      %v2967 = vpop.permute.xlu0 %2966
      %vm2968 = vcmask 523264
      %v2969 = vsel %vm2968, %v2937, %v2939
      %v2970 = vsel %vm2968, %v2941, %v2943
      %v2971 = vsel %vm2968, %v2945, %v2947
      %v2972 = vsel %vm2968, %v2949, %v2951
      %v2973 = vsel %vm2968, %v2953, %v2955
      %v2974 = vsel %vm2968, %v2957, %v2959
      %v2975 = vsel %vm2968, %v2961, %v2963
      %v2976 = vsel %vm2968, %v2965, %v2967
      %vm2977 = vcmask 523264
      %v2979 = vsel %vm2977, %v1841, %v2937
      %v2981 = vsel %vm2977, %v1843, %v2941
      %v2983 = vsel %vm2977, %v1845, %v2945
      %v2985 = vsel %vm2977, %v1847, %v2949
      %v2987 = vsel %vm2977, %v1849, %v2953
      %v2989 = vsel %vm2977, %v1851, %v2957
      %v2991 = vsel %vm2977, %v1853, %v2961
      %v2993 = vsel %vm2977, %v1855, %v2965
      %v3010 = vunpack.c.l.b16 %v1756
      %v3011 = vunpack.c.l.b16 %v2979
      %v3012 = vunpack.c.l.b16 %v2969
      %v3013 = vunpack.c.l.b16 %v1758
      %v3014 = vunpack.c.l.b16 %v2981
      %v3015 = vunpack.c.l.b16 %v2970
      %v3016 = vunpack.c.l.b16 %v1760
      %v3017 = vunpack.c.l.b16 %v2983
      %v3018 = vunpack.c.l.b16 %v2971
      %v3019 = vunpack.c.l.b16 %v1762
      %v3020 = vunpack.c.l.b16 %v2985
      %v3021 = vunpack.c.l.b16 %v2972
      %v3022 = vunpack.c.l.b16 %v1764
      %v3023 = vunpack.c.l.b16 %v2987
      %v3024 = vunpack.c.l.b16 %v2973
      %v3025 = vunpack.c.l.b16 %v1766
      %v3026 = vunpack.c.l.b16 %v2989
      %v3027 = vunpack.c.l.b16 %v2974
      %v3028 = vunpack.c.l.b16 %v1768
      %v3029 = vunpack.c.l.b16 %v2991
      %v3030 = vunpack.c.l.b16 %v2975
      %v3031 = vunpack.c.l.b16 %v1770
      %v3032 = vunpack.c.l.b16 %v2993
      %v3033 = vunpack.c.l.b16 %v2976
      %v3034 = vld [vmem:[%s3] sm:$0xf]
      %v3035 = vld [vmem:[%s3 + $0x4] sm:$0xf]
      %v3036 = vld [vmem:[%s3 + $0x8] sm:$0xf]
      %v3037 = vld [vmem:[%s3 + $0xc] sm:$0xf]
      %v3038 = vld [vmem:[%s3 + $0x10] sm:$0xf]
      %v3039 = vld [vmem:[%s3 + $0x14] sm:$0xf]
      %v3040 = vld [vmem:[%s3 + $0x18] sm:$0xf]
      %v3041 = vld [vmem:[%s3 + $0x1c] sm:$0xf]
      %v3042 = vld [vmem:[%s3 + $0x20] sm:$0xf]
      %v3043 = vld [vmem:[%s3 + $0x24] sm:$0xf]
      %v3044 = vld [vmem:[%s3 + $0x28] sm:$0xf]
      %v3045 = vld [vmem:[%s3 + $0x2c] sm:$0xf]
      %v3046 = vld [vmem:[%s3 + $0x30] sm:$0xf]
      %v3047 = vld [vmem:[%s3 + $0x34] sm:$0xf]
      %v3048 = vld [vmem:[%s3 + $0x38] sm:$0xf]
      %v3049 = vld [vmem:[%s3 + $0x3c] sm:$0xf]
      %v3050 = vld [vmem:[%s3 + $0x40] sm:$0xf]
      %v3051 = vld [vmem:[%s3 + $0x44] sm:$0xf]
      %v3052 = vld [vmem:[%s3 + $0x48] sm:$0xf]
      %v3053 = vld [vmem:[%s3 + $0x4c] sm:$0xf]
      %v3054 = vld [vmem:[%s3 + $0x50] sm:$0xf]
      %v3055 = vld [vmem:[%s3 + $0x54] sm:$0xf]
      %v3056 = vld [vmem:[%s3 + $0x58] sm:$0xf]
      %v3057 = vld [vmem:[%s3 + $0x5c] sm:$0xf]
      %v3058 = vld [vmem:[%s3 + $0x60] sm:$0xf]
      %v3059 = vld [vmem:[%s3 + $0x64] sm:$0xf]
      %v3060 = vld [vmem:[%s3 + $0x68] sm:$0xf]
      %v3061 = vld [vmem:[%s3 + $0x6c] sm:$0xf]
      %v3062 = vld [vmem:[%s3 + $0x70] sm:$0xf]
      %v3063 = vld [vmem:[%s3 + $0x74] sm:$0xf]
      %v3064 = vld [vmem:[%s3 + $0x78] sm:$0xf]
      %v3065 = vld [vmem:[%s3 + $0x7c] sm:$0xf]
      %v3066 = vld [vmem:[%s3 + $0x80] sm:$0xf]
      %v3067 = vld [vmem:[%s3 + $0x84] sm:$0xf]
      %v3068 = vld [vmem:[%s3 + $0x88] sm:$0xf]
      %v3069 = vld [vmem:[%s3 + $0x8c] sm:$0xf]
      %v3070 = vld [vmem:[%s3 + $0x90] sm:$0xf]
      %v3071 = vld [vmem:[%s3 + $0x94] sm:$0xf]
      %v3072 = vld [vmem:[%s3 + $0x98] sm:$0xf]
      %v3073 = vld [vmem:[%s3 + $0x9c] sm:$0xf]
      %v3074 = vld [vmem:[%s3 + $0xa0] sm:$0x3]
      %v3075 = vld [vmem:[%s4] sm:$0x1]
      %v3077 = vperm.slane %v3075, 0
      %v3079 = vpack.c.b16 %v3013, %v3010
      %v3080 = vpack.c.b16 %v3014, %v3011
      %v3081 = vpack.c.b16 %v3015, %v3012
      %v3082 = vpack.c.b16 %v3019, %v3016
      %v3083 = vpack.c.b16 %v3020, %v3017
      %v3084 = vpack.c.b16 %v3021, %v3018
      %v3085 = vpack.c.b16 %v3025, %v3022
      %v3086 = vpack.c.b16 %v3026, %v3023
      %v3087 = vpack.c.b16 %v3027, %v3024
      %v3088 = vpack.c.b16 %v3031, %v3028
      %v3089 = vpack.c.b16 %v3032, %v3029
      %v3090 = vpack.c.b16 %v3033, %v3030
      %v3140 = vunpack.c.l.b16 %v3034
      %v3141 = vunpack.c.l.b16 %v3035
      %v3142 = vunpack.c.l.b16 %v3036
      %v3143 = vunpack.c.l.b16 %v3037
      %v3144 = vunpack.c.l.b16 %v3038
      %v3145 = vunpack.c.l.b16 %v3039
      %v3146 = vunpack.c.l.b16 %v3040
      %v3147 = vunpack.c.l.b16 %v3041
      %v3148 = vunpack.c.l.b16 %v3042
      %v3149 = vunpack.c.l.b16 %v3043
      %v3150 = vunpack.c.l.b16 %v3044
      %v3151 = vunpack.c.l.b16 %v3045
      %v3152 = vunpack.c.l.b16 %v3046
      %v3153 = vunpack.c.l.b16 %v3047
      %v3154 = vunpack.c.l.b16 %v3048
      %v3155 = vunpack.c.l.b16 %v3049
      %v3156 = vunpack.c.l.b16 %v3050
      %v3157 = vunpack.c.l.b16 %v3051
      %v3158 = vunpack.c.l.b16 %v3052
      %v3159 = vunpack.c.l.b16 %v3053
      %v3160 = vunpack.c.l.b16 %v3054
      %v3161 = vunpack.c.l.b16 %v3055
      %v3162 = vunpack.c.l.b16 %v3056
      %v3163 = vunpack.c.l.b16 %v3057
      %v3164 = vunpack.c.l.b16 %v3058
      %v3165 = vunpack.c.l.b16 %v3059
      %v3166 = vunpack.c.l.b16 %v3060
      %v3167 = vunpack.c.l.b16 %v3061
      %v3168 = vunpack.c.l.b16 %v3062
      %v3169 = vunpack.c.l.b16 %v3063
      %v3170 = vunpack.c.l.b16 %v3064
      %v3171 = vunpack.c.l.b16 %v3065
      %v3172 = vunpack.c.l.b16 %v3066
      %v3173 = vunpack.c.l.b16 %v3067
      %v3174 = vunpack.c.l.b16 %v3068
      %v3175 = vunpack.c.l.b16 %v3069
      %v3176 = vunpack.c.l.b16 %v3070
      %v3177 = vunpack.c.l.b16 %v3071
      %v3178 = vunpack.c.l.b16 %v3072
      %v3179 = vunpack.c.l.b16 %v3073
      %v3180 = vunpack.c.l.b16 %v3074
      %v3181 = vpack.c.b16 %v3141, %v3140
      %v3182 = vpack.c.b16 %v3143, %v3142
      %v3183 = vpack.c.b16 %v3145, %v3144
      %v3184 = vpack.c.b16 %v3147, %v3146
      %v3185 = vpack.c.b16 %v3149, %v3148
      %v3186 = vpack.c.b16 %v3151, %v3150
      %v3187 = vpack.c.b16 %v3153, %v3152
      %v3188 = vpack.c.b16 %v3155, %v3154
      %v3189 = vpack.c.b16 %v3157, %v3156
      %v3190 = vpack.c.b16 %v3159, %v3158
      %v3191 = vpack.c.b16 %v3161, %v3160
      %v3192 = vpack.c.b16 %v3163, %v3162
      %v3193 = vpack.c.b16 %v3165, %v3164
      %v3194 = vpack.c.b16 %v3167, %v3166
      %v3195 = vpack.c.b16 %v3169, %v3168
      %v3196 = vpack.c.b16 %v3171, %v3170
      %v3197 = vpack.c.b16 %v3173, %v3172
      %v3198 = vpack.c.b16 %v3175, %v3174
      %v3199 = vpack.c.b16 %v3177, %v3176
      %v3200 = vpack.c.b16 %v3179, %v3178
      %v3201 = vpack.c.b16 %v3180, %v3180
      %vm3222 = vcmask 556032
      %v3224 = vsel %vm3222, %v3081, 0
      %v3227 = vsel %vm3222, %v3084, 0
      %v3230 = vsel %vm3222, %v3087, 0
      %v3233 = vsel %vm3222, %v3090, 0
      %vm3235 = vcmask 1041408
      %v3237 = vsel %vm3235, %v3201, 0
      %3239 = vmatpush.bf16.msra.mxu0 %v3188
      %3240 = vmatpush.bf16.msra.mxu0 %v3187
      %3241 = vmatpush.bf16.msra.mxu0 %v3186
      %3242 = vmatpush.bf16.msra.mxu0 %v3185
      %3243 = vmatpush.bf16.msra.mxu0 %v3184
      %3244 = vmatpush.bf16.msra.mxu0 %v3183
      %3245 = vmatpush.bf16.msra.mxu0 %v3182
      %3246 = vmatpush.bf16.msra.mxu0 %v3181
      %3247 = vmatmul.bf16.gmra.mxu0 %v3079
      %v3248 = vpop.f32.mrf.mxu0
      %v3249 = vadd.f32 %v3077, %v3248
      %v3250 = vpop.f32.mrf.mxu0
      %v3251 = vadd.f32 %v3077, %v3250
      %3252 = vmatmul.bf16.gmra.mxu0 %v3082
      %v3253 = vpop.f32.mrf.mxu0
      %v3254 = vadd.f32 %v3077, %v3253
      %v3255 = vpop.f32.mrf.mxu0
      %v3256 = vadd.f32 %v3077, %v3255
      %3257 = vmatmul.bf16.gmra.mxu0 %v3085
      %v3258 = vpop.f32.mrf.mxu0
      %v3259 = vadd.f32 %v3077, %v3258
      %v3260 = vpop.f32.mrf.mxu0
      %v3261 = vadd.f32 %v3077, %v3260
      %3262 = vmatmul.bf16.gmra.mxu0 %v3088
      %v3263 = vpop.f32.mrf.mxu0
      %v3264 = vadd.f32 %v3077, %v3263
      %v3265 = vpop.f32.mrf.mxu0
      %v3266 = vadd.f32 %v3077, %v3265
      %3267 = vdwg.mxu0
      %3268 = vmatpush.bf16.msra.mxu0 %v3196
      %3269 = vmatpush.bf16.msra.mxu0 %v3195
      %3270 = vmatpush.bf16.msra.mxu0 %v3194
      %3271 = vmatpush.bf16.msra.mxu0 %v3193
      %3272 = vmatpush.bf16.msra.mxu0 %v3192
      %3273 = vmatpush.bf16.msra.mxu0 %v3191
      %3274 = vmatpush.bf16.msra.mxu0 %v3190
      %3275 = vmatpush.bf16.msra.mxu0 %v3189
      %3276 = vmatmul.bf16.gmra.mxu0 %v3080
      %v3277 = vpop.f32.mrf.mxu0
      %v3278 = vadd.f32 %v3249, %v3277
      %v3279 = vpop.f32.mrf.mxu0
      %v3280 = vadd.f32 %v3251, %v3279
      %3281 = vmatmul.bf16.gmra.mxu0 %v3083
      %v3282 = vpop.f32.mrf.mxu0
      %v3283 = vadd.f32 %v3254, %v3282
      %v3284 = vpop.f32.mrf.mxu0
      %v3285 = vadd.f32 %v3256, %v3284
      %3286 = vmatmul.bf16.gmra.mxu0 %v3086
      %v3287 = vpop.f32.mrf.mxu0
      %v3288 = vadd.f32 %v3259, %v3287
      %v3289 = vpop.f32.mrf.mxu0
      %v3290 = vadd.f32 %v3261, %v3289
      %3291 = vmatmul.bf16.gmra.mxu0 %v3089
      %v3292 = vpop.f32.mrf.mxu0
      %v3293 = vadd.f32 %v3264, %v3292
      %v3294 = vpop.f32.mrf.mxu0
      %v3295 = vadd.f32 %v3266, %v3294
      %3296 = vdwg.mxu0
      %3297 = vmatpush.bf16.msra.mxu0 0
      %3298 = vmatpush.bf16.msra.mxu0 0
      %3299 = vmatpush.bf16.msra.mxu0 0
      %3300 = vmatpush.bf16.msra.mxu0 %v3237
      %3301 = vmatpush.bf16.msra.mxu0 %v3200
      %3302 = vmatpush.bf16.msra.mxu0 %v3199
      %3303 = vmatpush.bf16.msra.mxu0 %v3198
      %3304 = vmatpush.bf16.msra.mxu0 %v3197
      %3305 = vmatmul.bf16.gmra.mxu0 %v3224
      %v3306 = vpop.f32.mrf.mxu0
      %v3307 = vadd.f32 %v3278, %v3306
      %v3308 = vpop.f32.mrf.mxu0
      %v3309 = vadd.f32 %v3280, %v3308
      %3310 = vmatmul.bf16.gmra.mxu0 %v3227
      %v3311 = vpop.f32.mrf.mxu0
      %v3312 = vadd.f32 %v3283, %v3311
      %v3313 = vpop.f32.mrf.mxu0
      %v3314 = vadd.f32 %v3285, %v3313
      %3315 = vmatmul.bf16.gmra.mxu0 %v3230
      %v3316 = vpop.f32.mrf.mxu0
      %v3317 = vadd.f32 %v3288, %v3316
      %v3318 = vpop.f32.mrf.mxu0
      %v3319 = vadd.f32 %v3290, %v3318
      %3320 = vmatmul.bf16.gmra.mxu0 %v3233
      %v3321 = vpop.f32.mrf.mxu0
      %v3322 = vadd.f32 %v3293, %v3321
      %v3323 = vpop.f32.mrf.mxu0
      %v3324 = vadd.f32 %v3295, %v3323
      %3325 = vdwg.mxu0
      %3326 = vst.msk [vmem:[%s419] sm:$0xff] %vm2977, %v3307
      %3327 = vst.msk [vmem:[%s419 + $0x8] sm:$0xff] %vm2977, %v3309
      %3328 = vst.msk [vmem:[%s419 + $0x10] sm:$0xff] %vm2977, %v3312
      %3329 = vst.msk [vmem:[%s419 + $0x18] sm:$0xff] %vm2977, %v3314
      %3330 = vst.msk [vmem:[%s419 + $0x20] sm:$0xff] %vm2977, %v3317
      %3331 = vst.msk [vmem:[%s419 + $0x28] sm:$0xff] %vm2977, %v3319
      %3332 = vst.msk [vmem:[%s419 + $0x30] sm:$0xff] %vm2977, %v3322
      %3333 = vst.msk [vmem:[%s419 + $0x38] sm:$0xff] %vm2977, %v3324
      %v3334 = vsel %vm2977, %v3307, 0.0
      %v3335 = vsel %vm2977, %v3309, 0.0
      %v3336 = vadd.f32 %v3334, %v3335
      %v3337 = vsel %vm2977, %v3312, 0.0
      %v3338 = vadd.f32 %v3336, %v3337
      %v3339 = vsel %vm2977, %v3314, 0.0
      %v3340 = vadd.f32 %v3338, %v3339
      %v3341 = vsel %vm2977, %v3317, 0.0
      %v3342 = vadd.f32 %v3340, %v3341
      %v3343 = vsel %vm2977, %v3319, 0.0
      %v3344 = vadd.f32 %v3342, %v3343
      %v3345 = vsel %vm2977, %v3322, 0.0
      %v3346 = vadd.f32 %v3344, %v3345
      %v3347 = vsel %vm2977, %v3324, 0.0
      %v3348 = vadd.f32 %v3346, %v3347
      %v3349 = vrot.slane %v3348, 4
      %v3350 = vadd.f32 %v3348, %v3349
      %v3351 = vrot.slane %v3350, 2
      %v3352 = vadd.f32 %v3350, %v3351
      %v3353 = vrot.slane %v3352, 1
      %v3354 = vadd.f32 %v3352, %v3353
      %vm3355 = vcmask 516096
      %3356 = vst.msk [vmem:[%s426] sm:$0x1] %vm3355, %v3354
      %v3357 = vmul.f32 %v3307, %v3307
      %v3358 = vmul.f32 %v3309, %v3309
      %v3359 = vmul.f32 %v3312, %v3312
      %v3360 = vmul.f32 %v3314, %v3314
      %v3361 = vmul.f32 %v3317, %v3317
      %v3362 = vmul.f32 %v3319, %v3319
      %v3363 = vmul.f32 %v3322, %v3322
      %v3364 = vmul.f32 %v3324, %v3324
      %v3365 = vsel %vm2977, %v3357, 0.0
      %v3366 = vsel %vm2977, %v3358, 0.0
      %v3367 = vadd.f32 %v3365, %v3366
      %v3368 = vsel %vm2977, %v3359, 0.0
      %v3369 = vadd.f32 %v3367, %v3368
      %v3370 = vsel %vm2977, %v3360, 0.0
      %v3371 = vadd.f32 %v3369, %v3370
      %v3372 = vsel %vm2977, %v3361, 0.0
      %v3373 = vadd.f32 %v3371, %v3372
      %v3374 = vsel %vm2977, %v3362, 0.0
      %v3375 = vadd.f32 %v3373, %v3374
      %v3376 = vsel %vm2977, %v3363, 0.0
      %v3377 = vadd.f32 %v3375, %v3376
      %v3378 = vsel %vm2977, %v3364, 0.0
      %v3379 = vadd.f32 %v3377, %v3378
      %v3380 = vrot.slane %v3379, 4
      %v3381 = vadd.f32 %v3379, %v3380
      %v3382 = vrot.slane %v3381, 2
      %v3383 = vadd.f32 %v3381, %v3382
      %v3384 = vrot.slane %v3383, 1
      %v3385 = vadd.f32 %v3383, %v3384
      %3386 = vst.msk [vmem:[%s433] sm:$0x1] %vm3355, %v3385
      %p3387 = scmp.lt.s32.totalorder %s23, 1
      %s3388 = scalar_select %p3387, %s23, 1
      %p3389 = scmp.lt.s32.totalorder %s24, 7
      %s3390 = scalar_select %p3389, %s24, 7
      %s3391 = smul.addr %s3390, 8
      %s3392 = smul.addr %s3388, 64
      %s3393 = sadd.s32 %s3391, %s3392
      %s3394 = smul.addr %s3393, 8
      %s3395 = scalar_lea.vmem %s5, %s3394
      %p3396 = scmp.lt.s32.totalorder %s23, 1
      %s3397 = scalar_select %p3396, %s23, 1
      %p3398 = scmp.lt.s32.totalorder %s24, 7
      %s3399 = scalar_select %p3398, %s24, 7
      %s3400 = smul.addr %s3397, 8
      %s3401 = sadd.s32 %s3399, %s3400
      %s3402 = scalar_lea.vmem %s6, %s3401
      %p3403 = scmp.lt.s32.totalorder %s23, 1
      %s3404 = scalar_select %p3403, %s23, 1
      %p3405 = scmp.lt.s32.totalorder %s24, 7
      %s3406 = scalar_select %p3405, %s24, 7
      %s3407 = smul.addr %s3404, 8
      %s3408 = sadd.s32 %s3406, %s3407
      %s3409 = scalar_lea.vmem %s7, %s3408
      // Predicated region
      $region41: #{up_transition.6} parent=39 // pred_check
        %p3410 = pneg %p181
      $region42: #{up_transition.6} parent=39 // pred_check_branch
        %3412 = sbr.rel (%p3410) target = $region44
      $region43: #{up_transition.6} parent=39 // pred_region
        _
      $region44: #{up_transition.6} parent=39 // pred_fallthru
        _
      // Predicated region
      $region45: #{up_transition.6} parent=39 // pred_check
        %p3413 = pneg %p209
      $region46: #{up_transition.6} parent=39 // pred_check_branch
        %3415 = sbr.rel (%p3413) target = $region48
      $region47: #{up_transition.6} parent=39 // pred_region
        _
      $region48: #{up_transition.6} parent=39 // pred_fallthru
        _
      // Predicated region
      $region49: #{up_transition.6} parent=39 // pred_check
        %p3416 = pneg %p237
      $region50: #{up_transition.6} parent=39 // pred_check_branch
        %3418 = sbr.rel (%p3416) target = $region52
      $region51: #{up_transition.6} parent=39 // pred_region
        _
      $region52: #{up_transition.6} parent=39 // pred_fallthru
        _
    $region40: #{up_transition.6} parent=5 // pred_fallthru
      _
    %p3419 = scmp.le.s32.totalorder 2, %s14
    // Predicated region
    $region53: #{up_transition.6} parent=5 // pred_check
      %p3420 = pneg %p3419
    $region54: #{up_transition.6} parent=5 // pred_check_branch
      %3422 = sbr.rel (%p3420) target = $region56
    $region55: #{up_transition.6} parent=5 // pred_region
      %s3423 = ssub.s32 %s14, 2
      // Predicated region
      $region57: #{up_transition.6} parent=55 // pred_check
        %p3424 = pneg %p187
      $region58: #{up_transition.6} parent=55 // pred_check_branch
        %3426 = sbr.rel (%p3424) target = $region60
      $region59: #{up_transition.6} parent=55 // pred_region
        %p3427 = scmp.lt.s32.totalorder %s25, 1
        %s3428 = scalar_select %p3427, %s25, 1
        %p3429 = scmp.lt.s32.totalorder %s26, 7
        %s3430 = scalar_select %p3429, %s26, 7
        %s3431 = smul.addr %s3430, 8
        %s3432 = smul.addr %s3428, 64
        %s3433 = sadd.s32 %s3431, %s3432
        %s3434 = smul.addr %s3433, 8
        %s3435 = scalar_lea.vmem %s5, %s3434
      $region60: #{up_transition.6} parent=55 // pred_fallthru
        _
      // Predicated region
      $region61: #{up_transition.6} parent=55 // pred_check
        %p3436 = pneg %p215
      $region62: #{up_transition.6} parent=55 // pred_check_branch
        %3438 = sbr.rel (%p3436) target = $region64
      $region63: #{up_transition.6} parent=55 // pred_region
        %p3439 = scmp.lt.s32.totalorder %s25, 1
        %s3440 = scalar_select %p3439, %s25, 1
        %p3441 = scmp.lt.s32.totalorder %s26, 7
        %s3442 = scalar_select %p3441, %s26, 7
        %s3443 = smul.addr %s3440, 8
        %s3444 = sadd.s32 %s3442, %s3443
        %s3445 = scalar_lea.vmem %s6, %s3444
      $region64: #{up_transition.6} parent=55 // pred_fallthru
        _
      // Predicated region
      $region65: #{up_transition.6} parent=55 // pred_check
        %p3446 = pneg %p243
      $region66: #{up_transition.6} parent=55 // pred_check_branch
        %3448 = sbr.rel (%p3446) target = $region68
      $region67: #{up_transition.6} parent=55 // pred_region
        %p3449 = scmp.lt.s32.totalorder %s25, 1
        %s3450 = scalar_select %p3449, %s25, 1
        %p3451 = scmp.lt.s32.totalorder %s26, 7
        %s3452 = scalar_select %p3451, %s26, 7
        %s3453 = smul.addr %s3450, 8
        %s3454 = sadd.s32 %s3452, %s3453
        %s3455 = scalar_lea.vmem %s7, %s3454
      $region68: #{up_transition.6} parent=55 // pred_fallthru
        _
    $region56: #{up_transition.6} parent=5 // pred_fallthru
      _
  $region6: #{up_transition.6} parent=0 // loop_footer
    %s18 = sadd.s32 1, %s14
  $region7: #{up_transition.6} parent=0 // loop_footer_branch
    %13 = sbr.rel target = $region3
  $region8: #{up_transition.6} parent=0 // loop_exit
    _

// kernel: up_transition.9
$region0: #{up_transition.9}
  #allocation0 [shape = 'u32[]', space=smem, size = 0x4, offset = 0x4, fixed_abs, tag = 'smem constant byte address 0x4 - core index']
  #allocation1 [shape = 'u32[72,128]{1,0:T(1,128)}', space=vmem, size = 0x9000, scoped, tag = 'internal scratch']
  %s0 = inlined_call_operand.vmem [shape: f32[1024,64], index: 0, kind: input, shape index: {}]
  %s1 = inlined_call_operand.vmem [shape: f32[1,64], index: 1, kind: input, shape index: {}]
  %s2 = inlined_call_operand.vmem [shape: f32[1,64], index: 2, kind: input, shape index: {}]
  %s3 = inlined_call_operand.hbm [shape: f32[1024,64], index: 3, kind: output, shape index: {}]
  %s4 = sld [smem:[#allocation0]]
  $region22: #{up_transition.9} parent=0
    _
  %s6 = ssub.s32 1, %s4
  %s7 = scalar_select 0, %s6, %s4
  $region1: #{up_transition.9} parent=0
    #allocation2 [shape = 'u8[524288]{0}', space=vmem, size = 0x80000, scoped, tag = 'output window, operand 0, single buffered']
    #allocation3 [shape = 's32[1]{0}', space=sflag, size = 0x4, scoped, tag = 'scoped memory for up_transition.9']
    %8 = vsyncpa [#allocation3], 0
    // Predicated region
    $region2: #{up_transition.9} parent=1 // pred_check
      _
    $region3: #{up_transition.9} parent=1 // pred_check_branch
      %10 = sbr.rel (0) target = $region5
    $region4: #{up_transition.9} parent=1 // pred_region
      _
    $region5: #{up_transition.9} parent=1 // pred_fallthru
      _
    // Predicated region
    $region6: #{up_transition.9} parent=1 // pred_check
      _
    $region7: #{up_transition.9} parent=1 // pred_check_branch
      %12 = sbr.rel (0) target = $region9
    $region8: #{up_transition.9} parent=1 // pred_region
      _
    $region9: #{up_transition.9} parent=1 // pred_fallthru
      _
    // Predicated region
    $region10: #{up_transition.9} parent=1 // pred_check
      _
    $region11: #{up_transition.9} parent=1 // pred_check_branch
      %14 = sbr.rel (0) target = $region13
    $region12: #{up_transition.9} parent=1 // pred_region
      _
    $region13: #{up_transition.9} parent=1 // pred_fallthru
      _
    %v15 = vld [vmem:[%s0] sm:$0xff]
    %v16 = vld [vmem:[%s0 + $0x8] sm:$0xff]
    %v17 = vld [vmem:[%s0 + $0x10] sm:$0xff]
    %v18 = vld [vmem:[%s0 + $0x18] sm:$0xff]
    %v19 = vld [vmem:[%s0 + $0x20] sm:$0xff]
    %v20 = vld [vmem:[%s0 + $0x28] sm:$0xff]
    %v21 = vld [vmem:[%s0 + $0x30] sm:$0xff]
    %v22 = vld [vmem:[%s0 + $0x38] sm:$0xff]
    %v23 = vld [vmem:[%s0 + $0x40] sm:$0xff]
    %v24 = vld [vmem:[%s0 + $0x48] sm:$0xff]
    %v25 = vld [vmem:[%s0 + $0x50] sm:$0xff]
    %v26 = vld [vmem:[%s0 + $0x58] sm:$0xff]
    %v27 = vld [vmem:[%s0 + $0x60] sm:$0xff]
    %v28 = vld [vmem:[%s0 + $0x68] sm:$0xff]
    %v29 = vld [vmem:[%s0 + $0x70] sm:$0xff]
    %v30 = vld [vmem:[%s0 + $0x78] sm:$0xff]
    %v31 = vld [vmem:[%s0 + $0x80] sm:$0xff]
    %v32 = vld [vmem:[%s0 + $0x88] sm:$0xff]
    %v33 = vld [vmem:[%s0 + $0x90] sm:$0xff]
    %v34 = vld [vmem:[%s0 + $0x98] sm:$0xff]
    %v35 = vld [vmem:[%s0 + $0xa0] sm:$0xff]
    %v36 = vld [vmem:[%s0 + $0xa8] sm:$0xff]
    %v37 = vld [vmem:[%s0 + $0xb0] sm:$0xff]
    %v38 = vld [vmem:[%s0 + $0xb8] sm:$0xff]
    %v39 = vld [vmem:[%s0 + $0xc0] sm:$0xff]
    %v40 = vld [vmem:[%s0 + $0xc8] sm:$0xff]
    %v41 = vld [vmem:[%s0 + $0xd0] sm:$0xff]
    %v42 = vld [vmem:[%s0 + $0xd8] sm:$0xff]
    %v43 = vld [vmem:[%s0 + $0xe0] sm:$0xff]
    %v44 = vld [vmem:[%s0 + $0xe8] sm:$0xff]
    %v45 = vld [vmem:[%s0 + $0xf0] sm:$0xff]
    %v46 = vld [vmem:[%s0 + $0xf8] sm:$0xff]
    %v47 = vld [vmem:[%s0 + $0x100] sm:$0xff]
    %v48 = vld [vmem:[%s0 + $0x108] sm:$0xff]
    %v49 = vld [vmem:[%s0 + $0x110] sm:$0xff]
    %v50 = vld [vmem:[%s0 + $0x118] sm:$0xff]
    %v51 = vld [vmem:[%s0 + $0x120] sm:$0xff]
    %v52 = vld [vmem:[%s0 + $0x128] sm:$0xff]
    %v53 = vld [vmem:[%s0 + $0x130] sm:$0xff]
    %v54 = vld [vmem:[%s0 + $0x138] sm:$0xff]
    %v55 = vld [vmem:[%s0 + $0x140] sm:$0xff]
    %v56 = vld [vmem:[%s0 + $0x148] sm:$0xff]
    %v57 = vld [vmem:[%s0 + $0x150] sm:$0xff]
    %v58 = vld [vmem:[%s0 + $0x158] sm:$0xff]
    %v59 = vld [vmem:[%s0 + $0x160] sm:$0xff]
    %v60 = vld [vmem:[%s0 + $0x168] sm:$0xff]
    %v61 = vld [vmem:[%s0 + $0x170] sm:$0xff]
    %v62 = vld [vmem:[%s0 + $0x178] sm:$0xff]
    %v63 = vld [vmem:[%s0 + $0x180] sm:$0xff]
    %v64 = vld [vmem:[%s0 + $0x188] sm:$0xff]
    %v65 = vld [vmem:[%s0 + $0x190] sm:$0xff]
    %v66 = vld [vmem:[%s0 + $0x198] sm:$0xff]
    %v67 = vld [vmem:[%s0 + $0x1a0] sm:$0xff]
    %v68 = vld [vmem:[%s0 + $0x1a8] sm:$0xff]
    %v69 = vld [vmem:[%s0 + $0x1b0] sm:$0xff]
    %v70 = vld [vmem:[%s0 + $0x1b8] sm:$0xff]
    %v71 = vld [vmem:[%s0 + $0x1c0] sm:$0xff]
    %v72 = vld [vmem:[%s0 + $0x1c8] sm:$0xff]
    %v73 = vld [vmem:[%s0 + $0x1d0] sm:$0xff]
    %v74 = vld [vmem:[%s0 + $0x1d8] sm:$0xff]
    %v75 = vld [vmem:[%s0 + $0x1e0] sm:$0xff]
    %v76 = vld [vmem:[%s0 + $0x1e8] sm:$0xff]
    %v77 = vld [vmem:[%s0 + $0x1f0] sm:$0xff]
    %v78 = vld [vmem:[%s0 + $0x1f8] sm:$0xff]
    %v79 = vld [vmem:[%s0 + $0x200] sm:$0xff]
    %v80 = vld [vmem:[%s0 + $0x208] sm:$0xff]
    %v81 = vld [vmem:[%s0 + $0x210] sm:$0xff]
    %v82 = vld [vmem:[%s0 + $0x218] sm:$0xff]
    %v83 = vld [vmem:[%s0 + $0x220] sm:$0xff]
    %v84 = vld [vmem:[%s0 + $0x228] sm:$0xff]
    %v85 = vld [vmem:[%s0 + $0x230] sm:$0xff]
    %v86 = vld [vmem:[%s0 + $0x238] sm:$0xff]
    %v87 = vld [vmem:[%s0 + $0x240] sm:$0xff]
    %v88 = vld [vmem:[%s0 + $0x248] sm:$0xff]
    %v89 = vld [vmem:[%s0 + $0x250] sm:$0xff]
    %v90 = vld [vmem:[%s0 + $0x258] sm:$0xff]
    %v91 = vld [vmem:[%s0 + $0x260] sm:$0xff]
    %v92 = vld [vmem:[%s0 + $0x268] sm:$0xff]
    %v93 = vld [vmem:[%s0 + $0x270] sm:$0xff]
    %v94 = vld [vmem:[%s0 + $0x278] sm:$0xff]
    %v95 = vld [vmem:[%s0 + $0x280] sm:$0xff]
    %v96 = vld [vmem:[%s0 + $0x288] sm:$0xff]
    %v97 = vld [vmem:[%s0 + $0x290] sm:$0xff]
    %v98 = vld [vmem:[%s0 + $0x298] sm:$0xff]
    %v99 = vld [vmem:[%s0 + $0x2a0] sm:$0xff]
    %v100 = vld [vmem:[%s0 + $0x2a8] sm:$0xff]
    %v101 = vld [vmem:[%s0 + $0x2b0] sm:$0xff]
    %v102 = vld [vmem:[%s0 + $0x2b8] sm:$0xff]
    %v103 = vld [vmem:[%s0 + $0x2c0] sm:$0xff]
    %v104 = vld [vmem:[%s0 + $0x2c8] sm:$0xff]
    %v105 = vld [vmem:[%s0 + $0x2d0] sm:$0xff]
    %v106 = vld [vmem:[%s0 + $0x2d8] sm:$0xff]
    %v107 = vld [vmem:[%s0 + $0x2e0] sm:$0xff]
    %v108 = vld [vmem:[%s0 + $0x2e8] sm:$0xff]
    %v109 = vld [vmem:[%s0 + $0x2f0] sm:$0xff]
    %v110 = vld [vmem:[%s0 + $0x2f8] sm:$0xff]
    %v111 = vld [vmem:[%s0 + $0x300] sm:$0xff]
    %v112 = vld [vmem:[%s0 + $0x308] sm:$0xff]
    %v113 = vld [vmem:[%s0 + $0x310] sm:$0xff]
    %v114 = vld [vmem:[%s0 + $0x318] sm:$0xff]
    %v115 = vld [vmem:[%s0 + $0x320] sm:$0xff]
    %v116 = vld [vmem:[%s0 + $0x328] sm:$0xff]
    %v117 = vld [vmem:[%s0 + $0x330] sm:$0xff]
    %v118 = vld [vmem:[%s0 + $0x338] sm:$0xff]
    %v119 = vld [vmem:[%s0 + $0x340] sm:$0xff]
    %v120 = vld [vmem:[%s0 + $0x348] sm:$0xff]
    %v121 = vld [vmem:[%s0 + $0x350] sm:$0xff]
    %v122 = vld [vmem:[%s0 + $0x358] sm:$0xff]
    %v123 = vld [vmem:[%s0 + $0x360] sm:$0xff]
    %v124 = vld [vmem:[%s0 + $0x368] sm:$0xff]
    %v125 = vld [vmem:[%s0 + $0x370] sm:$0xff]
    %v126 = vld [vmem:[%s0 + $0x378] sm:$0xff]
    %v127 = vld [vmem:[%s0 + $0x380] sm:$0xff]
    %v128 = vld [vmem:[%s0 + $0x388] sm:$0xff]
    %v129 = vld [vmem:[%s0 + $0x390] sm:$0xff]
    %v130 = vld [vmem:[%s0 + $0x398] sm:$0xff]
    %v131 = vld [vmem:[%s0 + $0x3a0] sm:$0xff]
    %v132 = vld [vmem:[%s0 + $0x3a8] sm:$0xff]
    %v133 = vld [vmem:[%s0 + $0x3b0] sm:$0xff]
    %v134 = vld [vmem:[%s0 + $0x3b8] sm:$0xff]
    %v135 = vld [vmem:[%s0 + $0x3c0] sm:$0xff]
    %v136 = vld [vmem:[%s0 + $0x3c8] sm:$0xff]
    %v137 = vld [vmem:[%s0 + $0x3d0] sm:$0xff]
    %v138 = vld [vmem:[%s0 + $0x3d8] sm:$0xff]
    %v139 = vld [vmem:[%s0 + $0x3e0] sm:$0xff]
    %v140 = vld [vmem:[%s0 + $0x3e8] sm:$0xff]
    %v141 = vld [vmem:[%s0 + $0x3f0] sm:$0xff]
    %v142 = vld [vmem:[%s0 + $0x3f8] sm:$0xff]
    %v143 = vld [vmem:[%s1] sm:$0x1]
    %v145 = vperm.slane %v143, 0
    %v147 = vmul.f32 %v15, %v145
    %v148 = vmul.f32 %v16, %v145
    %v149 = vmul.f32 %v17, %v145
    %v150 = vmul.f32 %v18, %v145
    %v151 = vmul.f32 %v19, %v145
    %v152 = vmul.f32 %v20, %v145
    %v153 = vmul.f32 %v21, %v145
    %v154 = vmul.f32 %v22, %v145
    %v155 = vmul.f32 %v23, %v145
    %v156 = vmul.f32 %v24, %v145
    %v157 = vmul.f32 %v25, %v145
    %v158 = vmul.f32 %v26, %v145
    %v159 = vmul.f32 %v27, %v145
    %v160 = vmul.f32 %v28, %v145
    %v161 = vmul.f32 %v29, %v145
    %v162 = vmul.f32 %v30, %v145
    %v163 = vmul.f32 %v31, %v145
    %v164 = vmul.f32 %v32, %v145
    %v165 = vmul.f32 %v33, %v145
    %v166 = vmul.f32 %v34, %v145
    %v167 = vmul.f32 %v35, %v145
    %v168 = vmul.f32 %v36, %v145
    %v169 = vmul.f32 %v37, %v145
    %v170 = vmul.f32 %v38, %v145
    %v171 = vmul.f32 %v39, %v145
    %v172 = vmul.f32 %v40, %v145
    %v173 = vmul.f32 %v41, %v145
    %v174 = vmul.f32 %v42, %v145
    %v175 = vmul.f32 %v43, %v145
    %v176 = vmul.f32 %v44, %v145
    %v177 = vmul.f32 %v45, %v145
    %v178 = vmul.f32 %v46, %v145
    %v179 = vmul.f32 %v47, %v145
    %v180 = vmul.f32 %v48, %v145
    %v181 = vmul.f32 %v49, %v145
    %v182 = vmul.f32 %v50, %v145
    %v183 = vmul.f32 %v51, %v145
    %v184 = vmul.f32 %v52, %v145
    %v185 = vmul.f32 %v53, %v145
    %v186 = vmul.f32 %v54, %v145
    %v187 = vmul.f32 %v55, %v145
    %v188 = vmul.f32 %v56, %v145
    %v189 = vmul.f32 %v57, %v145
    %v190 = vmul.f32 %v58, %v145
    %v191 = vmul.f32 %v59, %v145
    %v192 = vmul.f32 %v60, %v145
    %v193 = vmul.f32 %v61, %v145
    %v194 = vmul.f32 %v62, %v145
    %v195 = vmul.f32 %v63, %v145
    %v196 = vmul.f32 %v64, %v145
    %v197 = vmul.f32 %v65, %v145
    %v198 = vmul.f32 %v66, %v145
    %v199 = vmul.f32 %v67, %v145
    %v200 = vmul.f32 %v68, %v145
    %v201 = vmul.f32 %v69, %v145
    %v202 = vmul.f32 %v70, %v145
    %v203 = vmul.f32 %v71, %v145
    %v204 = vmul.f32 %v72, %v145
    %v205 = vmul.f32 %v73, %v145
    %v206 = vmul.f32 %v74, %v145
    %v207 = vmul.f32 %v75, %v145
    %v208 = vmul.f32 %v76, %v145
    %v209 = vmul.f32 %v77, %v145
    %v210 = vmul.f32 %v78, %v145
    %v211 = vmul.f32 %v79, %v145
    %v212 = vmul.f32 %v80, %v145
    %v213 = vmul.f32 %v81, %v145
    %v214 = vmul.f32 %v82, %v145
    %v215 = vmul.f32 %v83, %v145
    %v216 = vmul.f32 %v84, %v145
    %v217 = vmul.f32 %v85, %v145
    %v218 = vmul.f32 %v86, %v145
    %v219 = vmul.f32 %v87, %v145
    %v220 = vmul.f32 %v88, %v145
    %v221 = vmul.f32 %v89, %v145
    %v222 = vmul.f32 %v90, %v145
    %v223 = vmul.f32 %v91, %v145
    %v224 = vmul.f32 %v92, %v145
    %v225 = vmul.f32 %v93, %v145
    %v226 = vmul.f32 %v94, %v145
    %v227 = vmul.f32 %v95, %v145
    %v228 = vmul.f32 %v96, %v145
    %v229 = vmul.f32 %v97, %v145
    %v230 = vmul.f32 %v98, %v145
    %v231 = vmul.f32 %v99, %v145
    %v232 = vmul.f32 %v100, %v145
    %v233 = vmul.f32 %v101, %v145
    %v234 = vmul.f32 %v102, %v145
    %v235 = vmul.f32 %v103, %v145
    %v236 = vmul.f32 %v104, %v145
    %v237 = vmul.f32 %v105, %v145
    %v238 = vmul.f32 %v106, %v145
    %v239 = vmul.f32 %v107, %v145
    %v240 = vmul.f32 %v108, %v145
    %v241 = vmul.f32 %v109, %v145
    %v242 = vmul.f32 %v110, %v145
    %v243 = vmul.f32 %v111, %v145
    %v244 = vmul.f32 %v112, %v145
    %v245 = vmul.f32 %v113, %v145
    %v246 = vmul.f32 %v114, %v145
    %v247 = vmul.f32 %v115, %v145
    %v248 = vmul.f32 %v116, %v145
    %v249 = vmul.f32 %v117, %v145
    %v250 = vmul.f32 %v118, %v145
    %v251 = vmul.f32 %v119, %v145
    %v252 = vmul.f32 %v120, %v145
    %v253 = vmul.f32 %v121, %v145
    %v254 = vmul.f32 %v122, %v145
    %v255 = vmul.f32 %v123, %v145
    %v256 = vmul.f32 %v124, %v145
    %v257 = vmul.f32 %v125, %v145
    %v258 = vmul.f32 %v126, %v145
    %v259 = vmul.f32 %v127, %v145
    %v260 = vmul.f32 %v128, %v145
    %v261 = vmul.f32 %v129, %v145
    %v262 = vmul.f32 %v130, %v145
    %v263 = vmul.f32 %v131, %v145
    %v264 = vmul.f32 %v132, %v145
    %v265 = vmul.f32 %v133, %v145
    %v266 = vmul.f32 %v134, %v145
    %v267 = vmul.f32 %v135, %v145
    %v268 = vmul.f32 %v136, %v145
    %v269 = vmul.f32 %v137, %v145
    %v270 = vmul.f32 %v138, %v145
    %v271 = vmul.f32 %v139, %v145
    %v272 = vmul.f32 %v140, %v145
    %v273 = vmul.f32 %v141, %v145
    %v274 = vmul.f32 %v142, %v145
    %v275 = vld [vmem:[%s2] sm:$0x1]
    %v277 = vperm.slane %v275, 0
    %v279 = vadd.f32 %v147, %v277
    %v280 = vadd.f32 %v148, %v277
    %v281 = vadd.f32 %v149, %v277
    %v282 = vadd.f32 %v150, %v277
    %v283 = vadd.f32 %v151, %v277
    %v284 = vadd.f32 %v152, %v277
    %v285 = vadd.f32 %v153, %v277
    %v286 = vadd.f32 %v154, %v277
    %v287 = vadd.f32 %v155, %v277
    %v288 = vadd.f32 %v156, %v277
    %v289 = vadd.f32 %v157, %v277
    %v290 = vadd.f32 %v158, %v277
    %v291 = vadd.f32 %v159, %v277
    %v292 = vadd.f32 %v160, %v277
    %v293 = vadd.f32 %v161, %v277
    %v294 = vadd.f32 %v162, %v277
    %v295 = vadd.f32 %v163, %v277
    %v296 = vadd.f32 %v164, %v277
    %v297 = vadd.f32 %v165, %v277
    %v298 = vadd.f32 %v166, %v277
    %v299 = vadd.f32 %v167, %v277
    %v300 = vadd.f32 %v168, %v277
    %v301 = vadd.f32 %v169, %v277
    %v302 = vadd.f32 %v170, %v277
    %v303 = vadd.f32 %v171, %v277
    %v304 = vadd.f32 %v172, %v277
    %v305 = vadd.f32 %v173, %v277
    %v306 = vadd.f32 %v174, %v277
    %v307 = vadd.f32 %v175, %v277
    %v308 = vadd.f32 %v176, %v277
    %v309 = vadd.f32 %v177, %v277
    %v310 = vadd.f32 %v178, %v277
    %v311 = vadd.f32 %v179, %v277
    %v312 = vadd.f32 %v180, %v277
    %v313 = vadd.f32 %v181, %v277
    %v314 = vadd.f32 %v182, %v277
    %v315 = vadd.f32 %v183, %v277
    %v316 = vadd.f32 %v184, %v277
    %v317 = vadd.f32 %v185, %v277
    %v318 = vadd.f32 %v186, %v277
    %v319 = vadd.f32 %v187, %v277
    %v320 = vadd.f32 %v188, %v277
    %v321 = vadd.f32 %v189, %v277
    %v322 = vadd.f32 %v190, %v277
    %v323 = vadd.f32 %v191, %v277
    %v324 = vadd.f32 %v192, %v277
    %v325 = vadd.f32 %v193, %v277
    %v326 = vadd.f32 %v194, %v277
    %v327 = vadd.f32 %v195, %v277
    %v328 = vadd.f32 %v196, %v277
    %v329 = vadd.f32 %v197, %v277
    %v330 = vadd.f32 %v198, %v277
    %v331 = vadd.f32 %v199, %v277
    %v332 = vadd.f32 %v200, %v277
    %v333 = vadd.f32 %v201, %v277
    %v334 = vadd.f32 %v202, %v277
    %v335 = vadd.f32 %v203, %v277
    %v336 = vadd.f32 %v204, %v277
    %v337 = vadd.f32 %v205, %v277
    %v338 = vadd.f32 %v206, %v277
    %v339 = vadd.f32 %v207, %v277
    %v340 = vadd.f32 %v208, %v277
    %v341 = vadd.f32 %v209, %v277
    %v342 = vadd.f32 %v210, %v277
    %v343 = vadd.f32 %v211, %v277
    %v344 = vadd.f32 %v212, %v277
    %v345 = vadd.f32 %v213, %v277
    %v346 = vadd.f32 %v214, %v277
    %v347 = vadd.f32 %v215, %v277
    %v348 = vadd.f32 %v216, %v277
    %v349 = vadd.f32 %v217, %v277
    %v350 = vadd.f32 %v218, %v277
    %v351 = vadd.f32 %v219, %v277
    %v352 = vadd.f32 %v220, %v277
    %v353 = vadd.f32 %v221, %v277
    %v354 = vadd.f32 %v222, %v277
    %v355 = vadd.f32 %v223, %v277
    %v356 = vadd.f32 %v224, %v277
    %v357 = vadd.f32 %v225, %v277
    %v358 = vadd.f32 %v226, %v277
    %v359 = vadd.f32 %v227, %v277
    %v360 = vadd.f32 %v228, %v277
    %v361 = vadd.f32 %v229, %v277
    %v362 = vadd.f32 %v230, %v277
    %v363 = vadd.f32 %v231, %v277
    %v364 = vadd.f32 %v232, %v277
    %v365 = vadd.f32 %v233, %v277
    %v366 = vadd.f32 %v234, %v277
    %v367 = vadd.f32 %v235, %v277
    %v368 = vadd.f32 %v236, %v277
    %v369 = vadd.f32 %v237, %v277
    %v370 = vadd.f32 %v238, %v277
    %v371 = vadd.f32 %v239, %v277
    %v372 = vadd.f32 %v240, %v277
    %v373 = vadd.f32 %v241, %v277
    %v374 = vadd.f32 %v242, %v277
    %v375 = vadd.f32 %v243, %v277
    %v376 = vadd.f32 %v244, %v277
    %v377 = vadd.f32 %v245, %v277
    %v378 = vadd.f32 %v246, %v277
    %v379 = vadd.f32 %v247, %v277
    %v380 = vadd.f32 %v248, %v277
    %v381 = vadd.f32 %v249, %v277
    %v382 = vadd.f32 %v250, %v277
    %v383 = vadd.f32 %v251, %v277
    %v384 = vadd.f32 %v252, %v277
    %v385 = vadd.f32 %v253, %v277
    %v386 = vadd.f32 %v254, %v277
    %v387 = vadd.f32 %v255, %v277
    %v388 = vadd.f32 %v256, %v277
    %v389 = vadd.f32 %v257, %v277
    %v390 = vadd.f32 %v258, %v277
    %v391 = vadd.f32 %v259, %v277
    %v392 = vadd.f32 %v260, %v277
    %v393 = vadd.f32 %v261, %v277
    %v394 = vadd.f32 %v262, %v277
    %v395 = vadd.f32 %v263, %v277
    %v396 = vadd.f32 %v264, %v277
    %v397 = vadd.f32 %v265, %v277
    %v398 = vadd.f32 %v266, %v277
    %v399 = vadd.f32 %v267, %v277
    %v400 = vadd.f32 %v268, %v277
    %v401 = vadd.f32 %v269, %v277
    %v402 = vadd.f32 %v270, %v277
    %v403 = vadd.f32 %v271, %v277
    %v404 = vadd.f32 %v272, %v277
    %v405 = vadd.f32 %v273, %v277
    %v406 = vadd.f32 %v274, %v277
    %v407 = vmax.f32 %v279, 0.0
    %v408 = vmax.f32 %v280, 0.0
    %v409 = vmax.f32 %v281, 0.0
    %v410 = vmax.f32 %v282, 0.0
    %v411 = vmax.f32 %v283, 0.0
    %v412 = vmax.f32 %v284, 0.0
    %v413 = vmax.f32 %v285, 0.0
    %v414 = vmax.f32 %v286, 0.0
    %v415 = vmax.f32 %v287, 0.0
    %v416 = vmax.f32 %v288, 0.0
    %v417 = vmax.f32 %v289, 0.0
    %v418 = vmax.f32 %v290, 0.0
    %v419 = vmax.f32 %v291, 0.0
    %v420 = vmax.f32 %v292, 0.0
    %v421 = vmax.f32 %v293, 0.0
    %v422 = vmax.f32 %v294, 0.0
    %v423 = vmax.f32 %v295, 0.0
    %v424 = vmax.f32 %v296, 0.0
    %v425 = vmax.f32 %v297, 0.0
    %v426 = vmax.f32 %v298, 0.0
    %v427 = vmax.f32 %v299, 0.0
    %v428 = vmax.f32 %v300, 0.0
    %v429 = vmax.f32 %v301, 0.0
    %v430 = vmax.f32 %v302, 0.0
    %v431 = vmax.f32 %v303, 0.0
    %v432 = vmax.f32 %v304, 0.0
    %v433 = vmax.f32 %v305, 0.0
    %v434 = vmax.f32 %v306, 0.0
    %v435 = vmax.f32 %v307, 0.0
    %v436 = vmax.f32 %v308, 0.0
    %v437 = vmax.f32 %v309, 0.0
    %v438 = vmax.f32 %v310, 0.0
    %v439 = vmax.f32 %v311, 0.0
    %v440 = vmax.f32 %v312, 0.0
    %v441 = vmax.f32 %v313, 0.0
    %v442 = vmax.f32 %v314, 0.0
    %v443 = vmax.f32 %v315, 0.0
    %v444 = vmax.f32 %v316, 0.0
    %v445 = vmax.f32 %v317, 0.0
    %v446 = vmax.f32 %v318, 0.0
    %v447 = vmax.f32 %v319, 0.0
    %v448 = vmax.f32 %v320, 0.0
    %v449 = vmax.f32 %v321, 0.0
    %v450 = vmax.f32 %v322, 0.0
    %v451 = vmax.f32 %v323, 0.0
    %v452 = vmax.f32 %v324, 0.0
    %v453 = vmax.f32 %v325, 0.0
    %v454 = vmax.f32 %v326, 0.0
    %v455 = vmax.f32 %v327, 0.0
    %v456 = vmax.f32 %v328, 0.0
    %v457 = vmax.f32 %v329, 0.0
    %v458 = vmax.f32 %v330, 0.0
    %v459 = vmax.f32 %v331, 0.0
    %v460 = vmax.f32 %v332, 0.0
    %v461 = vmax.f32 %v333, 0.0
    %v462 = vmax.f32 %v334, 0.0
    %v463 = vmax.f32 %v335, 0.0
    %v464 = vmax.f32 %v336, 0.0
    %v465 = vmax.f32 %v337, 0.0
    %v466 = vmax.f32 %v338, 0.0
    %v467 = vmax.f32 %v339, 0.0
    %v468 = vmax.f32 %v340, 0.0
    %v469 = vmax.f32 %v341, 0.0
    %v470 = vmax.f32 %v342, 0.0
    %v471 = vmax.f32 %v343, 0.0
    %v472 = vmax.f32 %v344, 0.0
    %v473 = vmax.f32 %v345, 0.0
    %v474 = vmax.f32 %v346, 0.0
    %v475 = vmax.f32 %v347, 0.0
    %v476 = vmax.f32 %v348, 0.0
    %v477 = vmax.f32 %v349, 0.0
    %v478 = vmax.f32 %v350, 0.0
    %v479 = vmax.f32 %v351, 0.0
    %v480 = vmax.f32 %v352, 0.0
    %v481 = vmax.f32 %v353, 0.0
    %v482 = vmax.f32 %v354, 0.0
    %v483 = vmax.f32 %v355, 0.0
    %v484 = vmax.f32 %v356, 0.0
    %v485 = vmax.f32 %v357, 0.0
    %v486 = vmax.f32 %v358, 0.0
    %v487 = vmax.f32 %v359, 0.0
    %v488 = vmax.f32 %v360, 0.0
    %v489 = vmax.f32 %v361, 0.0
    %v490 = vmax.f32 %v362, 0.0
    %v491 = vmax.f32 %v363, 0.0
    %v492 = vmax.f32 %v364, 0.0
    %v493 = vmax.f32 %v365, 0.0
    %v494 = vmax.f32 %v366, 0.0
    %v495 = vmax.f32 %v367, 0.0
    %v496 = vmax.f32 %v368, 0.0
    %v497 = vmax.f32 %v369, 0.0
    %v498 = vmax.f32 %v370, 0.0
    %v499 = vmax.f32 %v371, 0.0
    %v500 = vmax.f32 %v372, 0.0
    %v501 = vmax.f32 %v373, 0.0
    %v502 = vmax.f32 %v374, 0.0
    %v503 = vmax.f32 %v375, 0.0
    %v504 = vmax.f32 %v376, 0.0
    %v505 = vmax.f32 %v377, 0.0
    %v506 = vmax.f32 %v378, 0.0
    %v507 = vmax.f32 %v379, 0.0
    %v508 = vmax.f32 %v380, 0.0
    %v509 = vmax.f32 %v381, 0.0
    %v510 = vmax.f32 %v382, 0.0
    %v511 = vmax.f32 %v383, 0.0
    %v512 = vmax.f32 %v384, 0.0
    %v513 = vmax.f32 %v385, 0.0
    %v514 = vmax.f32 %v386, 0.0
    %v515 = vmax.f32 %v387, 0.0
    %v516 = vmax.f32 %v388, 0.0
    %v517 = vmax.f32 %v389, 0.0
    %v518 = vmax.f32 %v390, 0.0
    %v519 = vmax.f32 %v391, 0.0
    %v520 = vmax.f32 %v392, 0.0
    %v521 = vmax.f32 %v393, 0.0
    %v522 = vmax.f32 %v394, 0.0
    %v523 = vmax.f32 %v395, 0.0
    %v524 = vmax.f32 %v396, 0.0
    %v525 = vmax.f32 %v397, 0.0
    %v526 = vmax.f32 %v398, 0.0
    %v527 = vmax.f32 %v399, 0.0
    %v528 = vmax.f32 %v400, 0.0
    %v529 = vmax.f32 %v401, 0.0
    %v530 = vmax.f32 %v402, 0.0
    %v531 = vmax.f32 %v403, 0.0
    %v532 = vmax.f32 %v404, 0.0
    %v533 = vmax.f32 %v405, 0.0
    %v534 = vmax.f32 %v406, 0.0
    %vm535 = vcmask 523264
    %536 = vst.msk [vmem:[#allocation2] sm:$0xff] %vm535, %v407
    %537 = vst.msk [vmem:[#allocation2 + $0x8] sm:$0xff] %vm535, %v408
    %538 = vst.msk [vmem:[#allocation2 + $0x10] sm:$0xff] %vm535, %v409
    %539 = vst.msk [vmem:[#allocation2 + $0x18] sm:$0xff] %vm535, %v410
    %540 = vst.msk [vmem:[#allocation2 + $0x20] sm:$0xff] %vm535, %v411
    %541 = vst.msk [vmem:[#allocation2 + $0x28] sm:$0xff] %vm535, %v412
    %542 = vst.msk [vmem:[#allocation2 + $0x30] sm:$0xff] %vm535, %v413
    %543 = vst.msk [vmem:[#allocation2 + $0x38] sm:$0xff] %vm535, %v414
    %544 = vst.msk [vmem:[#allocation2 + $0x40] sm:$0xff] %vm535, %v415
    %545 = vst.msk [vmem:[#allocation2 + $0x48] sm:$0xff] %vm535, %v416
    %546 = vst.msk [vmem:[#allocation2 + $0x50] sm:$0xff] %vm535, %v417
    %547 = vst.msk [vmem:[#allocation2 + $0x58] sm:$0xff] %vm535, %v418
    %548 = vst.msk [vmem:[#allocation2 + $0x60] sm:$0xff] %vm535, %v419
    %549 = vst.msk [vmem:[#allocation2 + $0x68] sm:$0xff] %vm535, %v420
    %550 = vst.msk [vmem:[#allocation2 + $0x70] sm:$0xff] %vm535, %v421
    %551 = vst.msk [vmem:[#allocation2 + $0x78] sm:$0xff] %vm535, %v422
    %552 = vst.msk [vmem:[#allocation2 + $0x80] sm:$0xff] %vm535, %v423
    %553 = vst.msk [vmem:[#allocation2 + $0x88] sm:$0xff] %vm535, %v424
    %554 = vst.msk [vmem:[#allocation2 + $0x90] sm:$0xff] %vm535, %v425
    %555 = vst.msk [vmem:[#allocation2 + $0x98] sm:$0xff] %vm535, %v426
    %556 = vst.msk [vmem:[#allocation2 + $0xa0] sm:$0xff] %vm535, %v427
    %557 = vst.msk [vmem:[#allocation2 + $0xa8] sm:$0xff] %vm535, %v428
    %558 = vst.msk [vmem:[#allocation2 + $0xb0] sm:$0xff] %vm535, %v429
    %559 = vst.msk [vmem:[#allocation2 + $0xb8] sm:$0xff] %vm535, %v430
    %560 = vst.msk [vmem:[#allocation2 + $0xc0] sm:$0xff] %vm535, %v431
    %561 = vst.msk [vmem:[#allocation2 + $0xc8] sm:$0xff] %vm535, %v432
    %562 = vst.msk [vmem:[#allocation2 + $0xd0] sm:$0xff] %vm535, %v433
    %563 = vst.msk [vmem:[#allocation2 + $0xd8] sm:$0xff] %vm535, %v434
    %564 = vst.msk [vmem:[#allocation2 + $0xe0] sm:$0xff] %vm535, %v435
    %565 = vst.msk [vmem:[#allocation2 + $0xe8] sm:$0xff] %vm535, %v436
    %566 = vst.msk [vmem:[#allocation2 + $0xf0] sm:$0xff] %vm535, %v437
    %567 = vst.msk [vmem:[#allocation2 + $0xf8] sm:$0xff] %vm535, %v438
    %568 = vst.msk [vmem:[#allocation2 + $0x100] sm:$0xff] %vm535, %v439
    %569 = vst.msk [vmem:[#allocation2 + $0x108] sm:$0xff] %vm535, %v440
    %570 = vst.msk [vmem:[#allocation2 + $0x110] sm:$0xff] %vm535, %v441
    %571 = vst.msk [vmem:[#allocation2 + $0x118] sm:$0xff] %vm535, %v442
    %572 = vst.msk [vmem:[#allocation2 + $0x120] sm:$0xff] %vm535, %v443
    %573 = vst.msk [vmem:[#allocation2 + $0x128] sm:$0xff] %vm535, %v444
    %574 = vst.msk [vmem:[#allocation2 + $0x130] sm:$0xff] %vm535, %v445
    %575 = vst.msk [vmem:[#allocation2 + $0x138] sm:$0xff] %vm535, %v446
    %576 = vst.msk [vmem:[#allocation2 + $0x140] sm:$0xff] %vm535, %v447
    %577 = vst.msk [vmem:[#allocation2 + $0x148] sm:$0xff] %vm535, %v448
    %578 = vst.msk [vmem:[#allocation2 + $0x150] sm:$0xff] %vm535, %v449
    %579 = vst.msk [vmem:[#allocation2 + $0x158] sm:$0xff] %vm535, %v450
    %580 = vst.msk [vmem:[#allocation2 + $0x160] sm:$0xff] %vm535, %v451
    %581 = vst.msk [vmem:[#allocation2 + $0x168] sm:$0xff] %vm535, %v452
    %582 = vst.msk [vmem:[#allocation2 + $0x170] sm:$0xff] %vm535, %v453
    %583 = vst.msk [vmem:[#allocation2 + $0x178] sm:$0xff] %vm535, %v454
    %584 = vst.msk [vmem:[#allocation2 + $0x180] sm:$0xff] %vm535, %v455
    %585 = vst.msk [vmem:[#allocation2 + $0x188] sm:$0xff] %vm535, %v456
    %586 = vst.msk [vmem:[#allocation2 + $0x190] sm:$0xff] %vm535, %v457
    %587 = vst.msk [vmem:[#allocation2 + $0x198] sm:$0xff] %vm535, %v458
    %588 = vst.msk [vmem:[#allocation2 + $0x1a0] sm:$0xff] %vm535, %v459
    %589 = vst.msk [vmem:[#allocation2 + $0x1a8] sm:$0xff] %vm535, %v460
    %590 = vst.msk [vmem:[#allocation2 + $0x1b0] sm:$0xff] %vm535, %v461
    %591 = vst.msk [vmem:[#allocation2 + $0x1b8] sm:$0xff] %vm535, %v462
    %592 = vst.msk [vmem:[#allocation2 + $0x1c0] sm:$0xff] %vm535, %v463
    %593 = vst.msk [vmem:[#allocation2 + $0x1c8] sm:$0xff] %vm535, %v464
    %594 = vst.msk [vmem:[#allocation2 + $0x1d0] sm:$0xff] %vm535, %v465
    %595 = vst.msk [vmem:[#allocation2 + $0x1d8] sm:$0xff] %vm535, %v466
    %596 = vst.msk [vmem:[#allocation2 + $0x1e0] sm:$0xff] %vm535, %v467
    %597 = vst.msk [vmem:[#allocation2 + $0x1e8] sm:$0xff] %vm535, %v468
    %598 = vst.msk [vmem:[#allocation2 + $0x1f0] sm:$0xff] %vm535, %v469
    %599 = vst.msk [vmem:[#allocation2 + $0x1f8] sm:$0xff] %vm535, %v470
    %600 = vst.msk [vmem:[#allocation2 + $0x200] sm:$0xff] %vm535, %v471
    %601 = vst.msk [vmem:[#allocation2 + $0x208] sm:$0xff] %vm535, %v472
    %602 = vst.msk [vmem:[#allocation2 + $0x210] sm:$0xff] %vm535, %v473
    %603 = vst.msk [vmem:[#allocation2 + $0x218] sm:$0xff] %vm535, %v474
    %604 = vst.msk [vmem:[#allocation2 + $0x220] sm:$0xff] %vm535, %v475
    %605 = vst.msk [vmem:[#allocation2 + $0x228] sm:$0xff] %vm535, %v476
    %606 = vst.msk [vmem:[#allocation2 + $0x230] sm:$0xff] %vm535, %v477
    %607 = vst.msk [vmem:[#allocation2 + $0x238] sm:$0xff] %vm535, %v478
    %608 = vst.msk [vmem:[#allocation2 + $0x240] sm:$0xff] %vm535, %v479
    %609 = vst.msk [vmem:[#allocation2 + $0x248] sm:$0xff] %vm535, %v480
    %610 = vst.msk [vmem:[#allocation2 + $0x250] sm:$0xff] %vm535, %v481
    %611 = vst.msk [vmem:[#allocation2 + $0x258] sm:$0xff] %vm535, %v482
    %612 = vst.msk [vmem:[#allocation2 + $0x260] sm:$0xff] %vm535, %v483
    %613 = vst.msk [vmem:[#allocation2 + $0x268] sm:$0xff] %vm535, %v484
    %614 = vst.msk [vmem:[#allocation2 + $0x270] sm:$0xff] %vm535, %v485
    %615 = vst.msk [vmem:[#allocation2 + $0x278] sm:$0xff] %vm535, %v486
    %616 = vst.msk [vmem:[#allocation2 + $0x280] sm:$0xff] %vm535, %v487
    %617 = vst.msk [vmem:[#allocation2 + $0x288] sm:$0xff] %vm535, %v488
    %618 = vst.msk [vmem:[#allocation2 + $0x290] sm:$0xff] %vm535, %v489
    %619 = vst.msk [vmem:[#allocation2 + $0x298] sm:$0xff] %vm535, %v490
    %620 = vst.msk [vmem:[#allocation2 + $0x2a0] sm:$0xff] %vm535, %v491
    %621 = vst.msk [vmem:[#allocation2 + $0x2a8] sm:$0xff] %vm535, %v492
    %622 = vst.msk [vmem:[#allocation2 + $0x2b0] sm:$0xff] %vm535, %v493
    %623 = vst.msk [vmem:[#allocation2 + $0x2b8] sm:$0xff] %vm535, %v494
    %624 = vst.msk [vmem:[#allocation2 + $0x2c0] sm:$0xff] %vm535, %v495
    %625 = vst.msk [vmem:[#allocation2 + $0x2c8] sm:$0xff] %vm535, %v496
    %626 = vst.msk [vmem:[#allocation2 + $0x2d0] sm:$0xff] %vm535, %v497
    %627 = vst.msk [vmem:[#allocation2 + $0x2d8] sm:$0xff] %vm535, %v498
    %628 = vst.msk [vmem:[#allocation2 + $0x2e0] sm:$0xff] %vm535, %v499
    %629 = vst.msk [vmem:[#allocation2 + $0x2e8] sm:$0xff] %vm535, %v500
    %630 = vst.msk [vmem:[#allocation2 + $0x2f0] sm:$0xff] %vm535, %v501
    %631 = vst.msk [vmem:[#allocation2 + $0x2f8] sm:$0xff] %vm535, %v502
    %632 = vst.msk [vmem:[#allocation2 + $0x300] sm:$0xff] %vm535, %v503
    %633 = vst.msk [vmem:[#allocation2 + $0x308] sm:$0xff] %vm535, %v504
    %634 = vst.msk [vmem:[#allocation2 + $0x310] sm:$0xff] %vm535, %v505
    %635 = vst.msk [vmem:[#allocation2 + $0x318] sm:$0xff] %vm535, %v506
    %636 = vst.msk [vmem:[#allocation2 + $0x320] sm:$0xff] %vm535, %v507
    %637 = vst.msk [vmem:[#allocation2 + $0x328] sm:$0xff] %vm535, %v508
    %638 = vst.msk [vmem:[#allocation2 + $0x330] sm:$0xff] %vm535, %v509
    %639 = vst.msk [vmem:[#allocation2 + $0x338] sm:$0xff] %vm535, %v510
    %640 = vst.msk [vmem:[#allocation2 + $0x340] sm:$0xff] %vm535, %v511
    %641 = vst.msk [vmem:[#allocation2 + $0x348] sm:$0xff] %vm535, %v512
    %642 = vst.msk [vmem:[#allocation2 + $0x350] sm:$0xff] %vm535, %v513
    %643 = vst.msk [vmem:[#allocation2 + $0x358] sm:$0xff] %vm535, %v514
    %644 = vst.msk [vmem:[#allocation2 + $0x360] sm:$0xff] %vm535, %v515
    %645 = vst.msk [vmem:[#allocation2 + $0x368] sm:$0xff] %vm535, %v516
    %646 = vst.msk [vmem:[#allocation2 + $0x370] sm:$0xff] %vm535, %v517
    %647 = vst.msk [vmem:[#allocation2 + $0x378] sm:$0xff] %vm535, %v518
    %648 = vst.msk [vmem:[#allocation2 + $0x380] sm:$0xff] %vm535, %v519
    %649 = vst.msk [vmem:[#allocation2 + $0x388] sm:$0xff] %vm535, %v520
    %650 = vst.msk [vmem:[#allocation2 + $0x390] sm:$0xff] %vm535, %v521
    %651 = vst.msk [vmem:[#allocation2 + $0x398] sm:$0xff] %vm535, %v522
    %652 = vst.msk [vmem:[#allocation2 + $0x3a0] sm:$0xff] %vm535, %v523
    %653 = vst.msk [vmem:[#allocation2 + $0x3a8] sm:$0xff] %vm535, %v524
    %654 = vst.msk [vmem:[#allocation2 + $0x3b0] sm:$0xff] %vm535, %v525
    %655 = vst.msk [vmem:[#allocation2 + $0x3b8] sm:$0xff] %vm535, %v526
    %656 = vst.msk [vmem:[#allocation2 + $0x3c0] sm:$0xff] %vm535, %v527
    %657 = vst.msk [vmem:[#allocation2 + $0x3c8] sm:$0xff] %vm535, %v528
    %658 = vst.msk [vmem:[#allocation2 + $0x3d0] sm:$0xff] %vm535, %v529
    %659 = vst.msk [vmem:[#allocation2 + $0x3d8] sm:$0xff] %vm535, %v530
    %660 = vst.msk [vmem:[#allocation2 + $0x3e0] sm:$0xff] %vm535, %v531
    %661 = vst.msk [vmem:[#allocation2 + $0x3e8] sm:$0xff] %vm535, %v532
    %662 = vst.msk [vmem:[#allocation2 + $0x3f0] sm:$0xff] %vm535, %v533
    %663 = vst.msk [vmem:[#allocation2 + $0x3f8] sm:$0xff] %vm535, %v534
    // Predicated region
    $region14: #{up_transition.9} parent=1 // pred_check
      _
    $region15: #{up_transition.9} parent=1 // pred_check_branch
      %665 = sbr.rel (0) target = $region17
    $region16: #{up_transition.9} parent=1 // pred_region
      %667 = vsyncadd [#allocation3], 0
      %s668 = sshll.u32 [#allocation2], 4
      %s669 = int_to_ptr.vmem [resolvable:$true] %s668
      %s670 = sshll.u32 %s3, 4
      %s671 = int_to_ptr.hbm [resolvable:$true] %s670
      %676 = dma.vmem_to_hbm [thread:$0]  %s669, 16384, %s671, [#allocation3], 128, 128, 8
    $region17: #{up_transition.9} parent=1 // pred_fallthru
      _
    // Predicated region
    $region18: #{up_transition.9} parent=1 // pred_check
      _
    $region19: #{up_transition.9} parent=1 // pred_check_branch
      %678 = sbr.rel (0) target = $region21
    $region20: #{up_transition.9} parent=1 // pred_region
      %680 = dma.done [#allocation3], 16384
    $region21: #{up_transition.9} parent=1 // pred_fallthru
      _
    %681 = vsyncpa [#allocation3], 1

// kernel: up_transition.8
$region0: #{up_transition.8}
  #allocation0 [shape = 'u32[]', space=smem, size = 0x4, offset = 0x4, fixed_abs, tag = 'smem constant byte address 0x4 - core index']
  #allocation1 [shape = 'u32[72,128]{1,0:T(1,128)}', space=vmem, size = 0x9000, scoped, tag = 'internal scratch']
  %s0 = inlined_call_operand.vmem [shape: bf16[2,10,10,10,64], index: 0, kind: input, shape index: {}, may-alias: {0,1,2}]
  %s1 = inlined_call_operand.vmem [shape: bf16[2,10,10,10,64], index: 1, kind: input, shape index: {}, may-alias: {0,1,2}]
  %s2 = inlined_call_operand.vmem [shape: bf16[2,10,10,10,64], index: 2, kind: input, shape index: {}, may-alias: {0,1,2}]
  %s3 = inlined_call_operand.vmem [shape: bf16[1728,64], index: 3, kind: input, shape index: {}]
  %s4 = inlined_call_operand.vmem [shape: f32[1,64], index: 4, kind: input, shape index: {}]
  %s5 = inlined_call_operand.vmem [shape: f32[2,8,64,64], index: 5, kind: output, shape index: {0}]
  %s6 = inlined_call_operand.vmem [shape: f32[2,8,1,64], index: 6, kind: output, shape index: {1}]
  %s7 = inlined_call_operand.vmem [shape: f32[2,8,1,64], index: 7, kind: output, shape index: {2}]
  %8 = xla_tuple %s5, %s6, %s7
  %s9 = sld [smem:[#allocation0]]
  $region69: #{up_transition.8} parent=0
    _
  %s11 = ssub.s32 1, %s9
  %s12 = scalar_select 0, %s11, %s9
  loop: start=0, step=1, limit=18
  $region2: #{up_transition.8} parent=0 // loop_pre_header
    _
  $region3: #{up_transition.8} parent=0 // loop_header
    %s14 = sphi 0, %s18
    %p15 = scmp.ge.s32.totalorder %s14, 18
    %s21 = sphi 0, %s33
    %s22 = sphi 0, %s29
    %s23 = sphi 0, %s21
    %s24 = sphi 0, %s22
    %s25 = sphi 0, %s23
    %s26 = sphi 0, %s24
    %s38 = sphi 0, %s40
    %s41 = sphi 0, %s38
    %s42 = sphi 0, %s41
    %s58 = sphi 0, %s42
    %s68 = sphi 0, %s70
    %s71 = sphi 0, %s68
    %s72 = sphi 0, %s71
    %s88 = sphi 0, %s72
    %s98 = sphi 0, %s100
    %s101 = sphi 0, %s98
    %s102 = sphi 0, %s101
    %s118 = sphi 0, %s102
    %s122 = sphi 0, %s122
    %s124 = sphi 0, %s122
    %s125 = sphi 0, %s124
    %s139 = sphi 0, %s125
    %s143 = sphi 0, %s143
    %s145 = sphi 0, %s143
    %s146 = sphi 0, %s145
    %s160 = sphi 0, %s146
    %s168 = sphi 0, %s170
    %s171 = sphi 0, %s168
    %s172 = sphi 0, %s171
    %s188 = sphi 0, %s172
    %s196 = sphi 0, %s198
    %s199 = sphi 0, %s196
    %s200 = sphi 0, %s199
    %s216 = sphi 0, %s200
    %s224 = sphi 0, %s226
    %s227 = sphi 0, %s224
    %s228 = sphi 0, %s227
    %s244 = sphi 0, %s228
  $region4: #{up_transition.8} parent=0 // loop_header_branch
    %17 = sbr.rel (%p15) target = $region8
  $region5: #{up_transition.8} parent=0 // loop_body
    %s19 = ssub.s32 %s14, 1
    %s20 = ssub.s32 %s14, 2
    %s27 = sadd.s32 1, %s22
    %p28 = scmp.ge.s32.totalorder %s27, 8
    %s29 = scalar_select %p28, 0, %s27
    %s30 = sadd.s32 1, %s21
    %s31 = scalar_select %p28, %s30, %s21
    %p32 = scmp.ge.s32.totalorder %s31, 2
    %s33 = scalar_select %p32, 0, %s31
    %s34 = ssub.s32 %s21, %s33
    %s35 = ssub.s32 %s22, %s29
    %s36 = sor.u32 %s34, %s35
    %p37 = scmp.eq.s32.totalorder %s36, 0
    %s39 = sadd.s32 %s38, 1
    %s40 = scalar_select %p37, %s38, %s39
    %p43 = pneg %p37
    %p44 = scmp.eq.s32.totalorder %s14, 15
    %p45 = por %p43, %p44
    %p46 = scmp.ne.s32.totalorder %s38, %s41
    %p47 = scmp.eq.s32.totalorder %s14, 0
    %p48 = por %p46, %p47
    %p49 = scmp.ne.s32.totalorder %s38, %s41
    %p50 = scmp.eq.s32.totalorder %s19, 15
    %p51 = por %p49, %p50
    %p52 = scmp.ne.s32.totalorder %s41, %s42
    %p53 = scmp.eq.s32.totalorder %s19, 0
    %p54 = por %p52, %p53
    %p55 = scmp.ne.s32.totalorder %s41, %s42
    %p56 = scmp.eq.s32.totalorder %s20, 15
    %p57 = por %p55, %p56
    %p59 = scmp.ne.s32.totalorder %s42, %s58
    %p60 = scmp.eq.s32.totalorder %s20, 0
    %p61 = por %p59, %p60
    %s62 = sadd.s32 %s22, 1
    %s63 = sadd.s32 %s29, 1
    %s64 = ssub.s32 %s21, %s33
    %s65 = ssub.s32 %s62, %s63
    %s66 = sor.u32 %s64, %s65
    %p67 = scmp.eq.s32.totalorder %s66, 0
    %s69 = sadd.s32 %s68, 1
    %s70 = scalar_select %p67, %s68, %s69
    %p73 = pneg %p67
    %p74 = scmp.eq.s32.totalorder %s14, 15
    %p75 = por %p73, %p74
    %p76 = scmp.ne.s32.totalorder %s68, %s71
    %p77 = scmp.eq.s32.totalorder %s14, 0
    %p78 = por %p76, %p77
    %p79 = scmp.ne.s32.totalorder %s68, %s71
    %p80 = scmp.eq.s32.totalorder %s19, 15
    %p81 = por %p79, %p80
    %p82 = scmp.ne.s32.totalorder %s71, %s72
    %p83 = scmp.eq.s32.totalorder %s19, 0
    %p84 = por %p82, %p83
    %p85 = scmp.ne.s32.totalorder %s71, %s72
    %p86 = scmp.eq.s32.totalorder %s20, 15
    %p87 = por %p85, %p86
    %p89 = scmp.ne.s32.totalorder %s72, %s88
    %p90 = scmp.eq.s32.totalorder %s20, 0
    %p91 = por %p89, %p90
    %s92 = sadd.s32 %s22, 2
    %s93 = sadd.s32 %s29, 2
    %s94 = ssub.s32 %s21, %s33
    %s95 = ssub.s32 %s92, %s93
    %s96 = sor.u32 %s94, %s95
    %p97 = scmp.eq.s32.totalorder %s96, 0
    %s99 = sadd.s32 %s98, 1
    %s100 = scalar_select %p97, %s98, %s99
    %p103 = pneg %p97
    %p104 = scmp.eq.s32.totalorder %s14, 15
    %p105 = por %p103, %p104
    %p106 = scmp.ne.s32.totalorder %s98, %s101
    %p107 = scmp.eq.s32.totalorder %s14, 0
    %p108 = por %p106, %p107
    %p109 = scmp.ne.s32.totalorder %s98, %s101
    %p110 = scmp.eq.s32.totalorder %s19, 15
    %p111 = por %p109, %p110
    %p112 = scmp.ne.s32.totalorder %s101, %s102
    %p113 = scmp.eq.s32.totalorder %s19, 0
    %p114 = por %p112, %p113
    %p115 = scmp.ne.s32.totalorder %s101, %s102
    %p116 = scmp.eq.s32.totalorder %s20, 15
    %p117 = por %p115, %p116
    %p119 = scmp.ne.s32.totalorder %s102, %s118
    %p120 = scmp.eq.s32.totalorder %s20, 0
    %p121 = por %p119, %p120
    %s123 = sadd.s32 %s122, 1
    %p126 = scmp.eq.s32.totalorder %s14, 15
    %p127 = scmp.ne.s32.totalorder %s122, %s124
    %p128 = scmp.eq.s32.totalorder %s14, 0
    %p129 = por %p127, %p128
    %p130 = scmp.ne.s32.totalorder %s122, %s124
    %p131 = scmp.eq.s32.totalorder %s19, 15
    %p132 = por %p130, %p131
    %p133 = scmp.ne.s32.totalorder %s124, %s125
    %p134 = scmp.eq.s32.totalorder %s19, 0
    %p135 = por %p133, %p134
    %p136 = scmp.ne.s32.totalorder %s124, %s125
    %p137 = scmp.eq.s32.totalorder %s20, 15
    %p138 = por %p136, %p137
    %p140 = scmp.ne.s32.totalorder %s125, %s139
    %p141 = scmp.eq.s32.totalorder %s20, 0
    %p142 = por %p140, %p141
    %s144 = sadd.s32 %s143, 1
    %p147 = scmp.eq.s32.totalorder %s14, 15
    %p148 = scmp.ne.s32.totalorder %s143, %s145
    %p149 = scmp.eq.s32.totalorder %s14, 0
    %p150 = por %p148, %p149
    %p151 = scmp.ne.s32.totalorder %s143, %s145
    %p152 = scmp.eq.s32.totalorder %s19, 15
    %p153 = por %p151, %p152
    %p154 = scmp.ne.s32.totalorder %s145, %s146
    %p155 = scmp.eq.s32.totalorder %s19, 0
    %p156 = por %p154, %p155
    %p157 = scmp.ne.s32.totalorder %s145, %s146
    %p158 = scmp.eq.s32.totalorder %s20, 15
    %p159 = por %p157, %p158
    %p161 = scmp.ne.s32.totalorder %s146, %s160
    %p162 = scmp.eq.s32.totalorder %s20, 0
    %p163 = por %p161, %p162
    %s164 = ssub.s32 %s21, %s33
    %s165 = ssub.s32 %s22, %s29
    %s166 = sor.u32 %s164, %s165
    %p167 = scmp.eq.s32.totalorder %s166, 0
    %s169 = sadd.s32 %s168, 1
    %s170 = scalar_select %p167, %s168, %s169
    %p173 = pneg %p167
    %p174 = scmp.eq.s32.totalorder %s14, 15
    %p175 = por %p173, %p174
    %p176 = scmp.ne.s32.totalorder %s168, %s171
    %p177 = scmp.eq.s32.totalorder %s14, 0
    %p178 = por %p176, %p177
    %p179 = scmp.ne.s32.totalorder %s168, %s171
    %p180 = scmp.eq.s32.totalorder %s19, 15
    %p181 = por %p179, %p180
    %p182 = scmp.ne.s32.totalorder %s171, %s172
    %p183 = scmp.eq.s32.totalorder %s19, 0
    %p184 = por %p182, %p183
    %p185 = scmp.ne.s32.totalorder %s171, %s172
    %p186 = scmp.eq.s32.totalorder %s20, 15
    %p187 = por %p185, %p186
    %p189 = scmp.ne.s32.totalorder %s172, %s188
    %p190 = scmp.eq.s32.totalorder %s20, 0
    %p191 = por %p189, %p190
    %s192 = ssub.s32 %s21, %s33
    %s193 = ssub.s32 %s22, %s29
    %s194 = sor.u32 %s192, %s193
    %p195 = scmp.eq.s32.totalorder %s194, 0
    %s197 = sadd.s32 %s196, 1
    %s198 = scalar_select %p195, %s196, %s197
    %p201 = pneg %p195
    %p202 = scmp.eq.s32.totalorder %s14, 15
    %p203 = por %p201, %p202
    %p204 = scmp.ne.s32.totalorder %s196, %s199
    %p205 = scmp.eq.s32.totalorder %s14, 0
    %p206 = por %p204, %p205
    %p207 = scmp.ne.s32.totalorder %s196, %s199
    %p208 = scmp.eq.s32.totalorder %s19, 15
    %p209 = por %p207, %p208
    %p210 = scmp.ne.s32.totalorder %s199, %s200
    %p211 = scmp.eq.s32.totalorder %s19, 0
    %p212 = por %p210, %p211
    %p213 = scmp.ne.s32.totalorder %s199, %s200
    %p214 = scmp.eq.s32.totalorder %s20, 15
    %p215 = por %p213, %p214
    %p217 = scmp.ne.s32.totalorder %s200, %s216
    %p218 = scmp.eq.s32.totalorder %s20, 0
    %p219 = por %p217, %p218
    %s220 = ssub.s32 %s21, %s33
    %s221 = ssub.s32 %s22, %s29
    %s222 = sor.u32 %s220, %s221
    %p223 = scmp.eq.s32.totalorder %s222, 0
    %s225 = sadd.s32 %s224, 1
    %s226 = scalar_select %p223, %s224, %s225
    %p229 = pneg %p223
    %p230 = scmp.eq.s32.totalorder %s14, 15
    %p231 = por %p229, %p230
    %p232 = scmp.ne.s32.totalorder %s224, %s227
    %p233 = scmp.eq.s32.totalorder %s14, 0
    %p234 = por %p232, %p233
    %p235 = scmp.ne.s32.totalorder %s224, %s227
    %p236 = scmp.eq.s32.totalorder %s19, 15
    %p237 = por %p235, %p236
    %p238 = scmp.ne.s32.totalorder %s227, %s228
    %p239 = scmp.eq.s32.totalorder %s19, 0
    %p240 = por %p238, %p239
    %p241 = scmp.ne.s32.totalorder %s227, %s228
    %p242 = scmp.eq.s32.totalorder %s20, 15
    %p243 = por %p241, %p242
    %p245 = scmp.ne.s32.totalorder %s228, %s244
    %p246 = scmp.eq.s32.totalorder %s20, 0
    %p247 = por %p245, %p246
    %p248 = scmp.le.s32.totalorder 1, %s14
    %p249 = scmp.lt.s32.totalorder %s14, 17
    %p250 = pnand %p248, %p249
    %p251 = pneg %p250
    // Predicated region
    $region9: #{up_transition.8} parent=5 // pred_check
      _
    $region10: #{up_transition.8} parent=5 // pred_check_branch
      %253 = sbr.rel (%p250) target = $region12
    $region11: #{up_transition.8} parent=5 // pred_region
      %s254 = ssub.s32 %s14, 1
      // Predicated region
      $region13: #{up_transition.8} parent=11 // pred_check
        %p255 = pneg %p135
      $region14: #{up_transition.8} parent=11 // pred_check_branch
        %257 = sbr.rel (%p255) target = $region16
      $region15: #{up_transition.8} parent=11 // pred_region
        _
      $region16: #{up_transition.8} parent=11 // pred_fallthru
        _
      // Predicated region
      $region17: #{up_transition.8} parent=11 // pred_check
        %p258 = pneg %p156
      $region18: #{up_transition.8} parent=11 // pred_check_branch
        %260 = sbr.rel (%p258) target = $region20
      $region19: #{up_transition.8} parent=11 // pred_region
        _
      $region20: #{up_transition.8} parent=11 // pred_fallthru
        _
    $region12: #{up_transition.8} parent=5 // pred_fallthru
      _
    %p261 = scmp.lt.s32.totalorder %s14, 16
    // Predicated region
    $region21: #{up_transition.8} parent=5 // pred_check
      %p262 = pneg %p261
    $region22: #{up_transition.8} parent=5 // pred_check_branch
      %264 = sbr.rel (%p262) target = $region24
    $region23: #{up_transition.8} parent=5 // pred_region
      // Predicated region
      $region25: #{up_transition.8} parent=23 // pred_check
        %p265 = pneg %p48
      $region26: #{up_transition.8} parent=23 // pred_check_branch
        %267 = sbr.rel (%p265) target = $region28
      $region27: #{up_transition.8} parent=23 // pred_region
        %p268 = scmp.lt.s32.totalorder %s21, 1
        %s269 = scalar_select %p268, %s21, 1
        %p270 = scmp.lt.s32.totalorder %s22, 9
        %s271 = scalar_select %p270, %s22, 9
        %s272 = smul.addr %s271, 20
        %s273 = smul.addr %s269, 200
        %s274 = sadd.s32 %s272, %s273
        %s275 = smul.addr %s274, 4
        %s276 = scalar_lea.vmem %s0, %s275
      $region28: #{up_transition.8} parent=23 // pred_fallthru
        _
      // Predicated region
      $region29: #{up_transition.8} parent=23 // pred_check
        %p277 = pneg %p78
      $region30: #{up_transition.8} parent=23 // pred_check_branch
        %279 = sbr.rel (%p277) target = $region32
      $region31: #{up_transition.8} parent=23 // pred_region
        %s280 = sadd.s32 %s22, 1
        %p281 = scmp.lt.s32.totalorder %s21, 1
        %s282 = scalar_select %p281, %s21, 1
        %p283 = scmp.lt.s32.totalorder %s280, 9
        %s284 = scalar_select %p283, %s280, 9
        %s285 = smul.addr %s284, 20
        %s286 = smul.addr %s282, 200
        %s287 = sadd.s32 %s285, %s286
        %s288 = smul.addr %s287, 4
        %s289 = scalar_lea.vmem %s1, %s288
        %s290 = sadd.s32 %s22, 1
      $region32: #{up_transition.8} parent=23 // pred_fallthru
        _
      // Predicated region
      $region33: #{up_transition.8} parent=23 // pred_check
        %p291 = pneg %p108
      $region34: #{up_transition.8} parent=23 // pred_check_branch
        %293 = sbr.rel (%p291) target = $region36
      $region35: #{up_transition.8} parent=23 // pred_region
        %s294 = sadd.s32 %s22, 2
        %p295 = scmp.lt.s32.totalorder %s21, 1
        %s296 = scalar_select %p295, %s21, 1
        %p297 = scmp.lt.s32.totalorder %s294, 9
        %s298 = scalar_select %p297, %s294, 9
        %s299 = smul.addr %s298, 20
        %s300 = smul.addr %s296, 200
        %s301 = sadd.s32 %s299, %s300
        %s302 = smul.addr %s301, 4
        %s303 = scalar_lea.vmem %s2, %s302
        %s304 = sadd.s32 %s22, 2
      $region36: #{up_transition.8} parent=23 // pred_fallthru
        _
    $region24: #{up_transition.8} parent=5 // pred_fallthru
      _
    %p305 = scmp.le.s32.totalorder 1, %s14
    %p306 = scmp.lt.s32.totalorder %s14, 17
    %p307 = pnand %p305, %p306
    %p308 = pneg %p307
    // Predicated region
    $region37: #{up_transition.8} parent=5 // pred_check
      _
    $region38: #{up_transition.8} parent=5 // pred_check_branch
      %310 = sbr.rel (%p307) target = $region40
    $region39: #{up_transition.8} parent=5 // pred_region
      %s311 = ssub.s32 %s14, 1
      %p312 = scmp.lt.s32.totalorder %s23, 1
      %s313 = scalar_select %p312, %s23, 1
      %p314 = scmp.lt.s32.totalorder %s24, 9
      %s315 = scalar_select %p314, %s24, 9
      %s316 = smul.addr %s315, 20
      %s317 = smul.addr %s313, 200
      %s318 = sadd.s32 %s316, %s317
      %s319 = smul.addr %s318, 4
      %s320 = scalar_lea.vmem %s0, %s319
      %p321 = pneg %p54
      %p322 = pneg %p51
      %s323 = sadd.s32 %s24, 1
      %p324 = scmp.lt.s32.totalorder %s23, 1
      %s325 = scalar_select %p324, %s23, 1
      %p326 = scmp.lt.s32.totalorder %s323, 9
      %s327 = scalar_select %p326, %s323, 9
      %s328 = smul.addr %s327, 20
      %s329 = smul.addr %s325, 200
      %s330 = sadd.s32 %s328, %s329
      %s331 = smul.addr %s330, 4
      %s332 = scalar_lea.vmem %s1, %s331
      %p333 = pneg %p84
      %p334 = pneg %p81
      %s335 = sadd.s32 %s24, 2
      %p336 = scmp.lt.s32.totalorder %s23, 1
      %s337 = scalar_select %p336, %s23, 1
      %p338 = scmp.lt.s32.totalorder %s335, 9
      %s339 = scalar_select %p338, %s335, 9
      %s340 = smul.addr %s339, 20
      %s341 = smul.addr %s337, 200
      %s342 = sadd.s32 %s340, %s341
      %s343 = smul.addr %s342, 4
      %s344 = scalar_lea.vmem %s2, %s343
      %p345 = pneg %p114
      %p346 = pneg %p111
      %p347 = pneg %p135
      %p348 = pneg %p132
      %p349 = pneg %p156
      %p350 = pneg %p153
      %p351 = pneg %p184
      %p352 = pneg %p181
      %p353 = scmp.lt.s32.totalorder %s23, 1
      %s354 = scalar_select %p353, %s23, 1
      %p355 = scmp.lt.s32.totalorder %s24, 7
      %s356 = scalar_select %p355, %s24, 7
      %s357 = smul.addr %s356, 8
      %s358 = smul.addr %s354, 64
      %s359 = sadd.s32 %s357, %s358
      %s360 = smul.addr %s359, 8
      %s361 = scalar_lea.vmem %s5, %s360
      %p362 = pneg %p212
      %p363 = pneg %p209
      %p364 = scmp.lt.s32.totalorder %s23, 1
      %s365 = scalar_select %p364, %s23, 1
      %p366 = scmp.lt.s32.totalorder %s24, 7
      %s367 = scalar_select %p366, %s24, 7
      %s368 = smul.addr %s365, 8
      %s369 = sadd.s32 %s367, %s368
      %s370 = scalar_lea.vmem %s6, %s369
      %p371 = pneg %p240
      %p372 = pneg %p237
      %p373 = scmp.lt.s32.totalorder %s23, 1
      %s374 = scalar_select %p373, %s23, 1
      %p375 = scmp.lt.s32.totalorder %s24, 7
      %s376 = scalar_select %p375, %s24, 7
      %s377 = smul.addr %s374, 8
      %s378 = sadd.s32 %s376, %s377
      %s379 = scalar_lea.vmem %s7, %s378
      %p380 = scmp.lt.s32.totalorder %s23, 1
      %s381 = scalar_select %p380, %s23, 1
      %p382 = scmp.lt.s32.totalorder %s24, 9
      %s383 = scalar_select %p382, %s24, 9
      %s384 = smul.addr %s383, 20
      %s385 = smul.addr %s381, 200
      %s386 = sadd.s32 %s384, %s385
      %s387 = smul.addr %s386, 4
      %s388 = scalar_lea.vmem %s0, %s387
      %s389 = sadd.s32 %s24, 1
      %p390 = scmp.lt.s32.totalorder %s23, 1
      %s391 = scalar_select %p390, %s23, 1
      %p392 = scmp.lt.s32.totalorder %s389, 9
      %s393 = scalar_select %p392, %s389, 9
      %s394 = smul.addr %s393, 20
      %s395 = smul.addr %s391, 200
      %s396 = sadd.s32 %s394, %s395
      %s397 = smul.addr %s396, 4
      %s398 = scalar_lea.vmem %s1, %s397
      %s399 = sadd.s32 %s24, 1
      %s400 = sadd.s32 %s24, 2
      %p401 = scmp.lt.s32.totalorder %s23, 1
      %s402 = scalar_select %p401, %s23, 1
      %p403 = scmp.lt.s32.totalorder %s400, 9
      %s404 = scalar_select %p403, %s400, 9
      %s405 = smul.addr %s404, 20
      %s406 = smul.addr %s402, 200
      %s407 = sadd.s32 %s405, %s406
      %s408 = smul.addr %s407, 4
      %s409 = scalar_lea.vmem %s2, %s408
      %s410 = sadd.s32 %s24, 2
      %p411 = scmp.lt.s32.totalorder %s23, 1
      %s412 = scalar_select %p411, %s23, 1
      %p413 = scmp.lt.s32.totalorder %s24, 7
      %s414 = scalar_select %p413, %s24, 7
      %s415 = smul.addr %s414, 8
      %s416 = smul.addr %s412, 64
      %s417 = sadd.s32 %s415, %s416
      %s418 = smul.addr %s417, 8
      %s419 = scalar_lea.vmem %s5, %s418
      %p420 = scmp.lt.s32.totalorder %s23, 1
      %s421 = scalar_select %p420, %s23, 1
      %p422 = scmp.lt.s32.totalorder %s24, 7
      %s423 = scalar_select %p422, %s24, 7
      %s424 = smul.addr %s421, 8
      %s425 = sadd.s32 %s423, %s424
      %s426 = scalar_lea.vmem %s6, %s425
      %p427 = scmp.lt.s32.totalorder %s23, 1
      %s428 = scalar_select %p427, %s23, 1
      %p429 = scmp.lt.s32.totalorder %s24, 7
      %s430 = scalar_select %p429, %s24, 7
      %s431 = smul.addr %s428, 8
      %s432 = sadd.s32 %s430, %s431
      %s433 = scalar_lea.vmem %s7, %s432
      %v435 = vld [vmem:[%s388] sm:$0xf]
      %v436 = vld [vmem:[%s388 + $0x8] sm:$0xf]
      %v437 = vld [vmem:[%s388 + $0x10] sm:$0xf]
      %v438 = vld [vmem:[%s388 + $0x18] sm:$0xf]
      %v439 = vld [vmem:[%s388 + $0x20] sm:$0xf]
      %v440 = vld [vmem:[%s388 + $0x28] sm:$0xf]
      %v441 = vld [vmem:[%s388 + $0x30] sm:$0xf]
      %v442 = vld [vmem:[%s388 + $0x38] sm:$0xf]
      %v443 = vld [vmem:[%s388 + $0x4] sm:$0x1]
      %v444 = vld [vmem:[%s388 + $0xc] sm:$0x1]
      %v445 = vld [vmem:[%s388 + $0x14] sm:$0x1]
      %v446 = vld [vmem:[%s388 + $0x1c] sm:$0x1]
      %v447 = vld [vmem:[%s388 + $0x24] sm:$0x1]
      %v448 = vld [vmem:[%s388 + $0x2c] sm:$0x1]
      %v449 = vld [vmem:[%s388 + $0x34] sm:$0x1]
      %v450 = vld [vmem:[%s388 + $0x3c] sm:$0x1]
      %v451 = vld [vmem:[%s388] sm:$0xe]
      %v452 = vld [vmem:[%s388 + $0x8] sm:$0xe]
      %v453 = vld [vmem:[%s388 + $0x10] sm:$0xe]
      %v454 = vld [vmem:[%s388 + $0x18] sm:$0xe]
      %v455 = vld [vmem:[%s388 + $0x20] sm:$0xe]
      %v456 = vld [vmem:[%s388 + $0x28] sm:$0xe]
      %v457 = vld [vmem:[%s388 + $0x30] sm:$0xe]
      %v458 = vld [vmem:[%s388 + $0x38] sm:$0xe]
      %s459 = scalar_lea.vmem %s388, 8
      %v460 = vld [vmem:[%s459] sm:$0xf]
      %v461 = vld [vmem:[%s459 + $0x8] sm:$0xf]
      %v462 = vld [vmem:[%s459 + $0x10] sm:$0xf]
      %v463 = vld [vmem:[%s459 + $0x18] sm:$0xf]
      %v464 = vld [vmem:[%s459 + $0x20] sm:$0xf]
      %v465 = vld [vmem:[%s459 + $0x28] sm:$0xf]
      %v466 = vld [vmem:[%s459 + $0x30] sm:$0xf]
      %v467 = vld [vmem:[%s459 + $0x38] sm:$0xf]
      %v468 = vld [vmem:[%s459 + $0x4] sm:$0x1]
      %v469 = vld [vmem:[%s459 + $0xc] sm:$0x1]
      %v470 = vld [vmem:[%s459 + $0x14] sm:$0x1]
      %v471 = vld [vmem:[%s459 + $0x1c] sm:$0x1]
      %v472 = vld [vmem:[%s459 + $0x24] sm:$0x1]
      %v473 = vld [vmem:[%s459 + $0x2c] sm:$0x1]
      %v474 = vld [vmem:[%s459 + $0x34] sm:$0x1]
      %v475 = vld [vmem:[%s459 + $0x3c] sm:$0x1]
      %v476 = vld [vmem:[%s459] sm:$0xe]
      %v477 = vld [vmem:[%s459 + $0x8] sm:$0xe]
      %v478 = vld [vmem:[%s459 + $0x10] sm:$0xe]
      %v479 = vld [vmem:[%s459 + $0x18] sm:$0xe]
      %v480 = vld [vmem:[%s459 + $0x20] sm:$0xe]
      %v481 = vld [vmem:[%s459 + $0x28] sm:$0xe]
      %v482 = vld [vmem:[%s459 + $0x30] sm:$0xe]
      %v483 = vld [vmem:[%s459 + $0x38] sm:$0xe]
      %s484 = scalar_lea.vmem %s388, 16
      %v485 = vld [vmem:[%s484] sm:$0xf]
      %v486 = vld [vmem:[%s484 + $0x8] sm:$0xf]
      %v487 = vld [vmem:[%s484 + $0x10] sm:$0xf]
      %v488 = vld [vmem:[%s484 + $0x18] sm:$0xf]
      %v489 = vld [vmem:[%s484 + $0x20] sm:$0xf]
      %v490 = vld [vmem:[%s484 + $0x28] sm:$0xf]
      %v491 = vld [vmem:[%s484 + $0x30] sm:$0xf]
      %v492 = vld [vmem:[%s484 + $0x38] sm:$0xf]
      %v493 = vld [vmem:[%s484 + $0x4] sm:$0x1]
      %v494 = vld [vmem:[%s484 + $0xc] sm:$0x1]
      %v495 = vld [vmem:[%s484 + $0x14] sm:$0x1]
      %v496 = vld [vmem:[%s484 + $0x1c] sm:$0x1]
      %v497 = vld [vmem:[%s484 + $0x24] sm:$0x1]
      %v498 = vld [vmem:[%s484 + $0x2c] sm:$0x1]
      %v499 = vld [vmem:[%s484 + $0x34] sm:$0x1]
      %v500 = vld [vmem:[%s484 + $0x3c] sm:$0x1]
      %v501 = vld [vmem:[%s484] sm:$0xe]
      %v502 = vld [vmem:[%s484 + $0x8] sm:$0xe]
      %v503 = vld [vmem:[%s484 + $0x10] sm:$0xe]
      %v504 = vld [vmem:[%s484 + $0x18] sm:$0xe]
      %v505 = vld [vmem:[%s484 + $0x20] sm:$0xe]
      %v506 = vld [vmem:[%s484 + $0x28] sm:$0xe]
      %v507 = vld [vmem:[%s484 + $0x30] sm:$0xe]
      %v508 = vld [vmem:[%s484 + $0x38] sm:$0xe]
      %v509 = vld [vmem:[%s398] sm:$0xf]
      %v510 = vld [vmem:[%s398 + $0x8] sm:$0xf]
      %v511 = vld [vmem:[%s398 + $0x10] sm:$0xf]
      %v512 = vld [vmem:[%s398 + $0x18] sm:$0xf]
      %v513 = vld [vmem:[%s398 + $0x20] sm:$0xf]
      %v514 = vld [vmem:[%s398 + $0x28] sm:$0xf]
      %v515 = vld [vmem:[%s398 + $0x30] sm:$0xf]
      %v516 = vld [vmem:[%s398 + $0x38] sm:$0xf]
      %v517 = vld [vmem:[%s398 + $0x4] sm:$0x1]
      %v518 = vld [vmem:[%s398 + $0xc] sm:$0x1]
      %v519 = vld [vmem:[%s398 + $0x14] sm:$0x1]
      %v520 = vld [vmem:[%s398 + $0x1c] sm:$0x1]
      %v521 = vld [vmem:[%s398 + $0x24] sm:$0x1]
      %v522 = vld [vmem:[%s398 + $0x2c] sm:$0x1]
      %v523 = vld [vmem:[%s398 + $0x34] sm:$0x1]
      %v524 = vld [vmem:[%s398 + $0x3c] sm:$0x1]
      %v525 = vld [vmem:[%s398] sm:$0xe]
      %v526 = vld [vmem:[%s398 + $0x8] sm:$0xe]
      %v527 = vld [vmem:[%s398 + $0x10] sm:$0xe]
      %v528 = vld [vmem:[%s398 + $0x18] sm:$0xe]
      %v529 = vld [vmem:[%s398 + $0x20] sm:$0xe]
      %v530 = vld [vmem:[%s398 + $0x28] sm:$0xe]
      %v531 = vld [vmem:[%s398 + $0x30] sm:$0xe]
      %v532 = vld [vmem:[%s398 + $0x38] sm:$0xe]
      %s533 = scalar_lea.vmem %s398, 8
      %v534 = vld [vmem:[%s533] sm:$0xf]
      %v535 = vld [vmem:[%s533 + $0x8] sm:$0xf]
      %v536 = vld [vmem:[%s533 + $0x10] sm:$0xf]
      %v537 = vld [vmem:[%s533 + $0x18] sm:$0xf]
      %v538 = vld [vmem:[%s533 + $0x20] sm:$0xf]
      %v539 = vld [vmem:[%s533 + $0x28] sm:$0xf]
      %v540 = vld [vmem:[%s533 + $0x30] sm:$0xf]
      %v541 = vld [vmem:[%s533 + $0x38] sm:$0xf]
      %v542 = vld [vmem:[%s533 + $0x4] sm:$0x1]
      %v543 = vld [vmem:[%s533 + $0xc] sm:$0x1]
      %v544 = vld [vmem:[%s533 + $0x14] sm:$0x1]
      %v545 = vld [vmem:[%s533 + $0x1c] sm:$0x1]
      %v546 = vld [vmem:[%s533 + $0x24] sm:$0x1]
      %v547 = vld [vmem:[%s533 + $0x2c] sm:$0x1]
      %v548 = vld [vmem:[%s533 + $0x34] sm:$0x1]
      %v549 = vld [vmem:[%s533 + $0x3c] sm:$0x1]
      %v550 = vld [vmem:[%s533] sm:$0xe]
      %v551 = vld [vmem:[%s533 + $0x8] sm:$0xe]
      %v552 = vld [vmem:[%s533 + $0x10] sm:$0xe]
      %v553 = vld [vmem:[%s533 + $0x18] sm:$0xe]
      %v554 = vld [vmem:[%s533 + $0x20] sm:$0xe]
      %v555 = vld [vmem:[%s533 + $0x28] sm:$0xe]
      %v556 = vld [vmem:[%s533 + $0x30] sm:$0xe]
      %v557 = vld [vmem:[%s533 + $0x38] sm:$0xe]
      %s558 = scalar_lea.vmem %s398, 16
      %v559 = vld [vmem:[%s558] sm:$0xf]
      %v560 = vld [vmem:[%s558 + $0x8] sm:$0xf]
      %v561 = vld [vmem:[%s558 + $0x10] sm:$0xf]
      %v562 = vld [vmem:[%s558 + $0x18] sm:$0xf]
      %v563 = vld [vmem:[%s558 + $0x20] sm:$0xf]
      %v564 = vld [vmem:[%s558 + $0x28] sm:$0xf]
      %v565 = vld [vmem:[%s558 + $0x30] sm:$0xf]
      %v566 = vld [vmem:[%s558 + $0x38] sm:$0xf]
      %v567 = vld [vmem:[%s558 + $0x4] sm:$0x1]
      %v568 = vld [vmem:[%s558 + $0xc] sm:$0x1]
      %v569 = vld [vmem:[%s558 + $0x14] sm:$0x1]
      %v570 = vld [vmem:[%s558 + $0x1c] sm:$0x1]
      %v571 = vld [vmem:[%s558 + $0x24] sm:$0x1]
      %v572 = vld [vmem:[%s558 + $0x2c] sm:$0x1]
      %v573 = vld [vmem:[%s558 + $0x34] sm:$0x1]
      %v574 = vld [vmem:[%s558 + $0x3c] sm:$0x1]
      %v575 = vld [vmem:[%s558] sm:$0xe]
      %v576 = vld [vmem:[%s558 + $0x8] sm:$0xe]
      %v577 = vld [vmem:[%s558 + $0x10] sm:$0xe]
      %v578 = vld [vmem:[%s558 + $0x18] sm:$0xe]
      %v579 = vld [vmem:[%s558 + $0x20] sm:$0xe]
      %v580 = vld [vmem:[%s558 + $0x28] sm:$0xe]
      %v581 = vld [vmem:[%s558 + $0x30] sm:$0xe]
      %v582 = vld [vmem:[%s558 + $0x38] sm:$0xe]
      %v583 = vld [vmem:[%s409] sm:$0xf]
      %v584 = vld [vmem:[%s409 + $0x8] sm:$0xf]
      %v585 = vld [vmem:[%s409 + $0x10] sm:$0xf]
      %v586 = vld [vmem:[%s409 + $0x18] sm:$0xf]
      %v587 = vld [vmem:[%s409 + $0x20] sm:$0xf]
      %v588 = vld [vmem:[%s409 + $0x28] sm:$0xf]
      %v589 = vld [vmem:[%s409 + $0x30] sm:$0xf]
      %v590 = vld [vmem:[%s409 + $0x38] sm:$0xf]
      %v591 = vld [vmem:[%s409 + $0x4] sm:$0x1]
      %v592 = vld [vmem:[%s409 + $0xc] sm:$0x1]
      %v593 = vld [vmem:[%s409 + $0x14] sm:$0x1]
      %v594 = vld [vmem:[%s409 + $0x1c] sm:$0x1]
      %v595 = vld [vmem:[%s409 + $0x24] sm:$0x1]
      %v596 = vld [vmem:[%s409 + $0x2c] sm:$0x1]
      %v597 = vld [vmem:[%s409 + $0x34] sm:$0x1]
      %v598 = vld [vmem:[%s409 + $0x3c] sm:$0x1]
      %v599 = vld [vmem:[%s409] sm:$0xe]
      %v600 = vld [vmem:[%s409 + $0x8] sm:$0xe]
      %v601 = vld [vmem:[%s409 + $0x10] sm:$0xe]
      %v602 = vld [vmem:[%s409 + $0x18] sm:$0xe]
      %v603 = vld [vmem:[%s409 + $0x20] sm:$0xe]
      %v604 = vld [vmem:[%s409 + $0x28] sm:$0xe]
      %v605 = vld [vmem:[%s409 + $0x30] sm:$0xe]
      %v606 = vld [vmem:[%s409 + $0x38] sm:$0xe]
      %s607 = scalar_lea.vmem %s409, 8
      %v608 = vld [vmem:[%s607] sm:$0xf]
      %v609 = vld [vmem:[%s607 + $0x8] sm:$0xf]
      %v610 = vld [vmem:[%s607 + $0x10] sm:$0xf]
      %v611 = vld [vmem:[%s607 + $0x18] sm:$0xf]
      %v612 = vld [vmem:[%s607 + $0x20] sm:$0xf]
      %v613 = vld [vmem:[%s607 + $0x28] sm:$0xf]
      %v614 = vld [vmem:[%s607 + $0x30] sm:$0xf]
      %v615 = vld [vmem:[%s607 + $0x38] sm:$0xf]
      %v616 = vld [vmem:[%s607 + $0x4] sm:$0x1]
      %v617 = vld [vmem:[%s607 + $0xc] sm:$0x1]
      %v618 = vld [vmem:[%s607 + $0x14] sm:$0x1]
      %v619 = vld [vmem:[%s607 + $0x1c] sm:$0x1]
      %v620 = vld [vmem:[%s607 + $0x24] sm:$0x1]
      %v621 = vld [vmem:[%s607 + $0x2c] sm:$0x1]
      %v622 = vld [vmem:[%s607 + $0x34] sm:$0x1]
      %v623 = vld [vmem:[%s607 + $0x3c] sm:$0x1]
      %v624 = vld [vmem:[%s607] sm:$0xe]
      %v625 = vld [vmem:[%s607 + $0x8] sm:$0xe]
      %v626 = vld [vmem:[%s607 + $0x10] sm:$0xe]
      %v627 = vld [vmem:[%s607 + $0x18] sm:$0xe]
      %v628 = vld [vmem:[%s607 + $0x20] sm:$0xe]
      %v629 = vld [vmem:[%s607 + $0x28] sm:$0xe]
      %v630 = vld [vmem:[%s607 + $0x30] sm:$0xe]
      %v631 = vld [vmem:[%s607 + $0x38] sm:$0xe]
      %s632 = scalar_lea.vmem %s409, 16
      %v633 = vld [vmem:[%s632] sm:$0xf]
      %v634 = vld [vmem:[%s632 + $0x8] sm:$0xf]
      %v635 = vld [vmem:[%s632 + $0x10] sm:$0xf]
      %v636 = vld [vmem:[%s632 + $0x18] sm:$0xf]
      %v637 = vld [vmem:[%s632 + $0x20] sm:$0xf]
      %v638 = vld [vmem:[%s632 + $0x28] sm:$0xf]
      %v639 = vld [vmem:[%s632 + $0x30] sm:$0xf]
      %v640 = vld [vmem:[%s632 + $0x38] sm:$0xf]
      %v641 = vld [vmem:[%s632 + $0x4] sm:$0x1]
      %v642 = vld [vmem:[%s632 + $0xc] sm:$0x1]
      %v643 = vld [vmem:[%s632 + $0x14] sm:$0x1]
      %v644 = vld [vmem:[%s632 + $0x1c] sm:$0x1]
      %v645 = vld [vmem:[%s632 + $0x24] sm:$0x1]
      %v646 = vld [vmem:[%s632 + $0x2c] sm:$0x1]
      %v647 = vld [vmem:[%s632 + $0x34] sm:$0x1]
      %v648 = vld [vmem:[%s632 + $0x3c] sm:$0x1]
      %v649 = vld [vmem:[%s632] sm:$0xe]
      %v650 = vld [vmem:[%s632 + $0x8] sm:$0xe]
      %v651 = vld [vmem:[%s632 + $0x10] sm:$0xe]
      %v652 = vld [vmem:[%s632 + $0x18] sm:$0xe]
      %v653 = vld [vmem:[%s632 + $0x20] sm:$0xe]
      %v654 = vld [vmem:[%s632 + $0x28] sm:$0xe]
      %v655 = vld [vmem:[%s632 + $0x30] sm:$0xe]
      %v656 = vld [vmem:[%s632 + $0x38] sm:$0xe]
      %v673 = vunpack.c.l.b16 %v435
      %v674 = vunpack.c.l.b16 %v443
      %v675 = vunpack.c.l.b16 %v436
      %v676 = vunpack.c.l.b16 %v444
      %v677 = vunpack.c.l.b16 %v437
      %v678 = vunpack.c.l.b16 %v445
      %v679 = vunpack.c.l.b16 %v438
      %v680 = vunpack.c.l.b16 %v446
      %v681 = vunpack.c.l.b16 %v439
      %v682 = vunpack.c.l.b16 %v447
      %v683 = vunpack.c.l.b16 %v440
      %v684 = vunpack.c.l.b16 %v448
      %v685 = vunpack.c.l.b16 %v441
      %v686 = vunpack.c.l.b16 %v449
      %v687 = vunpack.c.l.b16 %v442
      %v688 = vunpack.c.l.b16 %v450
      %v689 = vpack.c.b16 %v674, %v673
      %v690 = vpack.c.b16 %v676, %v675
      %v691 = vpack.c.b16 %v678, %v677
      %v692 = vpack.c.b16 %v680, %v679
      %v693 = vpack.c.b16 %v682, %v681
      %v694 = vpack.c.b16 %v684, %v683
      %v695 = vpack.c.b16 %v686, %v685
      %v696 = vpack.c.b16 %v688, %v687
      %v698 = vshrl.u32 %v689, 16
      %v700 = vshll.u32 %v689, 16
      %v702 = vrot.slane %v700, 1
      %v703 = vor.u32 %v698, %v702
      %v705 = vshrl.u32 %v690, 16
      %v707 = vshll.u32 %v690, 16
      %v709 = vrot.slane %v707, 1
      %v710 = vor.u32 %v705, %v709
      %v712 = vshrl.u32 %v691, 16
      %v714 = vshll.u32 %v691, 16
      %v716 = vrot.slane %v714, 1
      %v717 = vor.u32 %v712, %v716
      %v719 = vshrl.u32 %v692, 16
      %v721 = vshll.u32 %v692, 16
      %v723 = vrot.slane %v721, 1
      %v724 = vor.u32 %v719, %v723
      %v726 = vshrl.u32 %v693, 16
      %v728 = vshll.u32 %v693, 16
      %v730 = vrot.slane %v728, 1
      %v731 = vor.u32 %v726, %v730
      %v733 = vshrl.u32 %v694, 16
      %v735 = vshll.u32 %v694, 16
      %v737 = vrot.slane %v735, 1
      %v738 = vor.u32 %v733, %v737
      %v740 = vshrl.u32 %v695, 16
      %v742 = vshll.u32 %v695, 16
      %v744 = vrot.slane %v742, 1
      %v745 = vor.u32 %v740, %v744
      %v747 = vshrl.u32 %v696, 16
      %v749 = vshll.u32 %v696, 16
      %v751 = vrot.slane %v749, 1
      %v752 = vor.u32 %v747, %v751
      %753 = vrot.lane.b32.xlu0 %v703, 64
      %v754 = vpop.permute.xlu0 %753
      %755 = vrot.lane.b32.xlu0 %v710, 64
      %v756 = vpop.permute.xlu0 %755
      %757 = vrot.lane.b32.xlu0 %v717, 64
      %v758 = vpop.permute.xlu0 %757
      %759 = vrot.lane.b32.xlu0 %v724, 64
      %v760 = vpop.permute.xlu0 %759
      %761 = vrot.lane.b32.xlu0 %v731, 64
      %v762 = vpop.permute.xlu0 %761
      %763 = vrot.lane.b32.xlu0 %v738, 64
      %v764 = vpop.permute.xlu0 %763
      %765 = vrot.lane.b32.xlu0 %v745, 64
      %v766 = vpop.permute.xlu0 %765
      %767 = vrot.lane.b32.xlu0 %v752, 64
      %v768 = vpop.permute.xlu0 %767
      %v777 = vunpack.c.l.b16 %v451
      %v778 = vunpack.c.l.b16 %v452
      %v779 = vunpack.c.l.b16 %v453
      %v780 = vunpack.c.l.b16 %v454
      %v781 = vunpack.c.l.b16 %v455
      %v782 = vunpack.c.l.b16 %v456
      %v783 = vunpack.c.l.b16 %v457
      %v784 = vunpack.c.l.b16 %v458
      %v785 = vpack.c.b16 %v674, %v777
      %v786 = vpack.c.b16 %v676, %v778
      %v787 = vpack.c.b16 %v678, %v779
      %v788 = vpack.c.b16 %v680, %v780
      %v789 = vpack.c.b16 %v682, %v781
      %v790 = vpack.c.b16 %v684, %v782
      %v791 = vpack.c.b16 %v686, %v783
      %v792 = vpack.c.b16 %v688, %v784
      %v793 = vrot.slane %v785, 1
      %v794 = vrot.slane %v786, 1
      %v795 = vrot.slane %v787, 1
      %v796 = vrot.slane %v788, 1
      %v797 = vrot.slane %v789, 1
      %v798 = vrot.slane %v790, 1
      %v799 = vrot.slane %v791, 1
      %v800 = vrot.slane %v792, 1
      %v809 = vunpack.c.l.b16 %v460
      %v810 = vunpack.c.l.b16 %v461
      %v811 = vunpack.c.l.b16 %v462
      %v812 = vunpack.c.l.b16 %v463
      %v813 = vunpack.c.l.b16 %v464
      %v814 = vunpack.c.l.b16 %v465
      %v815 = vunpack.c.l.b16 %v466
      %v816 = vunpack.c.l.b16 %v467
      %v817 = vpack.c.b16 %v809, %v809
      %v818 = vpack.c.b16 %v810, %v810
      %v819 = vpack.c.b16 %v811, %v811
      %v820 = vpack.c.b16 %v812, %v812
      %v821 = vpack.c.b16 %v813, %v813
      %v822 = vpack.c.b16 %v814, %v814
      %v823 = vpack.c.b16 %v815, %v815
      %v824 = vpack.c.b16 %v816, %v816
      %825 = vrot.lane.b32.xlu0 %v817, 64
      %v826 = vpop.permute.xlu0 %825
      %827 = vrot.lane.b32.xlu0 %v818, 64
      %v828 = vpop.permute.xlu0 %827
      %829 = vrot.lane.b32.xlu0 %v819, 64
      %v830 = vpop.permute.xlu0 %829
      %831 = vrot.lane.b32.xlu0 %v820, 64
      %v832 = vpop.permute.xlu0 %831
      %833 = vrot.lane.b32.xlu0 %v821, 64
      %v834 = vpop.permute.xlu0 %833
      %835 = vrot.lane.b32.xlu0 %v822, 64
      %v836 = vpop.permute.xlu0 %835
      %837 = vrot.lane.b32.xlu0 %v823, 64
      %v838 = vpop.permute.xlu0 %837
      %839 = vrot.lane.b32.xlu0 %v824, 64
      %v840 = vpop.permute.xlu0 %839
      %v849 = vunpack.c.l.b16 %v468
      %v850 = vunpack.c.l.b16 %v469
      %v851 = vunpack.c.l.b16 %v470
      %v852 = vunpack.c.l.b16 %v471
      %v853 = vunpack.c.l.b16 %v472
      %v854 = vunpack.c.l.b16 %v473
      %v855 = vunpack.c.l.b16 %v474
      %v856 = vunpack.c.l.b16 %v475
      %v857 = vpack.c.b16 %v849, %v809
      %v858 = vpack.c.b16 %v850, %v810
      %v859 = vpack.c.b16 %v851, %v811
      %v860 = vpack.c.b16 %v852, %v812
      %v861 = vpack.c.b16 %v853, %v813
      %v862 = vpack.c.b16 %v854, %v814
      %v863 = vpack.c.b16 %v855, %v815
      %v864 = vpack.c.b16 %v856, %v816
      %v866 = vshrl.u32 %v857, 16
      %v868 = vshll.u32 %v857, 16
      %v870 = vrot.slane %v868, 1
      %v871 = vor.u32 %v866, %v870
      %v873 = vshrl.u32 %v858, 16
      %v875 = vshll.u32 %v858, 16
      %v877 = vrot.slane %v875, 1
      %v878 = vor.u32 %v873, %v877
      %v880 = vshrl.u32 %v859, 16
      %v882 = vshll.u32 %v859, 16
      %v884 = vrot.slane %v882, 1
      %v885 = vor.u32 %v880, %v884
      %v887 = vshrl.u32 %v860, 16
      %v889 = vshll.u32 %v860, 16
      %v891 = vrot.slane %v889, 1
      %v892 = vor.u32 %v887, %v891
      %v894 = vshrl.u32 %v861, 16
      %v896 = vshll.u32 %v861, 16
      %v898 = vrot.slane %v896, 1
      %v899 = vor.u32 %v894, %v898
      %v901 = vshrl.u32 %v862, 16
      %v903 = vshll.u32 %v862, 16
      %v905 = vrot.slane %v903, 1
      %v906 = vor.u32 %v901, %v905
      %v908 = vshrl.u32 %v863, 16
      %v910 = vshll.u32 %v863, 16
      %v912 = vrot.slane %v910, 1
      %v913 = vor.u32 %v908, %v912
      %v915 = vshrl.u32 %v864, 16
      %v917 = vshll.u32 %v864, 16
      %v919 = vrot.slane %v917, 1
      %v920 = vor.u32 %v915, %v919
      %v929 = vunpack.c.l.b16 %v476
      %v930 = vunpack.c.l.b16 %v477
      %v931 = vunpack.c.l.b16 %v478
      %v932 = vunpack.c.l.b16 %v479
      %v933 = vunpack.c.l.b16 %v480
      %v934 = vunpack.c.l.b16 %v481
      %v935 = vunpack.c.l.b16 %v482
      %v936 = vunpack.c.l.b16 %v483
      %v937 = vpack.c.b16 %v849, %v929
      %v938 = vpack.c.b16 %v850, %v930
      %v939 = vpack.c.b16 %v851, %v931
      %v940 = vpack.c.b16 %v852, %v932
      %v941 = vpack.c.b16 %v853, %v933
      %v942 = vpack.c.b16 %v854, %v934
      %v943 = vpack.c.b16 %v855, %v935
      %v944 = vpack.c.b16 %v856, %v936
      %v945 = vrot.slane %v937, 1
      %v946 = vrot.slane %v938, 1
      %v947 = vrot.slane %v939, 1
      %v948 = vrot.slane %v940, 1
      %v949 = vrot.slane %v941, 1
      %v950 = vrot.slane %v942, 1
      %v951 = vrot.slane %v943, 1
      %v952 = vrot.slane %v944, 1
      %953 = vrot.lane.b32.xlu0 %v945, 64
      %v954 = vpop.permute.xlu0 %953
      %955 = vrot.lane.b32.xlu0 %v946, 64
      %v956 = vpop.permute.xlu0 %955
      %957 = vrot.lane.b32.xlu0 %v947, 64
      %v958 = vpop.permute.xlu0 %957
      %959 = vrot.lane.b32.xlu0 %v948, 64
      %v960 = vpop.permute.xlu0 %959
      %961 = vrot.lane.b32.xlu0 %v949, 64
      %v962 = vpop.permute.xlu0 %961
      %963 = vrot.lane.b32.xlu0 %v950, 64
      %v964 = vpop.permute.xlu0 %963
      %965 = vrot.lane.b32.xlu0 %v951, 64
      %v966 = vpop.permute.xlu0 %965
      %967 = vrot.lane.b32.xlu0 %v952, 64
      %v968 = vpop.permute.xlu0 %967
      %v985 = vunpack.c.l.b16 %v485
      %v986 = vunpack.c.l.b16 %v493
      %v987 = vunpack.c.l.b16 %v486
      %v988 = vunpack.c.l.b16 %v494
      %v989 = vunpack.c.l.b16 %v487
      %v990 = vunpack.c.l.b16 %v495
      %v991 = vunpack.c.l.b16 %v488
      %v992 = vunpack.c.l.b16 %v496
      %v993 = vunpack.c.l.b16 %v489
      %v994 = vunpack.c.l.b16 %v497
      %v995 = vunpack.c.l.b16 %v490
      %v996 = vunpack.c.l.b16 %v498
      %v997 = vunpack.c.l.b16 %v491
      %v998 = vunpack.c.l.b16 %v499
      %v999 = vunpack.c.l.b16 %v492
      %v1000 = vunpack.c.l.b16 %v500
      %v1001 = vpack.c.b16 %v986, %v985
      %v1002 = vpack.c.b16 %v988, %v987
      %v1003 = vpack.c.b16 %v990, %v989
      %v1004 = vpack.c.b16 %v992, %v991
      %v1005 = vpack.c.b16 %v994, %v993
      %v1006 = vpack.c.b16 %v996, %v995
      %v1007 = vpack.c.b16 %v998, %v997
      %v1008 = vpack.c.b16 %v1000, %v999
      %v1010 = vshrl.u32 %v1001, 16
      %v1012 = vshll.u32 %v1001, 16
      %v1014 = vrot.slane %v1012, 1
      %v1015 = vor.u32 %v1010, %v1014
      %v1017 = vshrl.u32 %v1002, 16
      %v1019 = vshll.u32 %v1002, 16
      %v1021 = vrot.slane %v1019, 1
      %v1022 = vor.u32 %v1017, %v1021
      %v1024 = vshrl.u32 %v1003, 16
      %v1026 = vshll.u32 %v1003, 16
      %v1028 = vrot.slane %v1026, 1
      %v1029 = vor.u32 %v1024, %v1028
      %v1031 = vshrl.u32 %v1004, 16
      %v1033 = vshll.u32 %v1004, 16
      %v1035 = vrot.slane %v1033, 1
      %v1036 = vor.u32 %v1031, %v1035
      %v1038 = vshrl.u32 %v1005, 16
      %v1040 = vshll.u32 %v1005, 16
      %v1042 = vrot.slane %v1040, 1
      %v1043 = vor.u32 %v1038, %v1042
      %v1045 = vshrl.u32 %v1006, 16
      %v1047 = vshll.u32 %v1006, 16
      %v1049 = vrot.slane %v1047, 1
      %v1050 = vor.u32 %v1045, %v1049
      %v1052 = vshrl.u32 %v1007, 16
      %v1054 = vshll.u32 %v1007, 16
      %v1056 = vrot.slane %v1054, 1
      %v1057 = vor.u32 %v1052, %v1056
      %v1059 = vshrl.u32 %v1008, 16
      %v1061 = vshll.u32 %v1008, 16
      %v1063 = vrot.slane %v1061, 1
      %v1064 = vor.u32 %v1059, %v1063
      %1065 = vrot.lane.b32.xlu0 %v1015, 64
      %v1066 = vpop.permute.xlu0 %1065
      %1067 = vrot.lane.b32.xlu0 %v1022, 64
      %v1068 = vpop.permute.xlu0 %1067
      %1069 = vrot.lane.b32.xlu0 %v1029, 64
      %v1070 = vpop.permute.xlu0 %1069
      %1071 = vrot.lane.b32.xlu0 %v1036, 64
      %v1072 = vpop.permute.xlu0 %1071
      %1073 = vrot.lane.b32.xlu0 %v1043, 64
      %v1074 = vpop.permute.xlu0 %1073
      %1075 = vrot.lane.b32.xlu0 %v1050, 64
      %v1076 = vpop.permute.xlu0 %1075
      %1077 = vrot.lane.b32.xlu0 %v1057, 64
      %v1078 = vpop.permute.xlu0 %1077
      %1079 = vrot.lane.b32.xlu0 %v1064, 64
      %v1080 = vpop.permute.xlu0 %1079
      %v1089 = vunpack.c.l.b16 %v501
      %v1090 = vunpack.c.l.b16 %v502
      %v1091 = vunpack.c.l.b16 %v503
      %v1092 = vunpack.c.l.b16 %v504
      %v1093 = vunpack.c.l.b16 %v505
      %v1094 = vunpack.c.l.b16 %v506
      %v1095 = vunpack.c.l.b16 %v507
      %v1096 = vunpack.c.l.b16 %v508
      %v1097 = vpack.c.b16 %v986, %v1089
      %v1098 = vpack.c.b16 %v988, %v1090
      %v1099 = vpack.c.b16 %v990, %v1091
      %v1100 = vpack.c.b16 %v992, %v1092
      %v1101 = vpack.c.b16 %v994, %v1093
      %v1102 = vpack.c.b16 %v996, %v1094
      %v1103 = vpack.c.b16 %v998, %v1095
      %v1104 = vpack.c.b16 %v1000, %v1096
      %v1105 = vrot.slane %v1097, 1
      %v1106 = vrot.slane %v1098, 1
      %v1107 = vrot.slane %v1099, 1
      %v1108 = vrot.slane %v1100, 1
      %v1109 = vrot.slane %v1101, 1
      %v1110 = vrot.slane %v1102, 1
      %v1111 = vrot.slane %v1103, 1
      %v1112 = vrot.slane %v1104, 1
      %v1121 = vunpack.c.l.b16 %v509
      %v1122 = vunpack.c.l.b16 %v510
      %v1123 = vunpack.c.l.b16 %v511
      %v1124 = vunpack.c.l.b16 %v512
      %v1125 = vunpack.c.l.b16 %v513
      %v1126 = vunpack.c.l.b16 %v514
      %v1127 = vunpack.c.l.b16 %v515
      %v1128 = vunpack.c.l.b16 %v516
      %v1129 = vpack.c.b16 %v1121, %v1121
      %v1130 = vpack.c.b16 %v1122, %v1122
      %v1131 = vpack.c.b16 %v1123, %v1123
      %v1132 = vpack.c.b16 %v1124, %v1124
      %v1133 = vpack.c.b16 %v1125, %v1125
      %v1134 = vpack.c.b16 %v1126, %v1126
      %v1135 = vpack.c.b16 %v1127, %v1127
      %v1136 = vpack.c.b16 %v1128, %v1128
      %1137 = vrot.lane.b32.xlu0 %v1129, 64
      %v1138 = vpop.permute.xlu0 %1137
      %1139 = vrot.lane.b32.xlu0 %v1130, 64
      %v1140 = vpop.permute.xlu0 %1139
      %1141 = vrot.lane.b32.xlu0 %v1131, 64
      %v1142 = vpop.permute.xlu0 %1141
      %1143 = vrot.lane.b32.xlu0 %v1132, 64
      %v1144 = vpop.permute.xlu0 %1143
      %1145 = vrot.lane.b32.xlu0 %v1133, 64
      %v1146 = vpop.permute.xlu0 %1145
      %1147 = vrot.lane.b32.xlu0 %v1134, 64
      %v1148 = vpop.permute.xlu0 %1147
      %1149 = vrot.lane.b32.xlu0 %v1135, 64
      %v1150 = vpop.permute.xlu0 %1149
      %1151 = vrot.lane.b32.xlu0 %v1136, 64
      %v1152 = vpop.permute.xlu0 %1151
      %v1161 = vunpack.c.l.b16 %v517
      %v1162 = vunpack.c.l.b16 %v518
      %v1163 = vunpack.c.l.b16 %v519
      %v1164 = vunpack.c.l.b16 %v520
      %v1165 = vunpack.c.l.b16 %v521
      %v1166 = vunpack.c.l.b16 %v522
      %v1167 = vunpack.c.l.b16 %v523
      %v1168 = vunpack.c.l.b16 %v524
      %v1169 = vpack.c.b16 %v1161, %v1121
      %v1170 = vpack.c.b16 %v1162, %v1122
      %v1171 = vpack.c.b16 %v1163, %v1123
      %v1172 = vpack.c.b16 %v1164, %v1124
      %v1173 = vpack.c.b16 %v1165, %v1125
      %v1174 = vpack.c.b16 %v1166, %v1126
      %v1175 = vpack.c.b16 %v1167, %v1127
      %v1176 = vpack.c.b16 %v1168, %v1128
      %v1178 = vshrl.u32 %v1169, 16
      %v1180 = vshll.u32 %v1169, 16
      %v1182 = vrot.slane %v1180, 1
      %v1183 = vor.u32 %v1178, %v1182
      %v1185 = vshrl.u32 %v1170, 16
      %v1187 = vshll.u32 %v1170, 16
      %v1189 = vrot.slane %v1187, 1
      %v1190 = vor.u32 %v1185, %v1189
      %v1192 = vshrl.u32 %v1171, 16
      %v1194 = vshll.u32 %v1171, 16
      %v1196 = vrot.slane %v1194, 1
      %v1197 = vor.u32 %v1192, %v1196
      %v1199 = vshrl.u32 %v1172, 16
      %v1201 = vshll.u32 %v1172, 16
      %v1203 = vrot.slane %v1201, 1
      %v1204 = vor.u32 %v1199, %v1203
      %v1206 = vshrl.u32 %v1173, 16
      %v1208 = vshll.u32 %v1173, 16
      %v1210 = vrot.slane %v1208, 1
      %v1211 = vor.u32 %v1206, %v1210
      %v1213 = vshrl.u32 %v1174, 16
      %v1215 = vshll.u32 %v1174, 16
      %v1217 = vrot.slane %v1215, 1
      %v1218 = vor.u32 %v1213, %v1217
      %v1220 = vshrl.u32 %v1175, 16
      %v1222 = vshll.u32 %v1175, 16
      %v1224 = vrot.slane %v1222, 1
      %v1225 = vor.u32 %v1220, %v1224
      %v1227 = vshrl.u32 %v1176, 16
      %v1229 = vshll.u32 %v1176, 16
      %v1231 = vrot.slane %v1229, 1
      %v1232 = vor.u32 %v1227, %v1231
      %v1241 = vunpack.c.l.b16 %v525
      %v1242 = vunpack.c.l.b16 %v526
      %v1243 = vunpack.c.l.b16 %v527
      %v1244 = vunpack.c.l.b16 %v528
      %v1245 = vunpack.c.l.b16 %v529
      %v1246 = vunpack.c.l.b16 %v530
      %v1247 = vunpack.c.l.b16 %v531
      %v1248 = vunpack.c.l.b16 %v532
      %v1249 = vpack.c.b16 %v1161, %v1241
      %v1250 = vpack.c.b16 %v1162, %v1242
      %v1251 = vpack.c.b16 %v1163, %v1243
      %v1252 = vpack.c.b16 %v1164, %v1244
      %v1253 = vpack.c.b16 %v1165, %v1245
      %v1254 = vpack.c.b16 %v1166, %v1246
      %v1255 = vpack.c.b16 %v1167, %v1247
      %v1256 = vpack.c.b16 %v1168, %v1248
      %v1257 = vrot.slane %v1249, 1
      %v1258 = vrot.slane %v1250, 1
      %v1259 = vrot.slane %v1251, 1
      %v1260 = vrot.slane %v1252, 1
      %v1261 = vrot.slane %v1253, 1
      %v1262 = vrot.slane %v1254, 1
      %v1263 = vrot.slane %v1255, 1
      %v1264 = vrot.slane %v1256, 1
      %1265 = vrot.lane.b32.xlu0 %v1257, 64
      %v1266 = vpop.permute.xlu0 %1265
      %1267 = vrot.lane.b32.xlu0 %v1258, 64
      %v1268 = vpop.permute.xlu0 %1267
      %1269 = vrot.lane.b32.xlu0 %v1259, 64
      %v1270 = vpop.permute.xlu0 %1269
      %1271 = vrot.lane.b32.xlu0 %v1260, 64
      %v1272 = vpop.permute.xlu0 %1271
      %1273 = vrot.lane.b32.xlu0 %v1261, 64
      %v1274 = vpop.permute.xlu0 %1273
      %1275 = vrot.lane.b32.xlu0 %v1262, 64
      %v1276 = vpop.permute.xlu0 %1275
      %1277 = vrot.lane.b32.xlu0 %v1263, 64
      %v1278 = vpop.permute.xlu0 %1277
      %1279 = vrot.lane.b32.xlu0 %v1264, 64
      %v1280 = vpop.permute.xlu0 %1279
      %v1297 = vunpack.c.l.b16 %v534
      %v1298 = vunpack.c.l.b16 %v542
      %v1299 = vunpack.c.l.b16 %v535
      %v1300 = vunpack.c.l.b16 %v543
      %v1301 = vunpack.c.l.b16 %v536
      %v1302 = vunpack.c.l.b16 %v544
      %v1303 = vunpack.c.l.b16 %v537
      %v1304 = vunpack.c.l.b16 %v545
      %v1305 = vunpack.c.l.b16 %v538
      %v1306 = vunpack.c.l.b16 %v546
      %v1307 = vunpack.c.l.b16 %v539
      %v1308 = vunpack.c.l.b16 %v547
      %v1309 = vunpack.c.l.b16 %v540
      %v1310 = vunpack.c.l.b16 %v548
      %v1311 = vunpack.c.l.b16 %v541
      %v1312 = vunpack.c.l.b16 %v549
      %v1313 = vpack.c.b16 %v1298, %v1297
      %v1314 = vpack.c.b16 %v1300, %v1299
      %v1315 = vpack.c.b16 %v1302, %v1301
      %v1316 = vpack.c.b16 %v1304, %v1303
      %v1317 = vpack.c.b16 %v1306, %v1305
      %v1318 = vpack.c.b16 %v1308, %v1307
      %v1319 = vpack.c.b16 %v1310, %v1309
      %v1320 = vpack.c.b16 %v1312, %v1311
      %v1322 = vshrl.u32 %v1313, 16
      %v1324 = vshll.u32 %v1313, 16
      %v1326 = vrot.slane %v1324, 1
      %v1327 = vor.u32 %v1322, %v1326
      %v1329 = vshrl.u32 %v1314, 16
      %v1331 = vshll.u32 %v1314, 16
      %v1333 = vrot.slane %v1331, 1
      %v1334 = vor.u32 %v1329, %v1333
      %v1336 = vshrl.u32 %v1315, 16
      %v1338 = vshll.u32 %v1315, 16
      %v1340 = vrot.slane %v1338, 1
      %v1341 = vor.u32 %v1336, %v1340
      %v1343 = vshrl.u32 %v1316, 16
      %v1345 = vshll.u32 %v1316, 16
      %v1347 = vrot.slane %v1345, 1
      %v1348 = vor.u32 %v1343, %v1347
      %v1350 = vshrl.u32 %v1317, 16
      %v1352 = vshll.u32 %v1317, 16
      %v1354 = vrot.slane %v1352, 1
      %v1355 = vor.u32 %v1350, %v1354
      %v1357 = vshrl.u32 %v1318, 16
      %v1359 = vshll.u32 %v1318, 16
      %v1361 = vrot.slane %v1359, 1
      %v1362 = vor.u32 %v1357, %v1361
      %v1364 = vshrl.u32 %v1319, 16
      %v1366 = vshll.u32 %v1319, 16
      %v1368 = vrot.slane %v1366, 1
      %v1369 = vor.u32 %v1364, %v1368
      %v1371 = vshrl.u32 %v1320, 16
      %v1373 = vshll.u32 %v1320, 16
      %v1375 = vrot.slane %v1373, 1
      %v1376 = vor.u32 %v1371, %v1375
      %1377 = vrot.lane.b32.xlu0 %v1327, 64
      %v1378 = vpop.permute.xlu0 %1377
      %1379 = vrot.lane.b32.xlu0 %v1334, 64
      %v1380 = vpop.permute.xlu0 %1379
      %1381 = vrot.lane.b32.xlu0 %v1341, 64
      %v1382 = vpop.permute.xlu0 %1381
      %1383 = vrot.lane.b32.xlu0 %v1348, 64
      %v1384 = vpop.permute.xlu0 %1383
      %1385 = vrot.lane.b32.xlu0 %v1355, 64
      %v1386 = vpop.permute.xlu0 %1385
      %1387 = vrot.lane.b32.xlu0 %v1362, 64
      %v1388 = vpop.permute.xlu0 %1387
      %1389 = vrot.lane.b32.xlu0 %v1369, 64
      %v1390 = vpop.permute.xlu0 %1389
      %1391 = vrot.lane.b32.xlu0 %v1376, 64
      %v1392 = vpop.permute.xlu0 %1391
      %v1401 = vunpack.c.l.b16 %v550
      %v1402 = vunpack.c.l.b16 %v551
      %v1403 = vunpack.c.l.b16 %v552
      %v1404 = vunpack.c.l.b16 %v553
      %v1405 = vunpack.c.l.b16 %v554
      %v1406 = vunpack.c.l.b16 %v555
      %v1407 = vunpack.c.l.b16 %v556
      %v1408 = vunpack.c.l.b16 %v557
      %v1409 = vpack.c.b16 %v1298, %v1401
      %v1410 = vpack.c.b16 %v1300, %v1402
      %v1411 = vpack.c.b16 %v1302, %v1403
      %v1412 = vpack.c.b16 %v1304, %v1404
      %v1413 = vpack.c.b16 %v1306, %v1405
      %v1414 = vpack.c.b16 %v1308, %v1406
      %v1415 = vpack.c.b16 %v1310, %v1407
      %v1416 = vpack.c.b16 %v1312, %v1408
      %v1417 = vrot.slane %v1409, 1
      %v1418 = vrot.slane %v1410, 1
      %v1419 = vrot.slane %v1411, 1
      %v1420 = vrot.slane %v1412, 1
      %v1421 = vrot.slane %v1413, 1
      %v1422 = vrot.slane %v1414, 1
      %v1423 = vrot.slane %v1415, 1
      %v1424 = vrot.slane %v1416, 1
      %v1433 = vunpack.c.l.b16 %v559
      %v1434 = vunpack.c.l.b16 %v560
      %v1435 = vunpack.c.l.b16 %v561
      %v1436 = vunpack.c.l.b16 %v562
      %v1437 = vunpack.c.l.b16 %v563
      %v1438 = vunpack.c.l.b16 %v564
      %v1439 = vunpack.c.l.b16 %v565
      %v1440 = vunpack.c.l.b16 %v566
      %v1441 = vpack.c.b16 %v1433, %v1433
      %v1442 = vpack.c.b16 %v1434, %v1434
      %v1443 = vpack.c.b16 %v1435, %v1435
      %v1444 = vpack.c.b16 %v1436, %v1436
      %v1445 = vpack.c.b16 %v1437, %v1437
      %v1446 = vpack.c.b16 %v1438, %v1438
      %v1447 = vpack.c.b16 %v1439, %v1439
      %v1448 = vpack.c.b16 %v1440, %v1440
      %1449 = vrot.lane.b32.xlu0 %v1441, 64
      %v1450 = vpop.permute.xlu0 %1449
      %1451 = vrot.lane.b32.xlu0 %v1442, 64
      %v1452 = vpop.permute.xlu0 %1451
      %1453 = vrot.lane.b32.xlu0 %v1443, 64
      %v1454 = vpop.permute.xlu0 %1453
      %1455 = vrot.lane.b32.xlu0 %v1444, 64
      %v1456 = vpop.permute.xlu0 %1455
      %1457 = vrot.lane.b32.xlu0 %v1445, 64
      %v1458 = vpop.permute.xlu0 %1457
      %1459 = vrot.lane.b32.xlu0 %v1446, 64
      %v1460 = vpop.permute.xlu0 %1459
      %1461 = vrot.lane.b32.xlu0 %v1447, 64
      %v1462 = vpop.permute.xlu0 %1461
      %1463 = vrot.lane.b32.xlu0 %v1448, 64
      %v1464 = vpop.permute.xlu0 %1463
      %vm1465 = vcmask 523264
      %v1468 = vsel %vm1465, %v435, %v754
      %v1471 = vsel %vm1465, %v436, %v756
      %v1474 = vsel %vm1465, %v437, %v758
      %v1477 = vsel %vm1465, %v438, %v760
      %v1480 = vsel %vm1465, %v439, %v762
      %v1483 = vsel %vm1465, %v440, %v764
      %v1486 = vsel %vm1465, %v441, %v766
      %v1489 = vsel %vm1465, %v442, %v768
      %v1492 = vsel %vm1465, %v793, %v826
      %v1495 = vsel %vm1465, %v794, %v828
      %v1498 = vsel %vm1465, %v795, %v830
      %v1501 = vsel %vm1465, %v796, %v832
      %v1504 = vsel %vm1465, %v797, %v834
      %v1507 = vsel %vm1465, %v798, %v836
      %v1510 = vsel %vm1465, %v799, %v838
      %v1513 = vsel %vm1465, %v800, %v840
      %v1516 = vsel %vm1465, %v871, %v954
      %v1519 = vsel %vm1465, %v878, %v956
      %v1522 = vsel %vm1465, %v885, %v958
      %v1525 = vsel %vm1465, %v892, %v960
      %v1528 = vsel %vm1465, %v899, %v962
      %v1531 = vsel %vm1465, %v906, %v964
      %v1534 = vsel %vm1465, %v913, %v966
      %v1537 = vsel %vm1465, %v920, %v968
      %v1540 = vsel %vm1465, %v485, %v1066
      %v1543 = vsel %vm1465, %v486, %v1068
      %v1546 = vsel %vm1465, %v487, %v1070
      %v1549 = vsel %vm1465, %v488, %v1072
      %v1552 = vsel %vm1465, %v489, %v1074
      %v1555 = vsel %vm1465, %v490, %v1076
      %v1558 = vsel %vm1465, %v491, %v1078
      %v1561 = vsel %vm1465, %v492, %v1080
      %v1564 = vsel %vm1465, %v1105, %v1138
      %v1567 = vsel %vm1465, %v1106, %v1140
      %v1570 = vsel %vm1465, %v1107, %v1142
      %v1573 = vsel %vm1465, %v1108, %v1144
      %v1576 = vsel %vm1465, %v1109, %v1146
      %v1579 = vsel %vm1465, %v1110, %v1148
      %v1582 = vsel %vm1465, %v1111, %v1150
      %v1585 = vsel %vm1465, %v1112, %v1152
      %v1588 = vsel %vm1465, %v1183, %v1266
      %v1591 = vsel %vm1465, %v1190, %v1268
      %v1594 = vsel %vm1465, %v1197, %v1270
      %v1597 = vsel %vm1465, %v1204, %v1272
      %v1600 = vsel %vm1465, %v1211, %v1274
      %v1603 = vsel %vm1465, %v1218, %v1276
      %v1606 = vsel %vm1465, %v1225, %v1278
      %v1609 = vsel %vm1465, %v1232, %v1280
      %v1612 = vsel %vm1465, %v534, %v1378
      %v1615 = vsel %vm1465, %v535, %v1380
      %v1618 = vsel %vm1465, %v536, %v1382
      %v1621 = vsel %vm1465, %v537, %v1384
      %v1624 = vsel %vm1465, %v538, %v1386
      %v1627 = vsel %vm1465, %v539, %v1388
      %v1630 = vsel %vm1465, %v540, %v1390
      %v1633 = vsel %vm1465, %v541, %v1392
      %v1636 = vsel %vm1465, %v1417, %v1450
      %v1639 = vsel %vm1465, %v1418, %v1452
      %v1642 = vsel %vm1465, %v1419, %v1454
      %v1645 = vsel %vm1465, %v1420, %v1456
      %v1648 = vsel %vm1465, %v1421, %v1458
      %v1651 = vsel %vm1465, %v1422, %v1460
      %v1654 = vsel %vm1465, %v1423, %v1462
      %v1657 = vsel %vm1465, %v1424, %v1464
      %v1666 = vunpack.c.l.b16 %v567
      %v1667 = vunpack.c.l.b16 %v568
      %v1668 = vunpack.c.l.b16 %v569
      %v1669 = vunpack.c.l.b16 %v570
      %v1670 = vunpack.c.l.b16 %v571
      %v1671 = vunpack.c.l.b16 %v572
      %v1672 = vunpack.c.l.b16 %v573
      %v1673 = vunpack.c.l.b16 %v574
      %v1674 = vpack.c.b16 %v1666, %v1433
      %v1675 = vpack.c.b16 %v1667, %v1434
      %v1676 = vpack.c.b16 %v1668, %v1435
      %v1677 = vpack.c.b16 %v1669, %v1436
      %v1678 = vpack.c.b16 %v1670, %v1437
      %v1679 = vpack.c.b16 %v1671, %v1438
      %v1680 = vpack.c.b16 %v1672, %v1439
      %v1681 = vpack.c.b16 %v1673, %v1440
      %v1690 = vunpack.c.l.b16 %v575
      %v1691 = vunpack.c.l.b16 %v576
      %v1692 = vunpack.c.l.b16 %v577
      %v1693 = vunpack.c.l.b16 %v578
      %v1694 = vunpack.c.l.b16 %v579
      %v1695 = vunpack.c.l.b16 %v580
      %v1696 = vunpack.c.l.b16 %v581
      %v1697 = vunpack.c.l.b16 %v582
      %v1698 = vpack.c.b16 %v1666, %v1690
      %v1699 = vpack.c.b16 %v1667, %v1691
      %v1700 = vpack.c.b16 %v1668, %v1692
      %v1701 = vpack.c.b16 %v1669, %v1693
      %v1702 = vpack.c.b16 %v1670, %v1694
      %v1703 = vpack.c.b16 %v1671, %v1695
      %v1704 = vpack.c.b16 %v1672, %v1696
      %v1705 = vpack.c.b16 %v1673, %v1697
      %v1707 = vshrl.u32 %v1698, 16
      %v1709 = vshll.u32 %v1698, 16
      %v1711 = vrot.slane %v1709, 1
      %v1712 = vor.u32 %v1707, %v1711
      %v1714 = vshrl.u32 %v1699, 16
      %v1716 = vshll.u32 %v1699, 16
      %v1718 = vrot.slane %v1716, 1
      %v1719 = vor.u32 %v1714, %v1718
      %v1721 = vshrl.u32 %v1700, 16
      %v1723 = vshll.u32 %v1700, 16
      %v1725 = vrot.slane %v1723, 1
      %v1726 = vor.u32 %v1721, %v1725
      %v1728 = vshrl.u32 %v1701, 16
      %v1730 = vshll.u32 %v1701, 16
      %v1732 = vrot.slane %v1730, 1
      %v1733 = vor.u32 %v1728, %v1732
      %v1735 = vshrl.u32 %v1702, 16
      %v1737 = vshll.u32 %v1702, 16
      %v1739 = vrot.slane %v1737, 1
      %v1740 = vor.u32 %v1735, %v1739
      %v1742 = vshrl.u32 %v1703, 16
      %v1744 = vshll.u32 %v1703, 16
      %v1746 = vrot.slane %v1744, 1
      %v1747 = vor.u32 %v1742, %v1746
      %v1749 = vshrl.u32 %v1704, 16
      %v1751 = vshll.u32 %v1704, 16
      %v1753 = vrot.slane %v1751, 1
      %v1754 = vor.u32 %v1749, %v1753
      %v1756 = vshrl.u32 %v1705, 16
      %v1758 = vshll.u32 %v1705, 16
      %v1760 = vrot.slane %v1758, 1
      %v1761 = vor.u32 %v1756, %v1760
      %1762 = vrot.lane.b32.xlu0 %v1712, 64
      %v1763 = vpop.permute.xlu0 %1762
      %1764 = vrot.lane.b32.xlu0 %v1719, 64
      %v1765 = vpop.permute.xlu0 %1764
      %1766 = vrot.lane.b32.xlu0 %v1726, 64
      %v1767 = vpop.permute.xlu0 %1766
      %1768 = vrot.lane.b32.xlu0 %v1733, 64
      %v1769 = vpop.permute.xlu0 %1768
      %1770 = vrot.lane.b32.xlu0 %v1740, 64
      %v1771 = vpop.permute.xlu0 %1770
      %1772 = vrot.lane.b32.xlu0 %v1747, 64
      %v1773 = vpop.permute.xlu0 %1772
      %1774 = vrot.lane.b32.xlu0 %v1754, 64
      %v1775 = vpop.permute.xlu0 %1774
      %1776 = vrot.lane.b32.xlu0 %v1761, 64
      %v1777 = vpop.permute.xlu0 %1776
      %v1786 = vunpack.c.l.b16 %v583
      %v1787 = vunpack.c.l.b16 %v584
      %v1788 = vunpack.c.l.b16 %v585
      %v1789 = vunpack.c.l.b16 %v586
      %v1790 = vunpack.c.l.b16 %v587
      %v1791 = vunpack.c.l.b16 %v588
      %v1792 = vunpack.c.l.b16 %v589
      %v1793 = vunpack.c.l.b16 %v590
      %v1794 = vpack.c.b16 %v1786, %v1786
      %v1795 = vpack.c.b16 %v1787, %v1787
      %v1796 = vpack.c.b16 %v1788, %v1788
      %v1797 = vpack.c.b16 %v1789, %v1789
      %v1798 = vpack.c.b16 %v1790, %v1790
      %v1799 = vpack.c.b16 %v1791, %v1791
      %v1800 = vpack.c.b16 %v1792, %v1792
      %v1801 = vpack.c.b16 %v1793, %v1793
      %v1803 = vshrl.u32 %v1794, 16
      %v1805 = vrot.slane %v1803, 7
      %v1806 = vshll.u32 %v1794, 16
      %v1808 = vor.u32 %v1805, %v1806
      %v1810 = vshrl.u32 %v1795, 16
      %v1812 = vrot.slane %v1810, 7
      %v1813 = vshll.u32 %v1795, 16
      %v1815 = vor.u32 %v1812, %v1813
      %v1817 = vshrl.u32 %v1796, 16
      %v1819 = vrot.slane %v1817, 7
      %v1820 = vshll.u32 %v1796, 16
      %v1822 = vor.u32 %v1819, %v1820
      %v1824 = vshrl.u32 %v1797, 16
      %v1826 = vrot.slane %v1824, 7
      %v1827 = vshll.u32 %v1797, 16
      %v1829 = vor.u32 %v1826, %v1827
      %v1831 = vshrl.u32 %v1798, 16
      %v1833 = vrot.slane %v1831, 7
      %v1834 = vshll.u32 %v1798, 16
      %v1836 = vor.u32 %v1833, %v1834
      %v1838 = vshrl.u32 %v1799, 16
      %v1840 = vrot.slane %v1838, 7
      %v1841 = vshll.u32 %v1799, 16
      %v1843 = vor.u32 %v1840, %v1841
      %v1845 = vshrl.u32 %v1800, 16
      %v1847 = vrot.slane %v1845, 7
      %v1848 = vshll.u32 %v1800, 16
      %v1850 = vor.u32 %v1847, %v1848
      %v1852 = vshrl.u32 %v1801, 16
      %v1854 = vrot.slane %v1852, 7
      %v1855 = vshll.u32 %v1801, 16
      %v1857 = vor.u32 %v1854, %v1855
      %v1866 = vunpack.c.l.b16 %v591
      %v1867 = vunpack.c.l.b16 %v592
      %v1868 = vunpack.c.l.b16 %v593
      %v1869 = vunpack.c.l.b16 %v594
      %v1870 = vunpack.c.l.b16 %v595
      %v1871 = vunpack.c.l.b16 %v596
      %v1872 = vunpack.c.l.b16 %v597
      %v1873 = vunpack.c.l.b16 %v598
      %v1874 = vpack.c.b16 %v1866, %v1786
      %v1875 = vpack.c.b16 %v1867, %v1787
      %v1876 = vpack.c.b16 %v1868, %v1788
      %v1877 = vpack.c.b16 %v1869, %v1789
      %v1878 = vpack.c.b16 %v1870, %v1790
      %v1879 = vpack.c.b16 %v1871, %v1791
      %v1880 = vpack.c.b16 %v1872, %v1792
      %v1881 = vpack.c.b16 %v1873, %v1793
      %1882 = vrot.lane.b32.xlu0 %v1874, 64
      %v1883 = vpop.permute.xlu0 %1882
      %1884 = vrot.lane.b32.xlu0 %v1875, 64
      %v1885 = vpop.permute.xlu0 %1884
      %1886 = vrot.lane.b32.xlu0 %v1876, 64
      %v1887 = vpop.permute.xlu0 %1886
      %1888 = vrot.lane.b32.xlu0 %v1877, 64
      %v1889 = vpop.permute.xlu0 %1888
      %1890 = vrot.lane.b32.xlu0 %v1878, 64
      %v1891 = vpop.permute.xlu0 %1890
      %1892 = vrot.lane.b32.xlu0 %v1879, 64
      %v1893 = vpop.permute.xlu0 %1892
      %1894 = vrot.lane.b32.xlu0 %v1880, 64
      %v1895 = vpop.permute.xlu0 %1894
      %1896 = vrot.lane.b32.xlu0 %v1881, 64
      %v1897 = vpop.permute.xlu0 %1896
      %v1906 = vunpack.c.l.b16 %v599
      %v1907 = vunpack.c.l.b16 %v600
      %v1908 = vunpack.c.l.b16 %v601
      %v1909 = vunpack.c.l.b16 %v602
      %v1910 = vunpack.c.l.b16 %v603
      %v1911 = vunpack.c.l.b16 %v604
      %v1912 = vunpack.c.l.b16 %v605
      %v1913 = vunpack.c.l.b16 %v606
      %v1914 = vpack.c.b16 %v1866, %v1906
      %v1915 = vpack.c.b16 %v1867, %v1907
      %v1916 = vpack.c.b16 %v1868, %v1908
      %v1917 = vpack.c.b16 %v1869, %v1909
      %v1918 = vpack.c.b16 %v1870, %v1910
      %v1919 = vpack.c.b16 %v1871, %v1911
      %v1920 = vpack.c.b16 %v1872, %v1912
      %v1921 = vpack.c.b16 %v1873, %v1913
      %v1923 = vshrl.u32 %v1914, 16
      %v1925 = vshll.u32 %v1914, 16
      %v1927 = vrot.slane %v1925, 1
      %v1928 = vor.u32 %v1923, %v1927
      %v1930 = vshrl.u32 %v1915, 16
      %v1932 = vshll.u32 %v1915, 16
      %v1934 = vrot.slane %v1932, 1
      %v1935 = vor.u32 %v1930, %v1934
      %v1937 = vshrl.u32 %v1916, 16
      %v1939 = vshll.u32 %v1916, 16
      %v1941 = vrot.slane %v1939, 1
      %v1942 = vor.u32 %v1937, %v1941
      %v1944 = vshrl.u32 %v1917, 16
      %v1946 = vshll.u32 %v1917, 16
      %v1948 = vrot.slane %v1946, 1
      %v1949 = vor.u32 %v1944, %v1948
      %v1951 = vshrl.u32 %v1918, 16
      %v1953 = vshll.u32 %v1918, 16
      %v1955 = vrot.slane %v1953, 1
      %v1956 = vor.u32 %v1951, %v1955
      %v1958 = vshrl.u32 %v1919, 16
      %v1960 = vshll.u32 %v1919, 16
      %v1962 = vrot.slane %v1960, 1
      %v1963 = vor.u32 %v1958, %v1962
      %v1965 = vshrl.u32 %v1920, 16
      %v1967 = vshll.u32 %v1920, 16
      %v1969 = vrot.slane %v1967, 1
      %v1970 = vor.u32 %v1965, %v1969
      %v1972 = vshrl.u32 %v1921, 16
      %v1974 = vshll.u32 %v1921, 16
      %v1976 = vrot.slane %v1974, 1
      %v1977 = vor.u32 %v1972, %v1976
      %v1986 = vunpack.c.l.b16 %v608
      %v1987 = vunpack.c.l.b16 %v609
      %v1988 = vunpack.c.l.b16 %v610
      %v1989 = vunpack.c.l.b16 %v611
      %v1990 = vunpack.c.l.b16 %v612
      %v1991 = vunpack.c.l.b16 %v613
      %v1992 = vunpack.c.l.b16 %v614
      %v1993 = vunpack.c.l.b16 %v615
      %v1994 = vpack.c.b16 %v1986, %v1986
      %v1995 = vpack.c.b16 %v1987, %v1987
      %v1996 = vpack.c.b16 %v1988, %v1988
      %v1997 = vpack.c.b16 %v1989, %v1989
      %v1998 = vpack.c.b16 %v1990, %v1990
      %v1999 = vpack.c.b16 %v1991, %v1991
      %v2000 = vpack.c.b16 %v1992, %v1992
      %v2001 = vpack.c.b16 %v1993, %v1993
      %v2003 = vshrl.u32 %v1994, 16
      %v2005 = vrot.slane %v2003, 7
      %v2006 = vshll.u32 %v1994, 16
      %v2008 = vor.u32 %v2005, %v2006
      %v2010 = vshrl.u32 %v1995, 16
      %v2012 = vrot.slane %v2010, 7
      %v2013 = vshll.u32 %v1995, 16
      %v2015 = vor.u32 %v2012, %v2013
      %v2017 = vshrl.u32 %v1996, 16
      %v2019 = vrot.slane %v2017, 7
      %v2020 = vshll.u32 %v1996, 16
      %v2022 = vor.u32 %v2019, %v2020
      %v2024 = vshrl.u32 %v1997, 16
      %v2026 = vrot.slane %v2024, 7
      %v2027 = vshll.u32 %v1997, 16
      %v2029 = vor.u32 %v2026, %v2027
      %v2031 = vshrl.u32 %v1998, 16
      %v2033 = vrot.slane %v2031, 7
      %v2034 = vshll.u32 %v1998, 16
      %v2036 = vor.u32 %v2033, %v2034
      %v2038 = vshrl.u32 %v1999, 16
      %v2040 = vrot.slane %v2038, 7
      %v2041 = vshll.u32 %v1999, 16
      %v2043 = vor.u32 %v2040, %v2041
      %v2045 = vshrl.u32 %v2000, 16
      %v2047 = vrot.slane %v2045, 7
      %v2048 = vshll.u32 %v2000, 16
      %v2050 = vor.u32 %v2047, %v2048
      %v2052 = vshrl.u32 %v2001, 16
      %v2054 = vrot.slane %v2052, 7
      %v2055 = vshll.u32 %v2001, 16
      %v2057 = vor.u32 %v2054, %v2055
      %2058 = vrot.lane.b32.xlu0 %v2008, 64
      %v2059 = vpop.permute.xlu0 %2058
      %2060 = vrot.lane.b32.xlu0 %v2015, 64
      %v2061 = vpop.permute.xlu0 %2060
      %2062 = vrot.lane.b32.xlu0 %v2022, 64
      %v2063 = vpop.permute.xlu0 %2062
      %2064 = vrot.lane.b32.xlu0 %v2029, 64
      %v2065 = vpop.permute.xlu0 %2064
      %2066 = vrot.lane.b32.xlu0 %v2036, 64
      %v2067 = vpop.permute.xlu0 %2066
      %2068 = vrot.lane.b32.xlu0 %v2043, 64
      %v2069 = vpop.permute.xlu0 %2068
      %2070 = vrot.lane.b32.xlu0 %v2050, 64
      %v2071 = vpop.permute.xlu0 %2070
      %2072 = vrot.lane.b32.xlu0 %v2057, 64
      %v2073 = vpop.permute.xlu0 %2072
      %v2082 = vunpack.c.l.b16 %v616
      %v2083 = vunpack.c.l.b16 %v617
      %v2084 = vunpack.c.l.b16 %v618
      %v2085 = vunpack.c.l.b16 %v619
      %v2086 = vunpack.c.l.b16 %v620
      %v2087 = vunpack.c.l.b16 %v621
      %v2088 = vunpack.c.l.b16 %v622
      %v2089 = vunpack.c.l.b16 %v623
      %v2090 = vpack.c.b16 %v2082, %v1986
      %v2091 = vpack.c.b16 %v2083, %v1987
      %v2092 = vpack.c.b16 %v2084, %v1988
      %v2093 = vpack.c.b16 %v2085, %v1989
      %v2094 = vpack.c.b16 %v2086, %v1990
      %v2095 = vpack.c.b16 %v2087, %v1991
      %v2096 = vpack.c.b16 %v2088, %v1992
      %v2097 = vpack.c.b16 %v2089, %v1993
      %v2106 = vunpack.c.l.b16 %v624
      %v2107 = vunpack.c.l.b16 %v625
      %v2108 = vunpack.c.l.b16 %v626
      %v2109 = vunpack.c.l.b16 %v627
      %v2110 = vunpack.c.l.b16 %v628
      %v2111 = vunpack.c.l.b16 %v629
      %v2112 = vunpack.c.l.b16 %v630
      %v2113 = vunpack.c.l.b16 %v631
      %v2114 = vpack.c.b16 %v2082, %v2106
      %v2115 = vpack.c.b16 %v2083, %v2107
      %v2116 = vpack.c.b16 %v2084, %v2108
      %v2117 = vpack.c.b16 %v2085, %v2109
      %v2118 = vpack.c.b16 %v2086, %v2110
      %v2119 = vpack.c.b16 %v2087, %v2111
      %v2120 = vpack.c.b16 %v2088, %v2112
      %v2121 = vpack.c.b16 %v2089, %v2113
      %v2123 = vshrl.u32 %v2114, 16
      %v2125 = vshll.u32 %v2114, 16
      %v2127 = vrot.slane %v2125, 1
      %v2128 = vor.u32 %v2123, %v2127
      %v2130 = vshrl.u32 %v2115, 16
      %v2132 = vshll.u32 %v2115, 16
      %v2134 = vrot.slane %v2132, 1
      %v2135 = vor.u32 %v2130, %v2134
      %v2137 = vshrl.u32 %v2116, 16
      %v2139 = vshll.u32 %v2116, 16
      %v2141 = vrot.slane %v2139, 1
      %v2142 = vor.u32 %v2137, %v2141
      %v2144 = vshrl.u32 %v2117, 16
      %v2146 = vshll.u32 %v2117, 16
      %v2148 = vrot.slane %v2146, 1
      %v2149 = vor.u32 %v2144, %v2148
      %v2151 = vshrl.u32 %v2118, 16
      %v2153 = vshll.u32 %v2118, 16
      %v2155 = vrot.slane %v2153, 1
      %v2156 = vor.u32 %v2151, %v2155
      %v2158 = vshrl.u32 %v2119, 16
      %v2160 = vshll.u32 %v2119, 16
      %v2162 = vrot.slane %v2160, 1
      %v2163 = vor.u32 %v2158, %v2162
      %v2165 = vshrl.u32 %v2120, 16
      %v2167 = vshll.u32 %v2120, 16
      %v2169 = vrot.slane %v2167, 1
      %v2170 = vor.u32 %v2165, %v2169
      %v2172 = vshrl.u32 %v2121, 16
      %v2174 = vshll.u32 %v2121, 16
      %v2176 = vrot.slane %v2174, 1
      %v2177 = vor.u32 %v2172, %v2176
      %2178 = vrot.lane.b32.xlu0 %v2128, 64
      %v2179 = vpop.permute.xlu0 %2178
      %2180 = vrot.lane.b32.xlu0 %v2135, 64
      %v2181 = vpop.permute.xlu0 %2180
      %2182 = vrot.lane.b32.xlu0 %v2142, 64
      %v2183 = vpop.permute.xlu0 %2182
      %2184 = vrot.lane.b32.xlu0 %v2149, 64
      %v2185 = vpop.permute.xlu0 %2184
      %2186 = vrot.lane.b32.xlu0 %v2156, 64
      %v2187 = vpop.permute.xlu0 %2186
      %2188 = vrot.lane.b32.xlu0 %v2163, 64
      %v2189 = vpop.permute.xlu0 %2188
      %2190 = vrot.lane.b32.xlu0 %v2170, 64
      %v2191 = vpop.permute.xlu0 %2190
      %2192 = vrot.lane.b32.xlu0 %v2177, 64
      %v2193 = vpop.permute.xlu0 %2192
      %v2202 = vunpack.c.l.b16 %v633
      %v2203 = vunpack.c.l.b16 %v634
      %v2204 = vunpack.c.l.b16 %v635
      %v2205 = vunpack.c.l.b16 %v636
      %v2206 = vunpack.c.l.b16 %v637
      %v2207 = vunpack.c.l.b16 %v638
      %v2208 = vunpack.c.l.b16 %v639
      %v2209 = vunpack.c.l.b16 %v640
      %v2210 = vpack.c.b16 %v2202, %v2202
      %v2211 = vpack.c.b16 %v2203, %v2203
      %v2212 = vpack.c.b16 %v2204, %v2204
      %v2213 = vpack.c.b16 %v2205, %v2205
      %v2214 = vpack.c.b16 %v2206, %v2206
      %v2215 = vpack.c.b16 %v2207, %v2207
      %v2216 = vpack.c.b16 %v2208, %v2208
      %v2217 = vpack.c.b16 %v2209, %v2209
      %v2219 = vshrl.u32 %v2210, 16
      %v2221 = vrot.slane %v2219, 7
      %v2222 = vshll.u32 %v2210, 16
      %v2224 = vor.u32 %v2221, %v2222
      %v2226 = vshrl.u32 %v2211, 16
      %v2228 = vrot.slane %v2226, 7
      %v2229 = vshll.u32 %v2211, 16
      %v2231 = vor.u32 %v2228, %v2229
      %v2233 = vshrl.u32 %v2212, 16
      %v2235 = vrot.slane %v2233, 7
      %v2236 = vshll.u32 %v2212, 16
      %v2238 = vor.u32 %v2235, %v2236
      %v2240 = vshrl.u32 %v2213, 16
      %v2242 = vrot.slane %v2240, 7
      %v2243 = vshll.u32 %v2213, 16
      %v2245 = vor.u32 %v2242, %v2243
      %v2247 = vshrl.u32 %v2214, 16
      %v2249 = vrot.slane %v2247, 7
      %v2250 = vshll.u32 %v2214, 16
      %v2252 = vor.u32 %v2249, %v2250
      %v2254 = vshrl.u32 %v2215, 16
      %v2256 = vrot.slane %v2254, 7
      %v2257 = vshll.u32 %v2215, 16
      %v2259 = vor.u32 %v2256, %v2257
      %v2261 = vshrl.u32 %v2216, 16
      %v2263 = vrot.slane %v2261, 7
      %v2264 = vshll.u32 %v2216, 16
      %v2266 = vor.u32 %v2263, %v2264
      %v2268 = vshrl.u32 %v2217, 16
      %v2270 = vrot.slane %v2268, 7
      %v2271 = vshll.u32 %v2217, 16
      %v2273 = vor.u32 %v2270, %v2271
      %v2282 = vunpack.c.l.b16 %v641
      %v2283 = vunpack.c.l.b16 %v642
      %v2284 = vunpack.c.l.b16 %v643
      %v2285 = vunpack.c.l.b16 %v644
      %v2286 = vunpack.c.l.b16 %v645
      %v2287 = vunpack.c.l.b16 %v646
      %v2288 = vunpack.c.l.b16 %v647
      %v2289 = vunpack.c.l.b16 %v648
      %v2290 = vpack.c.b16 %v2282, %v2202
      %v2291 = vpack.c.b16 %v2283, %v2203
      %v2292 = vpack.c.b16 %v2284, %v2204
      %v2293 = vpack.c.b16 %v2285, %v2205
      %v2294 = vpack.c.b16 %v2286, %v2206
      %v2295 = vpack.c.b16 %v2287, %v2207
      %v2296 = vpack.c.b16 %v2288, %v2208
      %v2297 = vpack.c.b16 %v2289, %v2209
      %2298 = vrot.lane.b32.xlu0 %v2290, 64
      %v2299 = vpop.permute.xlu0 %2298
      %2300 = vrot.lane.b32.xlu0 %v2291, 64
      %v2301 = vpop.permute.xlu0 %2300
      %2302 = vrot.lane.b32.xlu0 %v2292, 64
      %v2303 = vpop.permute.xlu0 %2302
      %2304 = vrot.lane.b32.xlu0 %v2293, 64
      %v2305 = vpop.permute.xlu0 %2304
      %2306 = vrot.lane.b32.xlu0 %v2294, 64
      %v2307 = vpop.permute.xlu0 %2306
      %2308 = vrot.lane.b32.xlu0 %v2295, 64
      %v2309 = vpop.permute.xlu0 %2308
      %2310 = vrot.lane.b32.xlu0 %v2296, 64
      %v2311 = vpop.permute.xlu0 %2310
      %2312 = vrot.lane.b32.xlu0 %v2297, 64
      %v2313 = vpop.permute.xlu0 %2312
      %v2322 = vunpack.c.l.b16 %v649
      %v2323 = vunpack.c.l.b16 %v650
      %v2324 = vunpack.c.l.b16 %v651
      %v2325 = vunpack.c.l.b16 %v652
      %v2326 = vunpack.c.l.b16 %v653
      %v2327 = vunpack.c.l.b16 %v654
      %v2328 = vunpack.c.l.b16 %v655
      %v2329 = vunpack.c.l.b16 %v656
      %v2330 = vpack.c.b16 %v2282, %v2322
      %v2331 = vpack.c.b16 %v2283, %v2323
      %v2332 = vpack.c.b16 %v2284, %v2324
      %v2333 = vpack.c.b16 %v2285, %v2325
      %v2334 = vpack.c.b16 %v2286, %v2326
      %v2335 = vpack.c.b16 %v2287, %v2327
      %v2336 = vpack.c.b16 %v2288, %v2328
      %v2337 = vpack.c.b16 %v2289, %v2329
      %v2339 = vshrl.u32 %v2330, 16
      %v2341 = vshll.u32 %v2330, 16
      %v2343 = vrot.slane %v2341, 1
      %v2344 = vor.u32 %v2339, %v2343
      %v2346 = vshrl.u32 %v2331, 16
      %v2348 = vshll.u32 %v2331, 16
      %v2350 = vrot.slane %v2348, 1
      %v2351 = vor.u32 %v2346, %v2350
      %v2353 = vshrl.u32 %v2332, 16
      %v2355 = vshll.u32 %v2332, 16
      %v2357 = vrot.slane %v2355, 1
      %v2358 = vor.u32 %v2353, %v2357
      %v2360 = vshrl.u32 %v2333, 16
      %v2362 = vshll.u32 %v2333, 16
      %v2364 = vrot.slane %v2362, 1
      %v2365 = vor.u32 %v2360, %v2364
      %v2367 = vshrl.u32 %v2334, 16
      %v2369 = vshll.u32 %v2334, 16
      %v2371 = vrot.slane %v2369, 1
      %v2372 = vor.u32 %v2367, %v2371
      %v2374 = vshrl.u32 %v2335, 16
      %v2376 = vshll.u32 %v2335, 16
      %v2378 = vrot.slane %v2376, 1
      %v2379 = vor.u32 %v2374, %v2378
      %v2381 = vshrl.u32 %v2336, 16
      %v2383 = vshll.u32 %v2336, 16
      %v2385 = vrot.slane %v2383, 1
      %v2386 = vor.u32 %v2381, %v2385
      %v2388 = vshrl.u32 %v2337, 16
      %v2390 = vshll.u32 %v2337, 16
      %v2392 = vrot.slane %v2390, 1
      %v2393 = vor.u32 %v2388, %v2392
      %v2396 = vsel %vm1465, %v1674, %v1763
      %v2399 = vsel %vm1465, %v1675, %v1765
      %v2402 = vsel %vm1465, %v1676, %v1767
      %v2405 = vsel %vm1465, %v1677, %v1769
      %v2408 = vsel %vm1465, %v1678, %v1771
      %v2411 = vsel %vm1465, %v1679, %v1773
      %v2414 = vsel %vm1465, %v1680, %v1775
      %v2417 = vsel %vm1465, %v1681, %v1777
      %v2420 = vsel %vm1465, %v1808, %v1883
      %v2423 = vsel %vm1465, %v1815, %v1885
      %v2426 = vsel %vm1465, %v1822, %v1887
      %v2429 = vsel %vm1465, %v1829, %v1889
      %v2432 = vsel %vm1465, %v1836, %v1891
      %v2435 = vsel %vm1465, %v1843, %v1893
      %v2438 = vsel %vm1465, %v1850, %v1895
      %v2441 = vsel %vm1465, %v1857, %v1897
      %v2444 = vsel %vm1465, %v1928, %v2059
      %v2447 = vsel %vm1465, %v1935, %v2061
      %v2450 = vsel %vm1465, %v1942, %v2063
      %v2453 = vsel %vm1465, %v1949, %v2065
      %v2456 = vsel %vm1465, %v1956, %v2067
      %v2459 = vsel %vm1465, %v1963, %v2069
      %v2462 = vsel %vm1465, %v1970, %v2071
      %v2465 = vsel %vm1465, %v1977, %v2073
      %v2468 = vsel %vm1465, %v2090, %v2179
      %v2471 = vsel %vm1465, %v2091, %v2181
      %v2474 = vsel %vm1465, %v2092, %v2183
      %v2477 = vsel %vm1465, %v2093, %v2185
      %v2480 = vsel %vm1465, %v2094, %v2187
      %v2483 = vsel %vm1465, %v2095, %v2189
      %v2486 = vsel %vm1465, %v2096, %v2191
      %v2489 = vsel %vm1465, %v2097, %v2193
      %v2492 = vsel %vm1465, %v2224, %v2299
      %v2495 = vsel %vm1465, %v2231, %v2301
      %v2498 = vsel %vm1465, %v2238, %v2303
      %v2501 = vsel %vm1465, %v2245, %v2305
      %v2504 = vsel %vm1465, %v2252, %v2307
      %v2507 = vsel %vm1465, %v2259, %v2309
      %v2510 = vsel %vm1465, %v2266, %v2311
      %v2513 = vsel %vm1465, %v2273, %v2313
      %v2514 = vshrl.u32 %v2396, 16
      %v2516 = vshll.u32 %v2396, 16
      %v2518 = vrot.slane %v2516, 1
      %v2519 = vor.u32 %v2514, %v2518
      %v2520 = vshrl.u32 %v2420, 16
      %v2522 = vshll.u32 %v2420, 16
      %v2524 = vrot.slane %v2522, 1
      %v2525 = vor.u32 %v2520, %v2524
      %v2526 = vshrl.u32 %v2444, 16
      %v2528 = vshll.u32 %v2444, 16
      %v2530 = vrot.slane %v2528, 1
      %v2531 = vor.u32 %v2526, %v2530
      %v2532 = vshrl.u32 %v2468, 16
      %v2534 = vshll.u32 %v2468, 16
      %v2536 = vrot.slane %v2534, 1
      %v2537 = vor.u32 %v2532, %v2536
      %v2538 = vshrl.u32 %v2492, 16
      %v2540 = vshll.u32 %v2492, 16
      %v2542 = vrot.slane %v2540, 1
      %v2543 = vor.u32 %v2538, %v2542
      %v2545 = vshrl.u32 %v2344, 16
      %v2547 = vshll.u32 %v2344, 16
      %v2549 = vrot.slane %v2547, 1
      %v2550 = vor.u32 %v2545, %v2549
      %v2551 = vshrl.u32 %v2399, 16
      %v2553 = vshll.u32 %v2399, 16
      %v2555 = vrot.slane %v2553, 1
      %v2556 = vor.u32 %v2551, %v2555
      %v2557 = vshrl.u32 %v2423, 16
      %v2559 = vshll.u32 %v2423, 16
      %v2561 = vrot.slane %v2559, 1
      %v2562 = vor.u32 %v2557, %v2561
      %v2563 = vshrl.u32 %v2447, 16
      %v2565 = vshll.u32 %v2447, 16
      %v2567 = vrot.slane %v2565, 1
      %v2568 = vor.u32 %v2563, %v2567
      %v2569 = vshrl.u32 %v2471, 16
      %v2571 = vshll.u32 %v2471, 16
      %v2573 = vrot.slane %v2571, 1
      %v2574 = vor.u32 %v2569, %v2573
      %v2575 = vshrl.u32 %v2495, 16
      %v2577 = vshll.u32 %v2495, 16
      %v2579 = vrot.slane %v2577, 1
      %v2580 = vor.u32 %v2575, %v2579
      %v2582 = vshrl.u32 %v2351, 16
      %v2584 = vshll.u32 %v2351, 16
      %v2586 = vrot.slane %v2584, 1
      %v2587 = vor.u32 %v2582, %v2586
      %v2588 = vshrl.u32 %v2402, 16
      %v2590 = vshll.u32 %v2402, 16
      %v2592 = vrot.slane %v2590, 1
      %v2593 = vor.u32 %v2588, %v2592
      %v2594 = vshrl.u32 %v2426, 16
      %v2596 = vshll.u32 %v2426, 16
      %v2598 = vrot.slane %v2596, 1
      %v2599 = vor.u32 %v2594, %v2598
      %v2600 = vshrl.u32 %v2450, 16
      %v2602 = vshll.u32 %v2450, 16
      %v2604 = vrot.slane %v2602, 1
      %v2605 = vor.u32 %v2600, %v2604
      %v2606 = vshrl.u32 %v2474, 16
      %v2608 = vshll.u32 %v2474, 16
      %v2610 = vrot.slane %v2608, 1
      %v2611 = vor.u32 %v2606, %v2610
      %v2612 = vshrl.u32 %v2498, 16
      %v2614 = vshll.u32 %v2498, 16
      %v2616 = vrot.slane %v2614, 1
      %v2617 = vor.u32 %v2612, %v2616
      %v2619 = vshrl.u32 %v2358, 16
      %v2621 = vshll.u32 %v2358, 16
      %v2623 = vrot.slane %v2621, 1
      %v2624 = vor.u32 %v2619, %v2623
      %v2625 = vshrl.u32 %v2405, 16
      %v2627 = vshll.u32 %v2405, 16
      %v2629 = vrot.slane %v2627, 1
      %v2630 = vor.u32 %v2625, %v2629
      %v2631 = vshrl.u32 %v2429, 16
      %v2633 = vshll.u32 %v2429, 16
      %v2635 = vrot.slane %v2633, 1
      %v2636 = vor.u32 %v2631, %v2635
      %v2637 = vshrl.u32 %v2453, 16
      %v2639 = vshll.u32 %v2453, 16
      %v2641 = vrot.slane %v2639, 1
      %v2642 = vor.u32 %v2637, %v2641
      %v2643 = vshrl.u32 %v2477, 16
      %v2645 = vshll.u32 %v2477, 16
      %v2647 = vrot.slane %v2645, 1
      %v2648 = vor.u32 %v2643, %v2647
      %v2649 = vshrl.u32 %v2501, 16
      %v2651 = vshll.u32 %v2501, 16
      %v2653 = vrot.slane %v2651, 1
      %v2654 = vor.u32 %v2649, %v2653
      %v2656 = vshrl.u32 %v2365, 16
      %v2658 = vshll.u32 %v2365, 16
      %v2660 = vrot.slane %v2658, 1
      %v2661 = vor.u32 %v2656, %v2660
      %v2662 = vshrl.u32 %v2408, 16
      %v2664 = vshll.u32 %v2408, 16
      %v2666 = vrot.slane %v2664, 1
      %v2667 = vor.u32 %v2662, %v2666
      %v2668 = vshrl.u32 %v2432, 16
      %v2670 = vshll.u32 %v2432, 16
      %v2672 = vrot.slane %v2670, 1
      %v2673 = vor.u32 %v2668, %v2672
      %v2674 = vshrl.u32 %v2456, 16
      %v2676 = vshll.u32 %v2456, 16
      %v2678 = vrot.slane %v2676, 1
      %v2679 = vor.u32 %v2674, %v2678
      %v2680 = vshrl.u32 %v2480, 16
      %v2682 = vshll.u32 %v2480, 16
      %v2684 = vrot.slane %v2682, 1
      %v2685 = vor.u32 %v2680, %v2684
      %v2686 = vshrl.u32 %v2504, 16
      %v2688 = vshll.u32 %v2504, 16
      %v2690 = vrot.slane %v2688, 1
      %v2691 = vor.u32 %v2686, %v2690
      %v2693 = vshrl.u32 %v2372, 16
      %v2695 = vshll.u32 %v2372, 16
      %v2697 = vrot.slane %v2695, 1
      %v2698 = vor.u32 %v2693, %v2697
      %v2699 = vshrl.u32 %v2411, 16
      %v2701 = vshll.u32 %v2411, 16
      %v2703 = vrot.slane %v2701, 1
      %v2704 = vor.u32 %v2699, %v2703
      %v2705 = vshrl.u32 %v2435, 16
      %v2707 = vshll.u32 %v2435, 16
      %v2709 = vrot.slane %v2707, 1
      %v2710 = vor.u32 %v2705, %v2709
      %v2711 = vshrl.u32 %v2459, 16
      %v2713 = vshll.u32 %v2459, 16
      %v2715 = vrot.slane %v2713, 1
      %v2716 = vor.u32 %v2711, %v2715
      %v2717 = vshrl.u32 %v2483, 16
      %v2719 = vshll.u32 %v2483, 16
      %v2721 = vrot.slane %v2719, 1
      %v2722 = vor.u32 %v2717, %v2721
      %v2723 = vshrl.u32 %v2507, 16
      %v2725 = vshll.u32 %v2507, 16
      %v2727 = vrot.slane %v2725, 1
      %v2728 = vor.u32 %v2723, %v2727
      %v2730 = vshrl.u32 %v2379, 16
      %v2732 = vshll.u32 %v2379, 16
      %v2734 = vrot.slane %v2732, 1
      %v2735 = vor.u32 %v2730, %v2734
      %v2736 = vshrl.u32 %v2414, 16
      %v2738 = vshll.u32 %v2414, 16
      %v2740 = vrot.slane %v2738, 1
      %v2741 = vor.u32 %v2736, %v2740
      %v2742 = vshrl.u32 %v2438, 16
      %v2744 = vshll.u32 %v2438, 16
      %v2746 = vrot.slane %v2744, 1
      %v2747 = vor.u32 %v2742, %v2746
      %v2748 = vshrl.u32 %v2462, 16
      %v2750 = vshll.u32 %v2462, 16
      %v2752 = vrot.slane %v2750, 1
      %v2753 = vor.u32 %v2748, %v2752
      %v2754 = vshrl.u32 %v2486, 16
      %v2756 = vshll.u32 %v2486, 16
      %v2758 = vrot.slane %v2756, 1
      %v2759 = vor.u32 %v2754, %v2758
      %v2760 = vshrl.u32 %v2510, 16
      %v2762 = vshll.u32 %v2510, 16
      %v2764 = vrot.slane %v2762, 1
      %v2765 = vor.u32 %v2760, %v2764
      %v2767 = vshrl.u32 %v2386, 16
      %v2769 = vshll.u32 %v2386, 16
      %v2771 = vrot.slane %v2769, 1
      %v2772 = vor.u32 %v2767, %v2771
      %v2773 = vshrl.u32 %v2417, 16
      %v2775 = vshll.u32 %v2417, 16
      %v2777 = vrot.slane %v2775, 1
      %v2778 = vor.u32 %v2773, %v2777
      %v2779 = vshrl.u32 %v2441, 16
      %v2781 = vshll.u32 %v2441, 16
      %v2783 = vrot.slane %v2781, 1
      %v2784 = vor.u32 %v2779, %v2783
      %v2785 = vshrl.u32 %v2465, 16
      %v2787 = vshll.u32 %v2465, 16
      %v2789 = vrot.slane %v2787, 1
      %v2790 = vor.u32 %v2785, %v2789
      %v2791 = vshrl.u32 %v2489, 16
      %v2793 = vshll.u32 %v2489, 16
      %v2795 = vrot.slane %v2793, 1
      %v2796 = vor.u32 %v2791, %v2795
      %v2797 = vshrl.u32 %v2513, 16
      %v2799 = vshll.u32 %v2513, 16
      %v2801 = vrot.slane %v2799, 1
      %v2802 = vor.u32 %v2797, %v2801
      %v2804 = vshrl.u32 %v2393, 16
      %v2806 = vshll.u32 %v2393, 16
      %v2808 = vrot.slane %v2806, 1
      %v2809 = vor.u32 %v2804, %v2808
      %v2874 = vunpack.c.l.b16 %v1468
      %v2875 = vunpack.c.l.b16 %v1492
      %v2876 = vunpack.c.l.b16 %v1516
      %v2877 = vunpack.c.l.b16 %v1540
      %v2878 = vunpack.c.l.b16 %v1564
      %v2879 = vunpack.c.l.b16 %v1588
      %v2880 = vunpack.c.l.b16 %v1612
      %v2881 = vunpack.c.l.b16 %v1636
      %v2882 = vunpack.c.l.b16 %v2519
      %v2883 = vunpack.c.l.b16 %v2525
      %v2884 = vunpack.c.l.b16 %v2531
      %v2885 = vunpack.c.l.b16 %v2537
      %v2886 = vunpack.c.l.b16 %v2543
      %v2887 = vunpack.c.l.b16 %v2550
      %v2888 = vunpack.c.l.b16 %v1471
      %v2889 = vunpack.c.l.b16 %v1495
      %v2890 = vunpack.c.l.b16 %v1519
      %v2891 = vunpack.c.l.b16 %v1543
      %v2892 = vunpack.c.l.b16 %v1567
      %v2893 = vunpack.c.l.b16 %v1591
      %v2894 = vunpack.c.l.b16 %v1615
      %v2895 = vunpack.c.l.b16 %v1639
      %v2896 = vunpack.c.l.b16 %v2556
      %v2897 = vunpack.c.l.b16 %v2562
      %v2898 = vunpack.c.l.b16 %v2568
      %v2899 = vunpack.c.l.b16 %v2574
      %v2900 = vunpack.c.l.b16 %v2580
      %v2901 = vunpack.c.l.b16 %v2587
      %v2902 = vunpack.c.l.b16 %v1474
      %v2903 = vunpack.c.l.b16 %v1498
      %v2904 = vunpack.c.l.b16 %v1522
      %v2905 = vunpack.c.l.b16 %v1546
      %v2906 = vunpack.c.l.b16 %v1570
      %v2907 = vunpack.c.l.b16 %v1594
      %v2908 = vunpack.c.l.b16 %v1618
      %v2909 = vunpack.c.l.b16 %v1642
      %v2910 = vunpack.c.l.b16 %v2593
      %v2911 = vunpack.c.l.b16 %v2599
      %v2912 = vunpack.c.l.b16 %v2605
      %v2913 = vunpack.c.l.b16 %v2611
      %v2914 = vunpack.c.l.b16 %v2617
      %v2915 = vunpack.c.l.b16 %v2624
      %v2916 = vunpack.c.l.b16 %v1477
      %v2917 = vunpack.c.l.b16 %v1501
      %v2918 = vunpack.c.l.b16 %v1525
      %v2919 = vunpack.c.l.b16 %v1549
      %v2920 = vunpack.c.l.b16 %v1573
      %v2921 = vunpack.c.l.b16 %v1597
      %v2922 = vunpack.c.l.b16 %v1621
      %v2923 = vunpack.c.l.b16 %v1645
      %v2924 = vunpack.c.l.b16 %v2630
      %v2925 = vunpack.c.l.b16 %v2636
      %v2926 = vunpack.c.l.b16 %v2642
      %v2927 = vunpack.c.l.b16 %v2648
      %v2928 = vunpack.c.l.b16 %v2654
      %v2929 = vunpack.c.l.b16 %v2661
      %v2930 = vunpack.c.l.b16 %v1480
      %v2931 = vunpack.c.l.b16 %v1504
      %v2932 = vunpack.c.l.b16 %v1528
      %v2933 = vunpack.c.l.b16 %v1552
      %v2934 = vunpack.c.l.b16 %v1576
      %v2935 = vunpack.c.l.b16 %v1600
      %v2936 = vunpack.c.l.b16 %v1624
      %v2937 = vunpack.c.l.b16 %v1648
      %v2938 = vunpack.c.l.b16 %v2667
      %v2939 = vunpack.c.l.b16 %v2673
      %v2940 = vunpack.c.l.b16 %v2679
      %v2941 = vunpack.c.l.b16 %v2685
      %v2942 = vunpack.c.l.b16 %v2691
      %v2943 = vunpack.c.l.b16 %v2698
      %v2944 = vunpack.c.l.b16 %v1483
      %v2945 = vunpack.c.l.b16 %v1507
      %v2946 = vunpack.c.l.b16 %v1531
      %v2947 = vunpack.c.l.b16 %v1555
      %v2948 = vunpack.c.l.b16 %v1579
      %v2949 = vunpack.c.l.b16 %v1603
      %v2950 = vunpack.c.l.b16 %v1627
      %v2951 = vunpack.c.l.b16 %v1651
      %v2952 = vunpack.c.l.b16 %v2704
      %v2953 = vunpack.c.l.b16 %v2710
      %v2954 = vunpack.c.l.b16 %v2716
      %v2955 = vunpack.c.l.b16 %v2722
      %v2956 = vunpack.c.l.b16 %v2728
      %v2957 = vunpack.c.l.b16 %v2735
      %v2958 = vunpack.c.l.b16 %v1486
      %v2959 = vunpack.c.l.b16 %v1510
      %v2960 = vunpack.c.l.b16 %v1534
      %v2961 = vunpack.c.l.b16 %v1558
      %v2962 = vunpack.c.l.b16 %v1582
      %v2963 = vunpack.c.l.b16 %v1606
      %v2964 = vunpack.c.l.b16 %v1630
      %v2965 = vunpack.c.l.b16 %v1654
      %v2966 = vunpack.c.l.b16 %v2741
      %v2967 = vunpack.c.l.b16 %v2747
      %v2968 = vunpack.c.l.b16 %v2753
      %v2969 = vunpack.c.l.b16 %v2759
      %v2970 = vunpack.c.l.b16 %v2765
      %v2971 = vunpack.c.l.b16 %v2772
      %v2972 = vunpack.c.l.b16 %v1489
      %v2973 = vunpack.c.l.b16 %v1513
      %v2974 = vunpack.c.l.b16 %v1537
      %v2975 = vunpack.c.l.b16 %v1561
      %v2976 = vunpack.c.l.b16 %v1585
      %v2977 = vunpack.c.l.b16 %v1609
      %v2978 = vunpack.c.l.b16 %v1633
      %v2979 = vunpack.c.l.b16 %v1657
      %v2980 = vunpack.c.l.b16 %v2778
      %v2981 = vunpack.c.l.b16 %v2784
      %v2982 = vunpack.c.l.b16 %v2790
      %v2983 = vunpack.c.l.b16 %v2796
      %v2984 = vunpack.c.l.b16 %v2802
      %v2985 = vunpack.c.l.b16 %v2809
      %v2986 = vld [vmem:[%s3] sm:$0xf]
      %v2987 = vld [vmem:[%s3 + $0x4] sm:$0xf]
      %v2988 = vld [vmem:[%s3 + $0x8] sm:$0xf]
      %v2989 = vld [vmem:[%s3 + $0xc] sm:$0xf]
      %v2990 = vld [vmem:[%s3 + $0x10] sm:$0xf]
      %v2991 = vld [vmem:[%s3 + $0x14] sm:$0xf]
      %v2992 = vld [vmem:[%s3 + $0x18] sm:$0xf]
      %v2993 = vld [vmem:[%s3 + $0x1c] sm:$0xf]
      %v2994 = vld [vmem:[%s3 + $0x20] sm:$0xf]
      %v2995 = vld [vmem:[%s3 + $0x24] sm:$0xf]
      %v2996 = vld [vmem:[%s3 + $0x28] sm:$0xf]
      %v2997 = vld [vmem:[%s3 + $0x2c] sm:$0xf]
      %v2998 = vld [vmem:[%s3 + $0x30] sm:$0xf]
      %v2999 = vld [vmem:[%s3 + $0x34] sm:$0xf]
      %v3000 = vld [vmem:[%s3 + $0x38] sm:$0xf]
      %v3001 = vld [vmem:[%s3 + $0x3c] sm:$0xf]
      %v3002 = vld [vmem:[%s3 + $0x40] sm:$0xf]
      %v3003 = vld [vmem:[%s3 + $0x44] sm:$0xf]
      %v3004 = vld [vmem:[%s3 + $0x48] sm:$0xf]
      %v3005 = vld [vmem:[%s3 + $0x4c] sm:$0xf]
      %v3006 = vld [vmem:[%s3 + $0x50] sm:$0xf]
      %v3007 = vld [vmem:[%s3 + $0x54] sm:$0xf]
      %v3008 = vld [vmem:[%s3 + $0x58] sm:$0xf]
      %v3009 = vld [vmem:[%s3 + $0x5c] sm:$0xf]
      %v3010 = vld [vmem:[%s3 + $0x60] sm:$0xf]
      %v3011 = vld [vmem:[%s3 + $0x64] sm:$0xf]
      %v3012 = vld [vmem:[%s3 + $0x68] sm:$0xf]
      %v3013 = vld [vmem:[%s3 + $0x6c] sm:$0xf]
      %v3014 = vld [vmem:[%s3 + $0x70] sm:$0xf]
      %v3015 = vld [vmem:[%s3 + $0x74] sm:$0xf]
      %v3016 = vld [vmem:[%s3 + $0x78] sm:$0xf]
      %v3017 = vld [vmem:[%s3 + $0x7c] sm:$0xf]
      %v3018 = vld [vmem:[%s3 + $0x80] sm:$0xf]
      %v3019 = vld [vmem:[%s3 + $0x84] sm:$0xf]
      %v3020 = vld [vmem:[%s3 + $0x88] sm:$0xf]
      %v3021 = vld [vmem:[%s3 + $0x8c] sm:$0xf]
      %v3022 = vld [vmem:[%s3 + $0x90] sm:$0xf]
      %v3023 = vld [vmem:[%s3 + $0x94] sm:$0xf]
      %v3024 = vld [vmem:[%s3 + $0x98] sm:$0xf]
      %v3025 = vld [vmem:[%s3 + $0x9c] sm:$0xf]
      %v3026 = vld [vmem:[%s3 + $0xa0] sm:$0xf]
      %v3027 = vld [vmem:[%s3 + $0xa4] sm:$0xf]
      %v3028 = vld [vmem:[%s3 + $0xa8] sm:$0xf]
      %v3029 = vld [vmem:[%s3 + $0xac] sm:$0xf]
      %v3030 = vld [vmem:[%s3 + $0xb0] sm:$0xf]
      %v3031 = vld [vmem:[%s3 + $0xb4] sm:$0xf]
      %v3032 = vld [vmem:[%s3 + $0xb8] sm:$0xf]
      %v3033 = vld [vmem:[%s3 + $0xbc] sm:$0xf]
      %v3034 = vld [vmem:[%s3 + $0xc0] sm:$0xf]
      %v3035 = vld [vmem:[%s3 + $0xc4] sm:$0xf]
      %v3036 = vld [vmem:[%s3 + $0xc8] sm:$0xf]
      %v3037 = vld [vmem:[%s3 + $0xcc] sm:$0xf]
      %v3038 = vld [vmem:[%s3 + $0xd0] sm:$0xf]
      %v3039 = vld [vmem:[%s3 + $0xd4] sm:$0xf]
      %v3040 = vld [vmem:[%s3 + $0xd8] sm:$0xf]
      %v3041 = vld [vmem:[%s3 + $0xdc] sm:$0xf]
      %v3042 = vld [vmem:[%s3 + $0xe0] sm:$0xf]
      %v3043 = vld [vmem:[%s3 + $0xe4] sm:$0xf]
      %v3044 = vld [vmem:[%s3 + $0xe8] sm:$0xf]
      %v3045 = vld [vmem:[%s3 + $0xec] sm:$0xf]
      %v3046 = vld [vmem:[%s3 + $0xf0] sm:$0xf]
      %v3047 = vld [vmem:[%s3 + $0xf4] sm:$0xf]
      %v3048 = vld [vmem:[%s3 + $0xf8] sm:$0xf]
      %v3049 = vld [vmem:[%s3 + $0xfc] sm:$0xf]
      %v3050 = vld [vmem:[%s3 + $0x100] sm:$0xf]
      %v3051 = vld [vmem:[%s3 + $0x104] sm:$0xf]
      %v3052 = vld [vmem:[%s3 + $0x108] sm:$0xf]
      %v3053 = vld [vmem:[%s3 + $0x10c] sm:$0xf]
      %v3054 = vld [vmem:[%s3 + $0x110] sm:$0xf]
      %v3055 = vld [vmem:[%s3 + $0x114] sm:$0xf]
      %v3056 = vld [vmem:[%s3 + $0x118] sm:$0xf]
      %v3057 = vld [vmem:[%s3 + $0x11c] sm:$0xf]
      %v3058 = vld [vmem:[%s3 + $0x120] sm:$0xf]
      %v3059 = vld [vmem:[%s3 + $0x124] sm:$0xf]
      %v3060 = vld [vmem:[%s3 + $0x128] sm:$0xf]
      %v3061 = vld [vmem:[%s3 + $0x12c] sm:$0xf]
      %v3062 = vld [vmem:[%s3 + $0x130] sm:$0xf]
      %v3063 = vld [vmem:[%s3 + $0x134] sm:$0xf]
      %v3064 = vld [vmem:[%s3 + $0x138] sm:$0xf]
      %v3065 = vld [vmem:[%s3 + $0x13c] sm:$0xf]
      %v3066 = vld [vmem:[%s3 + $0x140] sm:$0xf]
      %v3067 = vld [vmem:[%s3 + $0x144] sm:$0xf]
      %v3068 = vld [vmem:[%s3 + $0x148] sm:$0xf]
      %v3069 = vld [vmem:[%s3 + $0x14c] sm:$0xf]
      %v3070 = vld [vmem:[%s3 + $0x150] sm:$0xf]
      %v3071 = vld [vmem:[%s3 + $0x154] sm:$0xf]
      %v3072 = vld [vmem:[%s3 + $0x158] sm:$0xf]
      %v3073 = vld [vmem:[%s3 + $0x15c] sm:$0xf]
      %v3074 = vld [vmem:[%s3 + $0x160] sm:$0xf]
      %v3075 = vld [vmem:[%s3 + $0x164] sm:$0xf]
      %v3076 = vld [vmem:[%s3 + $0x168] sm:$0xf]
      %v3077 = vld [vmem:[%s3 + $0x16c] sm:$0xf]
      %v3078 = vld [vmem:[%s3 + $0x170] sm:$0xf]
      %v3079 = vld [vmem:[%s3 + $0x174] sm:$0xf]
      %v3080 = vld [vmem:[%s3 + $0x178] sm:$0xf]
      %v3081 = vld [vmem:[%s3 + $0x17c] sm:$0xf]
      %v3082 = vld [vmem:[%s3 + $0x180] sm:$0xf]
      %v3083 = vld [vmem:[%s3 + $0x184] sm:$0xf]
      %v3084 = vld [vmem:[%s3 + $0x188] sm:$0xf]
      %v3085 = vld [vmem:[%s3 + $0x18c] sm:$0xf]
      %v3086 = vld [vmem:[%s3 + $0x190] sm:$0xf]
      %v3087 = vld [vmem:[%s3 + $0x194] sm:$0xf]
      %v3088 = vld [vmem:[%s3 + $0x198] sm:$0xf]
      %v3089 = vld [vmem:[%s3 + $0x19c] sm:$0xf]
      %v3090 = vld [vmem:[%s3 + $0x1a0] sm:$0xf]
      %v3091 = vld [vmem:[%s3 + $0x1a4] sm:$0xf]
      %v3092 = vld [vmem:[%s3 + $0x1a8] sm:$0xf]
      %v3093 = vld [vmem:[%s3 + $0x1ac] sm:$0xf]
      %v3094 = vld [vmem:[%s3 + $0x1b0] sm:$0xf]
      %v3095 = vld [vmem:[%s3 + $0x1b4] sm:$0xf]
      %v3096 = vld [vmem:[%s3 + $0x1b8] sm:$0xf]
      %v3097 = vld [vmem:[%s3 + $0x1bc] sm:$0xf]
      %v3098 = vld [vmem:[%s3 + $0x1c0] sm:$0xf]
      %v3099 = vld [vmem:[%s3 + $0x1c4] sm:$0xf]
      %v3100 = vld [vmem:[%s3 + $0x1c8] sm:$0xf]
      %v3101 = vld [vmem:[%s3 + $0x1cc] sm:$0xf]
      %v3102 = vld [vmem:[%s3 + $0x1d0] sm:$0xf]
      %v3103 = vld [vmem:[%s3 + $0x1d4] sm:$0xf]
      %v3104 = vld [vmem:[%s3 + $0x1d8] sm:$0xf]
      %v3105 = vld [vmem:[%s3 + $0x1dc] sm:$0xf]
      %v3106 = vld [vmem:[%s3 + $0x1e0] sm:$0xf]
      %v3107 = vld [vmem:[%s3 + $0x1e4] sm:$0xf]
      %v3108 = vld [vmem:[%s3 + $0x1e8] sm:$0xf]
      %v3109 = vld [vmem:[%s3 + $0x1ec] sm:$0xf]
      %v3110 = vld [vmem:[%s3 + $0x1f0] sm:$0xf]
      %v3111 = vld [vmem:[%s3 + $0x1f4] sm:$0xf]
      %v3112 = vld [vmem:[%s3 + $0x1f8] sm:$0xf]
      %v3113 = vld [vmem:[%s3 + $0x1fc] sm:$0xf]
      %v3114 = vld [vmem:[%s3 + $0x200] sm:$0xf]
      %v3115 = vld [vmem:[%s3 + $0x204] sm:$0xf]
      %v3116 = vld [vmem:[%s3 + $0x208] sm:$0xf]
      %v3117 = vld [vmem:[%s3 + $0x20c] sm:$0xf]
      %v3118 = vld [vmem:[%s3 + $0x210] sm:$0xf]
      %v3119 = vld [vmem:[%s3 + $0x214] sm:$0xf]
      %v3120 = vld [vmem:[%s3 + $0x218] sm:$0xf]
      %v3121 = vld [vmem:[%s3 + $0x21c] sm:$0xf]
      %v3122 = vld [vmem:[%s3 + $0x220] sm:$0xf]
      %v3123 = vld [vmem:[%s3 + $0x224] sm:$0xf]
      %v3124 = vld [vmem:[%s3 + $0x228] sm:$0xf]
      %v3125 = vld [vmem:[%s3 + $0x22c] sm:$0xf]
      %v3126 = vld [vmem:[%s3 + $0x230] sm:$0xf]
      %v3127 = vld [vmem:[%s3 + $0x234] sm:$0xf]
      %v3128 = vld [vmem:[%s3 + $0x238] sm:$0xf]
      %v3129 = vld [vmem:[%s3 + $0x23c] sm:$0xf]
      %v3130 = vld [vmem:[%s3 + $0x240] sm:$0xf]
      %v3131 = vld [vmem:[%s3 + $0x244] sm:$0xf]
      %v3132 = vld [vmem:[%s3 + $0x248] sm:$0xf]
      %v3133 = vld [vmem:[%s3 + $0x24c] sm:$0xf]
      %v3134 = vld [vmem:[%s3 + $0x250] sm:$0xf]
      %v3135 = vld [vmem:[%s3 + $0x254] sm:$0xf]
      %v3136 = vld [vmem:[%s3 + $0x258] sm:$0xf]
      %v3137 = vld [vmem:[%s3 + $0x25c] sm:$0xf]
      %v3138 = vld [vmem:[%s3 + $0x260] sm:$0xf]
      %v3139 = vld [vmem:[%s3 + $0x264] sm:$0xf]
      %v3140 = vld [vmem:[%s3 + $0x268] sm:$0xf]
      %v3141 = vld [vmem:[%s3 + $0x26c] sm:$0xf]
      %v3142 = vld [vmem:[%s3 + $0x270] sm:$0xf]
      %v3143 = vld [vmem:[%s3 + $0x274] sm:$0xf]
      %v3144 = vld [vmem:[%s3 + $0x278] sm:$0xf]
      %v3145 = vld [vmem:[%s3 + $0x27c] sm:$0xf]
      %v3146 = vld [vmem:[%s3 + $0x280] sm:$0xf]
      %v3147 = vld [vmem:[%s3 + $0x284] sm:$0xf]
      %v3148 = vld [vmem:[%s3 + $0x288] sm:$0xf]
      %v3149 = vld [vmem:[%s3 + $0x28c] sm:$0xf]
      %v3150 = vld [vmem:[%s3 + $0x290] sm:$0xf]
      %v3151 = vld [vmem:[%s3 + $0x294] sm:$0xf]
      %v3152 = vld [vmem:[%s3 + $0x298] sm:$0xf]
      %v3153 = vld [vmem:[%s3 + $0x29c] sm:$0xf]
      %v3154 = vld [vmem:[%s3 + $0x2a0] sm:$0xf]
      %v3155 = vld [vmem:[%s3 + $0x2a4] sm:$0xf]
      %v3156 = vld [vmem:[%s3 + $0x2a8] sm:$0xf]
      %v3157 = vld [vmem:[%s3 + $0x2ac] sm:$0xf]
      %v3158 = vld [vmem:[%s3 + $0x2b0] sm:$0xf]
      %v3159 = vld [vmem:[%s3 + $0x2b4] sm:$0xf]
      %v3160 = vld [vmem:[%s3 + $0x2b8] sm:$0xf]
      %v3161 = vld [vmem:[%s3 + $0x2bc] sm:$0xf]
      %v3162 = vld [vmem:[%s3 + $0x2c0] sm:$0xf]
      %v3163 = vld [vmem:[%s3 + $0x2c4] sm:$0xf]
      %v3164 = vld [vmem:[%s3 + $0x2c8] sm:$0xf]
      %v3165 = vld [vmem:[%s3 + $0x2cc] sm:$0xf]
      %v3166 = vld [vmem:[%s3 + $0x2d0] sm:$0xf]
      %v3167 = vld [vmem:[%s3 + $0x2d4] sm:$0xf]
      %v3168 = vld [vmem:[%s3 + $0x2d8] sm:$0xf]
      %v3169 = vld [vmem:[%s3 + $0x2dc] sm:$0xf]
      %v3170 = vld [vmem:[%s3 + $0x2e0] sm:$0xf]
      %v3171 = vld [vmem:[%s3 + $0x2e4] sm:$0xf]
      %v3172 = vld [vmem:[%s3 + $0x2e8] sm:$0xf]
      %v3173 = vld [vmem:[%s3 + $0x2ec] sm:$0xf]
      %v3174 = vld [vmem:[%s3 + $0x2f0] sm:$0xf]
      %v3175 = vld [vmem:[%s3 + $0x2f4] sm:$0xf]
      %v3176 = vld [vmem:[%s3 + $0x2f8] sm:$0xf]
      %v3177 = vld [vmem:[%s3 + $0x2fc] sm:$0xf]
      %v3178 = vld [vmem:[%s3 + $0x300] sm:$0xf]
      %v3179 = vld [vmem:[%s3 + $0x304] sm:$0xf]
      %v3180 = vld [vmem:[%s3 + $0x308] sm:$0xf]
      %v3181 = vld [vmem:[%s3 + $0x30c] sm:$0xf]
      %v3182 = vld [vmem:[%s3 + $0x310] sm:$0xf]
      %v3183 = vld [vmem:[%s3 + $0x314] sm:$0xf]
      %v3184 = vld [vmem:[%s3 + $0x318] sm:$0xf]
      %v3185 = vld [vmem:[%s3 + $0x31c] sm:$0xf]
      %v3186 = vld [vmem:[%s3 + $0x320] sm:$0xf]
      %v3187 = vld [vmem:[%s3 + $0x324] sm:$0xf]
      %v3188 = vld [vmem:[%s3 + $0x328] sm:$0xf]
      %v3189 = vld [vmem:[%s3 + $0x32c] sm:$0xf]
      %v3190 = vld [vmem:[%s3 + $0x330] sm:$0xf]
      %v3191 = vld [vmem:[%s3 + $0x334] sm:$0xf]
      %v3192 = vld [vmem:[%s3 + $0x338] sm:$0xf]
      %v3193 = vld [vmem:[%s3 + $0x33c] sm:$0xf]
      %v3194 = vld [vmem:[%s3 + $0x340] sm:$0xf]
      %v3195 = vld [vmem:[%s3 + $0x344] sm:$0xf]
      %v3196 = vld [vmem:[%s3 + $0x348] sm:$0xf]
      %v3197 = vld [vmem:[%s3 + $0x34c] sm:$0xf]
      %v3198 = vld [vmem:[%s3 + $0x350] sm:$0xf]
      %v3199 = vld [vmem:[%s3 + $0x354] sm:$0xf]
      %v3200 = vld [vmem:[%s3 + $0x358] sm:$0xf]
      %v3201 = vld [vmem:[%s3 + $0x35c] sm:$0xf]
      %v3202 = vld [vmem:[%s4] sm:$0x1]
      %v3204 = vperm.slane %v3202, 0
      %v3206 = vpack.c.b16 %v2888, %v2874
      %v3207 = vpack.c.b16 %v2889, %v2875
      %v3208 = vpack.c.b16 %v2890, %v2876
      %v3209 = vpack.c.b16 %v2891, %v2877
      %v3210 = vpack.c.b16 %v2892, %v2878
      %v3211 = vpack.c.b16 %v2893, %v2879
      %v3212 = vpack.c.b16 %v2894, %v2880
      %v3213 = vpack.c.b16 %v2895, %v2881
      %v3214 = vpack.c.b16 %v2896, %v2882
      %v3215 = vpack.c.b16 %v2897, %v2883
      %v3216 = vpack.c.b16 %v2898, %v2884
      %v3217 = vpack.c.b16 %v2899, %v2885
      %v3218 = vpack.c.b16 %v2900, %v2886
      %v3219 = vpack.c.b16 %v2901, %v2887
      %v3220 = vpack.c.b16 %v2916, %v2902
      %v3221 = vpack.c.b16 %v2917, %v2903
      %v3222 = vpack.c.b16 %v2918, %v2904
      %v3223 = vpack.c.b16 %v2919, %v2905
      %v3224 = vpack.c.b16 %v2920, %v2906
      %v3225 = vpack.c.b16 %v2921, %v2907
      %v3226 = vpack.c.b16 %v2922, %v2908
      %v3227 = vpack.c.b16 %v2923, %v2909
      %v3228 = vpack.c.b16 %v2924, %v2910
      %v3229 = vpack.c.b16 %v2925, %v2911
      %v3230 = vpack.c.b16 %v2926, %v2912
      %v3231 = vpack.c.b16 %v2927, %v2913
      %v3232 = vpack.c.b16 %v2928, %v2914
      %v3233 = vpack.c.b16 %v2929, %v2915
      %v3234 = vpack.c.b16 %v2944, %v2930
      %v3235 = vpack.c.b16 %v2945, %v2931
      %v3236 = vpack.c.b16 %v2946, %v2932
      %v3237 = vpack.c.b16 %v2947, %v2933
      %v3238 = vpack.c.b16 %v2948, %v2934
      %v3239 = vpack.c.b16 %v2949, %v2935
      %v3240 = vpack.c.b16 %v2950, %v2936
      %v3241 = vpack.c.b16 %v2951, %v2937
      %v3242 = vpack.c.b16 %v2952, %v2938
      %v3243 = vpack.c.b16 %v2953, %v2939
      %v3244 = vpack.c.b16 %v2954, %v2940
      %v3245 = vpack.c.b16 %v2955, %v2941
      %v3246 = vpack.c.b16 %v2956, %v2942
      %v3247 = vpack.c.b16 %v2957, %v2943
      %v3248 = vpack.c.b16 %v2972, %v2958
      %v3249 = vpack.c.b16 %v2973, %v2959
      %v3250 = vpack.c.b16 %v2974, %v2960
      %v3251 = vpack.c.b16 %v2975, %v2961
      %v3252 = vpack.c.b16 %v2976, %v2962
      %v3253 = vpack.c.b16 %v2977, %v2963
      %v3254 = vpack.c.b16 %v2978, %v2964
      %v3255 = vpack.c.b16 %v2979, %v2965
      %v3256 = vpack.c.b16 %v2980, %v2966
      %v3257 = vpack.c.b16 %v2981, %v2967
      %v3258 = vpack.c.b16 %v2982, %v2968
      %v3259 = vpack.c.b16 %v2983, %v2969
      %v3260 = vpack.c.b16 %v2984, %v2970
      %v3261 = vpack.c.b16 %v2985, %v2971
      %v3530 = vunpack.c.l.b16 %v2986
      %v3531 = vunpack.c.l.b16 %v2987
      %v3532 = vunpack.c.l.b16 %v2988
      %v3533 = vunpack.c.l.b16 %v2989
      %v3534 = vunpack.c.l.b16 %v2990
      %v3535 = vunpack.c.l.b16 %v2991
      %v3536 = vunpack.c.l.b16 %v2992
      %v3537 = vunpack.c.l.b16 %v2993
      %v3538 = vunpack.c.l.b16 %v2994
      %v3539 = vunpack.c.l.b16 %v2995
      %v3540 = vunpack.c.l.b16 %v2996
      %v3541 = vunpack.c.l.b16 %v2997
      %v3542 = vunpack.c.l.b16 %v2998
      %v3543 = vunpack.c.l.b16 %v2999
      %v3544 = vunpack.c.l.b16 %v3000
      %v3545 = vunpack.c.l.b16 %v3001
      %v3546 = vunpack.c.l.b16 %v3002
      %v3547 = vunpack.c.l.b16 %v3003
      %v3548 = vunpack.c.l.b16 %v3004
      %v3549 = vunpack.c.l.b16 %v3005
      %v3550 = vunpack.c.l.b16 %v3006
      %v3551 = vunpack.c.l.b16 %v3007
      %v3552 = vunpack.c.l.b16 %v3008
      %v3553 = vunpack.c.l.b16 %v3009
      %v3554 = vunpack.c.l.b16 %v3010
      %v3555 = vunpack.c.l.b16 %v3011
      %v3556 = vunpack.c.l.b16 %v3012
      %v3557 = vunpack.c.l.b16 %v3013
      %v3558 = vunpack.c.l.b16 %v3014
      %v3559 = vunpack.c.l.b16 %v3015
      %v3560 = vunpack.c.l.b16 %v3016
      %v3561 = vunpack.c.l.b16 %v3017
      %v3562 = vunpack.c.l.b16 %v3018
      %v3563 = vunpack.c.l.b16 %v3019
      %v3564 = vunpack.c.l.b16 %v3020
      %v3565 = vunpack.c.l.b16 %v3021
      %v3566 = vunpack.c.l.b16 %v3022
      %v3567 = vunpack.c.l.b16 %v3023
      %v3568 = vunpack.c.l.b16 %v3024
      %v3569 = vunpack.c.l.b16 %v3025
      %v3570 = vunpack.c.l.b16 %v3026
      %v3571 = vunpack.c.l.b16 %v3027
      %v3572 = vunpack.c.l.b16 %v3028
      %v3573 = vunpack.c.l.b16 %v3029
      %v3574 = vunpack.c.l.b16 %v3030
      %v3575 = vunpack.c.l.b16 %v3031
      %v3576 = vunpack.c.l.b16 %v3032
      %v3577 = vunpack.c.l.b16 %v3033
      %v3578 = vunpack.c.l.b16 %v3034
      %v3579 = vunpack.c.l.b16 %v3035
      %v3580 = vunpack.c.l.b16 %v3036
      %v3581 = vunpack.c.l.b16 %v3037
      %v3582 = vunpack.c.l.b16 %v3038
      %v3583 = vunpack.c.l.b16 %v3039
      %v3584 = vunpack.c.l.b16 %v3040
      %v3585 = vunpack.c.l.b16 %v3041
      %v3586 = vunpack.c.l.b16 %v3042
      %v3587 = vunpack.c.l.b16 %v3043
      %v3588 = vunpack.c.l.b16 %v3044
      %v3589 = vunpack.c.l.b16 %v3045
      %v3590 = vunpack.c.l.b16 %v3046
      %v3591 = vunpack.c.l.b16 %v3047
      %v3592 = vunpack.c.l.b16 %v3048
      %v3593 = vunpack.c.l.b16 %v3049
      %v3594 = vunpack.c.l.b16 %v3050
      %v3595 = vunpack.c.l.b16 %v3051
      %v3596 = vunpack.c.l.b16 %v3052
      %v3597 = vunpack.c.l.b16 %v3053
      %v3598 = vunpack.c.l.b16 %v3054
      %v3599 = vunpack.c.l.b16 %v3055
      %v3600 = vunpack.c.l.b16 %v3056
      %v3601 = vunpack.c.l.b16 %v3057
      %v3602 = vunpack.c.l.b16 %v3058
      %v3603 = vunpack.c.l.b16 %v3059
      %v3604 = vunpack.c.l.b16 %v3060
      %v3605 = vunpack.c.l.b16 %v3061
      %v3606 = vunpack.c.l.b16 %v3062
      %v3607 = vunpack.c.l.b16 %v3063
      %v3608 = vunpack.c.l.b16 %v3064
      %v3609 = vunpack.c.l.b16 %v3065
      %v3610 = vunpack.c.l.b16 %v3066
      %v3611 = vunpack.c.l.b16 %v3067
      %v3612 = vunpack.c.l.b16 %v3068
      %v3613 = vunpack.c.l.b16 %v3069
      %v3614 = vunpack.c.l.b16 %v3070
      %v3615 = vunpack.c.l.b16 %v3071
      %v3616 = vunpack.c.l.b16 %v3072
      %v3617 = vunpack.c.l.b16 %v3073
      %v3618 = vunpack.c.l.b16 %v3074
      %v3619 = vunpack.c.l.b16 %v3075
      %v3620 = vunpack.c.l.b16 %v3076
      %v3621 = vunpack.c.l.b16 %v3077
      %v3622 = vunpack.c.l.b16 %v3078
      %v3623 = vunpack.c.l.b16 %v3079
      %v3624 = vunpack.c.l.b16 %v3080
      %v3625 = vunpack.c.l.b16 %v3081
      %v3626 = vunpack.c.l.b16 %v3082
      %v3627 = vunpack.c.l.b16 %v3083
      %v3628 = vunpack.c.l.b16 %v3084
      %v3629 = vunpack.c.l.b16 %v3085
      %v3630 = vunpack.c.l.b16 %v3086
      %v3631 = vunpack.c.l.b16 %v3087
      %v3632 = vunpack.c.l.b16 %v3088
      %v3633 = vunpack.c.l.b16 %v3089
      %v3634 = vunpack.c.l.b16 %v3090
      %v3635 = vunpack.c.l.b16 %v3091
      %v3636 = vunpack.c.l.b16 %v3092
      %v3637 = vunpack.c.l.b16 %v3093
      %v3638 = vunpack.c.l.b16 %v3094
      %v3639 = vunpack.c.l.b16 %v3095
      %v3640 = vunpack.c.l.b16 %v3096
      %v3641 = vunpack.c.l.b16 %v3097
      %v3642 = vunpack.c.l.b16 %v3098
      %v3643 = vunpack.c.l.b16 %v3099
      %v3644 = vunpack.c.l.b16 %v3100
      %v3645 = vunpack.c.l.b16 %v3101
      %v3646 = vunpack.c.l.b16 %v3102
      %v3647 = vunpack.c.l.b16 %v3103
      %v3648 = vunpack.c.l.b16 %v3104
      %v3649 = vunpack.c.l.b16 %v3105
      %v3650 = vunpack.c.l.b16 %v3106
      %v3651 = vunpack.c.l.b16 %v3107
      %v3652 = vunpack.c.l.b16 %v3108
      %v3653 = vunpack.c.l.b16 %v3109
      %v3654 = vunpack.c.l.b16 %v3110
      %v3655 = vunpack.c.l.b16 %v3111
      %v3656 = vunpack.c.l.b16 %v3112
      %v3657 = vunpack.c.l.b16 %v3113
      %v3658 = vunpack.c.l.b16 %v3114
      %v3659 = vunpack.c.l.b16 %v3115
      %v3660 = vunpack.c.l.b16 %v3116
      %v3661 = vunpack.c.l.b16 %v3117
      %v3662 = vunpack.c.l.b16 %v3118
      %v3663 = vunpack.c.l.b16 %v3119
      %v3664 = vunpack.c.l.b16 %v3120
      %v3665 = vunpack.c.l.b16 %v3121
      %v3666 = vunpack.c.l.b16 %v3122
      %v3667 = vunpack.c.l.b16 %v3123
      %v3668 = vunpack.c.l.b16 %v3124
      %v3669 = vunpack.c.l.b16 %v3125
      %v3670 = vunpack.c.l.b16 %v3126
      %v3671 = vunpack.c.l.b16 %v3127
      %v3672 = vunpack.c.l.b16 %v3128
      %v3673 = vunpack.c.l.b16 %v3129
      %v3674 = vunpack.c.l.b16 %v3130
      %v3675 = vunpack.c.l.b16 %v3131
      %v3676 = vunpack.c.l.b16 %v3132
      %v3677 = vunpack.c.l.b16 %v3133
      %v3678 = vunpack.c.l.b16 %v3134
      %v3679 = vunpack.c.l.b16 %v3135
      %v3680 = vunpack.c.l.b16 %v3136
      %v3681 = vunpack.c.l.b16 %v3137
      %v3682 = vunpack.c.l.b16 %v3138
      %v3683 = vunpack.c.l.b16 %v3139
      %v3684 = vunpack.c.l.b16 %v3140
      %v3685 = vunpack.c.l.b16 %v3141
      %v3686 = vunpack.c.l.b16 %v3142
      %v3687 = vunpack.c.l.b16 %v3143
      %v3688 = vunpack.c.l.b16 %v3144
      %v3689 = vunpack.c.l.b16 %v3145
      %v3690 = vunpack.c.l.b16 %v3146
      %v3691 = vunpack.c.l.b16 %v3147
      %v3692 = vunpack.c.l.b16 %v3148
      %v3693 = vunpack.c.l.b16 %v3149
      %v3694 = vunpack.c.l.b16 %v3150
      %v3695 = vunpack.c.l.b16 %v3151
      %v3696 = vunpack.c.l.b16 %v3152
      %v3697 = vunpack.c.l.b16 %v3153
      %v3698 = vunpack.c.l.b16 %v3154
      %v3699 = vunpack.c.l.b16 %v3155
      %v3700 = vunpack.c.l.b16 %v3156
      %v3701 = vunpack.c.l.b16 %v3157
      %v3702 = vunpack.c.l.b16 %v3158
      %v3703 = vunpack.c.l.b16 %v3159
      %v3704 = vunpack.c.l.b16 %v3160
      %v3705 = vunpack.c.l.b16 %v3161
      %v3706 = vunpack.c.l.b16 %v3162
      %v3707 = vunpack.c.l.b16 %v3163
      %v3708 = vunpack.c.l.b16 %v3164
      %v3709 = vunpack.c.l.b16 %v3165
      %v3710 = vunpack.c.l.b16 %v3166
      %v3711 = vunpack.c.l.b16 %v3167
      %v3712 = vunpack.c.l.b16 %v3168
      %v3713 = vunpack.c.l.b16 %v3169
      %v3714 = vunpack.c.l.b16 %v3170
      %v3715 = vunpack.c.l.b16 %v3171
      %v3716 = vunpack.c.l.b16 %v3172
      %v3717 = vunpack.c.l.b16 %v3173
      %v3718 = vunpack.c.l.b16 %v3174
      %v3719 = vunpack.c.l.b16 %v3175
      %v3720 = vunpack.c.l.b16 %v3176
      %v3721 = vunpack.c.l.b16 %v3177
      %v3722 = vunpack.c.l.b16 %v3178
      %v3723 = vunpack.c.l.b16 %v3179
      %v3724 = vunpack.c.l.b16 %v3180
      %v3725 = vunpack.c.l.b16 %v3181
      %v3726 = vunpack.c.l.b16 %v3182
      %v3727 = vunpack.c.l.b16 %v3183
      %v3728 = vunpack.c.l.b16 %v3184
      %v3729 = vunpack.c.l.b16 %v3185
      %v3730 = vunpack.c.l.b16 %v3186
      %v3731 = vunpack.c.l.b16 %v3187
      %v3732 = vunpack.c.l.b16 %v3188
      %v3733 = vunpack.c.l.b16 %v3189
      %v3734 = vunpack.c.l.b16 %v3190
      %v3735 = vunpack.c.l.b16 %v3191
      %v3736 = vunpack.c.l.b16 %v3192
      %v3737 = vunpack.c.l.b16 %v3193
      %v3738 = vunpack.c.l.b16 %v3194
      %v3739 = vunpack.c.l.b16 %v3195
      %v3740 = vunpack.c.l.b16 %v3196
      %v3741 = vunpack.c.l.b16 %v3197
      %v3742 = vunpack.c.l.b16 %v3198
      %v3743 = vunpack.c.l.b16 %v3199
      %v3744 = vunpack.c.l.b16 %v3200
      %v3745 = vunpack.c.l.b16 %v3201
      %v3746 = vpack.c.b16 %v3531, %v3530
      %v3747 = vpack.c.b16 %v3533, %v3532
      %v3748 = vpack.c.b16 %v3535, %v3534
      %v3749 = vpack.c.b16 %v3537, %v3536
      %v3750 = vpack.c.b16 %v3539, %v3538
      %v3751 = vpack.c.b16 %v3541, %v3540
      %v3752 = vpack.c.b16 %v3543, %v3542
      %v3753 = vpack.c.b16 %v3545, %v3544
      %v3754 = vpack.c.b16 %v3547, %v3546
      %v3755 = vpack.c.b16 %v3549, %v3548
      %v3756 = vpack.c.b16 %v3551, %v3550
      %v3757 = vpack.c.b16 %v3553, %v3552
      %v3758 = vpack.c.b16 %v3555, %v3554
      %v3759 = vpack.c.b16 %v3557, %v3556
      %v3760 = vpack.c.b16 %v3559, %v3558
      %v3761 = vpack.c.b16 %v3561, %v3560
      %v3762 = vpack.c.b16 %v3563, %v3562
      %v3763 = vpack.c.b16 %v3565, %v3564
      %v3764 = vpack.c.b16 %v3567, %v3566
      %v3765 = vpack.c.b16 %v3569, %v3568
      %v3766 = vpack.c.b16 %v3571, %v3570
      %v3767 = vpack.c.b16 %v3573, %v3572
      %v3768 = vpack.c.b16 %v3575, %v3574
      %v3769 = vpack.c.b16 %v3577, %v3576
      %v3770 = vpack.c.b16 %v3579, %v3578
      %v3771 = vpack.c.b16 %v3581, %v3580
      %v3772 = vpack.c.b16 %v3583, %v3582
      %v3773 = vpack.c.b16 %v3585, %v3584
      %v3774 = vpack.c.b16 %v3587, %v3586
      %v3775 = vpack.c.b16 %v3589, %v3588
      %v3776 = vpack.c.b16 %v3591, %v3590
      %v3777 = vpack.c.b16 %v3593, %v3592
      %v3778 = vpack.c.b16 %v3595, %v3594
      %v3779 = vpack.c.b16 %v3597, %v3596
      %v3780 = vpack.c.b16 %v3599, %v3598
      %v3781 = vpack.c.b16 %v3601, %v3600
      %v3782 = vpack.c.b16 %v3603, %v3602
      %v3783 = vpack.c.b16 %v3605, %v3604
      %v3784 = vpack.c.b16 %v3607, %v3606
      %v3785 = vpack.c.b16 %v3609, %v3608
      %v3786 = vpack.c.b16 %v3611, %v3610
      %v3787 = vpack.c.b16 %v3613, %v3612
      %v3788 = vpack.c.b16 %v3615, %v3614
      %v3789 = vpack.c.b16 %v3617, %v3616
      %v3790 = vpack.c.b16 %v3619, %v3618
      %v3791 = vpack.c.b16 %v3621, %v3620
      %v3792 = vpack.c.b16 %v3623, %v3622
      %v3793 = vpack.c.b16 %v3625, %v3624
      %v3794 = vpack.c.b16 %v3627, %v3626
      %v3795 = vpack.c.b16 %v3629, %v3628
      %v3796 = vpack.c.b16 %v3631, %v3630
      %v3797 = vpack.c.b16 %v3633, %v3632
      %v3798 = vpack.c.b16 %v3635, %v3634
      %v3799 = vpack.c.b16 %v3637, %v3636
      %v3800 = vpack.c.b16 %v3639, %v3638
      %v3801 = vpack.c.b16 %v3641, %v3640
      %v3802 = vpack.c.b16 %v3643, %v3642
      %v3803 = vpack.c.b16 %v3645, %v3644
      %v3804 = vpack.c.b16 %v3647, %v3646
      %v3805 = vpack.c.b16 %v3649, %v3648
      %v3806 = vpack.c.b16 %v3651, %v3650
      %v3807 = vpack.c.b16 %v3653, %v3652
      %v3808 = vpack.c.b16 %v3655, %v3654
      %v3809 = vpack.c.b16 %v3657, %v3656
      %v3810 = vpack.c.b16 %v3659, %v3658
      %v3811 = vpack.c.b16 %v3661, %v3660
      %v3812 = vpack.c.b16 %v3663, %v3662
      %v3813 = vpack.c.b16 %v3665, %v3664
      %v3814 = vpack.c.b16 %v3667, %v3666
      %v3815 = vpack.c.b16 %v3669, %v3668
      %v3816 = vpack.c.b16 %v3671, %v3670
      %v3817 = vpack.c.b16 %v3673, %v3672
      %v3818 = vpack.c.b16 %v3675, %v3674
      %v3819 = vpack.c.b16 %v3677, %v3676
      %v3820 = vpack.c.b16 %v3679, %v3678
      %v3821 = vpack.c.b16 %v3681, %v3680
      %v3822 = vpack.c.b16 %v3683, %v3682
      %v3823 = vpack.c.b16 %v3685, %v3684
      %v3824 = vpack.c.b16 %v3687, %v3686
      %v3825 = vpack.c.b16 %v3689, %v3688
      %v3826 = vpack.c.b16 %v3691, %v3690
      %v3827 = vpack.c.b16 %v3693, %v3692
      %v3828 = vpack.c.b16 %v3695, %v3694
      %v3829 = vpack.c.b16 %v3697, %v3696
      %v3830 = vpack.c.b16 %v3699, %v3698
      %v3831 = vpack.c.b16 %v3701, %v3700
      %v3832 = vpack.c.b16 %v3703, %v3702
      %v3833 = vpack.c.b16 %v3705, %v3704
      %v3834 = vpack.c.b16 %v3707, %v3706
      %v3835 = vpack.c.b16 %v3709, %v3708
      %v3836 = vpack.c.b16 %v3711, %v3710
      %v3837 = vpack.c.b16 %v3713, %v3712
      %v3838 = vpack.c.b16 %v3715, %v3714
      %v3839 = vpack.c.b16 %v3717, %v3716
      %v3840 = vpack.c.b16 %v3719, %v3718
      %v3841 = vpack.c.b16 %v3721, %v3720
      %v3842 = vpack.c.b16 %v3723, %v3722
      %v3843 = vpack.c.b16 %v3725, %v3724
      %v3844 = vpack.c.b16 %v3727, %v3726
      %v3845 = vpack.c.b16 %v3729, %v3728
      %v3846 = vpack.c.b16 %v3731, %v3730
      %v3847 = vpack.c.b16 %v3733, %v3732
      %v3848 = vpack.c.b16 %v3735, %v3734
      %v3849 = vpack.c.b16 %v3737, %v3736
      %v3850 = vpack.c.b16 %v3739, %v3738
      %v3851 = vpack.c.b16 %v3741, %v3740
      %v3852 = vpack.c.b16 %v3743, %v3742
      %v3853 = vpack.c.b16 %v3745, %v3744
      %v3963 = vsel %vm1465, %v3219, 0
      %v3966 = vsel %vm1465, %v3233, 0
      %v3969 = vsel %vm1465, %v3247, 0
      %v3972 = vsel %vm1465, %v3261, 0
      %3974 = vmatpush.bf16.msra.mxu0 %v3753
      %3975 = vmatpush.bf16.msra.mxu0 %v3752
      %3976 = vmatpush.bf16.msra.mxu0 %v3751
      %3977 = vmatpush.bf16.msra.mxu0 %v3750
      %3978 = vmatpush.bf16.msra.mxu0 %v3749
      %3979 = vmatpush.bf16.msra.mxu0 %v3748
      %3980 = vmatpush.bf16.msra.mxu0 %v3747
      %3981 = vmatpush.bf16.msra.mxu0 %v3746
      %3982 = vmatmul.bf16.gmra.mxu0 %v3206
      %v3983 = vpop.f32.mrf.mxu0
      %v3984 = vadd.f32 %v3204, %v3983
      %v3985 = vpop.f32.mrf.mxu0
      %v3986 = vadd.f32 %v3204, %v3985
      %3987 = vmatmul.bf16.gmra.mxu0 %v3220
      %v3988 = vpop.f32.mrf.mxu0
      %v3989 = vadd.f32 %v3204, %v3988
      %v3990 = vpop.f32.mrf.mxu0
      %v3991 = vadd.f32 %v3204, %v3990
      %3992 = vmatmul.bf16.gmra.mxu0 %v3234
      %v3993 = vpop.f32.mrf.mxu0
      %v3994 = vadd.f32 %v3204, %v3993
      %v3995 = vpop.f32.mrf.mxu0
      %v3996 = vadd.f32 %v3204, %v3995
      %3997 = vmatmul.bf16.gmra.mxu0 %v3248
      %v3998 = vpop.f32.mrf.mxu0
      %v3999 = vadd.f32 %v3204, %v3998
      %v4000 = vpop.f32.mrf.mxu0
      %v4001 = vadd.f32 %v3204, %v4000
      %4002 = vdwg.mxu0
      %4003 = vmatpush.bf16.msra.mxu0 %v3761
      %4004 = vmatpush.bf16.msra.mxu0 %v3760
      %4005 = vmatpush.bf16.msra.mxu0 %v3759
      %4006 = vmatpush.bf16.msra.mxu0 %v3758
      %4007 = vmatpush.bf16.msra.mxu0 %v3757
      %4008 = vmatpush.bf16.msra.mxu0 %v3756
      %4009 = vmatpush.bf16.msra.mxu0 %v3755
      %4010 = vmatpush.bf16.msra.mxu0 %v3754
      %4011 = vmatmul.bf16.gmra.mxu0 %v3207
      %v4012 = vpop.f32.mrf.mxu0
      %v4013 = vadd.f32 %v3984, %v4012
      %v4014 = vpop.f32.mrf.mxu0
      %v4015 = vadd.f32 %v3986, %v4014
      %4016 = vmatmul.bf16.gmra.mxu0 %v3221
      %v4017 = vpop.f32.mrf.mxu0
      %v4018 = vadd.f32 %v3989, %v4017
      %v4019 = vpop.f32.mrf.mxu0
      %v4020 = vadd.f32 %v3991, %v4019
      %4021 = vmatmul.bf16.gmra.mxu0 %v3235
      %v4022 = vpop.f32.mrf.mxu0
      %v4023 = vadd.f32 %v3994, %v4022
      %v4024 = vpop.f32.mrf.mxu0
      %v4025 = vadd.f32 %v3996, %v4024
      %4026 = vmatmul.bf16.gmra.mxu0 %v3249
      %v4027 = vpop.f32.mrf.mxu0
      %v4028 = vadd.f32 %v3999, %v4027
      %v4029 = vpop.f32.mrf.mxu0
      %v4030 = vadd.f32 %v4001, %v4029
      %4031 = vdwg.mxu0
      %4032 = vmatpush.bf16.msra.mxu0 %v3769
      %4033 = vmatpush.bf16.msra.mxu0 %v3768
      %4034 = vmatpush.bf16.msra.mxu0 %v3767
      %4035 = vmatpush.bf16.msra.mxu0 %v3766
      %4036 = vmatpush.bf16.msra.mxu0 %v3765
      %4037 = vmatpush.bf16.msra.mxu0 %v3764
      %4038 = vmatpush.bf16.msra.mxu0 %v3763
      %4039 = vmatpush.bf16.msra.mxu0 %v3762
      %4040 = vmatmul.bf16.gmra.mxu0 %v3208
      %v4041 = vpop.f32.mrf.mxu0
      %v4042 = vadd.f32 %v4013, %v4041
      %v4043 = vpop.f32.mrf.mxu0
      %v4044 = vadd.f32 %v4015, %v4043
      %4045 = vmatmul.bf16.gmra.mxu0 %v3222
      %v4046 = vpop.f32.mrf.mxu0
      %v4047 = vadd.f32 %v4018, %v4046
      %v4048 = vpop.f32.mrf.mxu0
      %v4049 = vadd.f32 %v4020, %v4048
      %4050 = vmatmul.bf16.gmra.mxu0 %v3236
      %v4051 = vpop.f32.mrf.mxu0
      %v4052 = vadd.f32 %v4023, %v4051
      %v4053 = vpop.f32.mrf.mxu0
      %v4054 = vadd.f32 %v4025, %v4053
      %4055 = vmatmul.bf16.gmra.mxu0 %v3250
      %v4056 = vpop.f32.mrf.mxu0
      %v4057 = vadd.f32 %v4028, %v4056
      %v4058 = vpop.f32.mrf.mxu0
      %v4059 = vadd.f32 %v4030, %v4058
      %4060 = vdwg.mxu0
      %4061 = vmatpush.bf16.msra.mxu0 %v3777
      %4062 = vmatpush.bf16.msra.mxu0 %v3776
      %4063 = vmatpush.bf16.msra.mxu0 %v3775
      %4064 = vmatpush.bf16.msra.mxu0 %v3774
      %4065 = vmatpush.bf16.msra.mxu0 %v3773
      %4066 = vmatpush.bf16.msra.mxu0 %v3772
      %4067 = vmatpush.bf16.msra.mxu0 %v3771
      %4068 = vmatpush.bf16.msra.mxu0 %v3770
      %4069 = vmatmul.bf16.gmra.mxu0 %v3209
      %v4070 = vpop.f32.mrf.mxu0
      %v4071 = vadd.f32 %v4042, %v4070
      %v4072 = vpop.f32.mrf.mxu0
      %v4073 = vadd.f32 %v4044, %v4072
      %4074 = vmatmul.bf16.gmra.mxu0 %v3223
      %v4075 = vpop.f32.mrf.mxu0
      %v4076 = vadd.f32 %v4047, %v4075
      %v4077 = vpop.f32.mrf.mxu0
      %v4078 = vadd.f32 %v4049, %v4077
      %4079 = vmatmul.bf16.gmra.mxu0 %v3237
      %v4080 = vpop.f32.mrf.mxu0
      %v4081 = vadd.f32 %v4052, %v4080
      %v4082 = vpop.f32.mrf.mxu0
      %v4083 = vadd.f32 %v4054, %v4082
      %4084 = vmatmul.bf16.gmra.mxu0 %v3251
      %v4085 = vpop.f32.mrf.mxu0
      %v4086 = vadd.f32 %v4057, %v4085
      %v4087 = vpop.f32.mrf.mxu0
      %v4088 = vadd.f32 %v4059, %v4087
      %4089 = vdwg.mxu0
      %4090 = vmatpush.bf16.msra.mxu0 %v3785
      %4091 = vmatpush.bf16.msra.mxu0 %v3784
      %4092 = vmatpush.bf16.msra.mxu0 %v3783
      %4093 = vmatpush.bf16.msra.mxu0 %v3782
      %4094 = vmatpush.bf16.msra.mxu0 %v3781
      %4095 = vmatpush.bf16.msra.mxu0 %v3780
      %4096 = vmatpush.bf16.msra.mxu0 %v3779
      %4097 = vmatpush.bf16.msra.mxu0 %v3778
      %4098 = vmatmul.bf16.gmra.mxu0 %v3210
      %v4099 = vpop.f32.mrf.mxu0
      %v4100 = vadd.f32 %v4071, %v4099
      %v4101 = vpop.f32.mrf.mxu0
      %v4102 = vadd.f32 %v4073, %v4101
      %4103 = vmatmul.bf16.gmra.mxu0 %v3224
      %v4104 = vpop.f32.mrf.mxu0
      %v4105 = vadd.f32 %v4076, %v4104
      %v4106 = vpop.f32.mrf.mxu0
      %v4107 = vadd.f32 %v4078, %v4106
      %4108 = vmatmul.bf16.gmra.mxu0 %v3238
      %v4109 = vpop.f32.mrf.mxu0
      %v4110 = vadd.f32 %v4081, %v4109
      %v4111 = vpop.f32.mrf.mxu0
      %v4112 = vadd.f32 %v4083, %v4111
      %4113 = vmatmul.bf16.gmra.mxu0 %v3252
      %v4114 = vpop.f32.mrf.mxu0
      %v4115 = vadd.f32 %v4086, %v4114
      %v4116 = vpop.f32.mrf.mxu0
      %v4117 = vadd.f32 %v4088, %v4116
      %4118 = vdwg.mxu0
      %4119 = vmatpush.bf16.msra.mxu0 %v3793
      %4120 = vmatpush.bf16.msra.mxu0 %v3792
      %4121 = vmatpush.bf16.msra.mxu0 %v3791
      %4122 = vmatpush.bf16.msra.mxu0 %v3790
      %4123 = vmatpush.bf16.msra.mxu0 %v3789
      %4124 = vmatpush.bf16.msra.mxu0 %v3788
      %4125 = vmatpush.bf16.msra.mxu0 %v3787
      %4126 = vmatpush.bf16.msra.mxu0 %v3786
      %4127 = vmatmul.bf16.gmra.mxu0 %v3211
      %v4128 = vpop.f32.mrf.mxu0
      %v4129 = vadd.f32 %v4100, %v4128
      %v4130 = vpop.f32.mrf.mxu0
      %v4131 = vadd.f32 %v4102, %v4130
      %4132 = vmatmul.bf16.gmra.mxu0 %v3225
      %v4133 = vpop.f32.mrf.mxu0
      %v4134 = vadd.f32 %v4105, %v4133
      %v4135 = vpop.f32.mrf.mxu0
      %v4136 = vadd.f32 %v4107, %v4135
      %4137 = vmatmul.bf16.gmra.mxu0 %v3239
      %v4138 = vpop.f32.mrf.mxu0
      %v4139 = vadd.f32 %v4110, %v4138
      %v4140 = vpop.f32.mrf.mxu0
      %v4141 = vadd.f32 %v4112, %v4140
      %4142 = vmatmul.bf16.gmra.mxu0 %v3253
      %v4143 = vpop.f32.mrf.mxu0
      %v4144 = vadd.f32 %v4115, %v4143
      %v4145 = vpop.f32.mrf.mxu0
      %v4146 = vadd.f32 %v4117, %v4145
      %4147 = vdwg.mxu0
      %4148 = vmatpush.bf16.msra.mxu0 %v3801
      %4149 = vmatpush.bf16.msra.mxu0 %v3800
      %4150 = vmatpush.bf16.msra.mxu0 %v3799
      %4151 = vmatpush.bf16.msra.mxu0 %v3798
      %4152 = vmatpush.bf16.msra.mxu0 %v3797
      %4153 = vmatpush.bf16.msra.mxu0 %v3796
      %4154 = vmatpush.bf16.msra.mxu0 %v3795
      %4155 = vmatpush.bf16.msra.mxu0 %v3794
      %4156 = vmatmul.bf16.gmra.mxu0 %v3212
      %v4157 = vpop.f32.mrf.mxu0
      %v4158 = vadd.f32 %v4129, %v4157
      %v4159 = vpop.f32.mrf.mxu0
      %v4160 = vadd.f32 %v4131, %v4159
      %4161 = vmatmul.bf16.gmra.mxu0 %v3226
      %v4162 = vpop.f32.mrf.mxu0
      %v4163 = vadd.f32 %v4134, %v4162
      %v4164 = vpop.f32.mrf.mxu0
      %v4165 = vadd.f32 %v4136, %v4164
      %4166 = vmatmul.bf16.gmra.mxu0 %v3240
      %v4167 = vpop.f32.mrf.mxu0
      %v4168 = vadd.f32 %v4139, %v4167
      %v4169 = vpop.f32.mrf.mxu0
      %v4170 = vadd.f32 %v4141, %v4169
      %4171 = vmatmul.bf16.gmra.mxu0 %v3254
      %v4172 = vpop.f32.mrf.mxu0
      %v4173 = vadd.f32 %v4144, %v4172
      %v4174 = vpop.f32.mrf.mxu0
      %v4175 = vadd.f32 %v4146, %v4174
      %4176 = vdwg.mxu0
      %4177 = vmatpush.bf16.msra.mxu0 %v3809
      %4178 = vmatpush.bf16.msra.mxu0 %v3808
      %4179 = vmatpush.bf16.msra.mxu0 %v3807
      %4180 = vmatpush.bf16.msra.mxu0 %v3806
      %4181 = vmatpush.bf16.msra.mxu0 %v3805
      %4182 = vmatpush.bf16.msra.mxu0 %v3804
      %4183 = vmatpush.bf16.msra.mxu0 %v3803
      %4184 = vmatpush.bf16.msra.mxu0 %v3802
      %4185 = vmatmul.bf16.gmra.mxu0 %v3213
      %v4186 = vpop.f32.mrf.mxu0
      %v4187 = vadd.f32 %v4158, %v4186
      %v4188 = vpop.f32.mrf.mxu0
      %v4189 = vadd.f32 %v4160, %v4188
      %4190 = vmatmul.bf16.gmra.mxu0 %v3227
      %v4191 = vpop.f32.mrf.mxu0
      %v4192 = vadd.f32 %v4163, %v4191
      %v4193 = vpop.f32.mrf.mxu0
      %v4194 = vadd.f32 %v4165, %v4193
      %4195 = vmatmul.bf16.gmra.mxu0 %v3241
      %v4196 = vpop.f32.mrf.mxu0
      %v4197 = vadd.f32 %v4168, %v4196
      %v4198 = vpop.f32.mrf.mxu0
      %v4199 = vadd.f32 %v4170, %v4198
      %4200 = vmatmul.bf16.gmra.mxu0 %v3255
      %v4201 = vpop.f32.mrf.mxu0
      %v4202 = vadd.f32 %v4173, %v4201
      %v4203 = vpop.f32.mrf.mxu0
      %v4204 = vadd.f32 %v4175, %v4203
      %4205 = vdwg.mxu0
      %4206 = vmatpush.bf16.msra.mxu0 %v3817
      %4207 = vmatpush.bf16.msra.mxu0 %v3816
      %4208 = vmatpush.bf16.msra.mxu0 %v3815
      %4209 = vmatpush.bf16.msra.mxu0 %v3814
      %4210 = vmatpush.bf16.msra.mxu0 %v3813
      %4211 = vmatpush.bf16.msra.mxu0 %v3812
      %4212 = vmatpush.bf16.msra.mxu0 %v3811
      %4213 = vmatpush.bf16.msra.mxu0 %v3810
      %4214 = vmatmul.bf16.gmra.mxu0 %v3214
      %v4215 = vpop.f32.mrf.mxu0
      %v4216 = vadd.f32 %v4187, %v4215
      %v4217 = vpop.f32.mrf.mxu0
      %v4218 = vadd.f32 %v4189, %v4217
      %4219 = vmatmul.bf16.gmra.mxu0 %v3228
      %v4220 = vpop.f32.mrf.mxu0
      %v4221 = vadd.f32 %v4192, %v4220
      %v4222 = vpop.f32.mrf.mxu0
      %v4223 = vadd.f32 %v4194, %v4222
      %4224 = vmatmul.bf16.gmra.mxu0 %v3242
      %v4225 = vpop.f32.mrf.mxu0
      %v4226 = vadd.f32 %v4197, %v4225
      %v4227 = vpop.f32.mrf.mxu0
      %v4228 = vadd.f32 %v4199, %v4227
      %4229 = vmatmul.bf16.gmra.mxu0 %v3256
      %v4230 = vpop.f32.mrf.mxu0
      %v4231 = vadd.f32 %v4202, %v4230
      %v4232 = vpop.f32.mrf.mxu0
      %v4233 = vadd.f32 %v4204, %v4232
      %4234 = vdwg.mxu0
      %4235 = vmatpush.bf16.msra.mxu0 %v3825
      %4236 = vmatpush.bf16.msra.mxu0 %v3824
      %4237 = vmatpush.bf16.msra.mxu0 %v3823
      %4238 = vmatpush.bf16.msra.mxu0 %v3822
      %4239 = vmatpush.bf16.msra.mxu0 %v3821
      %4240 = vmatpush.bf16.msra.mxu0 %v3820
      %4241 = vmatpush.bf16.msra.mxu0 %v3819
      %4242 = vmatpush.bf16.msra.mxu0 %v3818
      %4243 = vmatmul.bf16.gmra.mxu0 %v3215
      %v4244 = vpop.f32.mrf.mxu0
      %v4245 = vadd.f32 %v4216, %v4244
      %v4246 = vpop.f32.mrf.mxu0
      %v4247 = vadd.f32 %v4218, %v4246
      %4248 = vmatmul.bf16.gmra.mxu0 %v3229
      %v4249 = vpop.f32.mrf.mxu0
      %v4250 = vadd.f32 %v4221, %v4249
      %v4251 = vpop.f32.mrf.mxu0
      %v4252 = vadd.f32 %v4223, %v4251
      %4253 = vmatmul.bf16.gmra.mxu0 %v3243
      %v4254 = vpop.f32.mrf.mxu0
      %v4255 = vadd.f32 %v4226, %v4254
      %v4256 = vpop.f32.mrf.mxu0
      %v4257 = vadd.f32 %v4228, %v4256
      %4258 = vmatmul.bf16.gmra.mxu0 %v3257
      %v4259 = vpop.f32.mrf.mxu0
      %v4260 = vadd.f32 %v4231, %v4259
      %v4261 = vpop.f32.mrf.mxu0
      %v4262 = vadd.f32 %v4233, %v4261
      %4263 = vdwg.mxu0
      %4264 = vmatpush.bf16.msra.mxu0 %v3833
      %4265 = vmatpush.bf16.msra.mxu0 %v3832
      %4266 = vmatpush.bf16.msra.mxu0 %v3831
      %4267 = vmatpush.bf16.msra.mxu0 %v3830
      %4268 = vmatpush.bf16.msra.mxu0 %v3829
      %4269 = vmatpush.bf16.msra.mxu0 %v3828
      %4270 = vmatpush.bf16.msra.mxu0 %v3827
      %4271 = vmatpush.bf16.msra.mxu0 %v3826
      %4272 = vmatmul.bf16.gmra.mxu0 %v3216
      %v4273 = vpop.f32.mrf.mxu0
      %v4274 = vadd.f32 %v4245, %v4273
      %v4275 = vpop.f32.mrf.mxu0
      %v4276 = vadd.f32 %v4247, %v4275
      %4277 = vmatmul.bf16.gmra.mxu0 %v3230
      %v4278 = vpop.f32.mrf.mxu0
      %v4279 = vadd.f32 %v4250, %v4278
      %v4280 = vpop.f32.mrf.mxu0
      %v4281 = vadd.f32 %v4252, %v4280
      %4282 = vmatmul.bf16.gmra.mxu0 %v3244
      %v4283 = vpop.f32.mrf.mxu0
      %v4284 = vadd.f32 %v4255, %v4283
      %v4285 = vpop.f32.mrf.mxu0
      %v4286 = vadd.f32 %v4257, %v4285
      %4287 = vmatmul.bf16.gmra.mxu0 %v3258
      %v4288 = vpop.f32.mrf.mxu0
      %v4289 = vadd.f32 %v4260, %v4288
      %v4290 = vpop.f32.mrf.mxu0
      %v4291 = vadd.f32 %v4262, %v4290
      %4292 = vdwg.mxu0
      %4293 = vmatpush.bf16.msra.mxu0 %v3841
      %4294 = vmatpush.bf16.msra.mxu0 %v3840
      %4295 = vmatpush.bf16.msra.mxu0 %v3839
      %4296 = vmatpush.bf16.msra.mxu0 %v3838
      %4297 = vmatpush.bf16.msra.mxu0 %v3837
      %4298 = vmatpush.bf16.msra.mxu0 %v3836
      %4299 = vmatpush.bf16.msra.mxu0 %v3835
      %4300 = vmatpush.bf16.msra.mxu0 %v3834
      %4301 = vmatmul.bf16.gmra.mxu0 %v3217
      %v4302 = vpop.f32.mrf.mxu0
      %v4303 = vadd.f32 %v4274, %v4302
      %v4304 = vpop.f32.mrf.mxu0
      %v4305 = vadd.f32 %v4276, %v4304
      %4306 = vmatmul.bf16.gmra.mxu0 %v3231
      %v4307 = vpop.f32.mrf.mxu0
      %v4308 = vadd.f32 %v4279, %v4307
      %v4309 = vpop.f32.mrf.mxu0
      %v4310 = vadd.f32 %v4281, %v4309
      %4311 = vmatmul.bf16.gmra.mxu0 %v3245
      %v4312 = vpop.f32.mrf.mxu0
      %v4313 = vadd.f32 %v4284, %v4312
      %v4314 = vpop.f32.mrf.mxu0
      %v4315 = vadd.f32 %v4286, %v4314
      %4316 = vmatmul.bf16.gmra.mxu0 %v3259
      %v4317 = vpop.f32.mrf.mxu0
      %v4318 = vadd.f32 %v4289, %v4317
      %v4319 = vpop.f32.mrf.mxu0
      %v4320 = vadd.f32 %v4291, %v4319
      %4321 = vdwg.mxu0
      %4322 = vmatpush.bf16.msra.mxu0 %v3849
      %4323 = vmatpush.bf16.msra.mxu0 %v3848
      %4324 = vmatpush.bf16.msra.mxu0 %v3847
      %4325 = vmatpush.bf16.msra.mxu0 %v3846
      %4326 = vmatpush.bf16.msra.mxu0 %v3845
      %4327 = vmatpush.bf16.msra.mxu0 %v3844
      %4328 = vmatpush.bf16.msra.mxu0 %v3843
      %4329 = vmatpush.bf16.msra.mxu0 %v3842
      %4330 = vmatmul.bf16.gmra.mxu0 %v3218
      %v4331 = vpop.f32.mrf.mxu0
      %v4332 = vadd.f32 %v4303, %v4331
      %v4333 = vpop.f32.mrf.mxu0
      %v4334 = vadd.f32 %v4305, %v4333
      %4335 = vmatmul.bf16.gmra.mxu0 %v3232
      %v4336 = vpop.f32.mrf.mxu0
      %v4337 = vadd.f32 %v4308, %v4336
      %v4338 = vpop.f32.mrf.mxu0
      %v4339 = vadd.f32 %v4310, %v4338
      %4340 = vmatmul.bf16.gmra.mxu0 %v3246
      %v4341 = vpop.f32.mrf.mxu0
      %v4342 = vadd.f32 %v4313, %v4341
      %v4343 = vpop.f32.mrf.mxu0
      %v4344 = vadd.f32 %v4315, %v4343
      %4345 = vmatmul.bf16.gmra.mxu0 %v3260
      %v4346 = vpop.f32.mrf.mxu0
      %v4347 = vadd.f32 %v4318, %v4346
      %v4348 = vpop.f32.mrf.mxu0
      %v4349 = vadd.f32 %v4320, %v4348
      %4350 = vdwg.mxu0
      %4351 = vmatpush.bf16.msra.mxu0 0
      %4352 = vmatpush.bf16.msra.mxu0 0
      %4353 = vmatpush.bf16.msra.mxu0 0
      %4354 = vmatpush.bf16.msra.mxu0 0
      %4355 = vmatpush.bf16.msra.mxu0 %v3853
      %4356 = vmatpush.bf16.msra.mxu0 %v3852
      %4357 = vmatpush.bf16.msra.mxu0 %v3851
      %4358 = vmatpush.bf16.msra.mxu0 %v3850
      %4359 = vmatmul.bf16.gmra.mxu0 %v3963
      %v4360 = vpop.f32.mrf.mxu0
      %v4361 = vadd.f32 %v4332, %v4360
      %v4362 = vpop.f32.mrf.mxu0
      %v4363 = vadd.f32 %v4334, %v4362
      %4364 = vmatmul.bf16.gmra.mxu0 %v3966
      %v4365 = vpop.f32.mrf.mxu0
      %v4366 = vadd.f32 %v4337, %v4365
      %v4367 = vpop.f32.mrf.mxu0
      %v4368 = vadd.f32 %v4339, %v4367
      %4369 = vmatmul.bf16.gmra.mxu0 %v3969
      %v4370 = vpop.f32.mrf.mxu0
      %v4371 = vadd.f32 %v4342, %v4370
      %v4372 = vpop.f32.mrf.mxu0
      %v4373 = vadd.f32 %v4344, %v4372
      %4374 = vmatmul.bf16.gmra.mxu0 %v3972
      %v4375 = vpop.f32.mrf.mxu0
      %v4376 = vadd.f32 %v4347, %v4375
      %v4377 = vpop.f32.mrf.mxu0
      %v4378 = vadd.f32 %v4349, %v4377
      %4379 = vdwg.mxu0
      %4380 = vst.msk [vmem:[%s419] sm:$0xff] %vm1465, %v4361
      %4381 = vst.msk [vmem:[%s419 + $0x8] sm:$0xff] %vm1465, %v4363
      %4382 = vst.msk [vmem:[%s419 + $0x10] sm:$0xff] %vm1465, %v4366
      %4383 = vst.msk [vmem:[%s419 + $0x18] sm:$0xff] %vm1465, %v4368
      %4384 = vst.msk [vmem:[%s419 + $0x20] sm:$0xff] %vm1465, %v4371
      %4385 = vst.msk [vmem:[%s419 + $0x28] sm:$0xff] %vm1465, %v4373
      %4386 = vst.msk [vmem:[%s419 + $0x30] sm:$0xff] %vm1465, %v4376
      %4387 = vst.msk [vmem:[%s419 + $0x38] sm:$0xff] %vm1465, %v4378
      %v4388 = vsel %vm1465, %v4361, 0.0
      %v4389 = vsel %vm1465, %v4363, 0.0
      %v4390 = vadd.f32 %v4388, %v4389
      %v4391 = vsel %vm1465, %v4366, 0.0
      %v4392 = vadd.f32 %v4390, %v4391
      %v4393 = vsel %vm1465, %v4368, 0.0
      %v4394 = vadd.f32 %v4392, %v4393
      %v4395 = vsel %vm1465, %v4371, 0.0
      %v4396 = vadd.f32 %v4394, %v4395
      %v4397 = vsel %vm1465, %v4373, 0.0
      %v4398 = vadd.f32 %v4396, %v4397
      %v4399 = vsel %vm1465, %v4376, 0.0
      %v4400 = vadd.f32 %v4398, %v4399
      %v4401 = vsel %vm1465, %v4378, 0.0
      %v4402 = vadd.f32 %v4400, %v4401
      %v4403 = vrot.slane %v4402, 4
      %v4404 = vadd.f32 %v4402, %v4403
      %v4405 = vrot.slane %v4404, 2
      %v4406 = vadd.f32 %v4404, %v4405
      %v4407 = vrot.slane %v4406, 1
      %v4408 = vadd.f32 %v4406, %v4407
      %vm4409 = vcmask 516096
      %4410 = vst.msk [vmem:[%s426] sm:$0x1] %vm4409, %v4408
      %v4411 = vmul.f32 %v4361, %v4361
      %v4412 = vmul.f32 %v4363, %v4363
      %v4413 = vmul.f32 %v4366, %v4366
      %v4414 = vmul.f32 %v4368, %v4368
      %v4415 = vmul.f32 %v4371, %v4371
      %v4416 = vmul.f32 %v4373, %v4373
      %v4417 = vmul.f32 %v4376, %v4376
      %v4418 = vmul.f32 %v4378, %v4378
      %v4419 = vsel %vm1465, %v4411, 0.0
      %v4420 = vsel %vm1465, %v4412, 0.0
      %v4421 = vadd.f32 %v4419, %v4420
      %v4422 = vsel %vm1465, %v4413, 0.0
      %v4423 = vadd.f32 %v4421, %v4422
      %v4424 = vsel %vm1465, %v4414, 0.0
      %v4425 = vadd.f32 %v4423, %v4424
      %v4426 = vsel %vm1465, %v4415, 0.0
      %v4427 = vadd.f32 %v4425, %v4426
      %v4428 = vsel %vm1465, %v4416, 0.0
      %v4429 = vadd.f32 %v4427, %v4428
      %v4430 = vsel %vm1465, %v4417, 0.0
      %v4431 = vadd.f32 %v4429, %v4430
      %v4432 = vsel %vm1465, %v4418, 0.0
      %v4433 = vadd.f32 %v4431, %v4432
      %v4434 = vrot.slane %v4433, 4
      %v4435 = vadd.f32 %v4433, %v4434
      %v4436 = vrot.slane %v4435, 2
      %v4437 = vadd.f32 %v4435, %v4436
      %v4438 = vrot.slane %v4437, 1
      %v4439 = vadd.f32 %v4437, %v4438
      %4440 = vst.msk [vmem:[%s433] sm:$0x1] %vm4409, %v4439
      %p4441 = scmp.lt.s32.totalorder %s23, 1
      %s4442 = scalar_select %p4441, %s23, 1
      %p4443 = scmp.lt.s32.totalorder %s24, 7
      %s4444 = scalar_select %p4443, %s24, 7
      %s4445 = smul.addr %s4444, 8
      %s4446 = smul.addr %s4442, 64
      %s4447 = sadd.s32 %s4445, %s4446
      %s4448 = smul.addr %s4447, 8
      %s4449 = scalar_lea.vmem %s5, %s4448
      %p4450 = scmp.lt.s32.totalorder %s23, 1
      %s4451 = scalar_select %p4450, %s23, 1
      %p4452 = scmp.lt.s32.totalorder %s24, 7
      %s4453 = scalar_select %p4452, %s24, 7
      %s4454 = smul.addr %s4451, 8
      %s4455 = sadd.s32 %s4453, %s4454
      %s4456 = scalar_lea.vmem %s6, %s4455
      %p4457 = scmp.lt.s32.totalorder %s23, 1
      %s4458 = scalar_select %p4457, %s23, 1
      %p4459 = scmp.lt.s32.totalorder %s24, 7
      %s4460 = scalar_select %p4459, %s24, 7
      %s4461 = smul.addr %s4458, 8
      %s4462 = sadd.s32 %s4460, %s4461
      %s4463 = scalar_lea.vmem %s7, %s4462
      // Predicated region
      $region41: #{up_transition.8} parent=39 // pred_check
        %p4464 = pneg %p181
      $region42: #{up_transition.8} parent=39 // pred_check_branch
        %4466 = sbr.rel (%p4464) target = $region44
      $region43: #{up_transition.8} parent=39 // pred_region
        _
      $region44: #{up_transition.8} parent=39 // pred_fallthru
        _
      // Predicated region
      $region45: #{up_transition.8} parent=39 // pred_check
        %p4467 = pneg %p209
      $region46: #{up_transition.8} parent=39 // pred_check_branch
        %4469 = sbr.rel (%p4467) target = $region48
      $region47: #{up_transition.8} parent=39 // pred_region
        _
      $region48: #{up_transition.8} parent=39 // pred_fallthru
        _
      // Predicated region
      $region49: #{up_transition.8} parent=39 // pred_check
        %p4470 = pneg %p237
      $region50: #{up_transition.8} parent=39 // pred_check_branch
        %4472 = sbr.rel (%p4470) target = $region52
      $region51: #{up_transition.8} parent=39 // pred_region
        _
      $region52: #{up_transition.8} parent=39 // pred_fallthru
        _
    $region40: #{up_transition.8} parent=5 // pred_fallthru
      _
    %p4473 = scmp.le.s32.totalorder 2, %s14
    // Predicated region
    $region53: #{up_transition.8} parent=5 // pred_check
      %p4474 = pneg %p4473
    $region54: #{up_transition.8} parent=5 // pred_check_branch
      %4476 = sbr.rel (%p4474) target = $region56
    $region55: #{up_transition.8} parent=5 // pred_region
      %s4477 = ssub.s32 %s14, 2
      // Predicated region
      $region57: #{up_transition.8} parent=55 // pred_check
        %p4478 = pneg %p187
      $region58: #{up_transition.8} parent=55 // pred_check_branch
        %4480 = sbr.rel (%p4478) target = $region60
      $region59: #{up_transition.8} parent=55 // pred_region
        %p4481 = scmp.lt.s32.totalorder %s25, 1
        %s4482 = scalar_select %p4481, %s25, 1
        %p4483 = scmp.lt.s32.totalorder %s26, 7
        %s4484 = scalar_select %p4483, %s26, 7
        %s4485 = smul.addr %s4484, 8
        %s4486 = smul.addr %s4482, 64
        %s4487 = sadd.s32 %s4485, %s4486
        %s4488 = smul.addr %s4487, 8
        %s4489 = scalar_lea.vmem %s5, %s4488
      $region60: #{up_transition.8} parent=55 // pred_fallthru
        _
      // Predicated region
      $region61: #{up_transition.8} parent=55 // pred_check
        %p4490 = pneg %p215
      $region62: #{up_transition.8} parent=55 // pred_check_branch
        %4492 = sbr.rel (%p4490) target = $region64
      $region63: #{up_transition.8} parent=55 // pred_region
        %p4493 = scmp.lt.s32.totalorder %s25, 1
        %s4494 = scalar_select %p4493, %s25, 1
        %p4495 = scmp.lt.s32.totalorder %s26, 7
        %s4496 = scalar_select %p4495, %s26, 7
        %s4497 = smul.addr %s4494, 8
        %s4498 = sadd.s32 %s4496, %s4497
        %s4499 = scalar_lea.vmem %s6, %s4498
      $region64: #{up_transition.8} parent=55 // pred_fallthru
        _
      // Predicated region
      $region65: #{up_transition.8} parent=55 // pred_check
        %p4500 = pneg %p243
      $region66: #{up_transition.8} parent=55 // pred_check_branch
        %4502 = sbr.rel (%p4500) target = $region68
      $region67: #{up_transition.8} parent=55 // pred_region
        %p4503 = scmp.lt.s32.totalorder %s25, 1
        %s4504 = scalar_select %p4503, %s25, 1
        %p4505 = scmp.lt.s32.totalorder %s26, 7
        %s4506 = scalar_select %p4505, %s26, 7
        %s4507 = smul.addr %s4504, 8
        %s4508 = sadd.s32 %s4506, %s4507
        %s4509 = scalar_lea.vmem %s7, %s4508
      $region68: #{up_transition.8} parent=55 // pred_fallthru
        _
    $region56: #{up_transition.8} parent=5 // pred_fallthru
      _
  $region6: #{up_transition.8} parent=0 // loop_footer
    %s18 = sadd.s32 1, %s14
  $region7: #{up_transition.8} parent=0 // loop_footer_branch
    %13 = sbr.rel target = $region3
  $region8: #{up_transition.8} parent=0 // loop_exit
    _

</llo_original>
